<compile_context>
chip_gen: v7x
topology: tpu7x:2x2x1
jax: 0.10.0
libtpu: 0.0.40
codegen_flags: <defaults>
</compile_context>

<pallas_src>
import functools
import math

import jax
import jax.numpy as jnp
from jax.experimental import pallas as pl
from jax.experimental.pallas import tpu as pltpu


VMEM_LIMIT = 48 * 1024 * 1024   # < v7x's 64 MiB physical; plenty of headroom on v5e/v6e
LN_EPS = 1e-5


def _pick_tile(dim, preferred, align):
    """Largest tile <= preferred that divides dim and is a multiple of `align`;
    falls back to the full dim (full-dim blocks are always legal)."""
    if dim <= preferred:
        return dim
    t = (preferred // align) * align
    while t >= align:
        if dim % t == 0:
            return t
        t -= align
    return dim


def _layernorm(y, gamma, beta, eps):
    mu = jnp.mean(y, axis=-1, keepdims=True)
    var = jnp.mean((y - mu) ** 2, axis=-1, keepdims=True)
    return (y - mu) * jax.lax.rsqrt(var + eps) * gamma + beta


# ---------------------- fused MHA sublayer (one pallas_call) ----------------------


def _mha_ln_kernel(*refs, scale, num_heads, eps, has_mask, self_attention):
    i = 0
    xq_ref = refs[i]; i += 1
    if self_attention:
        xkv_ref = xq_ref
    else:
        xkv_ref = refs[i]; i += 1
    mask_ref = None
    if has_mask:
        mask_ref = refs[i]; i += 1
    (wq_ref, bq_ref, wk_ref, bk_ref, wv_ref, bv_ref,
     wo_ref, bo_ref, g_ref, bb_ref, o_ref) = refs[i:]

    xq = xq_ref[0]                          # (Sq, E) bf16
    xkv = xkv_ref[0]                        # (Sk, E) bf16
    mask = mask_ref[...] if has_mask else None

    sq, e = xq.shape
    acc = jnp.zeros((sq, e), jnp.float32)   # out-projection accumulator (f32)
    for h in range(num_heads):              # unrolled; all per-head ops are plain 2-D
        q = jnp.dot(xq, wq_ref[h], preferred_element_type=jnp.float32) + bq_ref[h]
        k = jnp.dot(xkv, wk_ref[h], preferred_element_type=jnp.float32) + bk_ref[h]
        v = jnp.dot(xkv, wv_ref[h], preferred_element_type=jnp.float32) + bv_ref[h]
        s = jax.lax.dot_general(
            q.astype(jnp.bfloat16), k.astype(jnp.bfloat16),
            (((1,), (1,)), ((), ())), preferred_element_type=jnp.float32) * scale
        if has_mask:
            s = s + mask
        s = s - jnp.max(s, axis=-1, keepdims=True)
        p = jnp.exp(s)
        p = p / jnp.sum(p, axis=-1, keepdims=True)          # exact divide
        o = jnp.dot(p.astype(jnp.bfloat16), v.astype(jnp.bfloat16),
                    preferred_element_type=jnp.float32)     # (Sq, Dh)
        acc = acc + jnp.dot(o.astype(jnp.bfloat16), wo_ref[h],
                            preferred_element_type=jnp.float32)

    y = acc + bo_ref[...] + xq.astype(jnp.float32)           # out-proj bias + residual
    o_ref[0] = _layernorm(y, g_ref[...], bb_ref[...], eps).astype(o_ref.dtype)


def mha_ln_sublayer(x_q, x_kv, p, ln_g, ln_b, *, num_heads, mask=None,
                    self_attention, eps=LN_EPS):
    """LayerNorm(x_q + MHA(x_q, x_kv)) as a single fused kernel, grid over batch."""
    B, Sq, E = x_q.shape
    Sk = x_kv.shape[1]
    Dh = E // num_heads
    scale = 1.0 / math.sqrt(Dh)
    has_mask = mask is not None

    operands = [x_q]
    in_specs = [pl.BlockSpec((1, Sq, E), lambda b: (b, 0, 0))]
    if not self_attention:
        operands.append(x_kv)
        in_specs.append(pl.BlockSpec((1, Sk, E), lambda b: (b, 0, 0)))
    if has_mask:
        operands.append(mask)
        in_specs.append(pl.BlockSpec((Sq, Sk), lambda b: (0, 0)))

    const_operands = [p["wq"], p["bq"], p["wk"], p["bk"], p["wv"], p["bv"],
                      p["wo"], p["bo"], ln_g, ln_b]
    for a in const_operands:                # weights: constant block index, stay resident
        in_specs.append(pl.BlockSpec(a.shape, lambda b, _nd=a.ndim: (0,) * _nd))
    operands += const_operands

    return pl.pallas_call(
        functools.partial(_mha_ln_kernel, scale=scale, num_heads=num_heads,
                          eps=eps, has_mask=has_mask, self_attention=self_attention),
        grid=(B,),
        in_specs=in_specs,
        out_specs=pl.BlockSpec((1, Sq, E), lambda b: (b, 0, 0)),
        out_shape=jax.ShapeDtypeStruct((B, Sq, E), jnp.bfloat16),
        compiler_params=pltpu.CompilerParams(
            dimension_semantics=("parallel",),
            vmem_limit_bytes=VMEM_LIMIT),
    )(*operands)


# ----------------------------- fused FFN + LayerNorm ------------------------------


def _ffn_ln_kernel(x_ref, w1_ref, b1_ref, w2_ref, b2_ref, g_ref, bb_ref, o_ref, *, eps):
    x = x_ref[0]                                              # (S, E) bf16
    h = jnp.dot(x, w1_ref[...], preferred_element_type=jnp.float32) + b1_ref[...]
    h = jnp.maximum(h, 0.0)
    y = jnp.dot(h.astype(jnp.bfloat16), w2_ref[...],
                preferred_element_type=jnp.float32) + b2_ref[...]
    y = y + x.astype(jnp.float32)                             # residual (f32)
    o_ref[0] = _layernorm(y, g_ref[...], bb_ref[...], eps).astype(o_ref.dtype)


def ffn_ln(x, w1, b1, w2, b2, gamma, beta, *, eps=LN_EPS):
    """LayerNorm(x + relu(x@w1+b1)@w2+b2); hidden stays in VMEM, never hits HBM."""
    B, S, E = x.shape
    F = w1.shape[1]
    return pl.pallas_call(
        functools.partial(_ffn_ln_kernel, eps=eps),
        grid=(B,),
        in_specs=[
            pl.BlockSpec((1, S, E), lambda b: (b, 0, 0)),
            pl.BlockSpec((E, F), lambda b: (0, 0)),
            pl.BlockSpec((1, F), lambda b: (0, 0)),
            pl.BlockSpec((F, E), lambda b: (0, 0)),
            pl.BlockSpec((1, E), lambda b: (0, 0)),
            pl.BlockSpec((1, E), lambda b: (0, 0)),
            pl.BlockSpec((1, E), lambda b: (0, 0)),
        ],
        out_specs=pl.BlockSpec((1, S, E), lambda b: (b, 0, 0)),
        out_shape=jax.ShapeDtypeStruct((B, S, E), jnp.bfloat16),
        compiler_params=pltpu.CompilerParams(
            dimension_semantics=("parallel",),
            vmem_limit_bytes=VMEM_LIMIT),
    )(x, w1, b1, w2, b2, gamma, beta)


# --------------------------------- LayerNorm only ---------------------------------


def _ln_kernel(x_ref, g_ref, b_ref, o_ref, *, eps):
    x = x_ref[0].astype(jnp.float32)
    o_ref[0] = _layernorm(x, g_ref[...], b_ref[...], eps).astype(o_ref.dtype)


def layernorm(x, gamma, beta, *, eps=LN_EPS):
    B, S, E = x.shape
    return pl.pallas_call(
        functools.partial(_ln_kernel, eps=eps),
        grid=(B,),
        in_specs=[
            pl.BlockSpec((1, S, E), lambda b: (b, 0, 0)),
            pl.BlockSpec((1, E), lambda b: (0, 0)),
            pl.BlockSpec((1, E), lambda b: (0, 0)),
        ],
        out_specs=pl.BlockSpec((1, S, E), lambda b: (b, 0, 0)),
        out_shape=jax.ShapeDtypeStruct((B, S, E), jnp.bfloat16),
        compiler_params=pltpu.CompilerParams(
            dimension_semantics=("parallel",),
            vmem_limit_bytes=VMEM_LIMIT),
    )(x, gamma, beta)


# ------------------------- fused final LayerNorm + fc_out -------------------------


def _ln_linear_kernel(x_ref, g_ref, bb_ref, w_ref, b_ref, o_ref, *, eps):
    x = x_ref[...].astype(jnp.float32)                        # (tm, E)
    xn = _layernorm(x, g_ref[...], bb_ref[...], eps).astype(jnp.bfloat16)
    o_ref[...] = jnp.dot(xn, w_ref[...], preferred_element_type=jnp.float32) + b_ref[...]


def ln_linear(x2d, gamma, beta, w, b, *, eps=LN_EPS, tm=256, tn=512):
    """LayerNorm(x2d) @ w + b, tiled over rows and the (128-padded) vocab dim."""
    M, E = x2d.shape
    N = w.shape[1]
    tm = _pick_tile(M, tm, 8)
    tn = _pick_tile(N, tn, 128)
    grid = (M // tm, N // tn)
    return pl.pallas_call(
        functools.partial(_ln_linear_kernel, eps=eps),
        grid=grid,
        in_specs=[
            pl.BlockSpec((tm, E), lambda i, j: (i, 0)),
            pl.BlockSpec((1, E), lambda i, j: (0, 0)),
            pl.BlockSpec((1, E), lambda i, j: (0, 0)),
            pl.BlockSpec((E, tn), lambda i, j: (0, j)),
            pl.BlockSpec((1, tn), lambda i, j: (0, j)),
        ],
        out_specs=pl.BlockSpec((tm, tn), lambda i, j: (i, j)),
        out_shape=jax.ShapeDtypeStruct((M, N), jnp.float32),
        compiler_params=pltpu.CompilerParams(
            dimension_semantics=("parallel", "parallel"),
            vmem_limit_bytes=VMEM_LIMIT),
    )(x2d, gamma, beta, w, b)


# ------------------------------- Transformer pieces -------------------------------


def encoder_layer(x, p, num_heads):
    x = mha_ln_sublayer(x, x, p["self_attn"], p["norm1_g"], p["norm1_b"],
                        num_heads=num_heads, self_attention=True)
    return ffn_ln(x, p["w1"], p["b1"], p["w2"], p["b2"], p["norm2_g"], p["norm2_b"])


def decoder_layer(x, memory, p, num_heads, tgt_mask):
    x = mha_ln_sublayer(x, x, p["self_attn"], p["norm1_g"], p["norm1_b"],
                        num_heads=num_heads, mask=tgt_mask, self_attention=True)
    x = mha_ln_sublayer(x, memory, p["cross_attn"], p["norm2_g"], p["norm2_b"],
                        num_heads=num_heads, self_attention=False)
    return ffn_ln(x, p["w1"], p["b1"], p["w2"], p["b2"], p["norm3_g"], p["norm3_b"])


def transformer_translator_forward(params, src, tgt, *, num_heads, tgt_vocab):
    """src: (B, S_src) int32, tgt: (B, S_tgt) int32 -> (B, S_tgt, tgt_vocab) f32."""
    B, S_src = src.shape
    _, S_tgt = tgt.shape
    E = params["enc_embed"].shape[1]

    # Pad target length to a multiple of 8 (8-aligned sublane tiles / unmasked stores).
    # Causal masking means real positions never attend to pad positions, so real rows
    # are bit-identical; pad rows are sliced off at the end.
    S_pad = ((S_tgt + 7) // 8) * 8
    if S_pad != S_tgt:
        tgt = jnp.pad(tgt, ((0, 0), (0, S_pad - S_tgt)))

    # token embedding + learned positional embedding (glue: XLA gathers)
    src_emb = params["enc_embed"][src] + params["pos_embed"][:S_src][None, :, :]
    tgt_emb = params["dec_embed"][tgt] + params["pos_embed"][:S_pad][None, :, :]

    # causal (square subsequent) mask: 0 on/below diagonal, -inf above
    idx = jnp.arange(S_pad)
    tgt_mask = jnp.where(idx[None, :] <= idx[:, None], 0.0, -jnp.inf).astype(jnp.float32)

    x = src_emb.astype(jnp.bfloat16)
    for lp in params["enc_layers"]:
        x = encoder_layer(x, lp, num_heads)
    memory = layernorm(x, params["enc_norm_g"], params["enc_norm_b"])

    y = tgt_emb.astype(jnp.bfloat16)
    for lp in params["dec_layers"]:
        y = decoder_layer(y, memory, lp, num_heads, tgt_mask)

    # final decoder LayerNorm fused into fc_out; vocab is 128-padded for lane-dense stores
    logits = ln_linear(y.reshape(B * S_pad, E), params["dec_norm_g"], params["dec_norm_b"],
                       params["fc_w"], params["fc_b"])
    return logits.reshape(B, S_pad, -1)[:, :S_tgt, :tgt_vocab]


# --------------------------------- parameter init ---------------------------------


def _bf16_normal(key, shape, scale=0.02):
    return (jax.random.normal(key, shape, jnp.float32) * scale).astype(jnp.bfloat16)


def _attn_params(key, E, H):
    Dh = E // H
    ks = jax.random.split(key, 4)
    return {
        "wq": _bf16_normal(ks[0], (H, E, Dh)), "bq": jnp.zeros((H, 1, Dh), jnp.float32),
        "wk": _bf16_normal(ks[1], (H, E, Dh)), "bk": jnp.zeros((H, 1, Dh), jnp.float32),
        "wv": _bf16_normal(ks[2], (H, E, Dh)), "bv": jnp.zeros((H, 1, Dh), jnp.float32),
        "wo": _bf16_normal(ks[3], (H, Dh, E)), "bo": jnp.zeros((1, E), jnp.float32),
    }


def _ffn_params(key, E, F):
    k1, k2 = jax.random.split(key)
    return {
        "w1": _bf16_normal(k1, (E, F)), "b1": jnp.zeros((1, F), jnp.float32),
        "w2": _bf16_normal(k2, (F, E)), "b2": jnp.zeros((1, E), jnp.float32),
    }


def _ln_params(E):
    return jnp.ones((1, E), jnp.float32), jnp.zeros((1, E), jnp.float32)


def _enc_layer_params(key, E, H, F):
    k0, k1 = jax.random.split(key)
    g1, b1 = _ln_params(E)
    g2, b2 = _ln_params(E)
    return {"self_attn": _attn_params(k0, E, H), **_ffn_params(k1, E, F),
            "norm1_g": g1, "norm1_b": b1, "norm2_g": g2, "norm2_b": b2}


def _dec_layer_params(key, E, H, F):
    k0, k1, k2 = jax.random.split(key, 3)
    g1, b1 = _ln_params(E)
    g2, b2 = _ln_params(E)
    g3, b3 = _ln_params(E)
    return {"self_attn": _attn_params(k0, E, H), "cross_attn": _attn_params(k1, E, H),
            **_ffn_params(k2, E, F),
            "norm1_g": g1, "norm1_b": b1, "norm2_g": g2, "norm2_b": b2,
            "norm3_g": g3, "norm3_b": b3}


def init_params(key, src_vocab, tgt_vocab, E, H, F, num_layers, max_len):
    keys = jax.random.split(key, 4 + 2 * num_layers)
    vocab_pad = ((tgt_vocab + 127) // 128) * 128
    enc_g, enc_b = _ln_params(E)
    dec_g, dec_b = _ln_params(E)
    return {
        "enc_embed": jax.random.normal(keys[0], (src_vocab, E), jnp.float32) * 0.02,
        "dec_embed": jax.random.normal(keys[1], (tgt_vocab, E), jnp.float32) * 0.02,
        "pos_embed": jax.random.normal(keys[2], (max_len, E), jnp.float32) * 0.02,
        "enc_layers": [_enc_layer_params(keys[4 + i], E, H, F) for i in range(num_layers)],
        "dec_layers": [_dec_layer_params(keys[4 + num_layers + i], E, H, F)
                       for i in range(num_layers)],
        "enc_norm_g": enc_g, "enc_norm_b": enc_b,
        "dec_norm_g": dec_g, "dec_norm_b": dec_b,
        "fc_w": _bf16_normal(keys[3], (E, vocab_pad)),
        "fc_b": jnp.zeros((1, vocab_pad), jnp.float32),
    }


# --------------------------------------- main --------------------------------------


if __name__ == "__main__":
    SRC_VOCAB, TGT_VOCAB = 53, 61
    EMBED_DIM, NUM_HEADS, FF_DIM, NUM_LAYERS, MAX_LEN = 64, 4, 128, 2, 32
    B, S_SRC, S_TGT = 2, 8, 10

    root = jax.random.PRNGKey(0)
    k_params, k_src, k_tgt = jax.random.split(root, 3)

    params = init_params(k_params, SRC_VOCAB, TGT_VOCAB, EMBED_DIM, NUM_HEADS,
                         FF_DIM, NUM_LAYERS, MAX_LEN)
    src = jax.random.randint(k_src, (B, S_SRC), 0, SRC_VOCAB, dtype=jnp.int32)
    tgt = jax.random.randint(k_tgt, (B, S_TGT), 0, TGT_VOCAB, dtype=jnp.int32)

    fwd = jax.jit(functools.partial(transformer_translator_forward,
                                    num_heads=NUM_HEADS, tgt_vocab=TGT_VOCAB))
    out = fwd(params, src, tgt)
    out = jax.block_until_ready(out)

    assert out.shape == (B, S_TGT, TGT_VOCAB), out.shape
    assert bool(jnp.all(jnp.isfinite(out)))
    print("KERNEL_OK")
</pallas_src>

<mosaic_0001>
module attributes {stable_mosaic.version = 11 : i64} {
  func.func @_mha_ln_kernel(%arg0: i32, %arg1: memref<1x8x64xbf16, #tpu.memory_space<vmem>>, %arg2: memref<4x64x16xbf16, #tpu.memory_space<vmem>>, %arg3: memref<4x1x16xf32, #tpu.memory_space<vmem>>, %arg4: memref<4x64x16xbf16, #tpu.memory_space<vmem>>, %arg5: memref<4x1x16xf32, #tpu.memory_space<vmem>>, %arg6: memref<4x64x16xbf16, #tpu.memory_space<vmem>>, %arg7: memref<4x1x16xf32, #tpu.memory_space<vmem>>, %arg8: memref<4x16x64xbf16, #tpu.memory_space<vmem>>, %arg9: memref<1x64xf32, #tpu.memory_space<vmem>>, %arg10: memref<1x64xf32, #tpu.memory_space<vmem>>, %arg11: memref<1x64xf32, #tpu.memory_space<vmem>>, %arg12: memref<1x8x64xbf16, #tpu.memory_space<vmem>>) attributes {dimension_semantics = [#tpu.dimension_semantics<parallel>], iteration_bounds = array<i64: 2>, scalar_prefetch = 0 : i64, scratch_operands = 0 : i64, tpu.core_type = #tpu.core_type<tc>, window_params = [{transform_indices = @transform_0, window_bounds = array<i64: 1, 8, 64>}, {pipeline_mode = #tpu.pipeline_mode<synchronous>, transform_indices = @transform_1, window_bounds = array<i64: 4, 64, 16>}, {pipeline_mode = #tpu.pipeline_mode<synchronous>, transform_indices = @transform_2, window_bounds = array<i64: 4, 1, 16>}, {pipeline_mode = #tpu.pipeline_mode<synchronous>, transform_indices = @transform_3, window_bounds = array<i64: 4, 64, 16>}, {pipeline_mode = #tpu.pipeline_mode<synchronous>, transform_indices = @transform_4, window_bounds = array<i64: 4, 1, 16>}, {pipeline_mode = #tpu.pipeline_mode<synchronous>, transform_indices = @transform_5, window_bounds = array<i64: 4, 64, 16>}, {pipeline_mode = #tpu.pipeline_mode<synchronous>, transform_indices = @transform_6, window_bounds = array<i64: 4, 1, 16>}, {pipeline_mode = #tpu.pipeline_mode<synchronous>, transform_indices = @transform_7, window_bounds = array<i64: 4, 16, 64>}, {pipeline_mode = #tpu.pipeline_mode<synchronous>, transform_indices = @transform_8, window_bounds = array<i64: 1, 64>}, {pipeline_mode = #tpu.pipeline_mode<synchronous>, transform_indices = @transform_9, window_bounds = array<i64: 1, 64>}, {pipeline_mode = #tpu.pipeline_mode<synchronous>, transform_indices = @transform_10, window_bounds = array<i64: 1, 64>}, {transform_indices = @transform_11, window_bounds = array<i64: 1, 8, 64>}]} {
    %c0 = arith.constant 0 : index
    %c0_0 = arith.constant 0 : index
    %c0_1 = arith.constant 0 : index
    %0 = vector.load %arg1[%c0, %c0_0, %c0_1] : memref<1x8x64xbf16, #tpu.memory_space<vmem>>, vector<1x8x64xbf16>
    %1 = vector.shape_cast %0 : vector<1x8x64xbf16> to vector<8x64xbf16>
    %c0_2 = arith.constant 0 : index
    %c0_3 = arith.constant 0 : index
    %c0_4 = arith.constant 0 : index
    %2 = vector.load %arg1[%c0_2, %c0_3, %c0_4] : memref<1x8x64xbf16, #tpu.memory_space<vmem>>, vector<1x8x64xbf16>
    %3 = vector.shape_cast %2 : vector<1x8x64xbf16> to vector<8x64xbf16>
    %cst = arith.constant 0.000000e+00 : f32
    %4 = vector.broadcast %cst : f32 to vector<8x64xf32>
    %c0_5 = arith.constant 0 : index
    %c0_6 = arith.constant 0 : index
    %c0_7 = arith.constant 0 : index
    %5 = vector.load %arg2[%c0_5, %c0_6, %c0_7] : memref<4x64x16xbf16, #tpu.memory_space<vmem>>, vector<1x64x16xbf16>
    %6 = vector.shape_cast %5 : vector<1x64x16xbf16> to vector<64x16xbf16>
    %cst_8 = arith.constant dense<0.000000e+00> : vector<8x16xf32>
    %7 = tpu.matmul %1, %6, %cst_8 {dimension_numbers = #tpu.dot_dimension_numbers<[1], [0], [0], [1], [0, 0, 1, 1], [], []>} : vector<8x64xbf16>, vector<64x16xbf16>, vector<8x16xf32> -> vector<8x16xf32>
    %c0_9 = arith.constant 0 : index
    %c0_10 = arith.constant 0 : index
    %c0_11 = arith.constant 0 : index
    %8 = vector.load %arg3[%c0_9, %c0_10, %c0_11] : memref<4x1x16xf32, #tpu.memory_space<vmem>>, vector<1x1x16xf32>
    %9 = vector.shape_cast %8 : vector<1x1x16xf32> to vector<1x16xf32>
    %10 = vector.broadcast %9 : vector<1x16xf32> to vector<8x16xf32>
    %11 = arith.addf %7, %10 : vector<8x16xf32>
    %c0_12 = arith.constant 0 : index
    %c0_13 = arith.constant 0 : index
    %c0_14 = arith.constant 0 : index
    %12 = vector.load %arg4[%c0_12, %c0_13, %c0_14] : memref<4x64x16xbf16, #tpu.memory_space<vmem>>, vector<1x64x16xbf16>
    %13 = vector.shape_cast %12 : vector<1x64x16xbf16> to vector<64x16xbf16>
    %cst_15 = arith.constant dense<0.000000e+00> : vector<8x16xf32>
    %14 = tpu.matmul %3, %13, %cst_15 {dimension_numbers = #tpu.dot_dimension_numbers<[1], [0], [0], [1], [0, 0, 1, 1], [], []>} : vector<8x64xbf16>, vector<64x16xbf16>, vector<8x16xf32> -> vector<8x16xf32>
    %c0_16 = arith.constant 0 : index
    %c0_17 = arith.constant 0 : index
    %c0_18 = arith.constant 0 : index
    %15 = vector.load %arg5[%c0_16, %c0_17, %c0_18] : memref<4x1x16xf32, #tpu.memory_space<vmem>>, vector<1x1x16xf32>
    %16 = vector.shape_cast %15 : vector<1x1x16xf32> to vector<1x16xf32>
    %17 = vector.broadcast %16 : vector<1x16xf32> to vector<8x16xf32>
    %18 = arith.addf %14, %17 : vector<8x16xf32>
    %c0_19 = arith.constant 0 : index
    %c0_20 = arith.constant 0 : index
    %c0_21 = arith.constant 0 : index
    %19 = vector.load %arg6[%c0_19, %c0_20, %c0_21] : memref<4x64x16xbf16, #tpu.memory_space<vmem>>, vector<1x64x16xbf16>
    %20 = vector.shape_cast %19 : vector<1x64x16xbf16> to vector<64x16xbf16>
    %cst_22 = arith.constant dense<0.000000e+00> : vector<8x16xf32>
    %21 = tpu.matmul %3, %20, %cst_22 {dimension_numbers = #tpu.dot_dimension_numbers<[1], [0], [0], [1], [0, 0, 1, 1], [], []>} : vector<8x64xbf16>, vector<64x16xbf16>, vector<8x16xf32> -> vector<8x16xf32>
    %c0_23 = arith.constant 0 : index
    %c0_24 = arith.constant 0 : index
    %c0_25 = arith.constant 0 : index
    %22 = vector.load %arg7[%c0_23, %c0_24, %c0_25] : memref<4x1x16xf32, #tpu.memory_space<vmem>>, vector<1x1x16xf32>
    %23 = vector.shape_cast %22 : vector<1x1x16xf32> to vector<1x16xf32>
    %24 = vector.broadcast %23 : vector<1x16xf32> to vector<8x16xf32>
    %25 = arith.addf %21, %24 : vector<8x16xf32>
    %26 = arith.truncf %11 : vector<8x16xf32> to vector<8x16xbf16>
    %27 = arith.truncf %18 : vector<8x16xf32> to vector<8x16xbf16>
    %cst_26 = arith.constant dense<0.000000e+00> : vector<8x8xf32>
    %28 = tpu.matmul %26, %27, %cst_26 {dimension_numbers = #tpu.dot_dimension_numbers<[1], [1], [0], [0], [0, 0, 1, 0], [], []>} : vector<8x16xbf16>, vector<8x16xbf16>, vector<8x8xf32> -> vector<8x8xf32>
    %cst_27 = arith.constant 2.500000e-01 : f32
    %29 = vector.broadcast %cst_27 : f32 to vector<8x8xf32>
    %30 = arith.mulf %28, %29 : vector<8x8xf32>
    %cst_28 = arith.constant dense<0xFF800000> : vector<8xf32>
    %31 = vector.multi_reduction <maximumf>, %30, %cst_28 [1] : vector<8x8xf32> to vector<8xf32>
    %32 = vector.shape_cast %31 : vector<8xf32> to vector<8x1xf32>
    %33 = vector.broadcast %32 : vector<8x1xf32> to vector<8x8xf32>
    %34 = arith.subf %30, %33 : vector<8x8xf32>
    %35 = math.exp %34 : vector<8x8xf32>
    %cst_29 = arith.constant dense<0.000000e+00> : vector<8xf32>
    %36 = vector.multi_reduction <add>, %35, %cst_29 [1] : vector<8x8xf32> to vector<8xf32>
    %37 = vector.shape_cast %36 : vector<8xf32> to vector<8x1xf32>
    %38 = vector.broadcast %37 : vector<8x1xf32> to vector<8x8xf32>
    %39 = arith.divf %35, %38 : vector<8x8xf32>
    %40 = arith.truncf %39 : vector<8x8xf32> to vector<8x8xbf16>
    %41 = arith.truncf %25 : vector<8x16xf32> to vector<8x16xbf16>
    %cst_30 = arith.constant dense<0.000000e+00> : vector<8x16xf32>
    %42 = tpu.matmul %40, %41, %cst_30 {dimension_numbers = #tpu.dot_dimension_numbers<[1], [0], [0], [1], [0, 0, 1, 1], [], []>} : vector<8x8xbf16>, vector<8x16xbf16>, vector<8x16xf32> -> vector<8x16xf32>
    %43 = arith.truncf %42 : vector<8x16xf32> to vector<8x16xbf16>
    %c0_31 = arith.constant 0 : index
    %c0_32 = arith.constant 0 : index
    %c0_33 = arith.constant 0 : index
    %44 = vector.load %arg8[%c0_31, %c0_32, %c0_33] : memref<4x16x64xbf16, #tpu.memory_space<vmem>>, vector<1x16x64xbf16>
    %45 = vector.shape_cast %44 : vector<1x16x64xbf16> to vector<16x64xbf16>
    %cst_34 = arith.constant dense<0.000000e+00> : vector<8x64xf32>
    %46 = tpu.matmul %43, %45, %cst_34 {dimension_numbers = #tpu.dot_dimension_numbers<[1], [0], [0], [1], [0, 0, 1, 1], [], []>} : vector<8x16xbf16>, vector<16x64xbf16>, vector<8x64xf32> -> vector<8x64xf32>
    %47 = arith.addf %4, %46 : vector<8x64xf32>
    %c1 = arith.constant 1 : index
    %c0_35 = arith.constant 0 : index
    %c0_36 = arith.constant 0 : index
    %48 = vector.load %arg2[%c1, %c0_35, %c0_36] : memref<4x64x16xbf16, #tpu.memory_space<vmem>>, vector<1x64x16xbf16>
    %49 = vector.shape_cast %48 : vector<1x64x16xbf16> to vector<64x16xbf16>
    %cst_37 = arith.constant dense<0.000000e+00> : vector<8x16xf32>
    %50 = tpu.matmul %1, %49, %cst_37 {dimension_numbers = #tpu.dot_dimension_numbers<[1], [0], [0], [1], [0, 0, 1, 1], [], []>} : vector<8x64xbf16>, vector<64x16xbf16>, vector<8x16xf32> -> vector<8x16xf32>
    %c1_38 = arith.constant 1 : index
    %c0_39 = arith.constant 0 : index
    %c0_40 = arith.constant 0 : index
    %51 = vector.load %arg3[%c1_38, %c0_39, %c0_40] : memref<4x1x16xf32, #tpu.memory_space<vmem>>, vector<1x1x16xf32>
    %52 = vector.shape_cast %51 : vector<1x1x16xf32> to vector<1x16xf32>
    %53 = vector.broadcast %52 : vector<1x16xf32> to vector<8x16xf32>
    %54 = arith.addf %50, %53 : vector<8x16xf32>
    %c1_41 = arith.constant 1 : index
    %c0_42 = arith.constant 0 : index
    %c0_43 = arith.constant 0 : index
    %55 = vector.load %arg4[%c1_41, %c0_42, %c0_43] : memref<4x64x16xbf16, #tpu.memory_space<vmem>>, vector<1x64x16xbf16>
    %56 = vector.shape_cast %55 : vector<1x64x16xbf16> to vector<64x16xbf16>
    %cst_44 = arith.constant dense<0.000000e+00> : vector<8x16xf32>
    %57 = tpu.matmul %3, %56, %cst_44 {dimension_numbers = #tpu.dot_dimension_numbers<[1], [0], [0], [1], [0, 0, 1, 1], [], []>} : vector<8x64xbf16>, vector<64x16xbf16>, vector<8x16xf32> -> vector<8x16xf32>
    %c1_45 = arith.constant 1 : index
    %c0_46 = arith.constant 0 : index
    %c0_47 = arith.constant 0 : index
    %58 = vector.load %arg5[%c1_45, %c0_46, %c0_47] : memref<4x1x16xf32, #tpu.memory_space<vmem>>, vector<1x1x16xf32>
    %59 = vector.shape_cast %58 : vector<1x1x16xf32> to vector<1x16xf32>
    %60 = vector.broadcast %59 : vector<1x16xf32> to vector<8x16xf32>
    %61 = arith.addf %57, %60 : vector<8x16xf32>
    %c1_48 = arith.constant 1 : index
    %c0_49 = arith.constant 0 : index
    %c0_50 = arith.constant 0 : index
    %62 = vector.load %arg6[%c1_48, %c0_49, %c0_50] : memref<4x64x16xbf16, #tpu.memory_space<vmem>>, vector<1x64x16xbf16>
    %63 = vector.shape_cast %62 : vector<1x64x16xbf16> to vector<64x16xbf16>
    %cst_51 = arith.constant dense<0.000000e+00> : vector<8x16xf32>
    %64 = tpu.matmul %3, %63, %cst_51 {dimension_numbers = #tpu.dot_dimension_numbers<[1], [0], [0], [1], [0, 0, 1, 1], [], []>} : vector<8x64xbf16>, vector<64x16xbf16>, vector<8x16xf32> -> vector<8x16xf32>
    %c1_52 = arith.constant 1 : index
    %c0_53 = arith.constant 0 : index
    %c0_54 = arith.constant 0 : index
    %65 = vector.load %arg7[%c1_52, %c0_53, %c0_54] : memref<4x1x16xf32, #tpu.memory_space<vmem>>, vector<1x1x16xf32>
    %66 = vector.shape_cast %65 : vector<1x1x16xf32> to vector<1x16xf32>
    %67 = vector.broadcast %66 : vector<1x16xf32> to vector<8x16xf32>
    %68 = arith.addf %64, %67 : vector<8x16xf32>
    %69 = arith.truncf %54 : vector<8x16xf32> to vector<8x16xbf16>
    %70 = arith.truncf %61 : vector<8x16xf32> to vector<8x16xbf16>
    %cst_55 = arith.constant dense<0.000000e+00> : vector<8x8xf32>
    %71 = tpu.matmul %69, %70, %cst_55 {dimension_numbers = #tpu.dot_dimension_numbers<[1], [1], [0], [0], [0, 0, 1, 0], [], []>} : vector<8x16xbf16>, vector<8x16xbf16>, vector<8x8xf32> -> vector<8x8xf32>
    %cst_56 = arith.constant 2.500000e-01 : f32
    %72 = vector.broadcast %cst_56 : f32 to vector<8x8xf32>
    %73 = arith.mulf %71, %72 : vector<8x8xf32>
    %cst_57 = arith.constant dense<0xFF800000> : vector<8xf32>
    %74 = vector.multi_reduction <maximumf>, %73, %cst_57 [1] : vector<8x8xf32> to vector<8xf32>
    %75 = vector.shape_cast %74 : vector<8xf32> to vector<8x1xf32>
    %76 = vector.broadcast %75 : vector<8x1xf32> to vector<8x8xf32>
    %77 = arith.subf %73, %76 : vector<8x8xf32>
    %78 = math.exp %77 : vector<8x8xf32>
    %cst_58 = arith.constant dense<0.000000e+00> : vector<8xf32>
    %79 = vector.multi_reduction <add>, %78, %cst_58 [1] : vector<8x8xf32> to vector<8xf32>
    %80 = vector.shape_cast %79 : vector<8xf32> to vector<8x1xf32>
    %81 = vector.broadcast %80 : vector<8x1xf32> to vector<8x8xf32>
    %82 = arith.divf %78, %81 : vector<8x8xf32>
    %83 = arith.truncf %82 : vector<8x8xf32> to vector<8x8xbf16>
    %84 = arith.truncf %68 : vector<8x16xf32> to vector<8x16xbf16>
    %cst_59 = arith.constant dense<0.000000e+00> : vector<8x16xf32>
    %85 = tpu.matmul %83, %84, %cst_59 {dimension_numbers = #tpu.dot_dimension_numbers<[1], [0], [0], [1], [0, 0, 1, 1], [], []>} : vector<8x8xbf16>, vector<8x16xbf16>, vector<8x16xf32> -> vector<8x16xf32>
    %86 = arith.truncf %85 : vector<8x16xf32> to vector<8x16xbf16>
    %c1_60 = arith.constant 1 : index
    %c0_61 = arith.constant 0 : index
    %c0_62 = arith.constant 0 : index
    %87 = vector.load %arg8[%c1_60, %c0_61, %c0_62] : memref<4x16x64xbf16, #tpu.memory_space<vmem>>, vector<1x16x64xbf16>
    %88 = vector.shape_cast %87 : vector<1x16x64xbf16> to vector<16x64xbf16>
    %cst_63 = arith.constant dense<0.000000e+00> : vector<8x64xf32>
    %89 = tpu.matmul %86, %88, %cst_63 {dimension_numbers = #tpu.dot_dimension_numbers<[1], [0], [0], [1], [0, 0, 1, 1], [], []>} : vector<8x16xbf16>, vector<16x64xbf16>, vector<8x64xf32> -> vector<8x64xf32>
    %90 = arith.addf %47, %89 : vector<8x64xf32>
    %c2 = arith.constant 2 : index
    %c0_64 = arith.constant 0 : index
    %c0_65 = arith.constant 0 : index
    %91 = vector.load %arg2[%c2, %c0_64, %c0_65] : memref<4x64x16xbf16, #tpu.memory_space<vmem>>, vector<1x64x16xbf16>
    %92 = vector.shape_cast %91 : vector<1x64x16xbf16> to vector<64x16xbf16>
    %cst_66 = arith.constant dense<0.000000e+00> : vector<8x16xf32>
    %93 = tpu.matmul %1, %92, %cst_66 {dimension_numbers = #tpu.dot_dimension_numbers<[1], [0], [0], [1], [0, 0, 1, 1], [], []>} : vector<8x64xbf16>, vector<64x16xbf16>, vector<8x16xf32> -> vector<8x16xf32>
    %c2_67 = arith.constant 2 : index
    %c0_68 = arith.constant 0 : index
    %c0_69 = arith.constant 0 : index
    %94 = vector.load %arg3[%c2_67, %c0_68, %c0_69] : memref<4x1x16xf32, #tpu.memory_space<vmem>>, vector<1x1x16xf32>
    %95 = vector.shape_cast %94 : vector<1x1x16xf32> to vector<1x16xf32>
    %96 = vector.broadcast %95 : vector<1x16xf32> to vector<8x16xf32>
    %97 = arith.addf %93, %96 : vector<8x16xf32>
    %c2_70 = arith.constant 2 : index
    %c0_71 = arith.constant 0 : index
    %c0_72 = arith.constant 0 : index
    %98 = vector.load %arg4[%c2_70, %c0_71, %c0_72] : memref<4x64x16xbf16, #tpu.memory_space<vmem>>, vector<1x64x16xbf16>
    %99 = vector.shape_cast %98 : vector<1x64x16xbf16> to vector<64x16xbf16>
    %cst_73 = arith.constant dense<0.000000e+00> : vector<8x16xf32>
    %100 = tpu.matmul %3, %99, %cst_73 {dimension_numbers = #tpu.dot_dimension_numbers<[1], [0], [0], [1], [0, 0, 1, 1], [], []>} : vector<8x64xbf16>, vector<64x16xbf16>, vector<8x16xf32> -> vector<8x16xf32>
    %c2_74 = arith.constant 2 : index
    %c0_75 = arith.constant 0 : index
    %c0_76 = arith.constant 0 : index
    %101 = vector.load %arg5[%c2_74, %c0_75, %c0_76] : memref<4x1x16xf32, #tpu.memory_space<vmem>>, vector<1x1x16xf32>
    %102 = vector.shape_cast %101 : vector<1x1x16xf32> to vector<1x16xf32>
    %103 = vector.broadcast %102 : vector<1x16xf32> to vector<8x16xf32>
    %104 = arith.addf %100, %103 : vector<8x16xf32>
    %c2_77 = arith.constant 2 : index
    %c0_78 = arith.constant 0 : index
    %c0_79 = arith.constant 0 : index
    %105 = vector.load %arg6[%c2_77, %c0_78, %c0_79] : memref<4x64x16xbf16, #tpu.memory_space<vmem>>, vector<1x64x16xbf16>
    %106 = vector.shape_cast %105 : vector<1x64x16xbf16> to vector<64x16xbf16>
    %cst_80 = arith.constant dense<0.000000e+00> : vector<8x16xf32>
    %107 = tpu.matmul %3, %106, %cst_80 {dimension_numbers = #tpu.dot_dimension_numbers<[1], [0], [0], [1], [0, 0, 1, 1], [], []>} : vector<8x64xbf16>, vector<64x16xbf16>, vector<8x16xf32> -> vector<8x16xf32>
    %c2_81 = arith.constant 2 : index
    %c0_82 = arith.constant 0 : index
    %c0_83 = arith.constant 0 : index
    %108 = vector.load %arg7[%c2_81, %c0_82, %c0_83] : memref<4x1x16xf32, #tpu.memory_space<vmem>>, vector<1x1x16xf32>
    %109 = vector.shape_cast %108 : vector<1x1x16xf32> to vector<1x16xf32>
    %110 = vector.broadcast %109 : vector<1x16xf32> to vector<8x16xf32>
    %111 = arith.addf %107, %110 : vector<8x16xf32>
    %112 = arith.truncf %97 : vector<8x16xf32> to vector<8x16xbf16>
    %113 = arith.truncf %104 : vector<8x16xf32> to vector<8x16xbf16>
    %cst_84 = arith.constant dense<0.000000e+00> : vector<8x8xf32>
    %114 = tpu.matmul %112, %113, %cst_84 {dimension_numbers = #tpu.dot_dimension_numbers<[1], [1], [0], [0], [0, 0, 1, 0], [], []>} : vector<8x16xbf16>, vector<8x16xbf16>, vector<8x8xf32> -> vector<8x8xf32>
    %cst_85 = arith.constant 2.500000e-01 : f32
    %115 = vector.broadcast %cst_85 : f32 to vector<8x8xf32>
    %116 = arith.mulf %114, %115 : vector<8x8xf32>
    %cst_86 = arith.constant dense<0xFF800000> : vector<8xf32>
    %117 = vector.multi_reduction <maximumf>, %116, %cst_86 [1] : vector<8x8xf32> to vector<8xf32>
    %118 = vector.shape_cast %117 : vector<8xf32> to vector<8x1xf32>
    %119 = vector.broadcast %118 : vector<8x1xf32> to vector<8x8xf32>
    %120 = arith.subf %116, %119 : vector<8x8xf32>
    %121 = math.exp %120 : vector<8x8xf32>
    %cst_87 = arith.constant dense<0.000000e+00> : vector<8xf32>
    %122 = vector.multi_reduction <add>, %121, %cst_87 [1] : vector<8x8xf32> to vector<8xf32>
    %123 = vector.shape_cast %122 : vector<8xf32> to vector<8x1xf32>
    %124 = vector.broadcast %123 : vector<8x1xf32> to vector<8x8xf32>
    %125 = arith.divf %121, %124 : vector<8x8xf32>
    %126 = arith.truncf %125 : vector<8x8xf32> to vector<8x8xbf16>
    %127 = arith.truncf %111 : vector<8x16xf32> to vector<8x16xbf16>
    %cst_88 = arith.constant dense<0.000000e+00> : vector<8x16xf32>
    %128 = tpu.matmul %126, %127, %cst_88 {dimension_numbers = #tpu.dot_dimension_numbers<[1], [0], [0], [1], [0, 0, 1, 1], [], []>} : vector<8x8xbf16>, vector<8x16xbf16>, vector<8x16xf32> -> vector<8x16xf32>
    %129 = arith.truncf %128 : vector<8x16xf32> to vector<8x16xbf16>
    %c2_89 = arith.constant 2 : index
    %c0_90 = arith.constant 0 : index
    %c0_91 = arith.constant 0 : index
    %130 = vector.load %arg8[%c2_89, %c0_90, %c0_91] : memref<4x16x64xbf16, #tpu.memory_space<vmem>>, vector<1x16x64xbf16>
    %131 = vector.shape_cast %130 : vector<1x16x64xbf16> to vector<16x64xbf16>
    %cst_92 = arith.constant dense<0.000000e+00> : vector<8x64xf32>
    %132 = tpu.matmul %129, %131, %cst_92 {dimension_numbers = #tpu.dot_dimension_numbers<[1], [0], [0], [1], [0, 0, 1, 1], [], []>} : vector<8x16xbf16>, vector<16x64xbf16>, vector<8x64xf32> -> vector<8x64xf32>
    %133 = arith.addf %90, %132 : vector<8x64xf32>
    %c3 = arith.constant 3 : index
    %c0_93 = arith.constant 0 : index
    %c0_94 = arith.constant 0 : index
    %134 = vector.load %arg2[%c3, %c0_93, %c0_94] : memref<4x64x16xbf16, #tpu.memory_space<vmem>>, vector<1x64x16xbf16>
    %135 = vector.shape_cast %134 : vector<1x64x16xbf16> to vector<64x16xbf16>
    %cst_95 = arith.constant dense<0.000000e+00> : vector<8x16xf32>
    %136 = tpu.matmul %1, %135, %cst_95 {dimension_numbers = #tpu.dot_dimension_numbers<[1], [0], [0], [1], [0, 0, 1, 1], [], []>} : vector<8x64xbf16>, vector<64x16xbf16>, vector<8x16xf32> -> vector<8x16xf32>
    %c3_96 = arith.constant 3 : index
    %c0_97 = arith.constant 0 : index
    %c0_98 = arith.constant 0 : index
    %137 = vector.load %arg3[%c3_96, %c0_97, %c0_98] : memref<4x1x16xf32, #tpu.memory_space<vmem>>, vector<1x1x16xf32>
    %138 = vector.shape_cast %137 : vector<1x1x16xf32> to vector<1x16xf32>
    %139 = vector.broadcast %138 : vector<1x16xf32> to vector<8x16xf32>
    %140 = arith.addf %136, %139 : vector<8x16xf32>
    %c3_99 = arith.constant 3 : index
    %c0_100 = arith.constant 0 : index
    %c0_101 = arith.constant 0 : index
    %141 = vector.load %arg4[%c3_99, %c0_100, %c0_101] : memref<4x64x16xbf16, #tpu.memory_space<vmem>>, vector<1x64x16xbf16>
    %142 = vector.shape_cast %141 : vector<1x64x16xbf16> to vector<64x16xbf16>
    %cst_102 = arith.constant dense<0.000000e+00> : vector<8x16xf32>
    %143 = tpu.matmul %3, %142, %cst_102 {dimension_numbers = #tpu.dot_dimension_numbers<[1], [0], [0], [1], [0, 0, 1, 1], [], []>} : vector<8x64xbf16>, vector<64x16xbf16>, vector<8x16xf32> -> vector<8x16xf32>
    %c3_103 = arith.constant 3 : index
    %c0_104 = arith.constant 0 : index
    %c0_105 = arith.constant 0 : index
    %144 = vector.load %arg5[%c3_103, %c0_104, %c0_105] : memref<4x1x16xf32, #tpu.memory_space<vmem>>, vector<1x1x16xf32>
    %145 = vector.shape_cast %144 : vector<1x1x16xf32> to vector<1x16xf32>
    %146 = vector.broadcast %145 : vector<1x16xf32> to vector<8x16xf32>
    %147 = arith.addf %143, %146 : vector<8x16xf32>
    %c3_106 = arith.constant 3 : index
    %c0_107 = arith.constant 0 : index
    %c0_108 = arith.constant 0 : index
    %148 = vector.load %arg6[%c3_106, %c0_107, %c0_108] : memref<4x64x16xbf16, #tpu.memory_space<vmem>>, vector<1x64x16xbf16>
    %149 = vector.shape_cast %148 : vector<1x64x16xbf16> to vector<64x16xbf16>
    %cst_109 = arith.constant dense<0.000000e+00> : vector<8x16xf32>
    %150 = tpu.matmul %3, %149, %cst_109 {dimension_numbers = #tpu.dot_dimension_numbers<[1], [0], [0], [1], [0, 0, 1, 1], [], []>} : vector<8x64xbf16>, vector<64x16xbf16>, vector<8x16xf32> -> vector<8x16xf32>
    %c3_110 = arith.constant 3 : index
    %c0_111 = arith.constant 0 : index
    %c0_112 = arith.constant 0 : index
    %151 = vector.load %arg7[%c3_110, %c0_111, %c0_112] : memref<4x1x16xf32, #tpu.memory_space<vmem>>, vector<1x1x16xf32>
    %152 = vector.shape_cast %151 : vector<1x1x16xf32> to vector<1x16xf32>
    %153 = vector.broadcast %152 : vector<1x16xf32> to vector<8x16xf32>
    %154 = arith.addf %150, %153 : vector<8x16xf32>
    %155 = arith.truncf %140 : vector<8x16xf32> to vector<8x16xbf16>
    %156 = arith.truncf %147 : vector<8x16xf32> to vector<8x16xbf16>
    %cst_113 = arith.constant dense<0.000000e+00> : vector<8x8xf32>
    %157 = tpu.matmul %155, %156, %cst_113 {dimension_numbers = #tpu.dot_dimension_numbers<[1], [1], [0], [0], [0, 0, 1, 0], [], []>} : vector<8x16xbf16>, vector<8x16xbf16>, vector<8x8xf32> -> vector<8x8xf32>
    %cst_114 = arith.constant 2.500000e-01 : f32
    %158 = vector.broadcast %cst_114 : f32 to vector<8x8xf32>
    %159 = arith.mulf %157, %158 : vector<8x8xf32>
    %cst_115 = arith.constant dense<0xFF800000> : vector<8xf32>
    %160 = vector.multi_reduction <maximumf>, %159, %cst_115 [1] : vector<8x8xf32> to vector<8xf32>
    %161 = vector.shape_cast %160 : vector<8xf32> to vector<8x1xf32>
    %162 = vector.broadcast %161 : vector<8x1xf32> to vector<8x8xf32>
    %163 = arith.subf %159, %162 : vector<8x8xf32>
    %164 = math.exp %163 : vector<8x8xf32>
    %cst_116 = arith.constant dense<0.000000e+00> : vector<8xf32>
    %165 = vector.multi_reduction <add>, %164, %cst_116 [1] : vector<8x8xf32> to vector<8xf32>
    %166 = vector.shape_cast %165 : vector<8xf32> to vector<8x1xf32>
    %167 = vector.broadcast %166 : vector<8x1xf32> to vector<8x8xf32>
    %168 = arith.divf %164, %167 : vector<8x8xf32>
    %169 = arith.truncf %168 : vector<8x8xf32> to vector<8x8xbf16>
    %170 = arith.truncf %154 : vector<8x16xf32> to vector<8x16xbf16>
    %cst_117 = arith.constant dense<0.000000e+00> : vector<8x16xf32>
    %171 = tpu.matmul %169, %170, %cst_117 {dimension_numbers = #tpu.dot_dimension_numbers<[1], [0], [0], [1], [0, 0, 1, 1], [], []>} : vector<8x8xbf16>, vector<8x16xbf16>, vector<8x16xf32> -> vector<8x16xf32>
    %172 = arith.truncf %171 : vector<8x16xf32> to vector<8x16xbf16>
    %c3_118 = arith.constant 3 : index
    %c0_119 = arith.constant 0 : index
    %c0_120 = arith.constant 0 : index
    %173 = vector.load %arg8[%c3_118, %c0_119, %c0_120] : memref<4x16x64xbf16, #tpu.memory_space<vmem>>, vector<1x16x64xbf16>
    %174 = vector.shape_cast %173 : vector<1x16x64xbf16> to vector<16x64xbf16>
    %cst_121 = arith.constant dense<0.000000e+00> : vector<8x64xf32>
    %175 = tpu.matmul %172, %174, %cst_121 {dimension_numbers = #tpu.dot_dimension_numbers<[1], [0], [0], [1], [0, 0, 1, 1], [], []>} : vector<8x16xbf16>, vector<16x64xbf16>, vector<8x64xf32> -> vector<8x64xf32>
    %176 = arith.addf %133, %175 : vector<8x64xf32>
    %c0_122 = arith.constant 0 : index
    %c0_123 = arith.constant 0 : index
    %177 = vector.load %arg9[%c0_122, %c0_123] : memref<1x64xf32, #tpu.memory_space<vmem>>, vector<1x64xf32>
    %178 = vector.broadcast %177 : vector<1x64xf32> to vector<8x64xf32>
    %179 = arith.addf %176, %178 : vector<8x64xf32>
    %180 = arith.extf %1 : vector<8x64xbf16> to vector<8x64xf32>
    %181 = arith.addf %179, %180 : vector<8x64xf32>
    %c0_124 = arith.constant 0 : index
    %c0_125 = arith.constant 0 : index
    %182 = vector.load %arg10[%c0_124, %c0_125] : memref<1x64xf32, #tpu.memory_space<vmem>>, vector<1x64xf32>
    %c0_126 = arith.constant 0 : index
    %c0_127 = arith.constant 0 : index
    %183 = vector.load %arg11[%c0_126, %c0_127] : memref<1x64xf32, #tpu.memory_space<vmem>>, vector<1x64xf32>
    %cst_128 = arith.constant dense<0.000000e+00> : vector<8xf32>
    %184 = vector.multi_reduction <add>, %181, %cst_128 [1] : vector<8x64xf32> to vector<8xf32>
    %185 = vector.shape_cast %184 : vector<8xf32> to vector<8x1xf32>
    %cst_129 = arith.constant 6.400000e+01 : f32
    %186 = vector.broadcast %cst_129 : f32 to vector<8x1xf32>
    %187 = arith.divf %185, %186 : vector<8x1xf32>
    %188 = vector.broadcast %187 : vector<8x1xf32> to vector<8x64xf32>
    %189 = arith.subf %181, %188 : vector<8x64xf32>
    %190 = arith.mulf %189, %189 : vector<8x64xf32>
    %cst_130 = arith.constant dense<0.000000e+00> : vector<8xf32>
    %191 = vector.multi_reduction <add>, %190, %cst_130 [1] : vector<8x64xf32> to vector<8xf32>
    %192 = vector.shape_cast %191 : vector<8xf32> to vector<8x1xf32>
    %cst_131 = arith.constant 6.400000e+01 : f32
    %193 = vector.broadcast %cst_131 : f32 to vector<8x1xf32>
    %194 = arith.divf %192, %193 : vector<8x1xf32>
    %195 = vector.broadcast %187 : vector<8x1xf32> to vector<8x64xf32>
    %196 = arith.subf %181, %195 : vector<8x64xf32>
    %cst_132 = arith.constant 9.99999974E-6 : f32
    %197 = vector.broadcast %cst_132 : f32 to vector<8x1xf32>
    %198 = arith.addf %194, %197 : vector<8x1xf32>
    %199 = math.rsqrt %198 : vector<8x1xf32>
    %200 = vector.broadcast %199 : vector<8x1xf32> to vector<8x64xf32>
    %201 = arith.mulf %196, %200 : vector<8x64xf32>
    %202 = vector.broadcast %182 : vector<1x64xf32> to vector<8x64xf32>
    %203 = arith.mulf %201, %202 : vector<8x64xf32>
    %204 = vector.broadcast %183 : vector<1x64xf32> to vector<8x64xf32>
    %205 = arith.addf %203, %204 : vector<8x64xf32>
    %206 = arith.truncf %205 : vector<8x64xf32> to vector<8x64xbf16>
    %c0_133 = arith.constant 0 : index
    %c0_134 = arith.constant 0 : index
    %c0_135 = arith.constant 0 : index
    %207 = vector.load %arg12[%c0_133, %c0_134, %c0_135] : memref<1x8x64xbf16, #tpu.memory_space<vmem>>, vector<1x8x64xbf16>
    %208 = vector.shape_cast %207 : vector<1x8x64xbf16> to vector<8x64xbf16>
    %209 = vector.shape_cast %206 : vector<8x64xbf16> to vector<1x8x64xbf16>
    tpu.vector_store %arg12[%c0_133, %c0_134, %c0_135], %209 {strides = array<i32>} : memref<1x8x64xbf16, #tpu.memory_space<vmem>>, vector<1x8x64xbf16>,
    return
  }
  func.func @transform_0(%arg0: i32) -> (i32, i32, i32) {
    %c0_i32 = arith.constant 0 : i32
    %c0_i32_0 = arith.constant 0 : i32
    %c0_i32_1 = arith.constant 0 : i32
    return %arg0, %c0_i32, %c0_i32_0 : i32, i32, i32
  }
  func.func @transform_1(%arg0: i32) -> (i32, i32, i32) {
    %c0_i32 = arith.constant 0 : i32
    %c0_i32_0 = arith.constant 0 : i32
    %c0_i32_1 = arith.constant 0 : i32
    %c0_i32_2 = arith.constant 0 : i32
    return %c0_i32, %c0_i32_0, %c0_i32_1 : i32, i32, i32
  }
  func.func @transform_2(%arg0: i32) -> (i32, i32, i32) {
    %c0_i32 = arith.constant 0 : i32
    %c0_i32_0 = arith.constant 0 : i32
    %c0_i32_1 = arith.constant 0 : i32
    %c0_i32_2 = arith.constant 0 : i32
    return %c0_i32, %c0_i32_0, %c0_i32_1 : i32, i32, i32
  }
  func.func @transform_3(%arg0: i32) -> (i32, i32, i32) {
    %c0_i32 = arith.constant 0 : i32
    %c0_i32_0 = arith.constant 0 : i32
    %c0_i32_1 = arith.constant 0 : i32
    %c0_i32_2 = arith.constant 0 : i32
    return %c0_i32, %c0_i32_0, %c0_i32_1 : i32, i32, i32
  }
  func.func @transform_4(%arg0: i32) -> (i32, i32, i32) {
    %c0_i32 = arith.constant 0 : i32
    %c0_i32_0 = arith.constant 0 : i32
    %c0_i32_1 = arith.constant 0 : i32
    %c0_i32_2 = arith.constant 0 : i32
    return %c0_i32, %c0_i32_0, %c0_i32_1 : i32, i32, i32
  }
  func.func @transform_5(%arg0: i32) -> (i32, i32, i32) {
    %c0_i32 = arith.constant 0 : i32
    %c0_i32_0 = arith.constant 0 : i32
    %c0_i32_1 = arith.constant 0 : i32
    %c0_i32_2 = arith.constant 0 : i32
    return %c0_i32, %c0_i32_0, %c0_i32_1 : i32, i32, i32
  }
  func.func @transform_6(%arg0: i32) -> (i32, i32, i32) {
    %c0_i32 = arith.constant 0 : i32
    %c0_i32_0 = arith.constant 0 : i32
    %c0_i32_1 = arith.constant 0 : i32
    %c0_i32_2 = arith.constant 0 : i32
    return %c0_i32, %c0_i32_0, %c0_i32_1 : i32, i32, i32
  }
  func.func @transform_7(%arg0: i32) -> (i32, i32, i32) {
    %c0_i32 = arith.constant 0 : i32
    %c0_i32_0 = arith.constant 0 : i32
    %c0_i32_1 = arith.constant 0 : i32
    %c0_i32_2 = arith.constant 0 : i32
    return %c0_i32, %c0_i32_0, %c0_i32_1 : i32, i32, i32
  }
  func.func @transform_8(%arg0: i32) -> (i32, i32) {
    %c0_i32 = arith.constant 0 : i32
    %c0_i32_0 = arith.constant 0 : i32
    %c0_i32_1 = arith.constant 0 : i32
    return %c0_i32, %c0_i32_0 : i32, i32
  }
  func.func @transform_9(%arg0: i32) -> (i32, i32) {
    %c0_i32 = arith.constant 0 : i32
    %c0_i32_0 = arith.constant 0 : i32
    %c0_i32_1 = arith.constant 0 : i32
    return %c0_i32, %c0_i32_0 : i32, i32
  }
  func.func @transform_10(%arg0: i32) -> (i32, i32) {
    %c0_i32 = arith.constant 0 : i32
    %c0_i32_0 = arith.constant 0 : i32
    %c0_i32_1 = arith.constant 0 : i32
    return %c0_i32, %c0_i32_0 : i32, i32
  }
  func.func @transform_11(%arg0: i32) -> (i32, i32, i32) {
    %c0_i32 = arith.constant 0 : i32
    %c0_i32_0 = arith.constant 0 : i32
    %c0_i32_1 = arith.constant 0 : i32
    return %arg0, %c0_i32, %c0_i32_0 : i32, i32, i32
  }
}

module attributes {stable_mosaic.version = 11 : i64} {
  func.func @_ffn_ln_kernel(%arg0: i32, %arg1: memref<1x8x64xbf16, #tpu.memory_space<vmem>>, %arg2: memref<64x128xbf16, #tpu.memory_space<vmem>>, %arg3: memref<1x128xf32, #tpu.memory_space<vmem>>, %arg4: memref<128x64xbf16, #tpu.memory_space<vmem>>, %arg5: memref<1x64xf32, #tpu.memory_space<vmem>>, %arg6: memref<1x64xf32, #tpu.memory_space<vmem>>, %arg7: memref<1x64xf32, #tpu.memory_space<vmem>>, %arg8: memref<1x8x64xbf16, #tpu.memory_space<vmem>>) attributes {dimension_semantics = [#tpu.dimension_semantics<parallel>], iteration_bounds = array<i64: 2>, scalar_prefetch = 0 : i64, scratch_operands = 0 : i64, tpu.core_type = #tpu.core_type<tc>, window_params = [{transform_indices = @transform_0, window_bounds = array<i64: 1, 8, 64>}, {pipeline_mode = #tpu.pipeline_mode<synchronous>, transform_indices = @transform_1, window_bounds = array<i64: 64, 128>}, {pipeline_mode = #tpu.pipeline_mode<synchronous>, transform_indices = @transform_2, window_bounds = array<i64: 1, 128>}, {pipeline_mode = #tpu.pipeline_mode<synchronous>, transform_indices = @transform_3, window_bounds = array<i64: 128, 64>}, {pipeline_mode = #tpu.pipeline_mode<synchronous>, transform_indices = @transform_4, window_bounds = array<i64: 1, 64>}, {pipeline_mode = #tpu.pipeline_mode<synchronous>, transform_indices = @transform_5, window_bounds = array<i64: 1, 64>}, {pipeline_mode = #tpu.pipeline_mode<synchronous>, transform_indices = @transform_6, window_bounds = array<i64: 1, 64>}, {transform_indices = @transform_7, window_bounds = array<i64: 1, 8, 64>}]} {
    %c0 = arith.constant 0 : index
    %c0_0 = arith.constant 0 : index
    %c0_1 = arith.constant 0 : index
    %0 = vector.load %arg1[%c0, %c0_0, %c0_1] : memref<1x8x64xbf16, #tpu.memory_space<vmem>>, vector<1x8x64xbf16>
    %1 = vector.shape_cast %0 : vector<1x8x64xbf16> to vector<8x64xbf16>
    %c0_2 = arith.constant 0 : index
    %c0_3 = arith.constant 0 : index
    %2 = vector.load %arg2[%c0_2, %c0_3] : memref<64x128xbf16, #tpu.memory_space<vmem>>, vector<64x128xbf16>
    %cst = arith.constant dense<0.000000e+00> : vector<8x128xf32>
    %3 = tpu.matmul %1, %2, %cst {dimension_numbers = #tpu.dot_dimension_numbers<[1], [0], [0], [1], [0, 0, 1, 1], [], []>} : vector<8x64xbf16>, vector<64x128xbf16>, vector<8x128xf32> -> vector<8x128xf32>
    %c0_4 = arith.constant 0 : index
    %c0_5 = arith.constant 0 : index
    %4 = vector.load %arg3[%c0_4, %c0_5] : memref<1x128xf32, #tpu.memory_space<vmem>>, vector<1x128xf32>
    %5 = vector.broadcast %4 : vector<1x128xf32> to vector<8x128xf32>
    %6 = arith.addf %3, %5 : vector<8x128xf32>
    %cst_6 = arith.constant 0.000000e+00 : f32
    %7 = vector.broadcast %cst_6 : f32 to vector<8x128xf32>
    %8 = arith.maximumf %6, %7 : vector<8x128xf32>
    %9 = arith.truncf %8 : vector<8x128xf32> to vector<8x128xbf16>
    %c0_7 = arith.constant 0 : index
    %c0_8 = arith.constant 0 : index
    %10 = vector.load %arg4[%c0_7, %c0_8] : memref<128x64xbf16, #tpu.memory_space<vmem>>, vector<128x64xbf16>
    %cst_9 = arith.constant dense<0.000000e+00> : vector<8x64xf32>
    %11 = tpu.matmul %9, %10, %cst_9 {dimension_numbers = #tpu.dot_dimension_numbers<[1], [0], [0], [1], [0, 0, 1, 1], [], []>} : vector<8x128xbf16>, vector<128x64xbf16>, vector<8x64xf32> -> vector<8x64xf32>
    %c0_10 = arith.constant 0 : index
    %c0_11 = arith.constant 0 : index
    %12 = vector.load %arg5[%c0_10, %c0_11] : memref<1x64xf32, #tpu.memory_space<vmem>>, vector<1x64xf32>
    %13 = vector.broadcast %12 : vector<1x64xf32> to vector<8x64xf32>
    %14 = arith.addf %11, %13 : vector<8x64xf32>
    %15 = arith.extf %1 : vector<8x64xbf16> to vector<8x64xf32>
    %16 = arith.addf %14, %15 : vector<8x64xf32>
    %c0_12 = arith.constant 0 : index
    %c0_13 = arith.constant 0 : index
    %17 = vector.load %arg6[%c0_12, %c0_13] : memref<1x64xf32, #tpu.memory_space<vmem>>, vector<1x64xf32>
    %c0_14 = arith.constant 0 : index
    %c0_15 = arith.constant 0 : index
    %18 = vector.load %arg7[%c0_14, %c0_15] : memref<1x64xf32, #tpu.memory_space<vmem>>, vector<1x64xf32>
    %cst_16 = arith.constant dense<0.000000e+00> : vector<8xf32>
    %19 = vector.multi_reduction <add>, %16, %cst_16 [1] : vector<8x64xf32> to vector<8xf32>
    %20 = vector.shape_cast %19 : vector<8xf32> to vector<8x1xf32>
    %cst_17 = arith.constant 6.400000e+01 : f32
    %21 = vector.broadcast %cst_17 : f32 to vector<8x1xf32>
    %22 = arith.divf %20, %21 : vector<8x1xf32>
    %23 = vector.broadcast %22 : vector<8x1xf32> to vector<8x64xf32>
    %24 = arith.subf %16, %23 : vector<8x64xf32>
    %25 = arith.mulf %24, %24 : vector<8x64xf32>
    %cst_18 = arith.constant dense<0.000000e+00> : vector<8xf32>
    %26 = vector.multi_reduction <add>, %25, %cst_18 [1] : vector<8x64xf32> to vector<8xf32>
    %27 = vector.shape_cast %26 : vector<8xf32> to vector<8x1xf32>
    %cst_19 = arith.constant 6.400000e+01 : f32
    %28 = vector.broadcast %cst_19 : f32 to vector<8x1xf32>
    %29 = arith.divf %27, %28 : vector<8x1xf32>
    %30 = vector.broadcast %22 : vector<8x1xf32> to vector<8x64xf32>
    %31 = arith.subf %16, %30 : vector<8x64xf32>
    %cst_20 = arith.constant 9.99999974E-6 : f32
    %32 = vector.broadcast %cst_20 : f32 to vector<8x1xf32>
    %33 = arith.addf %29, %32 : vector<8x1xf32>
    %34 = math.rsqrt %33 : vector<8x1xf32>
    %35 = vector.broadcast %34 : vector<8x1xf32> to vector<8x64xf32>
    %36 = arith.mulf %31, %35 : vector<8x64xf32>
    %37 = vector.broadcast %17 : vector<1x64xf32> to vector<8x64xf32>
    %38 = arith.mulf %36, %37 : vector<8x64xf32>
    %39 = vector.broadcast %18 : vector<1x64xf32> to vector<8x64xf32>
    %40 = arith.addf %38, %39 : vector<8x64xf32>
    %41 = arith.truncf %40 : vector<8x64xf32> to vector<8x64xbf16>
    %c0_21 = arith.constant 0 : index
    %c0_22 = arith.constant 0 : index
    %c0_23 = arith.constant 0 : index
    %42 = vector.load %arg8[%c0_21, %c0_22, %c0_23] : memref<1x8x64xbf16, #tpu.memory_space<vmem>>, vector<1x8x64xbf16>
    %43 = vector.shape_cast %42 : vector<1x8x64xbf16> to vector<8x64xbf16>
    %44 = vector.shape_cast %41 : vector<8x64xbf16> to vector<1x8x64xbf16>
    tpu.vector_store %arg8[%c0_21, %c0_22, %c0_23], %44 {strides = array<i32>} : memref<1x8x64xbf16, #tpu.memory_space<vmem>>, vector<1x8x64xbf16>,
    return
  }
  func.func @transform_0(%arg0: i32) -> (i32, i32, i32) {
    %c0_i32 = arith.constant 0 : i32
    %c0_i32_0 = arith.constant 0 : i32
    %c0_i32_1 = arith.constant 0 : i32
    return %arg0, %c0_i32, %c0_i32_0 : i32, i32, i32
  }
  func.func @transform_1(%arg0: i32) -> (i32, i32) {
    %c0_i32 = arith.constant 0 : i32
    %c0_i32_0 = arith.constant 0 : i32
    %c0_i32_1 = arith.constant 0 : i32
    return %c0_i32, %c0_i32_0 : i32, i32
  }
  func.func @transform_2(%arg0: i32) -> (i32, i32) {
    %c0_i32 = arith.constant 0 : i32
    %c0_i32_0 = arith.constant 0 : i32
    %c0_i32_1 = arith.constant 0 : i32
    return %c0_i32, %c0_i32_0 : i32, i32
  }
  func.func @transform_3(%arg0: i32) -> (i32, i32) {
    %c0_i32 = arith.constant 0 : i32
    %c0_i32_0 = arith.constant 0 : i32
    %c0_i32_1 = arith.constant 0 : i32
    return %c0_i32, %c0_i32_0 : i32, i32
  }
  func.func @transform_4(%arg0: i32) -> (i32, i32) {
    %c0_i32 = arith.constant 0 : i32
    %c0_i32_0 = arith.constant 0 : i32
    %c0_i32_1 = arith.constant 0 : i32
    return %c0_i32, %c0_i32_0 : i32, i32
  }
  func.func @transform_5(%arg0: i32) -> (i32, i32) {
    %c0_i32 = arith.constant 0 : i32
    %c0_i32_0 = arith.constant 0 : i32
    %c0_i32_1 = arith.constant 0 : i32
    return %c0_i32, %c0_i32_0 : i32, i32
  }
  func.func @transform_6(%arg0: i32) -> (i32, i32) {
    %c0_i32 = arith.constant 0 : i32
    %c0_i32_0 = arith.constant 0 : i32
    %c0_i32_1 = arith.constant 0 : i32
    return %c0_i32, %c0_i32_0 : i32, i32
  }
  func.func @transform_7(%arg0: i32) -> (i32, i32, i32) {
    %c0_i32 = arith.constant 0 : i32
    %c0_i32_0 = arith.constant 0 : i32
    %c0_i32_1 = arith.constant 0 : i32
    return %arg0, %c0_i32, %c0_i32_0 : i32, i32, i32
  }
}

module attributes {stable_mosaic.version = 11 : i64} {
  func.func @_mha_ln_kernel(%arg0: i32, %arg1: memref<1x16x64xbf16, #tpu.memory_space<vmem>>, %arg2: memref<16x16xf32, #tpu.memory_space<vmem>>, %arg3: memref<4x64x16xbf16, #tpu.memory_space<vmem>>, %arg4: memref<4x1x16xf32, #tpu.memory_space<vmem>>, %arg5: memref<4x64x16xbf16, #tpu.memory_space<vmem>>, %arg6: memref<4x1x16xf32, #tpu.memory_space<vmem>>, %arg7: memref<4x64x16xbf16, #tpu.memory_space<vmem>>, %arg8: memref<4x1x16xf32, #tpu.memory_space<vmem>>, %arg9: memref<4x16x64xbf16, #tpu.memory_space<vmem>>, %arg10: memref<1x64xf32, #tpu.memory_space<vmem>>, %arg11: memref<1x64xf32, #tpu.memory_space<vmem>>, %arg12: memref<1x64xf32, #tpu.memory_space<vmem>>, %arg13: memref<1x16x64xbf16, #tpu.memory_space<vmem>>) attributes {dimension_semantics = [#tpu.dimension_semantics<parallel>], iteration_bounds = array<i64: 2>, scalar_prefetch = 0 : i64, scratch_operands = 0 : i64, tpu.core_type = #tpu.core_type<tc>, window_params = [{transform_indices = @transform_0, window_bounds = array<i64: 1, 16, 64>}, {pipeline_mode = #tpu.pipeline_mode<synchronous>, transform_indices = @transform_1, window_bounds = array<i64: 16, 16>}, {pipeline_mode = #tpu.pipeline_mode<synchronous>, transform_indices = @transform_2, window_bounds = array<i64: 4, 64, 16>}, {pipeline_mode = #tpu.pipeline_mode<synchronous>, transform_indices = @transform_3, window_bounds = array<i64: 4, 1, 16>}, {pipeline_mode = #tpu.pipeline_mode<synchronous>, transform_indices = @transform_4, window_bounds = array<i64: 4, 64, 16>}, {pipeline_mode = #tpu.pipeline_mode<synchronous>, transform_indices = @transform_5, window_bounds = array<i64: 4, 1, 16>}, {pipeline_mode = #tpu.pipeline_mode<synchronous>, transform_indices = @transform_6, window_bounds = array<i64: 4, 64, 16>}, {pipeline_mode = #tpu.pipeline_mode<synchronous>, transform_indices = @transform_7, window_bounds = array<i64: 4, 1, 16>}, {pipeline_mode = #tpu.pipeline_mode<synchronous>, transform_indices = @transform_8, window_bounds = array<i64: 4, 16, 64>}, {pipeline_mode = #tpu.pipeline_mode<synchronous>, transform_indices = @transform_9, window_bounds = array<i64: 1, 64>}, {pipeline_mode = #tpu.pipeline_mode<synchronous>, transform_indices = @transform_10, window_bounds = array<i64: 1, 64>}, {pipeline_mode = #tpu.pipeline_mode<synchronous>, transform_indices = @transform_11, window_bounds = array<i64: 1, 64>}, {transform_indices = @transform_12, window_bounds = array<i64: 1, 16, 64>}]} {
    %c0 = arith.constant 0 : index
    %c0_0 = arith.constant 0 : index
    %c0_1 = arith.constant 0 : index
    %0 = vector.load %arg1[%c0, %c0_0, %c0_1] : memref<1x16x64xbf16, #tpu.memory_space<vmem>>, vector<1x16x64xbf16>
    %1 = vector.shape_cast %0 : vector<1x16x64xbf16> to vector<16x64xbf16>
    %c0_2 = arith.constant 0 : index
    %c0_3 = arith.constant 0 : index
    %c0_4 = arith.constant 0 : index
    %2 = vector.load %arg1[%c0_2, %c0_3, %c0_4] : memref<1x16x64xbf16, #tpu.memory_space<vmem>>, vector<1x16x64xbf16>
    %3 = vector.shape_cast %2 : vector<1x16x64xbf16> to vector<16x64xbf16>
    %c0_5 = arith.constant 0 : index
    %c0_6 = arith.constant 0 : index
    %4 = vector.load %arg2[%c0_5, %c0_6] : memref<16x16xf32, #tpu.memory_space<vmem>>, vector<16x16xf32>
    %cst = arith.constant 0.000000e+00 : f32
    %5 = vector.broadcast %cst : f32 to vector<16x64xf32>
    %c0_7 = arith.constant 0 : index
    %c0_8 = arith.constant 0 : index
    %c0_9 = arith.constant 0 : index
    %6 = vector.load %arg3[%c0_7, %c0_8, %c0_9] : memref<4x64x16xbf16, #tpu.memory_space<vmem>>, vector<1x64x16xbf16>
    %7 = vector.shape_cast %6 : vector<1x64x16xbf16> to vector<64x16xbf16>
    %cst_10 = arith.constant dense<0.000000e+00> : vector<16x16xf32>
    %8 = tpu.matmul %1, %7, %cst_10 {dimension_numbers = #tpu.dot_dimension_numbers<[1], [0], [0], [1], [0, 0, 1, 1], [], []>} : vector<16x64xbf16>, vector<64x16xbf16>, vector<16x16xf32> -> vector<16x16xf32>
    %c0_11 = arith.constant 0 : index
    %c0_12 = arith.constant 0 : index
    %c0_13 = arith.constant 0 : index
    %9 = vector.load %arg4[%c0_11, %c0_12, %c0_13] : memref<4x1x16xf32, #tpu.memory_space<vmem>>, vector<1x1x16xf32>
    %10 = vector.shape_cast %9 : vector<1x1x16xf32> to vector<1x16xf32>
    %11 = vector.broadcast %10 : vector<1x16xf32> to vector<16x16xf32>
    %12 = arith.addf %8, %11 : vector<16x16xf32>
    %c0_14 = arith.constant 0 : index
    %c0_15 = arith.constant 0 : index
    %c0_16 = arith.constant 0 : index
    %13 = vector.load %arg5[%c0_14, %c0_15, %c0_16] : memref<4x64x16xbf16, #tpu.memory_space<vmem>>, vector<1x64x16xbf16>
    %14 = vector.shape_cast %13 : vector<1x64x16xbf16> to vector<64x16xbf16>
    %cst_17 = arith.constant dense<0.000000e+00> : vector<16x16xf32>
    %15 = tpu.matmul %3, %14, %cst_17 {dimension_numbers = #tpu.dot_dimension_numbers<[1], [0], [0], [1], [0, 0, 1, 1], [], []>} : vector<16x64xbf16>, vector<64x16xbf16>, vector<16x16xf32> -> vector<16x16xf32>
    %c0_18 = arith.constant 0 : index
    %c0_19 = arith.constant 0 : index
    %c0_20 = arith.constant 0 : index
    %16 = vector.load %arg6[%c0_18, %c0_19, %c0_20] : memref<4x1x16xf32, #tpu.memory_space<vmem>>, vector<1x1x16xf32>
    %17 = vector.shape_cast %16 : vector<1x1x16xf32> to vector<1x16xf32>
    %18 = vector.broadcast %17 : vector<1x16xf32> to vector<16x16xf32>
    %19 = arith.addf %15, %18 : vector<16x16xf32>
    %c0_21 = arith.constant 0 : index
    %c0_22 = arith.constant 0 : index
    %c0_23 = arith.constant 0 : index
    %20 = vector.load %arg7[%c0_21, %c0_22, %c0_23] : memref<4x64x16xbf16, #tpu.memory_space<vmem>>, vector<1x64x16xbf16>
    %21 = vector.shape_cast %20 : vector<1x64x16xbf16> to vector<64x16xbf16>
    %cst_24 = arith.constant dense<0.000000e+00> : vector<16x16xf32>
    %22 = tpu.matmul %3, %21, %cst_24 {dimension_numbers = #tpu.dot_dimension_numbers<[1], [0], [0], [1], [0, 0, 1, 1], [], []>} : vector<16x64xbf16>, vector<64x16xbf16>, vector<16x16xf32> -> vector<16x16xf32>
    %c0_25 = arith.constant 0 : index
    %c0_26 = arith.constant 0 : index
    %c0_27 = arith.constant 0 : index
    %23 = vector.load %arg8[%c0_25, %c0_26, %c0_27] : memref<4x1x16xf32, #tpu.memory_space<vmem>>, vector<1x1x16xf32>
    %24 = vector.shape_cast %23 : vector<1x1x16xf32> to vector<1x16xf32>
    %25 = vector.broadcast %24 : vector<1x16xf32> to vector<16x16xf32>
    %26 = arith.addf %22, %25 : vector<16x16xf32>
    %27 = arith.truncf %12 : vector<16x16xf32> to vector<16x16xbf16>
    %28 = arith.truncf %19 : vector<16x16xf32> to vector<16x16xbf16>
    %cst_28 = arith.constant dense<0.000000e+00> : vector<16x16xf32>
    %29 = tpu.matmul %27, %28, %cst_28 {dimension_numbers = #tpu.dot_dimension_numbers<[1], [1], [0], [0], [0, 0, 1, 0], [], []>} : vector<16x16xbf16>, vector<16x16xbf16>, vector<16x16xf32> -> vector<16x16xf32>
    %cst_29 = arith.constant 2.500000e-01 : f32
    %30 = vector.broadcast %cst_29 : f32 to vector<16x16xf32>
    %31 = arith.mulf %29, %30 : vector<16x16xf32>
    %32 = arith.addf %31, %4 : vector<16x16xf32>
    %cst_30 = arith.constant dense<0xFF800000> : vector<16xf32>
    %33 = vector.multi_reduction <maximumf>, %32, %cst_30 [1] : vector<16x16xf32> to vector<16xf32>
    %34 = vector.shape_cast %33 : vector<16xf32> to vector<16x1xf32>
    %35 = vector.broadcast %34 : vector<16x1xf32> to vector<16x16xf32>
    %36 = arith.subf %32, %35 : vector<16x16xf32>
    %37 = math.exp %36 : vector<16x16xf32>
    %cst_31 = arith.constant dense<0.000000e+00> : vector<16xf32>
    %38 = vector.multi_reduction <add>, %37, %cst_31 [1] : vector<16x16xf32> to vector<16xf32>
    %39 = vector.shape_cast %38 : vector<16xf32> to vector<16x1xf32>
    %40 = vector.broadcast %39 : vector<16x1xf32> to vector<16x16xf32>
    %41 = arith.divf %37, %40 : vector<16x16xf32>
    %42 = arith.truncf %41 : vector<16x16xf32> to vector<16x16xbf16>
    %43 = arith.truncf %26 : vector<16x16xf32> to vector<16x16xbf16>
    %cst_32 = arith.constant dense<0.000000e+00> : vector<16x16xf32>
    %44 = tpu.matmul %42, %43, %cst_32 {dimension_numbers = #tpu.dot_dimension_numbers<[1], [0], [0], [1], [0, 0, 1, 1], [], []>} : vector<16x16xbf16>, vector<16x16xbf16>, vector<16x16xf32> -> vector<16x16xf32>
    %45 = arith.truncf %44 : vector<16x16xf32> to vector<16x16xbf16>
    %c0_33 = arith.constant 0 : index
    %c0_34 = arith.constant 0 : index
    %c0_35 = arith.constant 0 : index
    %46 = vector.load %arg9[%c0_33, %c0_34, %c0_35] : memref<4x16x64xbf16, #tpu.memory_space<vmem>>, vector<1x16x64xbf16>
    %47 = vector.shape_cast %46 : vector<1x16x64xbf16> to vector<16x64xbf16>
    %cst_36 = arith.constant dense<0.000000e+00> : vector<16x64xf32>
    %48 = tpu.matmul %45, %47, %cst_36 {dimension_numbers = #tpu.dot_dimension_numbers<[1], [0], [0], [1], [0, 0, 1, 1], [], []>} : vector<16x16xbf16>, vector<16x64xbf16>, vector<16x64xf32> -> vector<16x64xf32>
    %49 = arith.addf %5, %48 : vector<16x64xf32>
    %c1 = arith.constant 1 : index
    %c0_37 = arith.constant 0 : index
    %c0_38 = arith.constant 0 : index
    %50 = vector.load %arg3[%c1, %c0_37, %c0_38] : memref<4x64x16xbf16, #tpu.memory_space<vmem>>, vector<1x64x16xbf16>
    %51 = vector.shape_cast %50 : vector<1x64x16xbf16> to vector<64x16xbf16>
    %cst_39 = arith.constant dense<0.000000e+00> : vector<16x16xf32>
    %52 = tpu.matmul %1, %51, %cst_39 {dimension_numbers = #tpu.dot_dimension_numbers<[1], [0], [0], [1], [0, 0, 1, 1], [], []>} : vector<16x64xbf16>, vector<64x16xbf16>, vector<16x16xf32> -> vector<16x16xf32>
    %c1_40 = arith.constant 1 : index
    %c0_41 = arith.constant 0 : index
    %c0_42 = arith.constant 0 : index
    %53 = vector.load %arg4[%c1_40, %c0_41, %c0_42] : memref<4x1x16xf32, #tpu.memory_space<vmem>>, vector<1x1x16xf32>
    %54 = vector.shape_cast %53 : vector<1x1x16xf32> to vector<1x16xf32>
    %55 = vector.broadcast %54 : vector<1x16xf32> to vector<16x16xf32>
    %56 = arith.addf %52, %55 : vector<16x16xf32>
    %c1_43 = arith.constant 1 : index
    %c0_44 = arith.constant 0 : index
    %c0_45 = arith.constant 0 : index
    %57 = vector.load %arg5[%c1_43, %c0_44, %c0_45] : memref<4x64x16xbf16, #tpu.memory_space<vmem>>, vector<1x64x16xbf16>
    %58 = vector.shape_cast %57 : vector<1x64x16xbf16> to vector<64x16xbf16>
    %cst_46 = arith.constant dense<0.000000e+00> : vector<16x16xf32>
    %59 = tpu.matmul %3, %58, %cst_46 {dimension_numbers = #tpu.dot_dimension_numbers<[1], [0], [0], [1], [0, 0, 1, 1], [], []>} : vector<16x64xbf16>, vector<64x16xbf16>, vector<16x16xf32> -> vector<16x16xf32>
    %c1_47 = arith.constant 1 : index
    %c0_48 = arith.constant 0 : index
    %c0_49 = arith.constant 0 : index
    %60 = vector.load %arg6[%c1_47, %c0_48, %c0_49] : memref<4x1x16xf32, #tpu.memory_space<vmem>>, vector<1x1x16xf32>
    %61 = vector.shape_cast %60 : vector<1x1x16xf32> to vector<1x16xf32>
    %62 = vector.broadcast %61 : vector<1x16xf32> to vector<16x16xf32>
    %63 = arith.addf %59, %62 : vector<16x16xf32>
    %c1_50 = arith.constant 1 : index
    %c0_51 = arith.constant 0 : index
    %c0_52 = arith.constant 0 : index
    %64 = vector.load %arg7[%c1_50, %c0_51, %c0_52] : memref<4x64x16xbf16, #tpu.memory_space<vmem>>, vector<1x64x16xbf16>
    %65 = vector.shape_cast %64 : vector<1x64x16xbf16> to vector<64x16xbf16>
    %cst_53 = arith.constant dense<0.000000e+00> : vector<16x16xf32>
    %66 = tpu.matmul %3, %65, %cst_53 {dimension_numbers = #tpu.dot_dimension_numbers<[1], [0], [0], [1], [0, 0, 1, 1], [], []>} : vector<16x64xbf16>, vector<64x16xbf16>, vector<16x16xf32> -> vector<16x16xf32>
    %c1_54 = arith.constant 1 : index
    %c0_55 = arith.constant 0 : index
    %c0_56 = arith.constant 0 : index
    %67 = vector.load %arg8[%c1_54, %c0_55, %c0_56] : memref<4x1x16xf32, #tpu.memory_space<vmem>>, vector<1x1x16xf32>
    %68 = vector.shape_cast %67 : vector<1x1x16xf32> to vector<1x16xf32>
    %69 = vector.broadcast %68 : vector<1x16xf32> to vector<16x16xf32>
    %70 = arith.addf %66, %69 : vector<16x16xf32>
    %71 = arith.truncf %56 : vector<16x16xf32> to vector<16x16xbf16>
    %72 = arith.truncf %63 : vector<16x16xf32> to vector<16x16xbf16>
    %cst_57 = arith.constant dense<0.000000e+00> : vector<16x16xf32>
    %73 = tpu.matmul %71, %72, %cst_57 {dimension_numbers = #tpu.dot_dimension_numbers<[1], [1], [0], [0], [0, 0, 1, 0], [], []>} : vector<16x16xbf16>, vector<16x16xbf16>, vector<16x16xf32> -> vector<16x16xf32>
    %cst_58 = arith.constant 2.500000e-01 : f32
    %74 = vector.broadcast %cst_58 : f32 to vector<16x16xf32>
    %75 = arith.mulf %73, %74 : vector<16x16xf32>
    %76 = arith.addf %75, %4 : vector<16x16xf32>
    %cst_59 = arith.constant dense<0xFF800000> : vector<16xf32>
    %77 = vector.multi_reduction <maximumf>, %76, %cst_59 [1] : vector<16x16xf32> to vector<16xf32>
    %78 = vector.shape_cast %77 : vector<16xf32> to vector<16x1xf32>
    %79 = vector.broadcast %78 : vector<16x1xf32> to vector<16x16xf32>
    %80 = arith.subf %76, %79 : vector<16x16xf32>
    %81 = math.exp %80 : vector<16x16xf32>
    %cst_60 = arith.constant dense<0.000000e+00> : vector<16xf32>
    %82 = vector.multi_reduction <add>, %81, %cst_60 [1] : vector<16x16xf32> to vector<16xf32>
    %83 = vector.shape_cast %82 : vector<16xf32> to vector<16x1xf32>
    %84 = vector.broadcast %83 : vector<16x1xf32> to vector<16x16xf32>
    %85 = arith.divf %81, %84 : vector<16x16xf32>
    %86 = arith.truncf %85 : vector<16x16xf32> to vector<16x16xbf16>
    %87 = arith.truncf %70 : vector<16x16xf32> to vector<16x16xbf16>
    %cst_61 = arith.constant dense<0.000000e+00> : vector<16x16xf32>
    %88 = tpu.matmul %86, %87, %cst_61 {dimension_numbers = #tpu.dot_dimension_numbers<[1], [0], [0], [1], [0, 0, 1, 1], [], []>} : vector<16x16xbf16>, vector<16x16xbf16>, vector<16x16xf32> -> vector<16x16xf32>
    %89 = arith.truncf %88 : vector<16x16xf32> to vector<16x16xbf16>
    %c1_62 = arith.constant 1 : index
    %c0_63 = arith.constant 0 : index
    %c0_64 = arith.constant 0 : index
    %90 = vector.load %arg9[%c1_62, %c0_63, %c0_64] : memref<4x16x64xbf16, #tpu.memory_space<vmem>>, vector<1x16x64xbf16>
    %91 = vector.shape_cast %90 : vector<1x16x64xbf16> to vector<16x64xbf16>
    %cst_65 = arith.constant dense<0.000000e+00> : vector<16x64xf32>
    %92 = tpu.matmul %89, %91, %cst_65 {dimension_numbers = #tpu.dot_dimension_numbers<[1], [0], [0], [1], [0, 0, 1, 1], [], []>} : vector<16x16xbf16>, vector<16x64xbf16>, vector<16x64xf32> -> vector<16x64xf32>
    %93 = arith.addf %49, %92 : vector<16x64xf32>
    %c2 = arith.constant 2 : index
    %c0_66 = arith.constant 0 : index
    %c0_67 = arith.constant 0 : index
    %94 = vector.load %arg3[%c2, %c0_66, %c0_67] : memref<4x64x16xbf16, #tpu.memory_space<vmem>>, vector<1x64x16xbf16>
    %95 = vector.shape_cast %94 : vector<1x64x16xbf16> to vector<64x16xbf16>
    %cst_68 = arith.constant dense<0.000000e+00> : vector<16x16xf32>
    %96 = tpu.matmul %1, %95, %cst_68 {dimension_numbers = #tpu.dot_dimension_numbers<[1], [0], [0], [1], [0, 0, 1, 1], [], []>} : vector<16x64xbf16>, vector<64x16xbf16>, vector<16x16xf32> -> vector<16x16xf32>
    %c2_69 = arith.constant 2 : index
    %c0_70 = arith.constant 0 : index
    %c0_71 = arith.constant 0 : index
    %97 = vector.load %arg4[%c2_69, %c0_70, %c0_71] : memref<4x1x16xf32, #tpu.memory_space<vmem>>, vector<1x1x16xf32>
    %98 = vector.shape_cast %97 : vector<1x1x16xf32> to vector<1x16xf32>
    %99 = vector.broadcast %98 : vector<1x16xf32> to vector<16x16xf32>
    %100 = arith.addf %96, %99 : vector<16x16xf32>
    %c2_72 = arith.constant 2 : index
    %c0_73 = arith.constant 0 : index
    %c0_74 = arith.constant 0 : index
    %101 = vector.load %arg5[%c2_72, %c0_73, %c0_74] : memref<4x64x16xbf16, #tpu.memory_space<vmem>>, vector<1x64x16xbf16>
    %102 = vector.shape_cast %101 : vector<1x64x16xbf16> to vector<64x16xbf16>
    %cst_75 = arith.constant dense<0.000000e+00> : vector<16x16xf32>
    %103 = tpu.matmul %3, %102, %cst_75 {dimension_numbers = #tpu.dot_dimension_numbers<[1], [0], [0], [1], [0, 0, 1, 1], [], []>} : vector<16x64xbf16>, vector<64x16xbf16>, vector<16x16xf32> -> vector<16x16xf32>
    %c2_76 = arith.constant 2 : index
    %c0_77 = arith.constant 0 : index
    %c0_78 = arith.constant 0 : index
    %104 = vector.load %arg6[%c2_76, %c0_77, %c0_78] : memref<4x1x16xf32, #tpu.memory_space<vmem>>, vector<1x1x16xf32>
    %105 = vector.shape_cast %104 : vector<1x1x16xf32> to vector<1x16xf32>
    %106 = vector.broadcast %105 : vector<1x16xf32> to vector<16x16xf32>
    %107 = arith.addf %103, %106 : vector<16x16xf32>
    %c2_79 = arith.constant 2 : index
    %c0_80 = arith.constant 0 : index
    %c0_81 = arith.constant 0 : index
    %108 = vector.load %arg7[%c2_79, %c0_80, %c0_81] : memref<4x64x16xbf16, #tpu.memory_space<vmem>>, vector<1x64x16xbf16>
    %109 = vector.shape_cast %108 : vector<1x64x16xbf16> to vector<64x16xbf16>
    %cst_82 = arith.constant dense<0.000000e+00> : vector<16x16xf32>
    %110 = tpu.matmul %3, %109, %cst_82 {dimension_numbers = #tpu.dot_dimension_numbers<[1], [0], [0], [1], [0, 0, 1, 1], [], []>} : vector<16x64xbf16>, vector<64x16xbf16>, vector<16x16xf32> -> vector<16x16xf32>
    %c2_83 = arith.constant 2 : index
    %c0_84 = arith.constant 0 : index
    %c0_85 = arith.constant 0 : index
    %111 = vector.load %arg8[%c2_83, %c0_84, %c0_85] : memref<4x1x16xf32, #tpu.memory_space<vmem>>, vector<1x1x16xf32>
    %112 = vector.shape_cast %111 : vector<1x1x16xf32> to vector<1x16xf32>
    %113 = vector.broadcast %112 : vector<1x16xf32> to vector<16x16xf32>
    %114 = arith.addf %110, %113 : vector<16x16xf32>
    %115 = arith.truncf %100 : vector<16x16xf32> to vector<16x16xbf16>
    %116 = arith.truncf %107 : vector<16x16xf32> to vector<16x16xbf16>
    %cst_86 = arith.constant dense<0.000000e+00> : vector<16x16xf32>
    %117 = tpu.matmul %115, %116, %cst_86 {dimension_numbers = #tpu.dot_dimension_numbers<[1], [1], [0], [0], [0, 0, 1, 0], [], []>} : vector<16x16xbf16>, vector<16x16xbf16>, vector<16x16xf32> -> vector<16x16xf32>
    %cst_87 = arith.constant 2.500000e-01 : f32
    %118 = vector.broadcast %cst_87 : f32 to vector<16x16xf32>
    %119 = arith.mulf %117, %118 : vector<16x16xf32>
    %120 = arith.addf %119, %4 : vector<16x16xf32>
    %cst_88 = arith.constant dense<0xFF800000> : vector<16xf32>
    %121 = vector.multi_reduction <maximumf>, %120, %cst_88 [1] : vector<16x16xf32> to vector<16xf32>
    %122 = vector.shape_cast %121 : vector<16xf32> to vector<16x1xf32>
    %123 = vector.broadcast %122 : vector<16x1xf32> to vector<16x16xf32>
    %124 = arith.subf %120, %123 : vector<16x16xf32>
    %125 = math.exp %124 : vector<16x16xf32>
    %cst_89 = arith.constant dense<0.000000e+00> : vector<16xf32>
    %126 = vector.multi_reduction <add>, %125, %cst_89 [1] : vector<16x16xf32> to vector<16xf32>
    %127 = vector.shape_cast %126 : vector<16xf32> to vector<16x1xf32>
    %128 = vector.broadcast %127 : vector<16x1xf32> to vector<16x16xf32>
    %129 = arith.divf %125, %128 : vector<16x16xf32>
    %130 = arith.truncf %129 : vector<16x16xf32> to vector<16x16xbf16>
    %131 = arith.truncf %114 : vector<16x16xf32> to vector<16x16xbf16>
    %cst_90 = arith.constant dense<0.000000e+00> : vector<16x16xf32>
    %132 = tpu.matmul %130, %131, %cst_90 {dimension_numbers = #tpu.dot_dimension_numbers<[1], [0], [0], [1], [0, 0, 1, 1], [], []>} : vector<16x16xbf16>, vector<16x16xbf16>, vector<16x16xf32> -> vector<16x16xf32>
    %133 = arith.truncf %132 : vector<16x16xf32> to vector<16x16xbf16>
    %c2_91 = arith.constant 2 : index
    %c0_92 = arith.constant 0 : index
    %c0_93 = arith.constant 0 : index
    %134 = vector.load %arg9[%c2_91, %c0_92, %c0_93] : memref<4x16x64xbf16, #tpu.memory_space<vmem>>, vector<1x16x64xbf16>
    %135 = vector.shape_cast %134 : vector<1x16x64xbf16> to vector<16x64xbf16>
    %cst_94 = arith.constant dense<0.000000e+00> : vector<16x64xf32>
    %136 = tpu.matmul %133, %135, %cst_94 {dimension_numbers = #tpu.dot_dimension_numbers<[1], [0], [0], [1], [0, 0, 1, 1], [], []>} : vector<16x16xbf16>, vector<16x64xbf16>, vector<16x64xf32> -> vector<16x64xf32>
    %137 = arith.addf %93, %136 : vector<16x64xf32>
    %c3 = arith.constant 3 : index
    %c0_95 = arith.constant 0 : index
    %c0_96 = arith.constant 0 : index
    %138 = vector.load %arg3[%c3, %c0_95, %c0_96] : memref<4x64x16xbf16, #tpu.memory_space<vmem>>, vector<1x64x16xbf16>
    %139 = vector.shape_cast %138 : vector<1x64x16xbf16> to vector<64x16xbf16>
    %cst_97 = arith.constant dense<0.000000e+00> : vector<16x16xf32>
    %140 = tpu.matmul %1, %139, %cst_97 {dimension_numbers = #tpu.dot_dimension_numbers<[1], [0], [0], [1], [0, 0, 1, 1], [], []>} : vector<16x64xbf16>, vector<64x16xbf16>, vector<16x16xf32> -> vector<16x16xf32>
    %c3_98 = arith.constant 3 : index
    %c0_99 = arith.constant 0 : index
    %c0_100 = arith.constant 0 : index
    %141 = vector.load %arg4[%c3_98, %c0_99, %c0_100] : memref<4x1x16xf32, #tpu.memory_space<vmem>>, vector<1x1x16xf32>
    %142 = vector.shape_cast %141 : vector<1x1x16xf32> to vector<1x16xf32>
    %143 = vector.broadcast %142 : vector<1x16xf32> to vector<16x16xf32>
    %144 = arith.addf %140, %143 : vector<16x16xf32>
    %c3_101 = arith.constant 3 : index
    %c0_102 = arith.constant 0 : index
    %c0_103 = arith.constant 0 : index
    %145 = vector.load %arg5[%c3_101, %c0_102, %c0_103] : memref<4x64x16xbf16, #tpu.memory_space<vmem>>, vector<1x64x16xbf16>
    %146 = vector.shape_cast %145 : vector<1x64x16xbf16> to vector<64x16xbf16>
    %cst_104 = arith.constant dense<0.000000e+00> : vector<16x16xf32>
    %147 = tpu.matmul %3, %146, %cst_104 {dimension_numbers = #tpu.dot_dimension_numbers<[1], [0], [0], [1], [0, 0, 1, 1], [], []>} : vector<16x64xbf16>, vector<64x16xbf16>, vector<16x16xf32> -> vector<16x16xf32>
    %c3_105 = arith.constant 3 : index
    %c0_106 = arith.constant 0 : index
    %c0_107 = arith.constant 0 : index
    %148 = vector.load %arg6[%c3_105, %c0_106, %c0_107] : memref<4x1x16xf32, #tpu.memory_space<vmem>>, vector<1x1x16xf32>
    %149 = vector.shape_cast %148 : vector<1x1x16xf32> to vector<1x16xf32>
    %150 = vector.broadcast %149 : vector<1x16xf32> to vector<16x16xf32>
    %151 = arith.addf %147, %150 : vector<16x16xf32>
    %c3_108 = arith.constant 3 : index
    %c0_109 = arith.constant 0 : index
    %c0_110 = arith.constant 0 : index
    %152 = vector.load %arg7[%c3_108, %c0_109, %c0_110] : memref<4x64x16xbf16, #tpu.memory_space<vmem>>, vector<1x64x16xbf16>
    %153 = vector.shape_cast %152 : vector<1x64x16xbf16> to vector<64x16xbf16>
    %cst_111 = arith.constant dense<0.000000e+00> : vector<16x16xf32>
    %154 = tpu.matmul %3, %153, %cst_111 {dimension_numbers = #tpu.dot_dimension_numbers<[1], [0], [0], [1], [0, 0, 1, 1], [], []>} : vector<16x64xbf16>, vector<64x16xbf16>, vector<16x16xf32> -> vector<16x16xf32>
    %c3_112 = arith.constant 3 : index
    %c0_113 = arith.constant 0 : index
    %c0_114 = arith.constant 0 : index
    %155 = vector.load %arg8[%c3_112, %c0_113, %c0_114] : memref<4x1x16xf32, #tpu.memory_space<vmem>>, vector<1x1x16xf32>
    %156 = vector.shape_cast %155 : vector<1x1x16xf32> to vector<1x16xf32>
    %157 = vector.broadcast %156 : vector<1x16xf32> to vector<16x16xf32>
    %158 = arith.addf %154, %157 : vector<16x16xf32>
    %159 = arith.truncf %144 : vector<16x16xf32> to vector<16x16xbf16>
    %160 = arith.truncf %151 : vector<16x16xf32> to vector<16x16xbf16>
    %cst_115 = arith.constant dense<0.000000e+00> : vector<16x16xf32>
    %161 = tpu.matmul %159, %160, %cst_115 {dimension_numbers = #tpu.dot_dimension_numbers<[1], [1], [0], [0], [0, 0, 1, 0], [], []>} : vector<16x16xbf16>, vector<16x16xbf16>, vector<16x16xf32> -> vector<16x16xf32>
    %cst_116 = arith.constant 2.500000e-01 : f32
    %162 = vector.broadcast %cst_116 : f32 to vector<16x16xf32>
    %163 = arith.mulf %161, %162 : vector<16x16xf32>
    %164 = arith.addf %163, %4 : vector<16x16xf32>
    %cst_117 = arith.constant dense<0xFF800000> : vector<16xf32>
    %165 = vector.multi_reduction <maximumf>, %164, %cst_117 [1] : vector<16x16xf32> to vector<16xf32>
    %166 = vector.shape_cast %165 : vector<16xf32> to vector<16x1xf32>
    %167 = vector.broadcast %166 : vector<16x1xf32> to vector<16x16xf32>
    %168 = arith.subf %164, %167 : vector<16x16xf32>
    %169 = math.exp %168 : vector<16x16xf32>
    %cst_118 = arith.constant dense<0.000000e+00> : vector<16xf32>
    %170 = vector.multi_reduction <add>, %169, %cst_118 [1] : vector<16x16xf32> to vector<16xf32>
    %171 = vector.shape_cast %170 : vector<16xf32> to vector<16x1xf32>
    %172 = vector.broadcast %171 : vector<16x1xf32> to vector<16x16xf32>
    %173 = arith.divf %169, %172 : vector<16x16xf32>
    %174 = arith.truncf %173 : vector<16x16xf32> to vector<16x16xbf16>
    %175 = arith.truncf %158 : vector<16x16xf32> to vector<16x16xbf16>
    %cst_119 = arith.constant dense<0.000000e+00> : vector<16x16xf32>
    %176 = tpu.matmul %174, %175, %cst_119 {dimension_numbers = #tpu.dot_dimension_numbers<[1], [0], [0], [1], [0, 0, 1, 1], [], []>} : vector<16x16xbf16>, vector<16x16xbf16>, vector<16x16xf32> -> vector<16x16xf32>
    %177 = arith.truncf %176 : vector<16x16xf32> to vector<16x16xbf16>
    %c3_120 = arith.constant 3 : index
    %c0_121 = arith.constant 0 : index
    %c0_122 = arith.constant 0 : index
    %178 = vector.load %arg9[%c3_120, %c0_121, %c0_122] : memref<4x16x64xbf16, #tpu.memory_space<vmem>>, vector<1x16x64xbf16>
    %179 = vector.shape_cast %178 : vector<1x16x64xbf16> to vector<16x64xbf16>
    %cst_123 = arith.constant dense<0.000000e+00> : vector<16x64xf32>
    %180 = tpu.matmul %177, %179, %cst_123 {dimension_numbers = #tpu.dot_dimension_numbers<[1], [0], [0], [1], [0, 0, 1, 1], [], []>} : vector<16x16xbf16>, vector<16x64xbf16>, vector<16x64xf32> -> vector<16x64xf32>
    %181 = arith.addf %137, %180 : vector<16x64xf32>
    %c0_124 = arith.constant 0 : index
    %c0_125 = arith.constant 0 : index
    %182 = vector.load %arg10[%c0_124, %c0_125] : memref<1x64xf32, #tpu.memory_space<vmem>>, vector<1x64xf32>
    %183 = vector.broadcast %182 : vector<1x64xf32> to vector<16x64xf32>
    %184 = arith.addf %181, %183 : vector<16x64xf32>
    %185 = arith.extf %1 : vector<16x64xbf16> to vector<16x64xf32>
    %186 = arith.addf %184, %185 : vector<16x64xf32>
    %c0_126 = arith.constant 0 : index
    %c0_127 = arith.constant 0 : index
    %187 = vector.load %arg11[%c0_126, %c0_127] : memref<1x64xf32, #tpu.memory_space<vmem>>, vector<1x64xf32>
    %c0_128 = arith.constant 0 : index
    %c0_129 = arith.constant 0 : index
    %188 = vector.load %arg12[%c0_128, %c0_129] : memref<1x64xf32, #tpu.memory_space<vmem>>, vector<1x64xf32>
    %cst_130 = arith.constant dense<0.000000e+00> : vector<16xf32>
    %189 = vector.multi_reduction <add>, %186, %cst_130 [1] : vector<16x64xf32> to vector<16xf32>
    %190 = vector.shape_cast %189 : vector<16xf32> to vector<16x1xf32>
    %cst_131 = arith.constant 6.400000e+01 : f32
    %191 = vector.broadcast %cst_131 : f32 to vector<16x1xf32>
    %192 = arith.divf %190, %191 : vector<16x1xf32>
    %193 = vector.broadcast %192 : vector<16x1xf32> to vector<16x64xf32>
    %194 = arith.subf %186, %193 : vector<16x64xf32>
    %195 = arith.mulf %194, %194 : vector<16x64xf32>
    %cst_132 = arith.constant dense<0.000000e+00> : vector<16xf32>
    %196 = vector.multi_reduction <add>, %195, %cst_132 [1] : vector<16x64xf32> to vector<16xf32>
    %197 = vector.shape_cast %196 : vector<16xf32> to vector<16x1xf32>
    %cst_133 = arith.constant 6.400000e+01 : f32
    %198 = vector.broadcast %cst_133 : f32 to vector<16x1xf32>
    %199 = arith.divf %197, %198 : vector<16x1xf32>
    %200 = vector.broadcast %192 : vector<16x1xf32> to vector<16x64xf32>
    %201 = arith.subf %186, %200 : vector<16x64xf32>
    %cst_134 = arith.constant 9.99999974E-6 : f32
    %202 = vector.broadcast %cst_134 : f32 to vector<16x1xf32>
    %203 = arith.addf %199, %202 : vector<16x1xf32>
    %204 = math.rsqrt %203 : vector<16x1xf32>
    %205 = vector.broadcast %204 : vector<16x1xf32> to vector<16x64xf32>
    %206 = arith.mulf %201, %205 : vector<16x64xf32>
    %207 = vector.broadcast %187 : vector<1x64xf32> to vector<16x64xf32>
    %208 = arith.mulf %206, %207 : vector<16x64xf32>
    %209 = vector.broadcast %188 : vector<1x64xf32> to vector<16x64xf32>
    %210 = arith.addf %208, %209 : vector<16x64xf32>
    %211 = arith.truncf %210 : vector<16x64xf32> to vector<16x64xbf16>
    %c0_135 = arith.constant 0 : index
    %c0_136 = arith.constant 0 : index
    %c0_137 = arith.constant 0 : index
    %212 = vector.load %arg13[%c0_135, %c0_136, %c0_137] : memref<1x16x64xbf16, #tpu.memory_space<vmem>>, vector<1x16x64xbf16>
    %213 = vector.shape_cast %212 : vector<1x16x64xbf16> to vector<16x64xbf16>
    %214 = vector.shape_cast %211 : vector<16x64xbf16> to vector<1x16x64xbf16>
    tpu.vector_store %arg13[%c0_135, %c0_136, %c0_137], %214 {strides = array<i32>} : memref<1x16x64xbf16, #tpu.memory_space<vmem>>, vector<1x16x64xbf16>,
    return
  }
  func.func @transform_0(%arg0: i32) -> (i32, i32, i32) {
    %c0_i32 = arith.constant 0 : i32
    %c0_i32_0 = arith.constant 0 : i32
    %c0_i32_1 = arith.constant 0 : i32
    return %arg0, %c0_i32, %c0_i32_0 : i32, i32, i32
  }
  func.func @transform_1(%arg0: i32) -> (i32, i32) {
    %c0_i32 = arith.constant 0 : i32
    %c0_i32_0 = arith.constant 0 : i32
    %c0_i32_1 = arith.constant 0 : i32
    return %c0_i32, %c0_i32_0 : i32, i32
  }
  func.func @transform_2(%arg0: i32) -> (i32, i32, i32) {
    %c0_i32 = arith.constant 0 : i32
    %c0_i32_0 = arith.constant 0 : i32
    %c0_i32_1 = arith.constant 0 : i32
    %c0_i32_2 = arith.constant 0 : i32
    return %c0_i32, %c0_i32_0, %c0_i32_1 : i32, i32, i32
  }
  func.func @transform_3(%arg0: i32) -> (i32, i32, i32) {
    %c0_i32 = arith.constant 0 : i32
    %c0_i32_0 = arith.constant 0 : i32
    %c0_i32_1 = arith.constant 0 : i32
    %c0_i32_2 = arith.constant 0 : i32
    return %c0_i32, %c0_i32_0, %c0_i32_1 : i32, i32, i32
  }
  func.func @transform_4(%arg0: i32) -> (i32, i32, i32) {
    %c0_i32 = arith.constant 0 : i32
    %c0_i32_0 = arith.constant 0 : i32
    %c0_i32_1 = arith.constant 0 : i32
    %c0_i32_2 = arith.constant 0 : i32
    return %c0_i32, %c0_i32_0, %c0_i32_1 : i32, i32, i32
  }
  func.func @transform_5(%arg0: i32) -> (i32, i32, i32) {
    %c0_i32 = arith.constant 0 : i32
    %c0_i32_0 = arith.constant 0 : i32
    %c0_i32_1 = arith.constant 0 : i32
    %c0_i32_2 = arith.constant 0 : i32
    return %c0_i32, %c0_i32_0, %c0_i32_1 : i32, i32, i32
  }
  func.func @transform_6(%arg0: i32) -> (i32, i32, i32) {
    %c0_i32 = arith.constant 0 : i32
    %c0_i32_0 = arith.constant 0 : i32
    %c0_i32_1 = arith.constant 0 : i32
    %c0_i32_2 = arith.constant 0 : i32
    return %c0_i32, %c0_i32_0, %c0_i32_1 : i32, i32, i32
  }
  func.func @transform_7(%arg0: i32) -> (i32, i32, i32) {
    %c0_i32 = arith.constant 0 : i32
    %c0_i32_0 = arith.constant 0 : i32
    %c0_i32_1 = arith.constant 0 : i32
    %c0_i32_2 = arith.constant 0 : i32
    return %c0_i32, %c0_i32_0, %c0_i32_1 : i32, i32, i32
  }
  func.func @transform_8(%arg0: i32) -> (i32, i32, i32) {
    %c0_i32 = arith.constant 0 : i32
    %c0_i32_0 = arith.constant 0 : i32
    %c0_i32_1 = arith.constant 0 : i32
    %c0_i32_2 = arith.constant 0 : i32
    return %c0_i32, %c0_i32_0, %c0_i32_1 : i32, i32, i32
  }
  func.func @transform_9(%arg0: i32) -> (i32, i32) {
    %c0_i32 = arith.constant 0 : i32
    %c0_i32_0 = arith.constant 0 : i32
    %c0_i32_1 = arith.constant 0 : i32
    return %c0_i32, %c0_i32_0 : i32, i32
  }
  func.func @transform_10(%arg0: i32) -> (i32, i32) {
    %c0_i32 = arith.constant 0 : i32
    %c0_i32_0 = arith.constant 0 : i32
    %c0_i32_1 = arith.constant 0 : i32
    return %c0_i32, %c0_i32_0 : i32, i32
  }
  func.func @transform_11(%arg0: i32) -> (i32, i32) {
    %c0_i32 = arith.constant 0 : i32
    %c0_i32_0 = arith.constant 0 : i32
    %c0_i32_1 = arith.constant 0 : i32
    return %c0_i32, %c0_i32_0 : i32, i32
  }
  func.func @transform_12(%arg0: i32) -> (i32, i32, i32) {
    %c0_i32 = arith.constant 0 : i32
    %c0_i32_0 = arith.constant 0 : i32
    %c0_i32_1 = arith.constant 0 : i32
    return %arg0, %c0_i32, %c0_i32_0 : i32, i32, i32
  }
}

module attributes {stable_mosaic.version = 11 : i64} {
  func.func @_ln_kernel(%arg0: i32, %arg1: memref<1x8x64xbf16, #tpu.memory_space<vmem>>, %arg2: memref<1x64xf32, #tpu.memory_space<vmem>>, %arg3: memref<1x64xf32, #tpu.memory_space<vmem>>, %arg4: memref<1x8x64xbf16, #tpu.memory_space<vmem>>) attributes {dimension_semantics = [#tpu.dimension_semantics<parallel>], iteration_bounds = array<i64: 2>, scalar_prefetch = 0 : i64, scratch_operands = 0 : i64, tpu.core_type = #tpu.core_type<tc>, window_params = [{transform_indices = @transform_0, window_bounds = array<i64: 1, 8, 64>}, {pipeline_mode = #tpu.pipeline_mode<synchronous>, transform_indices = @transform_1, window_bounds = array<i64: 1, 64>}, {pipeline_mode = #tpu.pipeline_mode<synchronous>, transform_indices = @transform_2, window_bounds = array<i64: 1, 64>}, {transform_indices = @transform_3, window_bounds = array<i64: 1, 8, 64>}]} {
    %c0 = arith.constant 0 : index
    %c0_0 = arith.constant 0 : index
    %c0_1 = arith.constant 0 : index
    %0 = vector.load %arg1[%c0, %c0_0, %c0_1] : memref<1x8x64xbf16, #tpu.memory_space<vmem>>, vector<1x8x64xbf16>
    %1 = vector.shape_cast %0 : vector<1x8x64xbf16> to vector<8x64xbf16>
    %2 = arith.extf %1 : vector<8x64xbf16> to vector<8x64xf32>
    %c0_2 = arith.constant 0 : index
    %c0_3 = arith.constant 0 : index
    %3 = vector.load %arg2[%c0_2, %c0_3] : memref<1x64xf32, #tpu.memory_space<vmem>>, vector<1x64xf32>
    %c0_4 = arith.constant 0 : index
    %c0_5 = arith.constant 0 : index
    %4 = vector.load %arg3[%c0_4, %c0_5] : memref<1x64xf32, #tpu.memory_space<vmem>>, vector<1x64xf32>
    %cst = arith.constant dense<0.000000e+00> : vector<8xf32>
    %5 = vector.multi_reduction <add>, %2, %cst [1] : vector<8x64xf32> to vector<8xf32>
    %6 = vector.shape_cast %5 : vector<8xf32> to vector<8x1xf32>
    %cst_6 = arith.constant 6.400000e+01 : f32
    %7 = vector.broadcast %cst_6 : f32 to vector<8x1xf32>
    %8 = arith.divf %6, %7 : vector<8x1xf32>
    %9 = vector.broadcast %8 : vector<8x1xf32> to vector<8x64xf32>
    %10 = arith.subf %2, %9 : vector<8x64xf32>
    %11 = arith.mulf %10, %10 : vector<8x64xf32>
    %cst_7 = arith.constant dense<0.000000e+00> : vector<8xf32>
    %12 = vector.multi_reduction <add>, %11, %cst_7 [1] : vector<8x64xf32> to vector<8xf32>
    %13 = vector.shape_cast %12 : vector<8xf32> to vector<8x1xf32>
    %cst_8 = arith.constant 6.400000e+01 : f32
    %14 = vector.broadcast %cst_8 : f32 to vector<8x1xf32>
    %15 = arith.divf %13, %14 : vector<8x1xf32>
    %16 = vector.broadcast %8 : vector<8x1xf32> to vector<8x64xf32>
    %17 = arith.subf %2, %16 : vector<8x64xf32>
    %cst_9 = arith.constant 9.99999974E-6 : f32
    %18 = vector.broadcast %cst_9 : f32 to vector<8x1xf32>
    %19 = arith.addf %15, %18 : vector<8x1xf32>
    %20 = math.rsqrt %19 : vector<8x1xf32>
    %21 = vector.broadcast %20 : vector<8x1xf32> to vector<8x64xf32>
    %22 = arith.mulf %17, %21 : vector<8x64xf32>
    %23 = vector.broadcast %3 : vector<1x64xf32> to vector<8x64xf32>
    %24 = arith.mulf %22, %23 : vector<8x64xf32>
    %25 = vector.broadcast %4 : vector<1x64xf32> to vector<8x64xf32>
    %26 = arith.addf %24, %25 : vector<8x64xf32>
    %27 = arith.truncf %26 : vector<8x64xf32> to vector<8x64xbf16>
    %c0_10 = arith.constant 0 : index
    %c0_11 = arith.constant 0 : index
    %c0_12 = arith.constant 0 : index
    %28 = vector.load %arg4[%c0_10, %c0_11, %c0_12] : memref<1x8x64xbf16, #tpu.memory_space<vmem>>, vector<1x8x64xbf16>
    %29 = vector.shape_cast %28 : vector<1x8x64xbf16> to vector<8x64xbf16>
    %30 = vector.shape_cast %27 : vector<8x64xbf16> to vector<1x8x64xbf16>
    tpu.vector_store %arg4[%c0_10, %c0_11, %c0_12], %30 {strides = array<i32>} : memref<1x8x64xbf16, #tpu.memory_space<vmem>>, vector<1x8x64xbf16>,
    return
  }
  func.func @transform_0(%arg0: i32) -> (i32, i32, i32) {
    %c0_i32 = arith.constant 0 : i32
    %c0_i32_0 = arith.constant 0 : i32
    %c0_i32_1 = arith.constant 0 : i32
    return %arg0, %c0_i32, %c0_i32_0 : i32, i32, i32
  }
  func.func @transform_1(%arg0: i32) -> (i32, i32) {
    %c0_i32 = arith.constant 0 : i32
    %c0_i32_0 = arith.constant 0 : i32
    %c0_i32_1 = arith.constant 0 : i32
    return %c0_i32, %c0_i32_0 : i32, i32
  }
  func.func @transform_2(%arg0: i32) -> (i32, i32) {
    %c0_i32 = arith.constant 0 : i32
    %c0_i32_0 = arith.constant 0 : i32
    %c0_i32_1 = arith.constant 0 : i32
    return %c0_i32, %c0_i32_0 : i32, i32
  }
  func.func @transform_3(%arg0: i32) -> (i32, i32, i32) {
    %c0_i32 = arith.constant 0 : i32
    %c0_i32_0 = arith.constant 0 : i32
    %c0_i32_1 = arith.constant 0 : i32
    return %arg0, %c0_i32, %c0_i32_0 : i32, i32, i32
  }
}

module attributes {stable_mosaic.version = 11 : i64} {
  func.func @_mha_ln_kernel(%arg0: i32, %arg1: memref<1x16x64xbf16, #tpu.memory_space<vmem>>, %arg2: memref<1x8x64xbf16, #tpu.memory_space<vmem>>, %arg3: memref<4x64x16xbf16, #tpu.memory_space<vmem>>, %arg4: memref<4x1x16xf32, #tpu.memory_space<vmem>>, %arg5: memref<4x64x16xbf16, #tpu.memory_space<vmem>>, %arg6: memref<4x1x16xf32, #tpu.memory_space<vmem>>, %arg7: memref<4x64x16xbf16, #tpu.memory_space<vmem>>, %arg8: memref<4x1x16xf32, #tpu.memory_space<vmem>>, %arg9: memref<4x16x64xbf16, #tpu.memory_space<vmem>>, %arg10: memref<1x64xf32, #tpu.memory_space<vmem>>, %arg11: memref<1x64xf32, #tpu.memory_space<vmem>>, %arg12: memref<1x64xf32, #tpu.memory_space<vmem>>, %arg13: memref<1x16x64xbf16, #tpu.memory_space<vmem>>) attributes {dimension_semantics = [#tpu.dimension_semantics<parallel>], iteration_bounds = array<i64: 2>, scalar_prefetch = 0 : i64, scratch_operands = 0 : i64, tpu.core_type = #tpu.core_type<tc>, window_params = [{transform_indices = @transform_0, window_bounds = array<i64: 1, 16, 64>}, {transform_indices = @transform_1, window_bounds = array<i64: 1, 8, 64>}, {pipeline_mode = #tpu.pipeline_mode<synchronous>, transform_indices = @transform_2, window_bounds = array<i64: 4, 64, 16>}, {pipeline_mode = #tpu.pipeline_mode<synchronous>, transform_indices = @transform_3, window_bounds = array<i64: 4, 1, 16>}, {pipeline_mode = #tpu.pipeline_mode<synchronous>, transform_indices = @transform_4, window_bounds = array<i64: 4, 64, 16>}, {pipeline_mode = #tpu.pipeline_mode<synchronous>, transform_indices = @transform_5, window_bounds = array<i64: 4, 1, 16>}, {pipeline_mode = #tpu.pipeline_mode<synchronous>, transform_indices = @transform_6, window_bounds = array<i64: 4, 64, 16>}, {pipeline_mode = #tpu.pipeline_mode<synchronous>, transform_indices = @transform_7, window_bounds = array<i64: 4, 1, 16>}, {pipeline_mode = #tpu.pipeline_mode<synchronous>, transform_indices = @transform_8, window_bounds = array<i64: 4, 16, 64>}, {pipeline_mode = #tpu.pipeline_mode<synchronous>, transform_indices = @transform_9, window_bounds = array<i64: 1, 64>}, {pipeline_mode = #tpu.pipeline_mode<synchronous>, transform_indices = @transform_10, window_bounds = array<i64: 1, 64>}, {pipeline_mode = #tpu.pipeline_mode<synchronous>, transform_indices = @transform_11, window_bounds = array<i64: 1, 64>}, {transform_indices = @transform_12, window_bounds = array<i64: 1, 16, 64>}]} {
    %c0 = arith.constant 0 : index
    %c0_0 = arith.constant 0 : index
    %c0_1 = arith.constant 0 : index
    %0 = vector.load %arg1[%c0, %c0_0, %c0_1] : memref<1x16x64xbf16, #tpu.memory_space<vmem>>, vector<1x16x64xbf16>
    %1 = vector.shape_cast %0 : vector<1x16x64xbf16> to vector<16x64xbf16>
    %c0_2 = arith.constant 0 : index
    %c0_3 = arith.constant 0 : index
    %c0_4 = arith.constant 0 : index
    %2 = vector.load %arg2[%c0_2, %c0_3, %c0_4] : memref<1x8x64xbf16, #tpu.memory_space<vmem>>, vector<1x8x64xbf16>
    %3 = vector.shape_cast %2 : vector<1x8x64xbf16> to vector<8x64xbf16>
    %cst = arith.constant 0.000000e+00 : f32
    %4 = vector.broadcast %cst : f32 to vector<16x64xf32>
    %c0_5 = arith.constant 0 : index
    %c0_6 = arith.constant 0 : index
    %c0_7 = arith.constant 0 : index
    %5 = vector.load %arg3[%c0_5, %c0_6, %c0_7] : memref<4x64x16xbf16, #tpu.memory_space<vmem>>, vector<1x64x16xbf16>
    %6 = vector.shape_cast %5 : vector<1x64x16xbf16> to vector<64x16xbf16>
    %cst_8 = arith.constant dense<0.000000e+00> : vector<16x16xf32>
    %7 = tpu.matmul %1, %6, %cst_8 {dimension_numbers = #tpu.dot_dimension_numbers<[1], [0], [0], [1], [0, 0, 1, 1], [], []>} : vector<16x64xbf16>, vector<64x16xbf16>, vector<16x16xf32> -> vector<16x16xf32>
    %c0_9 = arith.constant 0 : index
    %c0_10 = arith.constant 0 : index
    %c0_11 = arith.constant 0 : index
    %8 = vector.load %arg4[%c0_9, %c0_10, %c0_11] : memref<4x1x16xf32, #tpu.memory_space<vmem>>, vector<1x1x16xf32>
    %9 = vector.shape_cast %8 : vector<1x1x16xf32> to vector<1x16xf32>
    %10 = vector.broadcast %9 : vector<1x16xf32> to vector<16x16xf32>
    %11 = arith.addf %7, %10 : vector<16x16xf32>
    %c0_12 = arith.constant 0 : index
    %c0_13 = arith.constant 0 : index
    %c0_14 = arith.constant 0 : index
    %12 = vector.load %arg5[%c0_12, %c0_13, %c0_14] : memref<4x64x16xbf16, #tpu.memory_space<vmem>>, vector<1x64x16xbf16>
    %13 = vector.shape_cast %12 : vector<1x64x16xbf16> to vector<64x16xbf16>
    %cst_15 = arith.constant dense<0.000000e+00> : vector<8x16xf32>
    %14 = tpu.matmul %3, %13, %cst_15 {dimension_numbers = #tpu.dot_dimension_numbers<[1], [0], [0], [1], [0, 0, 1, 1], [], []>} : vector<8x64xbf16>, vector<64x16xbf16>, vector<8x16xf32> -> vector<8x16xf32>
    %c0_16 = arith.constant 0 : index
    %c0_17 = arith.constant 0 : index
    %c0_18 = arith.constant 0 : index
    %15 = vector.load %arg6[%c0_16, %c0_17, %c0_18] : memref<4x1x16xf32, #tpu.memory_space<vmem>>, vector<1x1x16xf32>
    %16 = vector.shape_cast %15 : vector<1x1x16xf32> to vector<1x16xf32>
    %17 = vector.broadcast %16 : vector<1x16xf32> to vector<8x16xf32>
    %18 = arith.addf %14, %17 : vector<8x16xf32>
    %c0_19 = arith.constant 0 : index
    %c0_20 = arith.constant 0 : index
    %c0_21 = arith.constant 0 : index
    %19 = vector.load %arg7[%c0_19, %c0_20, %c0_21] : memref<4x64x16xbf16, #tpu.memory_space<vmem>>, vector<1x64x16xbf16>
    %20 = vector.shape_cast %19 : vector<1x64x16xbf16> to vector<64x16xbf16>
    %cst_22 = arith.constant dense<0.000000e+00> : vector<8x16xf32>
    %21 = tpu.matmul %3, %20, %cst_22 {dimension_numbers = #tpu.dot_dimension_numbers<[1], [0], [0], [1], [0, 0, 1, 1], [], []>} : vector<8x64xbf16>, vector<64x16xbf16>, vector<8x16xf32> -> vector<8x16xf32>
    %c0_23 = arith.constant 0 : index
    %c0_24 = arith.constant 0 : index
    %c0_25 = arith.constant 0 : index
    %22 = vector.load %arg8[%c0_23, %c0_24, %c0_25] : memref<4x1x16xf32, #tpu.memory_space<vmem>>, vector<1x1x16xf32>
    %23 = vector.shape_cast %22 : vector<1x1x16xf32> to vector<1x16xf32>
    %24 = vector.broadcast %23 : vector<1x16xf32> to vector<8x16xf32>
    %25 = arith.addf %21, %24 : vector<8x16xf32>
    %26 = arith.truncf %11 : vector<16x16xf32> to vector<16x16xbf16>
    %27 = arith.truncf %18 : vector<8x16xf32> to vector<8x16xbf16>
    %cst_26 = arith.constant dense<0.000000e+00> : vector<16x8xf32>
    %28 = tpu.matmul %26, %27, %cst_26 {dimension_numbers = #tpu.dot_dimension_numbers<[1], [1], [0], [0], [0, 0, 1, 0], [], []>} : vector<16x16xbf16>, vector<8x16xbf16>, vector<16x8xf32> -> vector<16x8xf32>
    %cst_27 = arith.constant 2.500000e-01 : f32
    %29 = vector.broadcast %cst_27 : f32 to vector<16x8xf32>
    %30 = arith.mulf %28, %29 : vector<16x8xf32>
    %cst_28 = arith.constant dense<0xFF800000> : vector<16xf32>
    %31 = vector.multi_reduction <maximumf>, %30, %cst_28 [1] : vector<16x8xf32> to vector<16xf32>
    %32 = vector.shape_cast %31 : vector<16xf32> to vector<16x1xf32>
    %33 = vector.broadcast %32 : vector<16x1xf32> to vector<16x8xf32>
    %34 = arith.subf %30, %33 : vector<16x8xf32>
    %35 = math.exp %34 : vector<16x8xf32>
    %cst_29 = arith.constant dense<0.000000e+00> : vector<16xf32>
    %36 = vector.multi_reduction <add>, %35, %cst_29 [1] : vector<16x8xf32> to vector<16xf32>
    %37 = vector.shape_cast %36 : vector<16xf32> to vector<16x1xf32>
    %38 = vector.broadcast %37 : vector<16x1xf32> to vector<16x8xf32>
    %39 = arith.divf %35, %38 : vector<16x8xf32>
    %40 = arith.truncf %39 : vector<16x8xf32> to vector<16x8xbf16>
    %41 = arith.truncf %25 : vector<8x16xf32> to vector<8x16xbf16>
    %cst_30 = arith.constant dense<0.000000e+00> : vector<16x16xf32>
    %42 = tpu.matmul %40, %41, %cst_30 {dimension_numbers = #tpu.dot_dimension_numbers<[1], [0], [0], [1], [0, 0, 1, 1], [], []>} : vector<16x8xbf16>, vector<8x16xbf16>, vector<16x16xf32> -> vector<16x16xf32>
    %43 = arith.truncf %42 : vector<16x16xf32> to vector<16x16xbf16>
    %c0_31 = arith.constant 0 : index
    %c0_32 = arith.constant 0 : index
    %c0_33 = arith.constant 0 : index
    %44 = vector.load %arg9[%c0_31, %c0_32, %c0_33] : memref<4x16x64xbf16, #tpu.memory_space<vmem>>, vector<1x16x64xbf16>
    %45 = vector.shape_cast %44 : vector<1x16x64xbf16> to vector<16x64xbf16>
    %cst_34 = arith.constant dense<0.000000e+00> : vector<16x64xf32>
    %46 = tpu.matmul %43, %45, %cst_34 {dimension_numbers = #tpu.dot_dimension_numbers<[1], [0], [0], [1], [0, 0, 1, 1], [], []>} : vector<16x16xbf16>, vector<16x64xbf16>, vector<16x64xf32> -> vector<16x64xf32>
    %47 = arith.addf %4, %46 : vector<16x64xf32>
    %c1 = arith.constant 1 : index
    %c0_35 = arith.constant 0 : index
    %c0_36 = arith.constant 0 : index
    %48 = vector.load %arg3[%c1, %c0_35, %c0_36] : memref<4x64x16xbf16, #tpu.memory_space<vmem>>, vector<1x64x16xbf16>
    %49 = vector.shape_cast %48 : vector<1x64x16xbf16> to vector<64x16xbf16>
    %cst_37 = arith.constant dense<0.000000e+00> : vector<16x16xf32>
    %50 = tpu.matmul %1, %49, %cst_37 {dimension_numbers = #tpu.dot_dimension_numbers<[1], [0], [0], [1], [0, 0, 1, 1], [], []>} : vector<16x64xbf16>, vector<64x16xbf16>, vector<16x16xf32> -> vector<16x16xf32>
    %c1_38 = arith.constant 1 : index
    %c0_39 = arith.constant 0 : index
    %c0_40 = arith.constant 0 : index
    %51 = vector.load %arg4[%c1_38, %c0_39, %c0_40] : memref<4x1x16xf32, #tpu.memory_space<vmem>>, vector<1x1x16xf32>
    %52 = vector.shape_cast %51 : vector<1x1x16xf32> to vector<1x16xf32>
    %53 = vector.broadcast %52 : vector<1x16xf32> to vector<16x16xf32>
    %54 = arith.addf %50, %53 : vector<16x16xf32>
    %c1_41 = arith.constant 1 : index
    %c0_42 = arith.constant 0 : index
    %c0_43 = arith.constant 0 : index
    %55 = vector.load %arg5[%c1_41, %c0_42, %c0_43] : memref<4x64x16xbf16, #tpu.memory_space<vmem>>, vector<1x64x16xbf16>
    %56 = vector.shape_cast %55 : vector<1x64x16xbf16> to vector<64x16xbf16>
    %cst_44 = arith.constant dense<0.000000e+00> : vector<8x16xf32>
    %57 = tpu.matmul %3, %56, %cst_44 {dimension_numbers = #tpu.dot_dimension_numbers<[1], [0], [0], [1], [0, 0, 1, 1], [], []>} : vector<8x64xbf16>, vector<64x16xbf16>, vector<8x16xf32> -> vector<8x16xf32>
    %c1_45 = arith.constant 1 : index
    %c0_46 = arith.constant 0 : index
    %c0_47 = arith.constant 0 : index
    %58 = vector.load %arg6[%c1_45, %c0_46, %c0_47] : memref<4x1x16xf32, #tpu.memory_space<vmem>>, vector<1x1x16xf32>
    %59 = vector.shape_cast %58 : vector<1x1x16xf32> to vector<1x16xf32>
    %60 = vector.broadcast %59 : vector<1x16xf32> to vector<8x16xf32>
    %61 = arith.addf %57, %60 : vector<8x16xf32>
    %c1_48 = arith.constant 1 : index
    %c0_49 = arith.constant 0 : index
    %c0_50 = arith.constant 0 : index
    %62 = vector.load %arg7[%c1_48, %c0_49, %c0_50] : memref<4x64x16xbf16, #tpu.memory_space<vmem>>, vector<1x64x16xbf16>
    %63 = vector.shape_cast %62 : vector<1x64x16xbf16> to vector<64x16xbf16>
    %cst_51 = arith.constant dense<0.000000e+00> : vector<8x16xf32>
    %64 = tpu.matmul %3, %63, %cst_51 {dimension_numbers = #tpu.dot_dimension_numbers<[1], [0], [0], [1], [0, 0, 1, 1], [], []>} : vector<8x64xbf16>, vector<64x16xbf16>, vector<8x16xf32> -> vector<8x16xf32>
    %c1_52 = arith.constant 1 : index
    %c0_53 = arith.constant 0 : index
    %c0_54 = arith.constant 0 : index
    %65 = vector.load %arg8[%c1_52, %c0_53, %c0_54] : memref<4x1x16xf32, #tpu.memory_space<vmem>>, vector<1x1x16xf32>
    %66 = vector.shape_cast %65 : vector<1x1x16xf32> to vector<1x16xf32>
    %67 = vector.broadcast %66 : vector<1x16xf32> to vector<8x16xf32>
    %68 = arith.addf %64, %67 : vector<8x16xf32>
    %69 = arith.truncf %54 : vector<16x16xf32> to vector<16x16xbf16>
    %70 = arith.truncf %61 : vector<8x16xf32> to vector<8x16xbf16>
    %cst_55 = arith.constant dense<0.000000e+00> : vector<16x8xf32>
    %71 = tpu.matmul %69, %70, %cst_55 {dimension_numbers = #tpu.dot_dimension_numbers<[1], [1], [0], [0], [0, 0, 1, 0], [], []>} : vector<16x16xbf16>, vector<8x16xbf16>, vector<16x8xf32> -> vector<16x8xf32>
    %cst_56 = arith.constant 2.500000e-01 : f32
    %72 = vector.broadcast %cst_56 : f32 to vector<16x8xf32>
    %73 = arith.mulf %71, %72 : vector<16x8xf32>
    %cst_57 = arith.constant dense<0xFF800000> : vector<16xf32>
    %74 = vector.multi_reduction <maximumf>, %73, %cst_57 [1] : vector<16x8xf32> to vector<16xf32>
    %75 = vector.shape_cast %74 : vector<16xf32> to vector<16x1xf32>
    %76 = vector.broadcast %75 : vector<16x1xf32> to vector<16x8xf32>
    %77 = arith.subf %73, %76 : vector<16x8xf32>
    %78 = math.exp %77 : vector<16x8xf32>
    %cst_58 = arith.constant dense<0.000000e+00> : vector<16xf32>
    %79 = vector.multi_reduction <add>, %78, %cst_58 [1] : vector<16x8xf32> to vector<16xf32>
    %80 = vector.shape_cast %79 : vector<16xf32> to vector<16x1xf32>
    %81 = vector.broadcast %80 : vector<16x1xf32> to vector<16x8xf32>
    %82 = arith.divf %78, %81 : vector<16x8xf32>
    %83 = arith.truncf %82 : vector<16x8xf32> to vector<16x8xbf16>
    %84 = arith.truncf %68 : vector<8x16xf32> to vector<8x16xbf16>
    %cst_59 = arith.constant dense<0.000000e+00> : vector<16x16xf32>
    %85 = tpu.matmul %83, %84, %cst_59 {dimension_numbers = #tpu.dot_dimension_numbers<[1], [0], [0], [1], [0, 0, 1, 1], [], []>} : vector<16x8xbf16>, vector<8x16xbf16>, vector<16x16xf32> -> vector<16x16xf32>
    %86 = arith.truncf %85 : vector<16x16xf32> to vector<16x16xbf16>
    %c1_60 = arith.constant 1 : index
    %c0_61 = arith.constant 0 : index
    %c0_62 = arith.constant 0 : index
    %87 = vector.load %arg9[%c1_60, %c0_61, %c0_62] : memref<4x16x64xbf16, #tpu.memory_space<vmem>>, vector<1x16x64xbf16>
    %88 = vector.shape_cast %87 : vector<1x16x64xbf16> to vector<16x64xbf16>
    %cst_63 = arith.constant dense<0.000000e+00> : vector<16x64xf32>
    %89 = tpu.matmul %86, %88, %cst_63 {dimension_numbers = #tpu.dot_dimension_numbers<[1], [0], [0], [1], [0, 0, 1, 1], [], []>} : vector<16x16xbf16>, vector<16x64xbf16>, vector<16x64xf32> -> vector<16x64xf32>
    %90 = arith.addf %47, %89 : vector<16x64xf32>
    %c2 = arith.constant 2 : index
    %c0_64 = arith.constant 0 : index
    %c0_65 = arith.constant 0 : index
    %91 = vector.load %arg3[%c2, %c0_64, %c0_65] : memref<4x64x16xbf16, #tpu.memory_space<vmem>>, vector<1x64x16xbf16>
    %92 = vector.shape_cast %91 : vector<1x64x16xbf16> to vector<64x16xbf16>
    %cst_66 = arith.constant dense<0.000000e+00> : vector<16x16xf32>
    %93 = tpu.matmul %1, %92, %cst_66 {dimension_numbers = #tpu.dot_dimension_numbers<[1], [0], [0], [1], [0, 0, 1, 1], [], []>} : vector<16x64xbf16>, vector<64x16xbf16>, vector<16x16xf32> -> vector<16x16xf32>
    %c2_67 = arith.constant 2 : index
    %c0_68 = arith.constant 0 : index
    %c0_69 = arith.constant 0 : index
    %94 = vector.load %arg4[%c2_67, %c0_68, %c0_69] : memref<4x1x16xf32, #tpu.memory_space<vmem>>, vector<1x1x16xf32>
    %95 = vector.shape_cast %94 : vector<1x1x16xf32> to vector<1x16xf32>
    %96 = vector.broadcast %95 : vector<1x16xf32> to vector<16x16xf32>
    %97 = arith.addf %93, %96 : vector<16x16xf32>
    %c2_70 = arith.constant 2 : index
    %c0_71 = arith.constant 0 : index
    %c0_72 = arith.constant 0 : index
    %98 = vector.load %arg5[%c2_70, %c0_71, %c0_72] : memref<4x64x16xbf16, #tpu.memory_space<vmem>>, vector<1x64x16xbf16>
    %99 = vector.shape_cast %98 : vector<1x64x16xbf16> to vector<64x16xbf16>
    %cst_73 = arith.constant dense<0.000000e+00> : vector<8x16xf32>
    %100 = tpu.matmul %3, %99, %cst_73 {dimension_numbers = #tpu.dot_dimension_numbers<[1], [0], [0], [1], [0, 0, 1, 1], [], []>} : vector<8x64xbf16>, vector<64x16xbf16>, vector<8x16xf32> -> vector<8x16xf32>
    %c2_74 = arith.constant 2 : index
    %c0_75 = arith.constant 0 : index
    %c0_76 = arith.constant 0 : index
    %101 = vector.load %arg6[%c2_74, %c0_75, %c0_76] : memref<4x1x16xf32, #tpu.memory_space<vmem>>, vector<1x1x16xf32>
    %102 = vector.shape_cast %101 : vector<1x1x16xf32> to vector<1x16xf32>
    %103 = vector.broadcast %102 : vector<1x16xf32> to vector<8x16xf32>
    %104 = arith.addf %100, %103 : vector<8x16xf32>
    %c2_77 = arith.constant 2 : index
    %c0_78 = arith.constant 0 : index
    %c0_79 = arith.constant 0 : index
    %105 = vector.load %arg7[%c2_77, %c0_78, %c0_79] : memref<4x64x16xbf16, #tpu.memory_space<vmem>>, vector<1x64x16xbf16>
    %106 = vector.shape_cast %105 : vector<1x64x16xbf16> to vector<64x16xbf16>
    %cst_80 = arith.constant dense<0.000000e+00> : vector<8x16xf32>
    %107 = tpu.matmul %3, %106, %cst_80 {dimension_numbers = #tpu.dot_dimension_numbers<[1], [0], [0], [1], [0, 0, 1, 1], [], []>} : vector<8x64xbf16>, vector<64x16xbf16>, vector<8x16xf32> -> vector<8x16xf32>
    %c2_81 = arith.constant 2 : index
    %c0_82 = arith.constant 0 : index
    %c0_83 = arith.constant 0 : index
    %108 = vector.load %arg8[%c2_81, %c0_82, %c0_83] : memref<4x1x16xf32, #tpu.memory_space<vmem>>, vector<1x1x16xf32>
    %109 = vector.shape_cast %108 : vector<1x1x16xf32> to vector<1x16xf32>
    %110 = vector.broadcast %109 : vector<1x16xf32> to vector<8x16xf32>
    %111 = arith.addf %107, %110 : vector<8x16xf32>
    %112 = arith.truncf %97 : vector<16x16xf32> to vector<16x16xbf16>
    %113 = arith.truncf %104 : vector<8x16xf32> to vector<8x16xbf16>
    %cst_84 = arith.constant dense<0.000000e+00> : vector<16x8xf32>
    %114 = tpu.matmul %112, %113, %cst_84 {dimension_numbers = #tpu.dot_dimension_numbers<[1], [1], [0], [0], [0, 0, 1, 0], [], []>} : vector<16x16xbf16>, vector<8x16xbf16>, vector<16x8xf32> -> vector<16x8xf32>
    %cst_85 = arith.constant 2.500000e-01 : f32
    %115 = vector.broadcast %cst_85 : f32 to vector<16x8xf32>
    %116 = arith.mulf %114, %115 : vector<16x8xf32>
    %cst_86 = arith.constant dense<0xFF800000> : vector<16xf32>
    %117 = vector.multi_reduction <maximumf>, %116, %cst_86 [1] : vector<16x8xf32> to vector<16xf32>
    %118 = vector.shape_cast %117 : vector<16xf32> to vector<16x1xf32>
    %119 = vector.broadcast %118 : vector<16x1xf32> to vector<16x8xf32>
    %120 = arith.subf %116, %119 : vector<16x8xf32>
    %121 = math.exp %120 : vector<16x8xf32>
    %cst_87 = arith.constant dense<0.000000e+00> : vector<16xf32>
    %122 = vector.multi_reduction <add>, %121, %cst_87 [1] : vector<16x8xf32> to vector<16xf32>
    %123 = vector.shape_cast %122 : vector<16xf32> to vector<16x1xf32>
    %124 = vector.broadcast %123 : vector<16x1xf32> to vector<16x8xf32>
    %125 = arith.divf %121, %124 : vector<16x8xf32>
    %126 = arith.truncf %125 : vector<16x8xf32> to vector<16x8xbf16>
    %127 = arith.truncf %111 : vector<8x16xf32> to vector<8x16xbf16>
    %cst_88 = arith.constant dense<0.000000e+00> : vector<16x16xf32>
    %128 = tpu.matmul %126, %127, %cst_88 {dimension_numbers = #tpu.dot_dimension_numbers<[1], [0], [0], [1], [0, 0, 1, 1], [], []>} : vector<16x8xbf16>, vector<8x16xbf16>, vector<16x16xf32> -> vector<16x16xf32>
    %129 = arith.truncf %128 : vector<16x16xf32> to vector<16x16xbf16>
    %c2_89 = arith.constant 2 : index
    %c0_90 = arith.constant 0 : index
    %c0_91 = arith.constant 0 : index
    %130 = vector.load %arg9[%c2_89, %c0_90, %c0_91] : memref<4x16x64xbf16, #tpu.memory_space<vmem>>, vector<1x16x64xbf16>
    %131 = vector.shape_cast %130 : vector<1x16x64xbf16> to vector<16x64xbf16>
    %cst_92 = arith.constant dense<0.000000e+00> : vector<16x64xf32>
    %132 = tpu.matmul %129, %131, %cst_92 {dimension_numbers = #tpu.dot_dimension_numbers<[1], [0], [0], [1], [0, 0, 1, 1], [], []>} : vector<16x16xbf16>, vector<16x64xbf16>, vector<16x64xf32> -> vector<16x64xf32>
    %133 = arith.addf %90, %132 : vector<16x64xf32>
    %c3 = arith.constant 3 : index
    %c0_93 = arith.constant 0 : index
    %c0_94 = arith.constant 0 : index
    %134 = vector.load %arg3[%c3, %c0_93, %c0_94] : memref<4x64x16xbf16, #tpu.memory_space<vmem>>, vector<1x64x16xbf16>
    %135 = vector.shape_cast %134 : vector<1x64x16xbf16> to vector<64x16xbf16>
    %cst_95 = arith.constant dense<0.000000e+00> : vector<16x16xf32>
    %136 = tpu.matmul %1, %135, %cst_95 {dimension_numbers = #tpu.dot_dimension_numbers<[1], [0], [0], [1], [0, 0, 1, 1], [], []>} : vector<16x64xbf16>, vector<64x16xbf16>, vector<16x16xf32> -> vector<16x16xf32>
    %c3_96 = arith.constant 3 : index
    %c0_97 = arith.constant 0 : index
    %c0_98 = arith.constant 0 : index
    %137 = vector.load %arg4[%c3_96, %c0_97, %c0_98] : memref<4x1x16xf32, #tpu.memory_space<vmem>>, vector<1x1x16xf32>
    %138 = vector.shape_cast %137 : vector<1x1x16xf32> to vector<1x16xf32>
    %139 = vector.broadcast %138 : vector<1x16xf32> to vector<16x16xf32>
    %140 = arith.addf %136, %139 : vector<16x16xf32>
    %c3_99 = arith.constant 3 : index
    %c0_100 = arith.constant 0 : index
    %c0_101 = arith.constant 0 : index
    %141 = vector.load %arg5[%c3_99, %c0_100, %c0_101] : memref<4x64x16xbf16, #tpu.memory_space<vmem>>, vector<1x64x16xbf16>
    %142 = vector.shape_cast %141 : vector<1x64x16xbf16> to vector<64x16xbf16>
    %cst_102 = arith.constant dense<0.000000e+00> : vector<8x16xf32>
    %143 = tpu.matmul %3, %142, %cst_102 {dimension_numbers = #tpu.dot_dimension_numbers<[1], [0], [0], [1], [0, 0, 1, 1], [], []>} : vector<8x64xbf16>, vector<64x16xbf16>, vector<8x16xf32> -> vector<8x16xf32>
    %c3_103 = arith.constant 3 : index
    %c0_104 = arith.constant 0 : index
    %c0_105 = arith.constant 0 : index
    %144 = vector.load %arg6[%c3_103, %c0_104, %c0_105] : memref<4x1x16xf32, #tpu.memory_space<vmem>>, vector<1x1x16xf32>
    %145 = vector.shape_cast %144 : vector<1x1x16xf32> to vector<1x16xf32>
    %146 = vector.broadcast %145 : vector<1x16xf32> to vector<8x16xf32>
    %147 = arith.addf %143, %146 : vector<8x16xf32>
    %c3_106 = arith.constant 3 : index
    %c0_107 = arith.constant 0 : index
    %c0_108 = arith.constant 0 : index
    %148 = vector.load %arg7[%c3_106, %c0_107, %c0_108] : memref<4x64x16xbf16, #tpu.memory_space<vmem>>, vector<1x64x16xbf16>
    %149 = vector.shape_cast %148 : vector<1x64x16xbf16> to vector<64x16xbf16>
    %cst_109 = arith.constant dense<0.000000e+00> : vector<8x16xf32>
    %150 = tpu.matmul %3, %149, %cst_109 {dimension_numbers = #tpu.dot_dimension_numbers<[1], [0], [0], [1], [0, 0, 1, 1], [], []>} : vector<8x64xbf16>, vector<64x16xbf16>, vector<8x16xf32> -> vector<8x16xf32>
    %c3_110 = arith.constant 3 : index
    %c0_111 = arith.constant 0 : index
    %c0_112 = arith.constant 0 : index
    %151 = vector.load %arg8[%c3_110, %c0_111, %c0_112] : memref<4x1x16xf32, #tpu.memory_space<vmem>>, vector<1x1x16xf32>
    %152 = vector.shape_cast %151 : vector<1x1x16xf32> to vector<1x16xf32>
    %153 = vector.broadcast %152 : vector<1x16xf32> to vector<8x16xf32>
    %154 = arith.addf %150, %153 : vector<8x16xf32>
    %155 = arith.truncf %140 : vector<16x16xf32> to vector<16x16xbf16>
    %156 = arith.truncf %147 : vector<8x16xf32> to vector<8x16xbf16>
    %cst_113 = arith.constant dense<0.000000e+00> : vector<16x8xf32>
    %157 = tpu.matmul %155, %156, %cst_113 {dimension_numbers = #tpu.dot_dimension_numbers<[1], [1], [0], [0], [0, 0, 1, 0], [], []>} : vector<16x16xbf16>, vector<8x16xbf16>, vector<16x8xf32> -> vector<16x8xf32>
    %cst_114 = arith.constant 2.500000e-01 : f32
    %158 = vector.broadcast %cst_114 : f32 to vector<16x8xf32>
    %159 = arith.mulf %157, %158 : vector<16x8xf32>
    %cst_115 = arith.constant dense<0xFF800000> : vector<16xf32>
    %160 = vector.multi_reduction <maximumf>, %159, %cst_115 [1] : vector<16x8xf32> to vector<16xf32>
    %161 = vector.shape_cast %160 : vector<16xf32> to vector<16x1xf32>
    %162 = vector.broadcast %161 : vector<16x1xf32> to vector<16x8xf32>
    %163 = arith.subf %159, %162 : vector<16x8xf32>
    %164 = math.exp %163 : vector<16x8xf32>
    %cst_116 = arith.constant dense<0.000000e+00> : vector<16xf32>
    %165 = vector.multi_reduction <add>, %164, %cst_116 [1] : vector<16x8xf32> to vector<16xf32>
    %166 = vector.shape_cast %165 : vector<16xf32> to vector<16x1xf32>
    %167 = vector.broadcast %166 : vector<16x1xf32> to vector<16x8xf32>
    %168 = arith.divf %164, %167 : vector<16x8xf32>
    %169 = arith.truncf %168 : vector<16x8xf32> to vector<16x8xbf16>
    %170 = arith.truncf %154 : vector<8x16xf32> to vector<8x16xbf16>
    %cst_117 = arith.constant dense<0.000000e+00> : vector<16x16xf32>
    %171 = tpu.matmul %169, %170, %cst_117 {dimension_numbers = #tpu.dot_dimension_numbers<[1], [0], [0], [1], [0, 0, 1, 1], [], []>} : vector<16x8xbf16>, vector<8x16xbf16>, vector<16x16xf32> -> vector<16x16xf32>
    %172 = arith.truncf %171 : vector<16x16xf32> to vector<16x16xbf16>
    %c3_118 = arith.constant 3 : index
    %c0_119 = arith.constant 0 : index
    %c0_120 = arith.constant 0 : index
    %173 = vector.load %arg9[%c3_118, %c0_119, %c0_120] : memref<4x16x64xbf16, #tpu.memory_space<vmem>>, vector<1x16x64xbf16>
    %174 = vector.shape_cast %173 : vector<1x16x64xbf16> to vector<16x64xbf16>
    %cst_121 = arith.constant dense<0.000000e+00> : vector<16x64xf32>
    %175 = tpu.matmul %172, %174, %cst_121 {dimension_numbers = #tpu.dot_dimension_numbers<[1], [0], [0], [1], [0, 0, 1, 1], [], []>} : vector<16x16xbf16>, vector<16x64xbf16>, vector<16x64xf32> -> vector<16x64xf32>
    %176 = arith.addf %133, %175 : vector<16x64xf32>
    %c0_122 = arith.constant 0 : index
    %c0_123 = arith.constant 0 : index
    %177 = vector.load %arg10[%c0_122, %c0_123] : memref<1x64xf32, #tpu.memory_space<vmem>>, vector<1x64xf32>
    %178 = vector.broadcast %177 : vector<1x64xf32> to vector<16x64xf32>
    %179 = arith.addf %176, %178 : vector<16x64xf32>
    %180 = arith.extf %1 : vector<16x64xbf16> to vector<16x64xf32>
    %181 = arith.addf %179, %180 : vector<16x64xf32>
    %c0_124 = arith.constant 0 : index
    %c0_125 = arith.constant 0 : index
    %182 = vector.load %arg11[%c0_124, %c0_125] : memref<1x64xf32, #tpu.memory_space<vmem>>, vector<1x64xf32>
    %c0_126 = arith.constant 0 : index
    %c0_127 = arith.constant 0 : index
    %183 = vector.load %arg12[%c0_126, %c0_127] : memref<1x64xf32, #tpu.memory_space<vmem>>, vector<1x64xf32>
    %cst_128 = arith.constant dense<0.000000e+00> : vector<16xf32>
    %184 = vector.multi_reduction <add>, %181, %cst_128 [1] : vector<16x64xf32> to vector<16xf32>
    %185 = vector.shape_cast %184 : vector<16xf32> to vector<16x1xf32>
    %cst_129 = arith.constant 6.400000e+01 : f32
    %186 = vector.broadcast %cst_129 : f32 to vector<16x1xf32>
    %187 = arith.divf %185, %186 : vector<16x1xf32>
    %188 = vector.broadcast %187 : vector<16x1xf32> to vector<16x64xf32>
    %189 = arith.subf %181, %188 : vector<16x64xf32>
    %190 = arith.mulf %189, %189 : vector<16x64xf32>
    %cst_130 = arith.constant dense<0.000000e+00> : vector<16xf32>
    %191 = vector.multi_reduction <add>, %190, %cst_130 [1] : vector<16x64xf32> to vector<16xf32>
    %192 = vector.shape_cast %191 : vector<16xf32> to vector<16x1xf32>
    %cst_131 = arith.constant 6.400000e+01 : f32
    %193 = vector.broadcast %cst_131 : f32 to vector<16x1xf32>
    %194 = arith.divf %192, %193 : vector<16x1xf32>
    %195 = vector.broadcast %187 : vector<16x1xf32> to vector<16x64xf32>
    %196 = arith.subf %181, %195 : vector<16x64xf32>
    %cst_132 = arith.constant 9.99999974E-6 : f32
    %197 = vector.broadcast %cst_132 : f32 to vector<16x1xf32>
    %198 = arith.addf %194, %197 : vector<16x1xf32>
    %199 = math.rsqrt %198 : vector<16x1xf32>
    %200 = vector.broadcast %199 : vector<16x1xf32> to vector<16x64xf32>
    %201 = arith.mulf %196, %200 : vector<16x64xf32>
    %202 = vector.broadcast %182 : vector<1x64xf32> to vector<16x64xf32>
    %203 = arith.mulf %201, %202 : vector<16x64xf32>
    %204 = vector.broadcast %183 : vector<1x64xf32> to vector<16x64xf32>
    %205 = arith.addf %203, %204 : vector<16x64xf32>
    %206 = arith.truncf %205 : vector<16x64xf32> to vector<16x64xbf16>
    %c0_133 = arith.constant 0 : index
    %c0_134 = arith.constant 0 : index
    %c0_135 = arith.constant 0 : index
    %207 = vector.load %arg13[%c0_133, %c0_134, %c0_135] : memref<1x16x64xbf16, #tpu.memory_space<vmem>>, vector<1x16x64xbf16>
    %208 = vector.shape_cast %207 : vector<1x16x64xbf16> to vector<16x64xbf16>
    %209 = vector.shape_cast %206 : vector<16x64xbf16> to vector<1x16x64xbf16>
    tpu.vector_store %arg13[%c0_133, %c0_134, %c0_135], %209 {strides = array<i32>} : memref<1x16x64xbf16, #tpu.memory_space<vmem>>, vector<1x16x64xbf16>,
    return
  }
  func.func @transform_0(%arg0: i32) -> (i32, i32, i32) {
    %c0_i32 = arith.constant 0 : i32
    %c0_i32_0 = arith.constant 0 : i32
    %c0_i32_1 = arith.constant 0 : i32
    return %arg0, %c0_i32, %c0_i32_0 : i32, i32, i32
  }
  func.func @transform_1(%arg0: i32) -> (i32, i32, i32) {
    %c0_i32 = arith.constant 0 : i32
    %c0_i32_0 = arith.constant 0 : i32
    %c0_i32_1 = arith.constant 0 : i32
    return %arg0, %c0_i32, %c0_i32_0 : i32, i32, i32
  }
  func.func @transform_2(%arg0: i32) -> (i32, i32, i32) {
    %c0_i32 = arith.constant 0 : i32
    %c0_i32_0 = arith.constant 0 : i32
    %c0_i32_1 = arith.constant 0 : i32
    %c0_i32_2 = arith.constant 0 : i32
    return %c0_i32, %c0_i32_0, %c0_i32_1 : i32, i32, i32
  }
  func.func @transform_3(%arg0: i32) -> (i32, i32, i32) {
    %c0_i32 = arith.constant 0 : i32
    %c0_i32_0 = arith.constant 0 : i32
    %c0_i32_1 = arith.constant 0 : i32
    %c0_i32_2 = arith.constant 0 : i32
    return %c0_i32, %c0_i32_0, %c0_i32_1 : i32, i32, i32
  }
  func.func @transform_4(%arg0: i32) -> (i32, i32, i32) {
    %c0_i32 = arith.constant 0 : i32
    %c0_i32_0 = arith.constant 0 : i32
    %c0_i32_1 = arith.constant 0 : i32
    %c0_i32_2 = arith.constant 0 : i32
    return %c0_i32, %c0_i32_0, %c0_i32_1 : i32, i32, i32
  }
  func.func @transform_5(%arg0: i32) -> (i32, i32, i32) {
    %c0_i32 = arith.constant 0 : i32
    %c0_i32_0 = arith.constant 0 : i32
    %c0_i32_1 = arith.constant 0 : i32
    %c0_i32_2 = arith.constant 0 : i32
    return %c0_i32, %c0_i32_0, %c0_i32_1 : i32, i32, i32
  }
  func.func @transform_6(%arg0: i32) -> (i32, i32, i32) {
    %c0_i32 = arith.constant 0 : i32
    %c0_i32_0 = arith.constant 0 : i32
    %c0_i32_1 = arith.constant 0 : i32
    %c0_i32_2 = arith.constant 0 : i32
    return %c0_i32, %c0_i32_0, %c0_i32_1 : i32, i32, i32
  }
  func.func @transform_7(%arg0: i32) -> (i32, i32, i32) {
    %c0_i32 = arith.constant 0 : i32
    %c0_i32_0 = arith.constant 0 : i32
    %c0_i32_1 = arith.constant 0 : i32
    %c0_i32_2 = arith.constant 0 : i32
    return %c0_i32, %c0_i32_0, %c0_i32_1 : i32, i32, i32
  }
  func.func @transform_8(%arg0: i32) -> (i32, i32, i32) {
    %c0_i32 = arith.constant 0 : i32
    %c0_i32_0 = arith.constant 0 : i32
    %c0_i32_1 = arith.constant 0 : i32
    %c0_i32_2 = arith.constant 0 : i32
    return %c0_i32, %c0_i32_0, %c0_i32_1 : i32, i32, i32
  }
  func.func @transform_9(%arg0: i32) -> (i32, i32) {
    %c0_i32 = arith.constant 0 : i32
    %c0_i32_0 = arith.constant 0 : i32
    %c0_i32_1 = arith.constant 0 : i32
    return %c0_i32, %c0_i32_0 : i32, i32
  }
  func.func @transform_10(%arg0: i32) -> (i32, i32) {
    %c0_i32 = arith.constant 0 : i32
    %c0_i32_0 = arith.constant 0 : i32
    %c0_i32_1 = arith.constant 0 : i32
    return %c0_i32, %c0_i32_0 : i32, i32
  }
  func.func @transform_11(%arg0: i32) -> (i32, i32) {
    %c0_i32 = arith.constant 0 : i32
    %c0_i32_0 = arith.constant 0 : i32
    %c0_i32_1 = arith.constant 0 : i32
    return %c0_i32, %c0_i32_0 : i32, i32
  }
  func.func @transform_12(%arg0: i32) -> (i32, i32, i32) {
    %c0_i32 = arith.constant 0 : i32
    %c0_i32_0 = arith.constant 0 : i32
    %c0_i32_1 = arith.constant 0 : i32
    return %arg0, %c0_i32, %c0_i32_0 : i32, i32, i32
  }
}

module attributes {stable_mosaic.version = 11 : i64} {
  func.func @_ffn_ln_kernel(%arg0: i32, %arg1: memref<1x16x64xbf16, #tpu.memory_space<vmem>>, %arg2: memref<64x128xbf16, #tpu.memory_space<vmem>>, %arg3: memref<1x128xf32, #tpu.memory_space<vmem>>, %arg4: memref<128x64xbf16, #tpu.memory_space<vmem>>, %arg5: memref<1x64xf32, #tpu.memory_space<vmem>>, %arg6: memref<1x64xf32, #tpu.memory_space<vmem>>, %arg7: memref<1x64xf32, #tpu.memory_space<vmem>>, %arg8: memref<1x16x64xbf16, #tpu.memory_space<vmem>>) attributes {dimension_semantics = [#tpu.dimension_semantics<parallel>], iteration_bounds = array<i64: 2>, scalar_prefetch = 0 : i64, scratch_operands = 0 : i64, tpu.core_type = #tpu.core_type<tc>, window_params = [{transform_indices = @transform_0, window_bounds = array<i64: 1, 16, 64>}, {pipeline_mode = #tpu.pipeline_mode<synchronous>, transform_indices = @transform_1, window_bounds = array<i64: 64, 128>}, {pipeline_mode = #tpu.pipeline_mode<synchronous>, transform_indices = @transform_2, window_bounds = array<i64: 1, 128>}, {pipeline_mode = #tpu.pipeline_mode<synchronous>, transform_indices = @transform_3, window_bounds = array<i64: 128, 64>}, {pipeline_mode = #tpu.pipeline_mode<synchronous>, transform_indices = @transform_4, window_bounds = array<i64: 1, 64>}, {pipeline_mode = #tpu.pipeline_mode<synchronous>, transform_indices = @transform_5, window_bounds = array<i64: 1, 64>}, {pipeline_mode = #tpu.pipeline_mode<synchronous>, transform_indices = @transform_6, window_bounds = array<i64: 1, 64>}, {transform_indices = @transform_7, window_bounds = array<i64: 1, 16, 64>}]} {
    %c0 = arith.constant 0 : index
    %c0_0 = arith.constant 0 : index
    %c0_1 = arith.constant 0 : index
    %0 = vector.load %arg1[%c0, %c0_0, %c0_1] : memref<1x16x64xbf16, #tpu.memory_space<vmem>>, vector<1x16x64xbf16>
    %1 = vector.shape_cast %0 : vector<1x16x64xbf16> to vector<16x64xbf16>
    %c0_2 = arith.constant 0 : index
    %c0_3 = arith.constant 0 : index
    %2 = vector.load %arg2[%c0_2, %c0_3] : memref<64x128xbf16, #tpu.memory_space<vmem>>, vector<64x128xbf16>
    %cst = arith.constant dense<0.000000e+00> : vector<16x128xf32>
    %3 = tpu.matmul %1, %2, %cst {dimension_numbers = #tpu.dot_dimension_numbers<[1], [0], [0], [1], [0, 0, 1, 1], [], []>} : vector<16x64xbf16>, vector<64x128xbf16>, vector<16x128xf32> -> vector<16x128xf32>
    %c0_4 = arith.constant 0 : index
    %c0_5 = arith.constant 0 : index
    %4 = vector.load %arg3[%c0_4, %c0_5] : memref<1x128xf32, #tpu.memory_space<vmem>>, vector<1x128xf32>
    %5 = vector.broadcast %4 : vector<1x128xf32> to vector<16x128xf32>
    %6 = arith.addf %3, %5 : vector<16x128xf32>
    %cst_6 = arith.constant 0.000000e+00 : f32
    %7 = vector.broadcast %cst_6 : f32 to vector<16x128xf32>
    %8 = arith.maximumf %6, %7 : vector<16x128xf32>
    %9 = arith.truncf %8 : vector<16x128xf32> to vector<16x128xbf16>
    %c0_7 = arith.constant 0 : index
    %c0_8 = arith.constant 0 : index
    %10 = vector.load %arg4[%c0_7, %c0_8] : memref<128x64xbf16, #tpu.memory_space<vmem>>, vector<128x64xbf16>
    %cst_9 = arith.constant dense<0.000000e+00> : vector<16x64xf32>
    %11 = tpu.matmul %9, %10, %cst_9 {dimension_numbers = #tpu.dot_dimension_numbers<[1], [0], [0], [1], [0, 0, 1, 1], [], []>} : vector<16x128xbf16>, vector<128x64xbf16>, vector<16x64xf32> -> vector<16x64xf32>
    %c0_10 = arith.constant 0 : index
    %c0_11 = arith.constant 0 : index
    %12 = vector.load %arg5[%c0_10, %c0_11] : memref<1x64xf32, #tpu.memory_space<vmem>>, vector<1x64xf32>
    %13 = vector.broadcast %12 : vector<1x64xf32> to vector<16x64xf32>
    %14 = arith.addf %11, %13 : vector<16x64xf32>
    %15 = arith.extf %1 : vector<16x64xbf16> to vector<16x64xf32>
    %16 = arith.addf %14, %15 : vector<16x64xf32>
    %c0_12 = arith.constant 0 : index
    %c0_13 = arith.constant 0 : index
    %17 = vector.load %arg6[%c0_12, %c0_13] : memref<1x64xf32, #tpu.memory_space<vmem>>, vector<1x64xf32>
    %c0_14 = arith.constant 0 : index
    %c0_15 = arith.constant 0 : index
    %18 = vector.load %arg7[%c0_14, %c0_15] : memref<1x64xf32, #tpu.memory_space<vmem>>, vector<1x64xf32>
    %cst_16 = arith.constant dense<0.000000e+00> : vector<16xf32>
    %19 = vector.multi_reduction <add>, %16, %cst_16 [1] : vector<16x64xf32> to vector<16xf32>
    %20 = vector.shape_cast %19 : vector<16xf32> to vector<16x1xf32>
    %cst_17 = arith.constant 6.400000e+01 : f32
    %21 = vector.broadcast %cst_17 : f32 to vector<16x1xf32>
    %22 = arith.divf %20, %21 : vector<16x1xf32>
    %23 = vector.broadcast %22 : vector<16x1xf32> to vector<16x64xf32>
    %24 = arith.subf %16, %23 : vector<16x64xf32>
    %25 = arith.mulf %24, %24 : vector<16x64xf32>
    %cst_18 = arith.constant dense<0.000000e+00> : vector<16xf32>
    %26 = vector.multi_reduction <add>, %25, %cst_18 [1] : vector<16x64xf32> to vector<16xf32>
    %27 = vector.shape_cast %26 : vector<16xf32> to vector<16x1xf32>
    %cst_19 = arith.constant 6.400000e+01 : f32
    %28 = vector.broadcast %cst_19 : f32 to vector<16x1xf32>
    %29 = arith.divf %27, %28 : vector<16x1xf32>
    %30 = vector.broadcast %22 : vector<16x1xf32> to vector<16x64xf32>
    %31 = arith.subf %16, %30 : vector<16x64xf32>
    %cst_20 = arith.constant 9.99999974E-6 : f32
    %32 = vector.broadcast %cst_20 : f32 to vector<16x1xf32>
    %33 = arith.addf %29, %32 : vector<16x1xf32>
    %34 = math.rsqrt %33 : vector<16x1xf32>
    %35 = vector.broadcast %34 : vector<16x1xf32> to vector<16x64xf32>
    %36 = arith.mulf %31, %35 : vector<16x64xf32>
    %37 = vector.broadcast %17 : vector<1x64xf32> to vector<16x64xf32>
    %38 = arith.mulf %36, %37 : vector<16x64xf32>
    %39 = vector.broadcast %18 : vector<1x64xf32> to vector<16x64xf32>
    %40 = arith.addf %38, %39 : vector<16x64xf32>
    %41 = arith.truncf %40 : vector<16x64xf32> to vector<16x64xbf16>
    %c0_21 = arith.constant 0 : index
    %c0_22 = arith.constant 0 : index
    %c0_23 = arith.constant 0 : index
    %42 = vector.load %arg8[%c0_21, %c0_22, %c0_23] : memref<1x16x64xbf16, #tpu.memory_space<vmem>>, vector<1x16x64xbf16>
    %43 = vector.shape_cast %42 : vector<1x16x64xbf16> to vector<16x64xbf16>
    %44 = vector.shape_cast %41 : vector<16x64xbf16> to vector<1x16x64xbf16>
    tpu.vector_store %arg8[%c0_21, %c0_22, %c0_23], %44 {strides = array<i32>} : memref<1x16x64xbf16, #tpu.memory_space<vmem>>, vector<1x16x64xbf16>,
    return
  }
  func.func @transform_0(%arg0: i32) -> (i32, i32, i32) {
    %c0_i32 = arith.constant 0 : i32
    %c0_i32_0 = arith.constant 0 : i32
    %c0_i32_1 = arith.constant 0 : i32
    return %arg0, %c0_i32, %c0_i32_0 : i32, i32, i32
  }
  func.func @transform_1(%arg0: i32) -> (i32, i32) {
    %c0_i32 = arith.constant 0 : i32
    %c0_i32_0 = arith.constant 0 : i32
    %c0_i32_1 = arith.constant 0 : i32
    return %c0_i32, %c0_i32_0 : i32, i32
  }
  func.func @transform_2(%arg0: i32) -> (i32, i32) {
    %c0_i32 = arith.constant 0 : i32
    %c0_i32_0 = arith.constant 0 : i32
    %c0_i32_1 = arith.constant 0 : i32
    return %c0_i32, %c0_i32_0 : i32, i32
  }
  func.func @transform_3(%arg0: i32) -> (i32, i32) {
    %c0_i32 = arith.constant 0 : i32
    %c0_i32_0 = arith.constant 0 : i32
    %c0_i32_1 = arith.constant 0 : i32
    return %c0_i32, %c0_i32_0 : i32, i32
  }
  func.func @transform_4(%arg0: i32) -> (i32, i32) {
    %c0_i32 = arith.constant 0 : i32
    %c0_i32_0 = arith.constant 0 : i32
    %c0_i32_1 = arith.constant 0 : i32
    return %c0_i32, %c0_i32_0 : i32, i32
  }
  func.func @transform_5(%arg0: i32) -> (i32, i32) {
    %c0_i32 = arith.constant 0 : i32
    %c0_i32_0 = arith.constant 0 : i32
    %c0_i32_1 = arith.constant 0 : i32
    return %c0_i32, %c0_i32_0 : i32, i32
  }
  func.func @transform_6(%arg0: i32) -> (i32, i32) {
    %c0_i32 = arith.constant 0 : i32
    %c0_i32_0 = arith.constant 0 : i32
    %c0_i32_1 = arith.constant 0 : i32
    return %c0_i32, %c0_i32_0 : i32, i32
  }
  func.func @transform_7(%arg0: i32) -> (i32, i32, i32) {
    %c0_i32 = arith.constant 0 : i32
    %c0_i32_0 = arith.constant 0 : i32
    %c0_i32_1 = arith.constant 0 : i32
    return %arg0, %c0_i32, %c0_i32_0 : i32, i32, i32
  }
}

module attributes {stable_mosaic.version = 11 : i64} {
  func.func @_ln_linear_kernel(%arg0: i32, %arg1: i32, %arg2: memref<32x64xbf16, #tpu.memory_space<vmem>>, %arg3: memref<1x64xf32, #tpu.memory_space<vmem>>, %arg4: memref<1x64xf32, #tpu.memory_space<vmem>>, %arg5: memref<64x128xbf16, #tpu.memory_space<vmem>>, %arg6: memref<1x128xf32, #tpu.memory_space<vmem>>, %arg7: memref<32x128xf32, #tpu.memory_space<vmem>>) attributes {dimension_semantics = [#tpu.dimension_semantics<parallel>, #tpu.dimension_semantics<parallel>], iteration_bounds = array<i64: 1, 1>, scalar_prefetch = 0 : i64, scratch_operands = 0 : i64, tpu.core_type = #tpu.core_type<tc>, window_params = [{transform_indices = @transform_0, window_bounds = array<i64: 32, 64>}, {pipeline_mode = #tpu.pipeline_mode<synchronous>, transform_indices = @transform_1, window_bounds = array<i64: 1, 64>}, {pipeline_mode = #tpu.pipeline_mode<synchronous>, transform_indices = @transform_2, window_bounds = array<i64: 1, 64>}, {transform_indices = @transform_3, window_bounds = array<i64: 64, 128>}, {transform_indices = @transform_4, window_bounds = array<i64: 1, 128>}, {transform_indices = @transform_5, window_bounds = array<i64: 32, 128>}]} {
    %c0 = arith.constant 0 : index
    %c0_0 = arith.constant 0 : index
    %0 = vector.load %arg2[%c0, %c0_0] : memref<32x64xbf16, #tpu.memory_space<vmem>>, vector<32x64xbf16>
    %1 = arith.extf %0 : vector<32x64xbf16> to vector<32x64xf32>
    %c0_1 = arith.constant 0 : index
    %c0_2 = arith.constant 0 : index
    %2 = vector.load %arg3[%c0_1, %c0_2] : memref<1x64xf32, #tpu.memory_space<vmem>>, vector<1x64xf32>
    %c0_3 = arith.constant 0 : index
    %c0_4 = arith.constant 0 : index
    %3 = vector.load %arg4[%c0_3, %c0_4] : memref<1x64xf32, #tpu.memory_space<vmem>>, vector<1x64xf32>
    %cst = arith.constant dense<0.000000e+00> : vector<32xf32>
    %4 = vector.multi_reduction <add>, %1, %cst [1] : vector<32x64xf32> to vector<32xf32>
    %5 = vector.shape_cast %4 : vector<32xf32> to vector<32x1xf32>
    %cst_5 = arith.constant 6.400000e+01 : f32
    %6 = vector.broadcast %cst_5 : f32 to vector<32x1xf32>
    %7 = arith.divf %5, %6 : vector<32x1xf32>
    %8 = vector.broadcast %7 : vector<32x1xf32> to vector<32x64xf32>
    %9 = arith.subf %1, %8 : vector<32x64xf32>
    %10 = arith.mulf %9, %9 : vector<32x64xf32>
    %cst_6 = arith.constant dense<0.000000e+00> : vector<32xf32>
    %11 = vector.multi_reduction <add>, %10, %cst_6 [1] : vector<32x64xf32> to vector<32xf32>
    %12 = vector.shape_cast %11 : vector<32xf32> to vector<32x1xf32>
    %cst_7 = arith.constant 6.400000e+01 : f32
    %13 = vector.broadcast %cst_7 : f32 to vector<32x1xf32>
    %14 = arith.divf %12, %13 : vector<32x1xf32>
    %15 = vector.broadcast %7 : vector<32x1xf32> to vector<32x64xf32>
    %16 = arith.subf %1, %15 : vector<32x64xf32>
    %cst_8 = arith.constant 9.99999974E-6 : f32
    %17 = vector.broadcast %cst_8 : f32 to vector<32x1xf32>
    %18 = arith.addf %14, %17 : vector<32x1xf32>
    %19 = math.rsqrt %18 : vector<32x1xf32>
    %20 = vector.broadcast %19 : vector<32x1xf32> to vector<32x64xf32>
    %21 = arith.mulf %16, %20 : vector<32x64xf32>
    %22 = vector.broadcast %2 : vector<1x64xf32> to vector<32x64xf32>
    %23 = arith.mulf %21, %22 : vector<32x64xf32>
    %24 = vector.broadcast %3 : vector<1x64xf32> to vector<32x64xf32>
    %25 = arith.addf %23, %24 : vector<32x64xf32>
    %26 = arith.truncf %25 : vector<32x64xf32> to vector<32x64xbf16>
    %c0_9 = arith.constant 0 : index
    %c0_10 = arith.constant 0 : index
    %27 = vector.load %arg5[%c0_9, %c0_10] : memref<64x128xbf16, #tpu.memory_space<vmem>>, vector<64x128xbf16>
    %cst_11 = arith.constant dense<0.000000e+00> : vector<32x128xf32>
    %28 = tpu.matmul %26, %27, %cst_11 {dimension_numbers = #tpu.dot_dimension_numbers<[1], [0], [0], [1], [0, 0, 1, 1], [], []>} : vector<32x64xbf16>, vector<64x128xbf16>, vector<32x128xf32> -> vector<32x128xf32>
    %c0_12 = arith.constant 0 : index
    %c0_13 = arith.constant 0 : index
    %29 = vector.load %arg6[%c0_12, %c0_13] : memref<1x128xf32, #tpu.memory_space<vmem>>, vector<1x128xf32>
    %30 = vector.broadcast %29 : vector<1x128xf32> to vector<32x128xf32>
    %31 = arith.addf %28, %30 : vector<32x128xf32>
    %c0_14 = arith.constant 0 : index
    %c0_15 = arith.constant 0 : index
    %32 = vector.load %arg7[%c0_14, %c0_15] : memref<32x128xf32, #tpu.memory_space<vmem>>, vector<32x128xf32>
    tpu.vector_store %arg7[%c0_14, %c0_15], %31 {strides = array<i32>} : memref<32x128xf32, #tpu.memory_space<vmem>>, vector<32x128xf32>,
    return
  }
  func.func @transform_0(%arg0: i32, %arg1: i32) -> (i32, i32) {
    %c0_i32 = arith.constant 0 : i32
    %c0_i32_0 = arith.constant 0 : i32
    return %arg0, %c0_i32 : i32, i32
  }
  func.func @transform_1(%arg0: i32, %arg1: i32) -> (i32, i32) {
    %c0_i32 = arith.constant 0 : i32
    %c0_i32_0 = arith.constant 0 : i32
    %c0_i32_1 = arith.constant 0 : i32
    return %c0_i32, %c0_i32_0 : i32, i32
  }
  func.func @transform_2(%arg0: i32, %arg1: i32) -> (i32, i32) {
    %c0_i32 = arith.constant 0 : i32
    %c0_i32_0 = arith.constant 0 : i32
    %c0_i32_1 = arith.constant 0 : i32
    return %c0_i32, %c0_i32_0 : i32, i32
  }
  func.func @transform_3(%arg0: i32, %arg1: i32) -> (i32, i32) {
    %c0_i32 = arith.constant 0 : i32
    %c0_i32_0 = arith.constant 0 : i32
    return %c0_i32, %arg1 : i32, i32
  }
  func.func @transform_4(%arg0: i32, %arg1: i32) -> (i32, i32) {
    %c0_i32 = arith.constant 0 : i32
    %c0_i32_0 = arith.constant 0 : i32
    return %c0_i32, %arg1 : i32, i32
  }
  func.func @transform_5(%arg0: i32, %arg1: i32) -> (i32, i32) {
    %c0_i32 = arith.constant 0 : i32
    return %arg0, %arg1 : i32, i32
  }
}

</mosaic_0001>

<llo_original>
// kernel: transformer_translator_forward.16
$region0: #{transformer_translator_forward.16}
  #allocation0 [shape = 'u32[]', space=smem, size = 0x4, offset = 0x4, fixed_abs, tag = 'smem constant byte address 0x4 - core index']
  #allocation1 [shape = 'u32[144,128]{1,0:T(1,128)}', space=vmem, size = 0x12000, scoped, tag = 'internal scratch']
  %s0 = inlined_call_operand.vmem [shape: bf16[2,8,64], index: 0, kind: input, shape index: {}]
  %s1 = inlined_call_operand.vmem [shape: f32[1,64], index: 1, kind: input, shape index: {}]
  %s2 = inlined_call_operand.vmem [shape: f32[1,64], index: 2, kind: input, shape index: {}]
  %s3 = inlined_call_operand.vmem [shape: bf16[2,8,64], index: 3, kind: output, shape index: {}]
  %s4 = sld [smem:[#allocation0]]
  $region45: #{transformer_translator_forward.16} parent=0
    _
  %s6 = ssub.s32 1, %s4
  %s7 = scalar_select 0, %s6, %s4
  loop: start=0, step=1, limit=4
  $region2: #{transformer_translator_forward.16} parent=0 // loop_pre_header
    _
  $region3: #{transformer_translator_forward.16} parent=0 // loop_header
    %s9 = sphi 0, %s13
    %p10 = scmp.ge.s32.totalorder %s9, 4
    %s19 = sphi 0, %s21
    %s22 = sphi 0, %s19
    %s23 = sphi 0, %s22
    %s39 = sphi 0, %s23
    %s43 = sphi 0, %s43
    %s45 = sphi 0, %s43
    %s46 = sphi 0, %s45
    %s60 = sphi 0, %s46
    %s64 = sphi 0, %s64
    %s66 = sphi 0, %s64
    %s67 = sphi 0, %s66
    %s81 = sphi 0, %s67
    %s87 = sphi 0, %s89
    %s90 = sphi 0, %s87
    %s91 = sphi 0, %s90
    %s107 = sphi 0, %s91
  $region4: #{transformer_translator_forward.16} parent=0 // loop_header_branch
    %12 = sbr.rel (%p10) target = $region8
  $region5: #{transformer_translator_forward.16} parent=0 // loop_body
    %s14 = ssub.s32 %s9, 1
    %s15 = ssub.s32 %s9, 2
    %s16 = sadd.s32 %s9, 1
    %s17 = ssub.s32 %s9, %s16
    %p18 = scmp.eq.s32.totalorder %s17, 0
    %s20 = sadd.s32 %s19, 1
    %s21 = scalar_select %p18, %s19, %s20
    %p24 = pneg %p18
    %p25 = scmp.eq.s32.totalorder %s9, 1
    %p26 = por %p24, %p25
    %p27 = scmp.ne.s32.totalorder %s19, %s22
    %p28 = scmp.eq.s32.totalorder %s9, 0
    %p29 = por %p27, %p28
    %p30 = scmp.ne.s32.totalorder %s19, %s22
    %p31 = scmp.eq.s32.totalorder %s14, 1
    %p32 = por %p30, %p31
    %p33 = scmp.ne.s32.totalorder %s22, %s23
    %p34 = scmp.eq.s32.totalorder %s14, 0
    %p35 = por %p33, %p34
    %p36 = scmp.ne.s32.totalorder %s22, %s23
    %p37 = scmp.eq.s32.totalorder %s15, 1
    %p38 = por %p36, %p37
    %p40 = scmp.ne.s32.totalorder %s23, %s39
    %p41 = scmp.eq.s32.totalorder %s15, 0
    %p42 = por %p40, %p41
    %s44 = sadd.s32 %s43, 1
    %p47 = scmp.eq.s32.totalorder %s9, 1
    %p48 = scmp.ne.s32.totalorder %s43, %s45
    %p49 = scmp.eq.s32.totalorder %s9, 0
    %p50 = por %p48, %p49
    %p51 = scmp.ne.s32.totalorder %s43, %s45
    %p52 = scmp.eq.s32.totalorder %s14, 1
    %p53 = por %p51, %p52
    %p54 = scmp.ne.s32.totalorder %s45, %s46
    %p55 = scmp.eq.s32.totalorder %s14, 0
    %p56 = por %p54, %p55
    %p57 = scmp.ne.s32.totalorder %s45, %s46
    %p58 = scmp.eq.s32.totalorder %s15, 1
    %p59 = por %p57, %p58
    %p61 = scmp.ne.s32.totalorder %s46, %s60
    %p62 = scmp.eq.s32.totalorder %s15, 0
    %p63 = por %p61, %p62
    %s65 = sadd.s32 %s64, 1
    %p68 = scmp.eq.s32.totalorder %s9, 1
    %p69 = scmp.ne.s32.totalorder %s64, %s66
    %p70 = scmp.eq.s32.totalorder %s9, 0
    %p71 = por %p69, %p70
    %p72 = scmp.ne.s32.totalorder %s64, %s66
    %p73 = scmp.eq.s32.totalorder %s14, 1
    %p74 = por %p72, %p73
    %p75 = scmp.ne.s32.totalorder %s66, %s67
    %p76 = scmp.eq.s32.totalorder %s14, 0
    %p77 = por %p75, %p76
    %p78 = scmp.ne.s32.totalorder %s66, %s67
    %p79 = scmp.eq.s32.totalorder %s15, 1
    %p80 = por %p78, %p79
    %p82 = scmp.ne.s32.totalorder %s67, %s81
    %p83 = scmp.eq.s32.totalorder %s15, 0
    %p84 = por %p82, %p83
    %s85 = ssub.s32 %s9, %s16
    %p86 = scmp.eq.s32.totalorder %s85, 0
    %s88 = sadd.s32 %s87, 1
    %s89 = scalar_select %p86, %s87, %s88
    %p92 = pneg %p86
    %p93 = scmp.eq.s32.totalorder %s9, 1
    %p94 = por %p92, %p93
    %p95 = scmp.ne.s32.totalorder %s87, %s90
    %p96 = scmp.eq.s32.totalorder %s9, 0
    %p97 = por %p95, %p96
    %p98 = scmp.ne.s32.totalorder %s87, %s90
    %p99 = scmp.eq.s32.totalorder %s14, 1
    %p100 = por %p98, %p99
    %p101 = scmp.ne.s32.totalorder %s90, %s91
    %p102 = scmp.eq.s32.totalorder %s14, 0
    %p103 = por %p101, %p102
    %p104 = scmp.ne.s32.totalorder %s90, %s91
    %p105 = scmp.eq.s32.totalorder %s15, 1
    %p106 = por %p104, %p105
    %p108 = scmp.ne.s32.totalorder %s91, %s107
    %p109 = scmp.eq.s32.totalorder %s15, 0
    %p110 = por %p108, %p109
    %p111 = scmp.le.s32.totalorder 1, %s9
    %p112 = scmp.lt.s32.totalorder %s9, 3
    %p113 = pnand %p111, %p112
    %p114 = pneg %p113
    // Predicated region
    $region9: #{transformer_translator_forward.16} parent=5 // pred_check
      _
    $region10: #{transformer_translator_forward.16} parent=5 // pred_check_branch
      %116 = sbr.rel (%p113) target = $region12
    $region11: #{transformer_translator_forward.16} parent=5 // pred_region
      %s117 = ssub.s32 %s9, 1
      // Predicated region
      $region13: #{transformer_translator_forward.16} parent=11 // pred_check
        %p118 = pneg %p56
      $region14: #{transformer_translator_forward.16} parent=11 // pred_check_branch
        %120 = sbr.rel (%p118) target = $region16
      $region15: #{transformer_translator_forward.16} parent=11 // pred_region
        _
      $region16: #{transformer_translator_forward.16} parent=11 // pred_fallthru
        _
      // Predicated region
      $region17: #{transformer_translator_forward.16} parent=11 // pred_check
        %p121 = pneg %p77
      $region18: #{transformer_translator_forward.16} parent=11 // pred_check_branch
        %123 = sbr.rel (%p121) target = $region20
      $region19: #{transformer_translator_forward.16} parent=11 // pred_region
        _
      $region20: #{transformer_translator_forward.16} parent=11 // pred_fallthru
        _
    $region12: #{transformer_translator_forward.16} parent=5 // pred_fallthru
      _
    %p124 = scmp.lt.s32.totalorder %s9, 2
    // Predicated region
    $region21: #{transformer_translator_forward.16} parent=5 // pred_check
      %p125 = pneg %p124
    $region22: #{transformer_translator_forward.16} parent=5 // pred_check_branch
      %127 = sbr.rel (%p125) target = $region24
    $region23: #{transformer_translator_forward.16} parent=5 // pred_region
      // Predicated region
      $region25: #{transformer_translator_forward.16} parent=23 // pred_check
        %p128 = pneg %p29
      $region26: #{transformer_translator_forward.16} parent=23 // pred_check_branch
        %130 = sbr.rel (%p128) target = $region28
      $region27: #{transformer_translator_forward.16} parent=23 // pred_region
        %p131 = scmp.lt.s32.totalorder %s9, 1
        %s132 = scalar_select %p131, %s9, 1
        %s133 = smul.addr %s132, 4
        %s134 = scalar_lea.vmem %s0, %s133
      $region28: #{transformer_translator_forward.16} parent=23 // pred_fallthru
        _
    $region24: #{transformer_translator_forward.16} parent=5 // pred_fallthru
      _
    %p135 = scmp.le.s32.totalorder 1, %s9
    %p136 = scmp.lt.s32.totalorder %s9, 3
    %p137 = pnand %p135, %p136
    %p138 = pneg %p137
    // Predicated region
    $region29: #{transformer_translator_forward.16} parent=5 // pred_check
      _
    $region30: #{transformer_translator_forward.16} parent=5 // pred_check_branch
      %140 = sbr.rel (%p137) target = $region32
    $region31: #{transformer_translator_forward.16} parent=5 // pred_region
      %s141 = ssub.s32 %s9, 1
      %p142 = scmp.lt.s32.totalorder %s14, 1
      %s143 = scalar_select %p142, %s14, 1
      %s144 = smul.addr %s143, 4
      %s145 = scalar_lea.vmem %s0, %s144
      %p146 = pneg %p35
      %p147 = pneg %p32
      %p148 = pneg %p56
      %p149 = pneg %p53
      %p150 = pneg %p77
      %p151 = pneg %p74
      %p152 = pneg %p103
      %p153 = pneg %p100
      %p154 = scmp.lt.s32.totalorder %s14, 1
      %s155 = scalar_select %p154, %s14, 1
      %s156 = smul.addr %s155, 4
      %s157 = scalar_lea.vmem %s3, %s156
      %p158 = scmp.lt.s32.totalorder %s14, 1
      %s159 = scalar_select %p158, %s14, 1
      %s160 = smul.addr %s159, 4
      %s161 = scalar_lea.vmem %s0, %s160
      %p162 = scmp.lt.s32.totalorder %s14, 1
      %s163 = scalar_select %p162, %s14, 1
      %s164 = smul.addr %s163, 4
      %s165 = scalar_lea.vmem %s3, %s164
      %v166 = vld [vmem:[%s161] sm:$0xf]
      %v167 = vunpack.c.l.bf16 %v166
      %v168 = vld [vmem:[%s1] sm:$0x1]
      %v169 = vld [vmem:[%s2] sm:$0x1]
      %vm170 = vcmask 523264
      %v171 = vsel %vm170, %v167, 0.0
      %172 = vadd.xlane.f32.xlu0 %v171
      %v173 = vpop.xlane.xlu0 %172
      %v174 = vrcp.pop 64.0
      %v175 = vmul.f32 %v173, %v174
      %v176 = vsub.f32 %v167, %v175
      %v177 = vmul.f32 %v176, %v176
      %v178 = vsel %vm170, %v177, 0.0
      %179 = vadd.xlane.f32.xlu0 %v178
      %v180 = vpop.xlane.xlu0 %179
      %v181 = vmul.f32 %v180, %v174
      %v182 = vadd.f32 %v181, 1e-05
      %v183 = vrsqrt.pop %v182
      %v184 = vmul.f32 %v176, %v183
      %v186 = vlaneseq
      %v187 = vshrl.u32 %v186, 7
      %v188 = vsub.s32 0, %v187
      %v189 = vrot.slane %v168, %v188
      %v191 = vmul.f32 %v184, %v189
      %v193 = vlaneseq
      %v194 = vshrl.u32 %v193, 7
      %v195 = vsub.s32 0, %v194
      %v196 = vrot.slane %v169, %v195
      %v198 = vadd.f32 %v191, %v196
      %v199 = vpack.c.bf16 %v198, %v198
      %vm200 = vcmask 519168
      %201 = vst.msk [vmem:[%s165] sm:$0xf] %vm200, %v199
      %p202 = scmp.lt.s32.totalorder %s14, 1
      %s203 = scalar_select %p202, %s14, 1
      %s204 = smul.addr %s203, 4
      %s205 = scalar_lea.vmem %s3, %s204
      // Predicated region
      $region33: #{transformer_translator_forward.16} parent=31 // pred_check
        %p206 = pneg %p100
      $region34: #{transformer_translator_forward.16} parent=31 // pred_check_branch
        %208 = sbr.rel (%p206) target = $region36
      $region35: #{transformer_translator_forward.16} parent=31 // pred_region
        _
      $region36: #{transformer_translator_forward.16} parent=31 // pred_fallthru
        _
    $region32: #{transformer_translator_forward.16} parent=5 // pred_fallthru
      _
    %p209 = scmp.le.s32.totalorder 2, %s9
    // Predicated region
    $region37: #{transformer_translator_forward.16} parent=5 // pred_check
      %p210 = pneg %p209
    $region38: #{transformer_translator_forward.16} parent=5 // pred_check_branch
      %212 = sbr.rel (%p210) target = $region40
    $region39: #{transformer_translator_forward.16} parent=5 // pred_region
      %s213 = ssub.s32 %s9, 2
      // Predicated region
      $region41: #{transformer_translator_forward.16} parent=39 // pred_check
        %p214 = pneg %p106
      $region42: #{transformer_translator_forward.16} parent=39 // pred_check_branch
        %216 = sbr.rel (%p214) target = $region44
      $region43: #{transformer_translator_forward.16} parent=39 // pred_region
        %p217 = scmp.lt.s32.totalorder %s15, 1
        %s218 = scalar_select %p217, %s15, 1
        %s219 = smul.addr %s218, 4
        %s220 = scalar_lea.vmem %s3, %s219
      $region44: #{transformer_translator_forward.16} parent=39 // pred_fallthru
        _
    $region40: #{transformer_translator_forward.16} parent=5 // pred_fallthru
      _
  $region6: #{transformer_translator_forward.16} parent=0 // loop_footer
    %s13 = sadd.s32 1, %s9
  $region7: #{transformer_translator_forward.16} parent=0 // loop_footer_branch
    %8 = sbr.rel target = $region3
  $region8: #{transformer_translator_forward.16} parent=0 // loop_exit
    _

// kernel: transformer_translator_forward.13
$region0: #{transformer_translator_forward.13}
  #allocation0 [shape = 'u32[]', space=smem, size = 0x4, offset = 0x4, fixed_abs, tag = 'smem constant byte address 0x4 - core index']
  #allocation1 [shape = 'u32[144,128]{1,0:T(1,128)}', space=vmem, size = 0x12000, scoped, tag = 'internal scratch']
  %s0 = inlined_call_operand.vmem [shape: bf16[2,8,64], index: 0, kind: input, shape index: {}]
  %s1 = inlined_call_operand.vmem [shape: bf16[64,128], index: 1, kind: input, shape index: {}]
  %s2 = inlined_call_operand.vmem [shape: f32[1,128], index: 2, kind: input, shape index: {}]
  %s3 = inlined_call_operand.vmem [shape: bf16[128,64], index: 3, kind: input, shape index: {}]
  %s4 = inlined_call_operand.vmem [shape: f32[1,64], index: 4, kind: input, shape index: {}]
  %s5 = inlined_call_operand.vmem [shape: f32[1,64], index: 5, kind: input, shape index: {}]
  %s6 = inlined_call_operand.vmem [shape: f32[1,64], index: 6, kind: input, shape index: {}]
  %s7 = inlined_call_operand.vmem [shape: bf16[2,8,64], index: 7, kind: output, shape index: {}]
  %s8 = sld [smem:[#allocation0]]
  $region61: #{transformer_translator_forward.13} parent=0
    _
  %s10 = ssub.s32 1, %s8
  %s11 = scalar_select 0, %s10, %s8
  loop: start=0, step=1, limit=4
  $region2: #{transformer_translator_forward.13} parent=0 // loop_pre_header
    _
  $region3: #{transformer_translator_forward.13} parent=0 // loop_header
    %s13 = sphi 0, %s17
    %p14 = scmp.ge.s32.totalorder %s13, 4
    %s23 = sphi 0, %s25
    %s26 = sphi 0, %s23
    %s27 = sphi 0, %s26
    %s43 = sphi 0, %s27
    %s47 = sphi 0, %s47
    %s49 = sphi 0, %s47
    %s50 = sphi 0, %s49
    %s64 = sphi 0, %s50
    %s68 = sphi 0, %s68
    %s70 = sphi 0, %s68
    %s71 = sphi 0, %s70
    %s85 = sphi 0, %s71
    %s89 = sphi 0, %s89
    %s91 = sphi 0, %s89
    %s92 = sphi 0, %s91
    %s106 = sphi 0, %s92
    %s110 = sphi 0, %s110
    %s112 = sphi 0, %s110
    %s113 = sphi 0, %s112
    %s127 = sphi 0, %s113
    %s131 = sphi 0, %s131
    %s133 = sphi 0, %s131
    %s134 = sphi 0, %s133
    %s148 = sphi 0, %s134
    %s152 = sphi 0, %s152
    %s154 = sphi 0, %s152
    %s155 = sphi 0, %s154
    %s169 = sphi 0, %s155
    %s175 = sphi 0, %s177
    %s178 = sphi 0, %s175
    %s179 = sphi 0, %s178
    %s195 = sphi 0, %s179
  $region4: #{transformer_translator_forward.13} parent=0 // loop_header_branch
    %16 = sbr.rel (%p14) target = $region8
  $region5: #{transformer_translator_forward.13} parent=0 // loop_body
    %s18 = ssub.s32 %s13, 1
    %s19 = ssub.s32 %s13, 2
    %s20 = sadd.s32 %s13, 1
    %s21 = ssub.s32 %s13, %s20
    %p22 = scmp.eq.s32.totalorder %s21, 0
    %s24 = sadd.s32 %s23, 1
    %s25 = scalar_select %p22, %s23, %s24
    %p28 = pneg %p22
    %p29 = scmp.eq.s32.totalorder %s13, 1
    %p30 = por %p28, %p29
    %p31 = scmp.ne.s32.totalorder %s23, %s26
    %p32 = scmp.eq.s32.totalorder %s13, 0
    %p33 = por %p31, %p32
    %p34 = scmp.ne.s32.totalorder %s23, %s26
    %p35 = scmp.eq.s32.totalorder %s18, 1
    %p36 = por %p34, %p35
    %p37 = scmp.ne.s32.totalorder %s26, %s27
    %p38 = scmp.eq.s32.totalorder %s18, 0
    %p39 = por %p37, %p38
    %p40 = scmp.ne.s32.totalorder %s26, %s27
    %p41 = scmp.eq.s32.totalorder %s19, 1
    %p42 = por %p40, %p41
    %p44 = scmp.ne.s32.totalorder %s27, %s43
    %p45 = scmp.eq.s32.totalorder %s19, 0
    %p46 = por %p44, %p45
    %s48 = sadd.s32 %s47, 1
    %p51 = scmp.eq.s32.totalorder %s13, 1
    %p52 = scmp.ne.s32.totalorder %s47, %s49
    %p53 = scmp.eq.s32.totalorder %s13, 0
    %p54 = por %p52, %p53
    %p55 = scmp.ne.s32.totalorder %s47, %s49
    %p56 = scmp.eq.s32.totalorder %s18, 1
    %p57 = por %p55, %p56
    %p58 = scmp.ne.s32.totalorder %s49, %s50
    %p59 = scmp.eq.s32.totalorder %s18, 0
    %p60 = por %p58, %p59
    %p61 = scmp.ne.s32.totalorder %s49, %s50
    %p62 = scmp.eq.s32.totalorder %s19, 1
    %p63 = por %p61, %p62
    %p65 = scmp.ne.s32.totalorder %s50, %s64
    %p66 = scmp.eq.s32.totalorder %s19, 0
    %p67 = por %p65, %p66
    %s69 = sadd.s32 %s68, 1
    %p72 = scmp.eq.s32.totalorder %s13, 1
    %p73 = scmp.ne.s32.totalorder %s68, %s70
    %p74 = scmp.eq.s32.totalorder %s13, 0
    %p75 = por %p73, %p74
    %p76 = scmp.ne.s32.totalorder %s68, %s70
    %p77 = scmp.eq.s32.totalorder %s18, 1
    %p78 = por %p76, %p77
    %p79 = scmp.ne.s32.totalorder %s70, %s71
    %p80 = scmp.eq.s32.totalorder %s18, 0
    %p81 = por %p79, %p80
    %p82 = scmp.ne.s32.totalorder %s70, %s71
    %p83 = scmp.eq.s32.totalorder %s19, 1
    %p84 = por %p82, %p83
    %p86 = scmp.ne.s32.totalorder %s71, %s85
    %p87 = scmp.eq.s32.totalorder %s19, 0
    %p88 = por %p86, %p87
    %s90 = sadd.s32 %s89, 1
    %p93 = scmp.eq.s32.totalorder %s13, 1
    %p94 = scmp.ne.s32.totalorder %s89, %s91
    %p95 = scmp.eq.s32.totalorder %s13, 0
    %p96 = por %p94, %p95
    %p97 = scmp.ne.s32.totalorder %s89, %s91
    %p98 = scmp.eq.s32.totalorder %s18, 1
    %p99 = por %p97, %p98
    %p100 = scmp.ne.s32.totalorder %s91, %s92
    %p101 = scmp.eq.s32.totalorder %s18, 0
    %p102 = por %p100, %p101
    %p103 = scmp.ne.s32.totalorder %s91, %s92
    %p104 = scmp.eq.s32.totalorder %s19, 1
    %p105 = por %p103, %p104
    %p107 = scmp.ne.s32.totalorder %s92, %s106
    %p108 = scmp.eq.s32.totalorder %s19, 0
    %p109 = por %p107, %p108
    %s111 = sadd.s32 %s110, 1
    %p114 = scmp.eq.s32.totalorder %s13, 1
    %p115 = scmp.ne.s32.totalorder %s110, %s112
    %p116 = scmp.eq.s32.totalorder %s13, 0
    %p117 = por %p115, %p116
    %p118 = scmp.ne.s32.totalorder %s110, %s112
    %p119 = scmp.eq.s32.totalorder %s18, 1
    %p120 = por %p118, %p119
    %p121 = scmp.ne.s32.totalorder %s112, %s113
    %p122 = scmp.eq.s32.totalorder %s18, 0
    %p123 = por %p121, %p122
    %p124 = scmp.ne.s32.totalorder %s112, %s113
    %p125 = scmp.eq.s32.totalorder %s19, 1
    %p126 = por %p124, %p125
    %p128 = scmp.ne.s32.totalorder %s113, %s127
    %p129 = scmp.eq.s32.totalorder %s19, 0
    %p130 = por %p128, %p129
    %s132 = sadd.s32 %s131, 1
    %p135 = scmp.eq.s32.totalorder %s13, 1
    %p136 = scmp.ne.s32.totalorder %s131, %s133
    %p137 = scmp.eq.s32.totalorder %s13, 0
    %p138 = por %p136, %p137
    %p139 = scmp.ne.s32.totalorder %s131, %s133
    %p140 = scmp.eq.s32.totalorder %s18, 1
    %p141 = por %p139, %p140
    %p142 = scmp.ne.s32.totalorder %s133, %s134
    %p143 = scmp.eq.s32.totalorder %s18, 0
    %p144 = por %p142, %p143
    %p145 = scmp.ne.s32.totalorder %s133, %s134
    %p146 = scmp.eq.s32.totalorder %s19, 1
    %p147 = por %p145, %p146
    %p149 = scmp.ne.s32.totalorder %s134, %s148
    %p150 = scmp.eq.s32.totalorder %s19, 0
    %p151 = por %p149, %p150
    %s153 = sadd.s32 %s152, 1
    %p156 = scmp.eq.s32.totalorder %s13, 1
    %p157 = scmp.ne.s32.totalorder %s152, %s154
    %p158 = scmp.eq.s32.totalorder %s13, 0
    %p159 = por %p157, %p158
    %p160 = scmp.ne.s32.totalorder %s152, %s154
    %p161 = scmp.eq.s32.totalorder %s18, 1
    %p162 = por %p160, %p161
    %p163 = scmp.ne.s32.totalorder %s154, %s155
    %p164 = scmp.eq.s32.totalorder %s18, 0
    %p165 = por %p163, %p164
    %p166 = scmp.ne.s32.totalorder %s154, %s155
    %p167 = scmp.eq.s32.totalorder %s19, 1
    %p168 = por %p166, %p167
    %p170 = scmp.ne.s32.totalorder %s155, %s169
    %p171 = scmp.eq.s32.totalorder %s19, 0
    %p172 = por %p170, %p171
    %s173 = ssub.s32 %s13, %s20
    %p174 = scmp.eq.s32.totalorder %s173, 0
    %s176 = sadd.s32 %s175, 1
    %s177 = scalar_select %p174, %s175, %s176
    %p180 = pneg %p174
    %p181 = scmp.eq.s32.totalorder %s13, 1
    %p182 = por %p180, %p181
    %p183 = scmp.ne.s32.totalorder %s175, %s178
    %p184 = scmp.eq.s32.totalorder %s13, 0
    %p185 = por %p183, %p184
    %p186 = scmp.ne.s32.totalorder %s175, %s178
    %p187 = scmp.eq.s32.totalorder %s18, 1
    %p188 = por %p186, %p187
    %p189 = scmp.ne.s32.totalorder %s178, %s179
    %p190 = scmp.eq.s32.totalorder %s18, 0
    %p191 = por %p189, %p190
    %p192 = scmp.ne.s32.totalorder %s178, %s179
    %p193 = scmp.eq.s32.totalorder %s19, 1
    %p194 = por %p192, %p193
    %p196 = scmp.ne.s32.totalorder %s179, %s195
    %p197 = scmp.eq.s32.totalorder %s19, 0
    %p198 = por %p196, %p197
    %p199 = scmp.le.s32.totalorder 1, %s13
    %p200 = scmp.lt.s32.totalorder %s13, 3
    %p201 = pnand %p199, %p200
    %p202 = pneg %p201
    // Predicated region
    $region9: #{transformer_translator_forward.13} parent=5 // pred_check
      _
    $region10: #{transformer_translator_forward.13} parent=5 // pred_check_branch
      %204 = sbr.rel (%p201) target = $region12
    $region11: #{transformer_translator_forward.13} parent=5 // pred_region
      %s205 = ssub.s32 %s13, 1
      // Predicated region
      $region13: #{transformer_translator_forward.13} parent=11 // pred_check
        %p206 = pneg %p60
      $region14: #{transformer_translator_forward.13} parent=11 // pred_check_branch
        %208 = sbr.rel (%p206) target = $region16
      $region15: #{transformer_translator_forward.13} parent=11 // pred_region
        _
      $region16: #{transformer_translator_forward.13} parent=11 // pred_fallthru
        _
      // Predicated region
      $region17: #{transformer_translator_forward.13} parent=11 // pred_check
        %p209 = pneg %p81
      $region18: #{transformer_translator_forward.13} parent=11 // pred_check_branch
        %211 = sbr.rel (%p209) target = $region20
      $region19: #{transformer_translator_forward.13} parent=11 // pred_region
        _
      $region20: #{transformer_translator_forward.13} parent=11 // pred_fallthru
        _
      // Predicated region
      $region21: #{transformer_translator_forward.13} parent=11 // pred_check
        %p212 = pneg %p102
      $region22: #{transformer_translator_forward.13} parent=11 // pred_check_branch
        %214 = sbr.rel (%p212) target = $region24
      $region23: #{transformer_translator_forward.13} parent=11 // pred_region
        _
      $region24: #{transformer_translator_forward.13} parent=11 // pred_fallthru
        _
      // Predicated region
      $region25: #{transformer_translator_forward.13} parent=11 // pred_check
        %p215 = pneg %p123
      $region26: #{transformer_translator_forward.13} parent=11 // pred_check_branch
        %217 = sbr.rel (%p215) target = $region28
      $region27: #{transformer_translator_forward.13} parent=11 // pred_region
        _
      $region28: #{transformer_translator_forward.13} parent=11 // pred_fallthru
        _
      // Predicated region
      $region29: #{transformer_translator_forward.13} parent=11 // pred_check
        %p218 = pneg %p144
      $region30: #{transformer_translator_forward.13} parent=11 // pred_check_branch
        %220 = sbr.rel (%p218) target = $region32
      $region31: #{transformer_translator_forward.13} parent=11 // pred_region
        _
      $region32: #{transformer_translator_forward.13} parent=11 // pred_fallthru
        _
      // Predicated region
      $region33: #{transformer_translator_forward.13} parent=11 // pred_check
        %p221 = pneg %p165
      $region34: #{transformer_translator_forward.13} parent=11 // pred_check_branch
        %223 = sbr.rel (%p221) target = $region36
      $region35: #{transformer_translator_forward.13} parent=11 // pred_region
        _
      $region36: #{transformer_translator_forward.13} parent=11 // pred_fallthru
        _
    $region12: #{transformer_translator_forward.13} parent=5 // pred_fallthru
      _
    %p224 = scmp.lt.s32.totalorder %s13, 2
    // Predicated region
    $region37: #{transformer_translator_forward.13} parent=5 // pred_check
      %p225 = pneg %p224
    $region38: #{transformer_translator_forward.13} parent=5 // pred_check_branch
      %227 = sbr.rel (%p225) target = $region40
    $region39: #{transformer_translator_forward.13} parent=5 // pred_region
      // Predicated region
      $region41: #{transformer_translator_forward.13} parent=39 // pred_check
        %p228 = pneg %p33
      $region42: #{transformer_translator_forward.13} parent=39 // pred_check_branch
        %230 = sbr.rel (%p228) target = $region44
      $region43: #{transformer_translator_forward.13} parent=39 // pred_region
        %p231 = scmp.lt.s32.totalorder %s13, 1
        %s232 = scalar_select %p231, %s13, 1
        %s233 = smul.addr %s232, 4
        %s234 = scalar_lea.vmem %s0, %s233
      $region44: #{transformer_translator_forward.13} parent=39 // pred_fallthru
        _
    $region40: #{transformer_translator_forward.13} parent=5 // pred_fallthru
      _
    %p235 = scmp.le.s32.totalorder 1, %s13
    %p236 = scmp.lt.s32.totalorder %s13, 3
    %p237 = pnand %p235, %p236
    %p238 = pneg %p237
    // Predicated region
    $region45: #{transformer_translator_forward.13} parent=5 // pred_check
      _
    $region46: #{transformer_translator_forward.13} parent=5 // pred_check_branch
      %240 = sbr.rel (%p237) target = $region48
    $region47: #{transformer_translator_forward.13} parent=5 // pred_region
      %s241 = ssub.s32 %s13, 1
      %p242 = scmp.lt.s32.totalorder %s18, 1
      %s243 = scalar_select %p242, %s18, 1
      %s244 = smul.addr %s243, 4
      %s245 = scalar_lea.vmem %s0, %s244
      %p246 = pneg %p39
      %p247 = pneg %p36
      %p248 = pneg %p60
      %p249 = pneg %p57
      %p250 = pneg %p81
      %p251 = pneg %p78
      %p252 = pneg %p102
      %p253 = pneg %p99
      %p254 = pneg %p123
      %p255 = pneg %p120
      %p256 = pneg %p144
      %p257 = pneg %p141
      %p258 = pneg %p165
      %p259 = pneg %p162
      %p260 = pneg %p191
      %p261 = pneg %p188
      %p262 = scmp.lt.s32.totalorder %s18, 1
      %s263 = scalar_select %p262, %s18, 1
      %s264 = smul.addr %s263, 4
      %s265 = scalar_lea.vmem %s7, %s264
      %p266 = scmp.lt.s32.totalorder %s18, 1
      %s267 = scalar_select %p266, %s18, 1
      %s268 = smul.addr %s267, 4
      %s269 = scalar_lea.vmem %s0, %s268
      %p270 = scmp.lt.s32.totalorder %s18, 1
      %s271 = scalar_select %p270, %s18, 1
      %s272 = smul.addr %s271, 4
      %s273 = scalar_lea.vmem %s7, %s272
      %v275 = vld [vmem:[%s269] sm:$0xf]
      %v276 = vld [vmem:[%s1] sm:$0xf]
      %v277 = vld [vmem:[%s1 + $0x4] sm:$0xf]
      %v278 = vld [vmem:[%s1 + $0x8] sm:$0xf]
      %v279 = vld [vmem:[%s1 + $0xc] sm:$0xf]
      %v280 = vld [vmem:[%s1 + $0x10] sm:$0xf]
      %v281 = vld [vmem:[%s1 + $0x14] sm:$0xf]
      %v282 = vld [vmem:[%s1 + $0x18] sm:$0xf]
      %v283 = vld [vmem:[%s1 + $0x1c] sm:$0xf]
      %v284 = vld [vmem:[%s2] sm:$0x1]
      %v286 = vlaneseq
      %v287 = vshrl.u32 %v286, 7
      %v288 = vsub.s32 0, %v287
      %v289 = vrot.slane %v284, %v288
      %v299 = vunpack.c.l.b16 %v276
      %v300 = vunpack.c.l.b16 %v277
      %v301 = vunpack.c.l.b16 %v278
      %v302 = vunpack.c.l.b16 %v279
      %v303 = vunpack.c.l.b16 %v280
      %v304 = vunpack.c.l.b16 %v281
      %v305 = vunpack.c.l.b16 %v282
      %v306 = vunpack.c.l.b16 %v283
      %v307 = vpack.c.b16 %v300, %v299
      %v308 = vpack.c.b16 %v302, %v301
      %v309 = vpack.c.b16 %v304, %v303
      %v310 = vpack.c.b16 %v306, %v305
      %vm315 = vcmask 523264
      %v317 = vsel %vm315, %v275, 0
      %319 = vmatprep.subr.bf16.mxu0 0
      %320 = vmatpush1.bf16.msra.mxu0 %v307
      %321 = vmatprep.subr.bf16.mxu0 0
      %322 = vmatpush1.bf16.msra.mxu0 %v308
      %323 = vmatprep.subr.bf16.mxu0 0
      %324 = vmatpush1.bf16.msra.mxu0 %v309
      %325 = vmatprep.subr.bf16.mxu0 0
      %326 = vmatpush1.bf16.msra.mxu0 %v310
      %327 = vmatprep.subr.bf16.mxu0 0
      %328 = vmatpush1.bf16.msra.mxu0 0
      %329 = vmatprep.subr.bf16.mxu0 0
      %330 = vmatpush1.bf16.msra.mxu0 0
      %331 = vmatprep.subr.bf16.mxu0 0
      %332 = vmatpush1.bf16.msra.mxu0 0
      %333 = vmatprep.subr.bf16.mxu0 0
      %334 = vmatpush1.bf16.msra.mxu0 0
      %335 = vmatprep.subr.bf16.mxu0 0
      %336 = vmatpush1.bf16.msra.mxu0 0
      %337 = vmatprep.subr.bf16.mxu0 0
      %338 = vmatpush1.bf16.msra.mxu0 0
      %339 = vmatprep.subr.bf16.mxu0 0
      %340 = vmatpush1.bf16.msra.mxu0 0
      %341 = vmatprep.subr.bf16.mxu0 0
      %342 = vmatpush1.bf16.msra.mxu0 0
      %343 = vmatprep.subr.bf16.mxu0 0
      %344 = vmatpush1.bf16.msra.mxu0 0
      %345 = vmatprep.subr.bf16.mxu0 0
      %346 = vmatpush1.bf16.msra.mxu0 0
      %347 = vmatprep.subr.bf16.mxu0 0
      %348 = vmatpush1.bf16.msra.mxu0 0
      %349 = vmatprep.subr.bf16.mxu0 0
      %350 = vmatpush1.bf16.msra.mxu0 0
      %351 = vmatprep.mubr.bf16.mxu0 0
      %352 = vmatmul.mubr.bf16.gmra.mrb[0].mxu0 %v317
      %v353 = vpop.f32.mrb[0].mxu0
      %v354 = vadd.f32 %v289, %v353
      %v355 = vpop.f32.mrb[0].mxu0
      %v356 = vpop.f32.mrb[0].mxu0
      %v357 = vpop.f32.mrb[0].mxu0
      %358 = vdwg.mxu0
      %v359 = vmax.f32 %v354, 0.0
      %v360 = vpack.c.bf16 %v359, %v359
      %v361 = vld [vmem:[%s3] sm:$0xf]
      %v362 = vld [vmem:[%s3 + $0x4] sm:$0xf]
      %v363 = vld [vmem:[%s3 + $0x8] sm:$0xf]
      %v364 = vld [vmem:[%s3 + $0xc] sm:$0xf]
      %v365 = vld [vmem:[%s3 + $0x10] sm:$0xf]
      %v366 = vld [vmem:[%s3 + $0x14] sm:$0xf]
      %v367 = vld [vmem:[%s3 + $0x18] sm:$0xf]
      %v368 = vld [vmem:[%s3 + $0x1c] sm:$0xf]
      %v369 = vld [vmem:[%s3 + $0x20] sm:$0xf]
      %v370 = vld [vmem:[%s3 + $0x24] sm:$0xf]
      %v371 = vld [vmem:[%s3 + $0x28] sm:$0xf]
      %v372 = vld [vmem:[%s3 + $0x2c] sm:$0xf]
      %v373 = vld [vmem:[%s3 + $0x30] sm:$0xf]
      %v374 = vld [vmem:[%s3 + $0x34] sm:$0xf]
      %v375 = vld [vmem:[%s3 + $0x38] sm:$0xf]
      %v376 = vld [vmem:[%s3 + $0x3c] sm:$0xf]
      %v377 = vld [vmem:[%s4] sm:$0x1]
      %v379 = vlaneseq
      %v380 = vshrl.u32 %v379, 7
      %v381 = vsub.s32 0, %v380
      %v382 = vrot.slane %v377, %v381
      %v400 = vunpack.c.l.b16 %v361
      %v401 = vunpack.c.l.b16 %v362
      %v402 = vunpack.c.l.b16 %v363
      %v403 = vunpack.c.l.b16 %v364
      %v404 = vunpack.c.l.b16 %v365
      %v405 = vunpack.c.l.b16 %v366
      %v406 = vunpack.c.l.b16 %v367
      %v407 = vunpack.c.l.b16 %v368
      %v408 = vunpack.c.l.b16 %v369
      %v409 = vunpack.c.l.b16 %v370
      %v410 = vunpack.c.l.b16 %v371
      %v411 = vunpack.c.l.b16 %v372
      %v412 = vunpack.c.l.b16 %v373
      %v413 = vunpack.c.l.b16 %v374
      %v414 = vunpack.c.l.b16 %v375
      %v415 = vunpack.c.l.b16 %v376
      %v416 = vpack.c.b16 %v401, %v400
      %v417 = vpack.c.b16 %v403, %v402
      %v418 = vpack.c.b16 %v405, %v404
      %v419 = vpack.c.b16 %v407, %v406
      %v420 = vpack.c.b16 %v409, %v408
      %v421 = vpack.c.b16 %v411, %v410
      %v422 = vpack.c.b16 %v413, %v412
      %v423 = vpack.c.b16 %v415, %v414
      %432 = vmatprep.subr.bf16.mxu0 0
      %433 = vmatpush1.bf16.msra.mxu0 %v416
      %434 = vmatprep.subr.bf16.mxu0 0
      %435 = vmatpush1.bf16.msra.mxu0 %v417
      %436 = vmatprep.subr.bf16.mxu0 0
      %437 = vmatpush1.bf16.msra.mxu0 %v418
      %438 = vmatprep.subr.bf16.mxu0 0
      %439 = vmatpush1.bf16.msra.mxu0 %v419
      %440 = vmatprep.subr.bf16.mxu0 0
      %441 = vmatpush1.bf16.msra.mxu0 %v420
      %442 = vmatprep.subr.bf16.mxu0 0
      %443 = vmatpush1.bf16.msra.mxu0 %v421
      %444 = vmatprep.subr.bf16.mxu0 0
      %445 = vmatpush1.bf16.msra.mxu0 %v422
      %446 = vmatprep.subr.bf16.mxu0 0
      %447 = vmatpush1.bf16.msra.mxu0 %v423
      %448 = vmatprep.subr.bf16.mxu0 0
      %449 = vmatpush1.bf16.msra.mxu0 0
      %450 = vmatprep.subr.bf16.mxu0 0
      %451 = vmatpush1.bf16.msra.mxu0 0
      %452 = vmatprep.subr.bf16.mxu0 0
      %453 = vmatpush1.bf16.msra.mxu0 0
      %454 = vmatprep.subr.bf16.mxu0 0
      %455 = vmatpush1.bf16.msra.mxu0 0
      %456 = vmatprep.subr.bf16.mxu0 0
      %457 = vmatpush1.bf16.msra.mxu0 0
      %458 = vmatprep.subr.bf16.mxu0 0
      %459 = vmatpush1.bf16.msra.mxu0 0
      %460 = vmatprep.subr.bf16.mxu0 0
      %461 = vmatpush1.bf16.msra.mxu0 0
      %462 = vmatprep.subr.bf16.mxu0 0
      %463 = vmatpush1.bf16.msra.mxu0 0
      %464 = vmatprep.mubr.bf16.mxu0 0
      %465 = vmatmul.mubr.bf16.gmra.mrb[0].mxu0 %v360
      %v466 = vpop.f32.mrb[0].mxu0
      %v467 = vadd.f32 %v382, %v466
      %v468 = vpop.f32.mrb[0].mxu0
      %v469 = vpop.f32.mrb[0].mxu0
      %v470 = vpop.f32.mrb[0].mxu0
      %471 = vdwg.mxu0
      %v472 = vunpack.c.l.bf16 %v275
      %v473 = vadd.f32 %v467, %v472
      %v474 = vld [vmem:[%s5] sm:$0x1]
      %v475 = vld [vmem:[%s6] sm:$0x1]
      %v476 = vsel %vm315, %v473, 0.0
      %477 = vadd.xlane.f32.xlu0 %v476
      %v478 = vpop.xlane.xlu0 %477
      %v479 = vrcp.pop 64.0
      %v480 = vmul.f32 %v478, %v479
      %v481 = vsub.f32 %v473, %v480
      %v482 = vmul.f32 %v481, %v481
      %v483 = vsel %vm315, %v482, 0.0
      %484 = vadd.xlane.f32.xlu0 %v483
      %v485 = vpop.xlane.xlu0 %484
      %v486 = vmul.f32 %v485, %v479
      %v487 = vadd.f32 %v486, 1e-05
      %v488 = vrsqrt.pop %v487
      %v489 = vmul.f32 %v481, %v488
      %v491 = vlaneseq
      %v492 = vshrl.u32 %v491, 7
      %v493 = vsub.s32 0, %v492
      %v494 = vrot.slane %v474, %v493
      %v496 = vmul.f32 %v489, %v494
      %v498 = vlaneseq
      %v499 = vshrl.u32 %v498, 7
      %v500 = vsub.s32 0, %v499
      %v501 = vrot.slane %v475, %v500
      %v503 = vadd.f32 %v496, %v501
      %v504 = vpack.c.bf16 %v503, %v503
      %vm505 = vcmask 519168
      %506 = vst.msk [vmem:[%s273] sm:$0xf] %vm505, %v504
      %p507 = scmp.lt.s32.totalorder %s18, 1
      %s508 = scalar_select %p507, %s18, 1
      %s509 = smul.addr %s508, 4
      %s510 = scalar_lea.vmem %s7, %s509
      // Predicated region
      $region49: #{transformer_translator_forward.13} parent=47 // pred_check
        %p511 = pneg %p188
      $region50: #{transformer_translator_forward.13} parent=47 // pred_check_branch
        %513 = sbr.rel (%p511) target = $region52
      $region51: #{transformer_translator_forward.13} parent=47 // pred_region
        _
      $region52: #{transformer_translator_forward.13} parent=47 // pred_fallthru
        _
    $region48: #{transformer_translator_forward.13} parent=5 // pred_fallthru
      _
    %p514 = scmp.le.s32.totalorder 2, %s13
    // Predicated region
    $region53: #{transformer_translator_forward.13} parent=5 // pred_check
      %p515 = pneg %p514
    $region54: #{transformer_translator_forward.13} parent=5 // pred_check_branch
      %517 = sbr.rel (%p515) target = $region56
    $region55: #{transformer_translator_forward.13} parent=5 // pred_region
      %s518 = ssub.s32 %s13, 2
      // Predicated region
      $region57: #{transformer_translator_forward.13} parent=55 // pred_check
        %p519 = pneg %p194
      $region58: #{transformer_translator_forward.13} parent=55 // pred_check_branch
        %521 = sbr.rel (%p519) target = $region60
      $region59: #{transformer_translator_forward.13} parent=55 // pred_region
        %p522 = scmp.lt.s32.totalorder %s19, 1
        %s523 = scalar_select %p522, %s19, 1
        %s524 = smul.addr %s523, 4
        %s525 = scalar_lea.vmem %s7, %s524
      $region60: #{transformer_translator_forward.13} parent=55 // pred_fallthru
        _
    $region56: #{transformer_translator_forward.13} parent=5 // pred_fallthru
      _
  $region6: #{transformer_translator_forward.13} parent=0 // loop_footer
    %s17 = sadd.s32 1, %s13
  $region7: #{transformer_translator_forward.13} parent=0 // loop_footer_branch
    %12 = sbr.rel target = $region3
  $region8: #{transformer_translator_forward.13} parent=0 // loop_exit
    _

// kernel: transformer_translator_forward.12
$region0: #{transformer_translator_forward.12}
  #allocation0 [shape = 'u32[]', space=smem, size = 0x4, offset = 0x4, fixed_abs, tag = 'smem constant byte address 0x4 - core index']
  #allocation1 [shape = 'u32[144,128]{1,0:T(1,128)}', space=vmem, size = 0x12000, scoped, tag = 'internal scratch']
  %s0 = inlined_call_operand.vmem [shape: bf16[2,8,64], index: 0, kind: input, shape index: {}]
  %s1 = inlined_call_operand.vmem [shape: bf16[4,64,16], index: 1, kind: input, shape index: {}]
  %s2 = inlined_call_operand.vmem [shape: f32[4,1,16], index: 2, kind: input, shape index: {}]
  %s3 = inlined_call_operand.vmem [shape: bf16[4,64,16], index: 3, kind: input, shape index: {}]
  %s4 = inlined_call_operand.vmem [shape: f32[4,1,16], index: 4, kind: input, shape index: {}]
  %s5 = inlined_call_operand.vmem [shape: bf16[4,64,16], index: 5, kind: input, shape index: {}]
  %s6 = inlined_call_operand.vmem [shape: f32[4,1,16], index: 6, kind: input, shape index: {}]
  %s7 = inlined_call_operand.vmem [shape: bf16[4,16,64], index: 7, kind: input, shape index: {}]
  %s8 = inlined_call_operand.vmem [shape: f32[1,64], index: 8, kind: input, shape index: {}]
  %s9 = inlined_call_operand.vmem [shape: f32[1,64], index: 9, kind: input, shape index: {}]
  %s10 = inlined_call_operand.vmem [shape: f32[1,64], index: 10, kind: input, shape index: {}]
  %s11 = inlined_call_operand.vmem [shape: bf16[2,8,64], index: 11, kind: output, shape index: {}]
  %s12 = sld [smem:[#allocation0]]
  $region77: #{transformer_translator_forward.12} parent=0
    _
  %s14 = ssub.s32 1, %s12
  %s15 = scalar_select 0, %s14, %s12
  loop: start=0, step=1, limit=4
  $region2: #{transformer_translator_forward.12} parent=0 // loop_pre_header
    _
  $region3: #{transformer_translator_forward.12} parent=0 // loop_header
    %s17 = sphi 0, %s21
    %p18 = scmp.ge.s32.totalorder %s17, 4
    %s27 = sphi 0, %s29
    %s30 = sphi 0, %s27
    %s31 = sphi 0, %s30
    %s47 = sphi 0, %s31
    %s51 = sphi 0, %s51
    %s53 = sphi 0, %s51
    %s54 = sphi 0, %s53
    %s68 = sphi 0, %s54
    %s72 = sphi 0, %s72
    %s74 = sphi 0, %s72
    %s75 = sphi 0, %s74
    %s89 = sphi 0, %s75
    %s93 = sphi 0, %s93
    %s95 = sphi 0, %s93
    %s96 = sphi 0, %s95
    %s110 = sphi 0, %s96
    %s114 = sphi 0, %s114
    %s116 = sphi 0, %s114
    %s117 = sphi 0, %s116
    %s131 = sphi 0, %s117
    %s135 = sphi 0, %s135
    %s137 = sphi 0, %s135
    %s138 = sphi 0, %s137
    %s152 = sphi 0, %s138
    %s156 = sphi 0, %s156
    %s158 = sphi 0, %s156
    %s159 = sphi 0, %s158
    %s173 = sphi 0, %s159
    %s177 = sphi 0, %s177
    %s179 = sphi 0, %s177
    %s180 = sphi 0, %s179
    %s194 = sphi 0, %s180
    %s198 = sphi 0, %s198
    %s200 = sphi 0, %s198
    %s201 = sphi 0, %s200
    %s215 = sphi 0, %s201
    %s219 = sphi 0, %s219
    %s221 = sphi 0, %s219
    %s222 = sphi 0, %s221
    %s236 = sphi 0, %s222
    %s240 = sphi 0, %s240
    %s242 = sphi 0, %s240
    %s243 = sphi 0, %s242
    %s257 = sphi 0, %s243
    %s263 = sphi 0, %s265
    %s266 = sphi 0, %s263
    %s267 = sphi 0, %s266
    %s283 = sphi 0, %s267
  $region4: #{transformer_translator_forward.12} parent=0 // loop_header_branch
    %20 = sbr.rel (%p18) target = $region8
  $region5: #{transformer_translator_forward.12} parent=0 // loop_body
    %s22 = ssub.s32 %s17, 1
    %s23 = ssub.s32 %s17, 2
    %s24 = sadd.s32 %s17, 1
    %s25 = ssub.s32 %s17, %s24
    %p26 = scmp.eq.s32.totalorder %s25, 0
    %s28 = sadd.s32 %s27, 1
    %s29 = scalar_select %p26, %s27, %s28
    %p32 = pneg %p26
    %p33 = scmp.eq.s32.totalorder %s17, 1
    %p34 = por %p32, %p33
    %p35 = scmp.ne.s32.totalorder %s27, %s30
    %p36 = scmp.eq.s32.totalorder %s17, 0
    %p37 = por %p35, %p36
    %p38 = scmp.ne.s32.totalorder %s27, %s30
    %p39 = scmp.eq.s32.totalorder %s22, 1
    %p40 = por %p38, %p39
    %p41 = scmp.ne.s32.totalorder %s30, %s31
    %p42 = scmp.eq.s32.totalorder %s22, 0
    %p43 = por %p41, %p42
    %p44 = scmp.ne.s32.totalorder %s30, %s31
    %p45 = scmp.eq.s32.totalorder %s23, 1
    %p46 = por %p44, %p45
    %p48 = scmp.ne.s32.totalorder %s31, %s47
    %p49 = scmp.eq.s32.totalorder %s23, 0
    %p50 = por %p48, %p49
    %s52 = sadd.s32 %s51, 1
    %p55 = scmp.eq.s32.totalorder %s17, 1
    %p56 = scmp.ne.s32.totalorder %s51, %s53
    %p57 = scmp.eq.s32.totalorder %s17, 0
    %p58 = por %p56, %p57
    %p59 = scmp.ne.s32.totalorder %s51, %s53
    %p60 = scmp.eq.s32.totalorder %s22, 1
    %p61 = por %p59, %p60
    %p62 = scmp.ne.s32.totalorder %s53, %s54
    %p63 = scmp.eq.s32.totalorder %s22, 0
    %p64 = por %p62, %p63
    %p65 = scmp.ne.s32.totalorder %s53, %s54
    %p66 = scmp.eq.s32.totalorder %s23, 1
    %p67 = por %p65, %p66
    %p69 = scmp.ne.s32.totalorder %s54, %s68
    %p70 = scmp.eq.s32.totalorder %s23, 0
    %p71 = por %p69, %p70
    %s73 = sadd.s32 %s72, 1
    %p76 = scmp.eq.s32.totalorder %s17, 1
    %p77 = scmp.ne.s32.totalorder %s72, %s74
    %p78 = scmp.eq.s32.totalorder %s17, 0
    %p79 = por %p77, %p78
    %p80 = scmp.ne.s32.totalorder %s72, %s74
    %p81 = scmp.eq.s32.totalorder %s22, 1
    %p82 = por %p80, %p81
    %p83 = scmp.ne.s32.totalorder %s74, %s75
    %p84 = scmp.eq.s32.totalorder %s22, 0
    %p85 = por %p83, %p84
    %p86 = scmp.ne.s32.totalorder %s74, %s75
    %p87 = scmp.eq.s32.totalorder %s23, 1
    %p88 = por %p86, %p87
    %p90 = scmp.ne.s32.totalorder %s75, %s89
    %p91 = scmp.eq.s32.totalorder %s23, 0
    %p92 = por %p90, %p91
    %s94 = sadd.s32 %s93, 1
    %p97 = scmp.eq.s32.totalorder %s17, 1
    %p98 = scmp.ne.s32.totalorder %s93, %s95
    %p99 = scmp.eq.s32.totalorder %s17, 0
    %p100 = por %p98, %p99
    %p101 = scmp.ne.s32.totalorder %s93, %s95
    %p102 = scmp.eq.s32.totalorder %s22, 1
    %p103 = por %p101, %p102
    %p104 = scmp.ne.s32.totalorder %s95, %s96
    %p105 = scmp.eq.s32.totalorder %s22, 0
    %p106 = por %p104, %p105
    %p107 = scmp.ne.s32.totalorder %s95, %s96
    %p108 = scmp.eq.s32.totalorder %s23, 1
    %p109 = por %p107, %p108
    %p111 = scmp.ne.s32.totalorder %s96, %s110
    %p112 = scmp.eq.s32.totalorder %s23, 0
    %p113 = por %p111, %p112
    %s115 = sadd.s32 %s114, 1
    %p118 = scmp.eq.s32.totalorder %s17, 1
    %p119 = scmp.ne.s32.totalorder %s114, %s116
    %p120 = scmp.eq.s32.totalorder %s17, 0
    %p121 = por %p119, %p120
    %p122 = scmp.ne.s32.totalorder %s114, %s116
    %p123 = scmp.eq.s32.totalorder %s22, 1
    %p124 = por %p122, %p123
    %p125 = scmp.ne.s32.totalorder %s116, %s117
    %p126 = scmp.eq.s32.totalorder %s22, 0
    %p127 = por %p125, %p126
    %p128 = scmp.ne.s32.totalorder %s116, %s117
    %p129 = scmp.eq.s32.totalorder %s23, 1
    %p130 = por %p128, %p129
    %p132 = scmp.ne.s32.totalorder %s117, %s131
    %p133 = scmp.eq.s32.totalorder %s23, 0
    %p134 = por %p132, %p133
    %s136 = sadd.s32 %s135, 1
    %p139 = scmp.eq.s32.totalorder %s17, 1
    %p140 = scmp.ne.s32.totalorder %s135, %s137
    %p141 = scmp.eq.s32.totalorder %s17, 0
    %p142 = por %p140, %p141
    %p143 = scmp.ne.s32.totalorder %s135, %s137
    %p144 = scmp.eq.s32.totalorder %s22, 1
    %p145 = por %p143, %p144
    %p146 = scmp.ne.s32.totalorder %s137, %s138
    %p147 = scmp.eq.s32.totalorder %s22, 0
    %p148 = por %p146, %p147
    %p149 = scmp.ne.s32.totalorder %s137, %s138
    %p150 = scmp.eq.s32.totalorder %s23, 1
    %p151 = por %p149, %p150
    %p153 = scmp.ne.s32.totalorder %s138, %s152
    %p154 = scmp.eq.s32.totalorder %s23, 0
    %p155 = por %p153, %p154
    %s157 = sadd.s32 %s156, 1
    %p160 = scmp.eq.s32.totalorder %s17, 1
    %p161 = scmp.ne.s32.totalorder %s156, %s158
    %p162 = scmp.eq.s32.totalorder %s17, 0
    %p163 = por %p161, %p162
    %p164 = scmp.ne.s32.totalorder %s156, %s158
    %p165 = scmp.eq.s32.totalorder %s22, 1
    %p166 = por %p164, %p165
    %p167 = scmp.ne.s32.totalorder %s158, %s159
    %p168 = scmp.eq.s32.totalorder %s22, 0
    %p169 = por %p167, %p168
    %p170 = scmp.ne.s32.totalorder %s158, %s159
    %p171 = scmp.eq.s32.totalorder %s23, 1
    %p172 = por %p170, %p171
    %p174 = scmp.ne.s32.totalorder %s159, %s173
    %p175 = scmp.eq.s32.totalorder %s23, 0
    %p176 = por %p174, %p175
    %s178 = sadd.s32 %s177, 1
    %p181 = scmp.eq.s32.totalorder %s17, 1
    %p182 = scmp.ne.s32.totalorder %s177, %s179
    %p183 = scmp.eq.s32.totalorder %s17, 0
    %p184 = por %p182, %p183
    %p185 = scmp.ne.s32.totalorder %s177, %s179
    %p186 = scmp.eq.s32.totalorder %s22, 1
    %p187 = por %p185, %p186
    %p188 = scmp.ne.s32.totalorder %s179, %s180
    %p189 = scmp.eq.s32.totalorder %s22, 0
    %p190 = por %p188, %p189
    %p191 = scmp.ne.s32.totalorder %s179, %s180
    %p192 = scmp.eq.s32.totalorder %s23, 1
    %p193 = por %p191, %p192
    %p195 = scmp.ne.s32.totalorder %s180, %s194
    %p196 = scmp.eq.s32.totalorder %s23, 0
    %p197 = por %p195, %p196
    %s199 = sadd.s32 %s198, 1
    %p202 = scmp.eq.s32.totalorder %s17, 1
    %p203 = scmp.ne.s32.totalorder %s198, %s200
    %p204 = scmp.eq.s32.totalorder %s17, 0
    %p205 = por %p203, %p204
    %p206 = scmp.ne.s32.totalorder %s198, %s200
    %p207 = scmp.eq.s32.totalorder %s22, 1
    %p208 = por %p206, %p207
    %p209 = scmp.ne.s32.totalorder %s200, %s201
    %p210 = scmp.eq.s32.totalorder %s22, 0
    %p211 = por %p209, %p210
    %p212 = scmp.ne.s32.totalorder %s200, %s201
    %p213 = scmp.eq.s32.totalorder %s23, 1
    %p214 = por %p212, %p213
    %p216 = scmp.ne.s32.totalorder %s201, %s215
    %p217 = scmp.eq.s32.totalorder %s23, 0
    %p218 = por %p216, %p217
    %s220 = sadd.s32 %s219, 1
    %p223 = scmp.eq.s32.totalorder %s17, 1
    %p224 = scmp.ne.s32.totalorder %s219, %s221
    %p225 = scmp.eq.s32.totalorder %s17, 0
    %p226 = por %p224, %p225
    %p227 = scmp.ne.s32.totalorder %s219, %s221
    %p228 = scmp.eq.s32.totalorder %s22, 1
    %p229 = por %p227, %p228
    %p230 = scmp.ne.s32.totalorder %s221, %s222
    %p231 = scmp.eq.s32.totalorder %s22, 0
    %p232 = por %p230, %p231
    %p233 = scmp.ne.s32.totalorder %s221, %s222
    %p234 = scmp.eq.s32.totalorder %s23, 1
    %p235 = por %p233, %p234
    %p237 = scmp.ne.s32.totalorder %s222, %s236
    %p238 = scmp.eq.s32.totalorder %s23, 0
    %p239 = por %p237, %p238
    %s241 = sadd.s32 %s240, 1
    %p244 = scmp.eq.s32.totalorder %s17, 1
    %p245 = scmp.ne.s32.totalorder %s240, %s242
    %p246 = scmp.eq.s32.totalorder %s17, 0
    %p247 = por %p245, %p246
    %p248 = scmp.ne.s32.totalorder %s240, %s242
    %p249 = scmp.eq.s32.totalorder %s22, 1
    %p250 = por %p248, %p249
    %p251 = scmp.ne.s32.totalorder %s242, %s243
    %p252 = scmp.eq.s32.totalorder %s22, 0
    %p253 = por %p251, %p252
    %p254 = scmp.ne.s32.totalorder %s242, %s243
    %p255 = scmp.eq.s32.totalorder %s23, 1
    %p256 = por %p254, %p255
    %p258 = scmp.ne.s32.totalorder %s243, %s257
    %p259 = scmp.eq.s32.totalorder %s23, 0
    %p260 = por %p258, %p259
    %s261 = ssub.s32 %s17, %s24
    %p262 = scmp.eq.s32.totalorder %s261, 0
    %s264 = sadd.s32 %s263, 1
    %s265 = scalar_select %p262, %s263, %s264
    %p268 = pneg %p262
    %p269 = scmp.eq.s32.totalorder %s17, 1
    %p270 = por %p268, %p269
    %p271 = scmp.ne.s32.totalorder %s263, %s266
    %p272 = scmp.eq.s32.totalorder %s17, 0
    %p273 = por %p271, %p272
    %p274 = scmp.ne.s32.totalorder %s263, %s266
    %p275 = scmp.eq.s32.totalorder %s22, 1
    %p276 = por %p274, %p275
    %p277 = scmp.ne.s32.totalorder %s266, %s267
    %p278 = scmp.eq.s32.totalorder %s22, 0
    %p279 = por %p277, %p278
    %p280 = scmp.ne.s32.totalorder %s266, %s267
    %p281 = scmp.eq.s32.totalorder %s23, 1
    %p282 = por %p280, %p281
    %p284 = scmp.ne.s32.totalorder %s267, %s283
    %p285 = scmp.eq.s32.totalorder %s23, 0
    %p286 = por %p284, %p285
    %p287 = scmp.le.s32.totalorder 1, %s17
    %p288 = scmp.lt.s32.totalorder %s17, 3
    %p289 = pnand %p287, %p288
    %p290 = pneg %p289
    // Predicated region
    $region9: #{transformer_translator_forward.12} parent=5 // pred_check
      _
    $region10: #{transformer_translator_forward.12} parent=5 // pred_check_branch
      %292 = sbr.rel (%p289) target = $region12
    $region11: #{transformer_translator_forward.12} parent=5 // pred_region
      %s293 = ssub.s32 %s17, 1
      // Predicated region
      $region13: #{transformer_translator_forward.12} parent=11 // pred_check
        %p294 = pneg %p64
      $region14: #{transformer_translator_forward.12} parent=11 // pred_check_branch
        %296 = sbr.rel (%p294) target = $region16
      $region15: #{transformer_translator_forward.12} parent=11 // pred_region
        _
      $region16: #{transformer_translator_forward.12} parent=11 // pred_fallthru
        _
      // Predicated region
      $region17: #{transformer_translator_forward.12} parent=11 // pred_check
        %p297 = pneg %p85
      $region18: #{transformer_translator_forward.12} parent=11 // pred_check_branch
        %299 = sbr.rel (%p297) target = $region20
      $region19: #{transformer_translator_forward.12} parent=11 // pred_region
        _
      $region20: #{transformer_translator_forward.12} parent=11 // pred_fallthru
        _
      // Predicated region
      $region21: #{transformer_translator_forward.12} parent=11 // pred_check
        %p300 = pneg %p106
      $region22: #{transformer_translator_forward.12} parent=11 // pred_check_branch
        %302 = sbr.rel (%p300) target = $region24
      $region23: #{transformer_translator_forward.12} parent=11 // pred_region
        _
      $region24: #{transformer_translator_forward.12} parent=11 // pred_fallthru
        _
      // Predicated region
      $region25: #{transformer_translator_forward.12} parent=11 // pred_check
        %p303 = pneg %p127
      $region26: #{transformer_translator_forward.12} parent=11 // pred_check_branch
        %305 = sbr.rel (%p303) target = $region28
      $region27: #{transformer_translator_forward.12} parent=11 // pred_region
        _
      $region28: #{transformer_translator_forward.12} parent=11 // pred_fallthru
        _
      // Predicated region
      $region29: #{transformer_translator_forward.12} parent=11 // pred_check
        %p306 = pneg %p148
      $region30: #{transformer_translator_forward.12} parent=11 // pred_check_branch
        %308 = sbr.rel (%p306) target = $region32
      $region31: #{transformer_translator_forward.12} parent=11 // pred_region
        _
      $region32: #{transformer_translator_forward.12} parent=11 // pred_fallthru
        _
      // Predicated region
      $region33: #{transformer_translator_forward.12} parent=11 // pred_check
        %p309 = pneg %p169
      $region34: #{transformer_translator_forward.12} parent=11 // pred_check_branch
        %311 = sbr.rel (%p309) target = $region36
      $region35: #{transformer_translator_forward.12} parent=11 // pred_region
        _
      $region36: #{transformer_translator_forward.12} parent=11 // pred_fallthru
        _
      // Predicated region
      $region37: #{transformer_translator_forward.12} parent=11 // pred_check
        %p312 = pneg %p190
      $region38: #{transformer_translator_forward.12} parent=11 // pred_check_branch
        %314 = sbr.rel (%p312) target = $region40
      $region39: #{transformer_translator_forward.12} parent=11 // pred_region
        _
      $region40: #{transformer_translator_forward.12} parent=11 // pred_fallthru
        _
      // Predicated region
      $region41: #{transformer_translator_forward.12} parent=11 // pred_check
        %p315 = pneg %p211
      $region42: #{transformer_translator_forward.12} parent=11 // pred_check_branch
        %317 = sbr.rel (%p315) target = $region44
      $region43: #{transformer_translator_forward.12} parent=11 // pred_region
        _
      $region44: #{transformer_translator_forward.12} parent=11 // pred_fallthru
        _
      // Predicated region
      $region45: #{transformer_translator_forward.12} parent=11 // pred_check
        %p318 = pneg %p232
      $region46: #{transformer_translator_forward.12} parent=11 // pred_check_branch
        %320 = sbr.rel (%p318) target = $region48
      $region47: #{transformer_translator_forward.12} parent=11 // pred_region
        _
      $region48: #{transformer_translator_forward.12} parent=11 // pred_fallthru
        _
      // Predicated region
      $region49: #{transformer_translator_forward.12} parent=11 // pred_check
        %p321 = pneg %p253
      $region50: #{transformer_translator_forward.12} parent=11 // pred_check_branch
        %323 = sbr.rel (%p321) target = $region52
      $region51: #{transformer_translator_forward.12} parent=11 // pred_region
        _
      $region52: #{transformer_translator_forward.12} parent=11 // pred_fallthru
        _
    $region12: #{transformer_translator_forward.12} parent=5 // pred_fallthru
      _
    %p324 = scmp.lt.s32.totalorder %s17, 2
    // Predicated region
    $region53: #{transformer_translator_forward.12} parent=5 // pred_check
      %p325 = pneg %p324
    $region54: #{transformer_translator_forward.12} parent=5 // pred_check_branch
      %327 = sbr.rel (%p325) target = $region56
    $region55: #{transformer_translator_forward.12} parent=5 // pred_region
      // Predicated region
      $region57: #{transformer_translator_forward.12} parent=55 // pred_check
        %p328 = pneg %p37
      $region58: #{transformer_translator_forward.12} parent=55 // pred_check_branch
        %330 = sbr.rel (%p328) target = $region60
      $region59: #{transformer_translator_forward.12} parent=55 // pred_region
        %p331 = scmp.lt.s32.totalorder %s17, 1
        %s332 = scalar_select %p331, %s17, 1
        %s333 = smul.addr %s332, 4
        %s334 = scalar_lea.vmem %s0, %s333
      $region60: #{transformer_translator_forward.12} parent=55 // pred_fallthru
        _
    $region56: #{transformer_translator_forward.12} parent=5 // pred_fallthru
      _
    %p335 = scmp.le.s32.totalorder 1, %s17
    %p336 = scmp.lt.s32.totalorder %s17, 3
    %p337 = pnand %p335, %p336
    %p338 = pneg %p337
    // Predicated region
    $region61: #{transformer_translator_forward.12} parent=5 // pred_check
      _
    $region62: #{transformer_translator_forward.12} parent=5 // pred_check_branch
      %340 = sbr.rel (%p337) target = $region64
    $region63: #{transformer_translator_forward.12} parent=5 // pred_region
      %s341 = ssub.s32 %s17, 1
      %p342 = scmp.lt.s32.totalorder %s22, 1
      %s343 = scalar_select %p342, %s22, 1
      %s344 = smul.addr %s343, 4
      %s345 = scalar_lea.vmem %s0, %s344
      %p346 = pneg %p43
      %p347 = pneg %p40
      %p348 = pneg %p64
      %p349 = pneg %p61
      %p350 = pneg %p85
      %p351 = pneg %p82
      %p352 = pneg %p106
      %p353 = pneg %p103
      %p354 = pneg %p127
      %p355 = pneg %p124
      %p356 = pneg %p148
      %p357 = pneg %p145
      %p358 = pneg %p169
      %p359 = pneg %p166
      %p360 = pneg %p190
      %p361 = pneg %p187
      %p362 = pneg %p211
      %p363 = pneg %p208
      %p364 = pneg %p232
      %p365 = pneg %p229
      %p366 = pneg %p253
      %p367 = pneg %p250
      %p368 = pneg %p279
      %p369 = pneg %p276
      %p370 = scmp.lt.s32.totalorder %s22, 1
      %s371 = scalar_select %p370, %s22, 1
      %s372 = smul.addr %s371, 4
      %s373 = scalar_lea.vmem %s11, %s372
      %p374 = scmp.lt.s32.totalorder %s22, 1
      %s375 = scalar_select %p374, %s22, 1
      %s376 = smul.addr %s375, 4
      %s377 = scalar_lea.vmem %s0, %s376
      %p378 = scmp.lt.s32.totalorder %s22, 1
      %s379 = scalar_select %p378, %s22, 1
      %s380 = smul.addr %s379, 4
      %s381 = scalar_lea.vmem %s11, %s380
      %v383 = vld [vmem:[%s377] sm:$0xf]
      %v384 = vld [vmem:[%s1] sm:$0xf]
      %v385 = vld [vmem:[%s1 + $0x4] sm:$0xf]
      %v386 = vld [vmem:[%s1 + $0x8] sm:$0xf]
      %v387 = vld [vmem:[%s1 + $0xc] sm:$0xf]
      %v388 = vld [vmem:[%s1 + $0x10] sm:$0xf]
      %v389 = vld [vmem:[%s1 + $0x14] sm:$0xf]
      %v390 = vld [vmem:[%s1 + $0x18] sm:$0xf]
      %v391 = vld [vmem:[%s1 + $0x1c] sm:$0xf]
      %v392 = vld [vmem:[%s2] sm:$0x1]
      %v394 = vlaneseq
      %v395 = vshrl.u32 %v394, 7
      %v396 = vsub.s32 0, %v395
      %v397 = vrot.slane %v392, %v396
      %v407 = vunpack.c.l.b16 %v384
      %v408 = vunpack.c.l.b16 %v385
      %v409 = vunpack.c.l.b16 %v386
      %v410 = vunpack.c.l.b16 %v387
      %v411 = vunpack.c.l.b16 %v388
      %v412 = vunpack.c.l.b16 %v389
      %v413 = vunpack.c.l.b16 %v390
      %v414 = vunpack.c.l.b16 %v391
      %v415 = vpack.c.b16 %v408, %v407
      %v416 = vpack.c.b16 %v410, %v409
      %v417 = vpack.c.b16 %v412, %v411
      %v418 = vpack.c.b16 %v414, %v413
      %vm423 = vcmask 523264
      %v425 = vsel %vm423, %v383, 0
      %427 = vmatprep.subr.bf16.mxu0 0
      %428 = vmatpush1.bf16.msra.mxu0 %v415
      %429 = vmatprep.subr.bf16.mxu0 0
      %430 = vmatpush1.bf16.msra.mxu0 %v416
      %431 = vmatprep.subr.bf16.mxu0 0
      %432 = vmatpush1.bf16.msra.mxu0 %v417
      %433 = vmatprep.subr.bf16.mxu0 0
      %434 = vmatpush1.bf16.msra.mxu0 %v418
      %435 = vmatprep.subr.bf16.mxu0 0
      %436 = vmatpush1.bf16.msra.mxu0 0
      %437 = vmatprep.subr.bf16.mxu0 0
      %438 = vmatpush1.bf16.msra.mxu0 0
      %439 = vmatprep.subr.bf16.mxu0 0
      %440 = vmatpush1.bf16.msra.mxu0 0
      %441 = vmatprep.subr.bf16.mxu0 0
      %442 = vmatpush1.bf16.msra.mxu0 0
      %443 = vmatprep.subr.bf16.mxu0 0
      %444 = vmatpush1.bf16.msra.mxu0 0
      %445 = vmatprep.subr.bf16.mxu0 0
      %446 = vmatpush1.bf16.msra.mxu0 0
      %447 = vmatprep.subr.bf16.mxu0 0
      %448 = vmatpush1.bf16.msra.mxu0 0
      %449 = vmatprep.subr.bf16.mxu0 0
      %450 = vmatpush1.bf16.msra.mxu0 0
      %451 = vmatprep.subr.bf16.mxu0 0
      %452 = vmatpush1.bf16.msra.mxu0 0
      %453 = vmatprep.subr.bf16.mxu0 0
      %454 = vmatpush1.bf16.msra.mxu0 0
      %455 = vmatprep.subr.bf16.mxu0 0
      %456 = vmatpush1.bf16.msra.mxu0 0
      %457 = vmatprep.subr.bf16.mxu0 0
      %458 = vmatpush1.bf16.msra.mxu0 0
      %459 = vmatprep.mubr.bf16.mxu0 0
      %460 = vmatmul.mubr.bf16.gmra.mrb[0].mxu0 %v425
      %v461 = vpop.f32.mrb[0].mxu0
      %v462 = vadd.f32 %v397, %v461
      %v463 = vpop.f32.mrb[0].mxu0
      %v464 = vpop.f32.mrb[0].mxu0
      %v465 = vpop.f32.mrb[0].mxu0
      %466 = vdwg.mxu0
      %v467 = vld [vmem:[%s3] sm:$0xf]
      %v468 = vld [vmem:[%s3 + $0x4] sm:$0xf]
      %v469 = vld [vmem:[%s3 + $0x8] sm:$0xf]
      %v470 = vld [vmem:[%s3 + $0xc] sm:$0xf]
      %v471 = vld [vmem:[%s3 + $0x10] sm:$0xf]
      %v472 = vld [vmem:[%s3 + $0x14] sm:$0xf]
      %v473 = vld [vmem:[%s3 + $0x18] sm:$0xf]
      %v474 = vld [vmem:[%s3 + $0x1c] sm:$0xf]
      %v475 = vld [vmem:[%s4] sm:$0x1]
      %v477 = vlaneseq
      %v478 = vshrl.u32 %v477, 7
      %v479 = vsub.s32 0, %v478
      %v480 = vrot.slane %v475, %v479
      %v490 = vunpack.c.l.b16 %v467
      %v491 = vunpack.c.l.b16 %v468
      %v492 = vunpack.c.l.b16 %v469
      %v493 = vunpack.c.l.b16 %v470
      %v494 = vunpack.c.l.b16 %v471
      %v495 = vunpack.c.l.b16 %v472
      %v496 = vunpack.c.l.b16 %v473
      %v497 = vunpack.c.l.b16 %v474
      %v498 = vpack.c.b16 %v491, %v490
      %v499 = vpack.c.b16 %v493, %v492
      %v500 = vpack.c.b16 %v495, %v494
      %v501 = vpack.c.b16 %v497, %v496
      %506 = vmatprep.subr.bf16.mxu0 0
      %507 = vmatpush1.bf16.msra.mxu0 %v498
      %508 = vmatprep.subr.bf16.mxu0 0
      %509 = vmatpush1.bf16.msra.mxu0 %v499
      %510 = vmatprep.subr.bf16.mxu0 0
      %511 = vmatpush1.bf16.msra.mxu0 %v500
      %512 = vmatprep.subr.bf16.mxu0 0
      %513 = vmatpush1.bf16.msra.mxu0 %v501
      %514 = vmatprep.subr.bf16.mxu0 0
      %515 = vmatpush1.bf16.msra.mxu0 0
      %516 = vmatprep.subr.bf16.mxu0 0
      %517 = vmatpush1.bf16.msra.mxu0 0
      %518 = vmatprep.subr.bf16.mxu0 0
      %519 = vmatpush1.bf16.msra.mxu0 0
      %520 = vmatprep.subr.bf16.mxu0 0
      %521 = vmatpush1.bf16.msra.mxu0 0
      %522 = vmatprep.subr.bf16.mxu0 0
      %523 = vmatpush1.bf16.msra.mxu0 0
      %524 = vmatprep.subr.bf16.mxu0 0
      %525 = vmatpush1.bf16.msra.mxu0 0
      %526 = vmatprep.subr.bf16.mxu0 0
      %527 = vmatpush1.bf16.msra.mxu0 0
      %528 = vmatprep.subr.bf16.mxu0 0
      %529 = vmatpush1.bf16.msra.mxu0 0
      %530 = vmatprep.subr.bf16.mxu0 0
      %531 = vmatpush1.bf16.msra.mxu0 0
      %532 = vmatprep.subr.bf16.mxu0 0
      %533 = vmatpush1.bf16.msra.mxu0 0
      %534 = vmatprep.subr.bf16.mxu0 0
      %535 = vmatpush1.bf16.msra.mxu0 0
      %536 = vmatprep.subr.bf16.mxu0 0
      %537 = vmatpush1.bf16.msra.mxu0 0
      %538 = vmatprep.mubr.bf16.mxu0 0
      %539 = vmatmul.mubr.bf16.gmra.mrb[0].mxu0 %v425
      %v540 = vpop.f32.mrb[0].mxu0
      %v541 = vadd.f32 %v480, %v540
      %v542 = vpop.f32.mrb[0].mxu0
      %v543 = vpop.f32.mrb[0].mxu0
      %v544 = vpop.f32.mrb[0].mxu0
      %545 = vdwg.mxu0
      %v546 = vld [vmem:[%s5] sm:$0xf]
      %v547 = vld [vmem:[%s5 + $0x4] sm:$0xf]
      %v548 = vld [vmem:[%s5 + $0x8] sm:$0xf]
      %v549 = vld [vmem:[%s5 + $0xc] sm:$0xf]
      %v550 = vld [vmem:[%s5 + $0x10] sm:$0xf]
      %v551 = vld [vmem:[%s5 + $0x14] sm:$0xf]
      %v552 = vld [vmem:[%s5 + $0x18] sm:$0xf]
      %v553 = vld [vmem:[%s5 + $0x1c] sm:$0xf]
      %v554 = vld [vmem:[%s6] sm:$0x1]
      %v556 = vlaneseq
      %v557 = vshrl.u32 %v556, 7
      %v558 = vsub.s32 0, %v557
      %v559 = vrot.slane %v554, %v558
      %v569 = vunpack.c.l.b16 %v546
      %v570 = vunpack.c.l.b16 %v547
      %v571 = vunpack.c.l.b16 %v548
      %v572 = vunpack.c.l.b16 %v549
      %v573 = vunpack.c.l.b16 %v550
      %v574 = vunpack.c.l.b16 %v551
      %v575 = vunpack.c.l.b16 %v552
      %v576 = vunpack.c.l.b16 %v553
      %v577 = vpack.c.b16 %v570, %v569
      %v578 = vpack.c.b16 %v572, %v571
      %v579 = vpack.c.b16 %v574, %v573
      %v580 = vpack.c.b16 %v576, %v575
      %585 = vmatprep.subr.bf16.mxu0 0
      %586 = vmatpush1.bf16.msra.mxu0 %v577
      %587 = vmatprep.subr.bf16.mxu0 0
      %588 = vmatpush1.bf16.msra.mxu0 %v578
      %589 = vmatprep.subr.bf16.mxu0 0
      %590 = vmatpush1.bf16.msra.mxu0 %v579
      %591 = vmatprep.subr.bf16.mxu0 0
      %592 = vmatpush1.bf16.msra.mxu0 %v580
      %593 = vmatprep.subr.bf16.mxu0 0
      %594 = vmatpush1.bf16.msra.mxu0 0
      %595 = vmatprep.subr.bf16.mxu0 0
      %596 = vmatpush1.bf16.msra.mxu0 0
      %597 = vmatprep.subr.bf16.mxu0 0
      %598 = vmatpush1.bf16.msra.mxu0 0
      %599 = vmatprep.subr.bf16.mxu0 0
      %600 = vmatpush1.bf16.msra.mxu0 0
      %601 = vmatprep.subr.bf16.mxu0 0
      %602 = vmatpush1.bf16.msra.mxu0 0
      %603 = vmatprep.subr.bf16.mxu0 0
      %604 = vmatpush1.bf16.msra.mxu0 0
      %605 = vmatprep.subr.bf16.mxu0 0
      %606 = vmatpush1.bf16.msra.mxu0 0
      %607 = vmatprep.subr.bf16.mxu0 0
      %608 = vmatpush1.bf16.msra.mxu0 0
      %609 = vmatprep.subr.bf16.mxu0 0
      %610 = vmatpush1.bf16.msra.mxu0 0
      %611 = vmatprep.subr.bf16.mxu0 0
      %612 = vmatpush1.bf16.msra.mxu0 0
      %613 = vmatprep.subr.bf16.mxu0 0
      %614 = vmatpush1.bf16.msra.mxu0 0
      %615 = vmatprep.subr.bf16.mxu0 0
      %616 = vmatpush1.bf16.msra.mxu0 0
      %617 = vmatprep.mubr.bf16.mxu0 0
      %618 = vmatmul.mubr.bf16.gmra.mrb[0].mxu0 %v425
      %v619 = vpop.f32.mrb[0].mxu0
      %v620 = vadd.f32 %v559, %v619
      %v621 = vpop.f32.mrb[0].mxu0
      %v622 = vpop.f32.mrb[0].mxu0
      %v623 = vpop.f32.mrb[0].mxu0
      %624 = vdwg.mxu0
      %v625 = vpack.c.bf16 %v462, %v462
      %v626 = vpack.c.bf16 %v541, %v541
      %vm627 = vcmask 130048
      %v629 = vsel %vm627, %v625, 0
      %v632 = vsel %vm627, %v626, 0
      %634 = vmatprep.subr.bf16.mxu0 0
      %635 = vmatpush1.bf16.xpose.msra.mxu0 %v632
      %636 = vmatprep.subr.bf16.mxu0 0
      %637 = vmatpush1.bf16.xpose.msra.mxu0 0
      %638 = vmatprep.subr.bf16.mxu0 0
      %639 = vmatpush1.bf16.xpose.msra.mxu0 0
      %640 = vmatprep.subr.bf16.mxu0 0
      %641 = vmatpush1.bf16.xpose.msra.mxu0 0
      %642 = vmatprep.subr.bf16.mxu0 0
      %643 = vmatpush1.bf16.xpose.msra.mxu0 0
      %644 = vmatprep.subr.bf16.mxu0 0
      %645 = vmatpush1.bf16.xpose.msra.mxu0 0
      %646 = vmatprep.subr.bf16.mxu0 0
      %647 = vmatpush1.bf16.xpose.msra.mxu0 0
      %648 = vmatprep.subr.bf16.mxu0 0
      %649 = vmatpush1.bf16.xpose.msra.mxu0 0
      %650 = vmatprep.subr.bf16.mxu0 0
      %651 = vmatpush1.bf16.xpose.msra.mxu0 0
      %652 = vmatprep.subr.bf16.mxu0 0
      %653 = vmatpush1.bf16.xpose.msra.mxu0 0
      %654 = vmatprep.subr.bf16.mxu0 0
      %655 = vmatpush1.bf16.xpose.msra.mxu0 0
      %656 = vmatprep.subr.bf16.mxu0 0
      %657 = vmatpush1.bf16.xpose.msra.mxu0 0
      %658 = vmatprep.subr.bf16.mxu0 0
      %659 = vmatpush1.bf16.xpose.msra.mxu0 0
      %660 = vmatprep.subr.bf16.mxu0 0
      %661 = vmatpush1.bf16.xpose.msra.mxu0 0
      %662 = vmatprep.subr.bf16.mxu0 0
      %663 = vmatpush1.bf16.xpose.msra.mxu0 0
      %664 = vmatprep.subr.bf16.mxu0 0
      %665 = vmatpush1.bf16.xpose.msra.mxu0 0
      %666 = vmatprep.mubr.bf16.mxu0 0
      %667 = vmatmul.mubr.bf16.gmra.mrb[0].mxu0 %v629
      %v668 = vpop.f32.mrb[0].mxu0
      %v669 = vadd.f32 0.0, %v668
      %v670 = vpop.f32.mrb[0].mxu0
      %v671 = vpop.f32.mrb[0].mxu0
      %v672 = vpop.f32.mrb[0].mxu0
      %673 = vdwg.mxu0
      %v674 = vmul.f32 %v669, 0.25
      %vm675 = vcmask 64512
      %v676 = vsel %vm675, %v674, -inf
      %677 = vmax.xlane.f32.xlu0 %v676
      %v678 = vpop.xlane.xlu0 %677
      %v679 = vsub.f32 %v674, %v678
      %v680 = vmul.f32 %v679, 1.442695
      %v681 = vpow.pop %v680
      %v682 = vsel %vm675, %v681, 0.0
      %683 = vadd.xlane.f32.xlu0 %v682
      %v684 = vpop.xlane.xlu0 %683
      %v685 = vrcp.pop %v684
      %v686 = vmul.f32 %v681, %v685
      %v687 = vpack.c.bf16 %v686, %v686
      %v688 = vpack.c.bf16 %v620, %v620
      %v690 = vsel %vm675, %v687, 0
      %vm692 = vcmask 1043456
      %v694 = vsel %vm692, %v688, 0
      %696 = vmatprep.subr.bf16.mxu0 0
      %697 = vmatpush1.bf16.msra.mxu0 %v694
      %698 = vmatprep.subr.bf16.mxu0 0
      %699 = vmatpush1.bf16.msra.mxu0 0
      %700 = vmatprep.subr.bf16.mxu0 0
      %701 = vmatpush1.bf16.msra.mxu0 0
      %702 = vmatprep.subr.bf16.mxu0 0
      %703 = vmatpush1.bf16.msra.mxu0 0
      %704 = vmatprep.subr.bf16.mxu0 0
      %705 = vmatpush1.bf16.msra.mxu0 0
      %706 = vmatprep.subr.bf16.mxu0 0
      %707 = vmatpush1.bf16.msra.mxu0 0
      %708 = vmatprep.subr.bf16.mxu0 0
      %709 = vmatpush1.bf16.msra.mxu0 0
      %710 = vmatprep.subr.bf16.mxu0 0
      %711 = vmatpush1.bf16.msra.mxu0 0
      %712 = vmatprep.subr.bf16.mxu0 0
      %713 = vmatpush1.bf16.msra.mxu0 0
      %714 = vmatprep.subr.bf16.mxu0 0
      %715 = vmatpush1.bf16.msra.mxu0 0
      %716 = vmatprep.subr.bf16.mxu0 0
      %717 = vmatpush1.bf16.msra.mxu0 0
      %718 = vmatprep.subr.bf16.mxu0 0
      %719 = vmatpush1.bf16.msra.mxu0 0
      %720 = vmatprep.subr.bf16.mxu0 0
      %721 = vmatpush1.bf16.msra.mxu0 0
      %722 = vmatprep.subr.bf16.mxu0 0
      %723 = vmatpush1.bf16.msra.mxu0 0
      %724 = vmatprep.subr.bf16.mxu0 0
      %725 = vmatpush1.bf16.msra.mxu0 0
      %726 = vmatprep.subr.bf16.mxu0 0
      %727 = vmatpush1.bf16.msra.mxu0 0
      %728 = vmatprep.mubr.bf16.mxu0 0
      %729 = vmatmul.mubr.bf16.gmra.mrb[0].mxu0 %v690
      %v730 = vpop.f32.mrb[0].mxu0
      %v731 = vadd.f32 0.0, %v730
      %v732 = vpop.f32.mrb[0].mxu0
      %v733 = vpop.f32.mrb[0].mxu0
      %v734 = vpop.f32.mrb[0].mxu0
      %735 = vdwg.mxu0
      %v736 = vpack.c.bf16 %v731, %v731
      %v737 = vld [vmem:[%s7] sm:$0xf]
      %v738 = vld [vmem:[%s7 + $0x4] sm:$0xf]
      %s739 = scalar_lea.vmem %s1, 32
      %v740 = vld [vmem:[%s739] sm:$0xf]
      %v741 = vld [vmem:[%s739 + $0x4] sm:$0xf]
      %v742 = vld [vmem:[%s739 + $0x8] sm:$0xf]
      %v743 = vld [vmem:[%s739 + $0xc] sm:$0xf]
      %v744 = vld [vmem:[%s739 + $0x10] sm:$0xf]
      %v745 = vld [vmem:[%s739 + $0x14] sm:$0xf]
      %v746 = vld [vmem:[%s739 + $0x18] sm:$0xf]
      %v747 = vld [vmem:[%s739 + $0x1c] sm:$0xf]
      %s748 = scalar_lea.vmem %s2, 1
      %v749 = vld [vmem:[%s748] sm:$0x1]
      %v751 = vlaneseq
      %v752 = vshrl.u32 %v751, 7
      %v753 = vsub.s32 0, %v752
      %v754 = vrot.slane %v749, %v753
      %v764 = vunpack.c.l.b16 %v740
      %v765 = vunpack.c.l.b16 %v741
      %v766 = vunpack.c.l.b16 %v742
      %v767 = vunpack.c.l.b16 %v743
      %v768 = vunpack.c.l.b16 %v744
      %v769 = vunpack.c.l.b16 %v745
      %v770 = vunpack.c.l.b16 %v746
      %v771 = vunpack.c.l.b16 %v747
      %v772 = vpack.c.b16 %v765, %v764
      %v773 = vpack.c.b16 %v767, %v766
      %v774 = vpack.c.b16 %v769, %v768
      %v775 = vpack.c.b16 %v771, %v770
      %780 = vmatprep.subr.bf16.mxu0 0
      %781 = vmatpush1.bf16.msra.mxu0 %v772
      %782 = vmatprep.subr.bf16.mxu0 0
      %783 = vmatpush1.bf16.msra.mxu0 %v773
      %784 = vmatprep.subr.bf16.mxu0 0
      %785 = vmatpush1.bf16.msra.mxu0 %v774
      %786 = vmatprep.subr.bf16.mxu0 0
      %787 = vmatpush1.bf16.msra.mxu0 %v775
      %788 = vmatprep.subr.bf16.mxu0 0
      %789 = vmatpush1.bf16.msra.mxu0 0
      %790 = vmatprep.subr.bf16.mxu0 0
      %791 = vmatpush1.bf16.msra.mxu0 0
      %792 = vmatprep.subr.bf16.mxu0 0
      %793 = vmatpush1.bf16.msra.mxu0 0
      %794 = vmatprep.subr.bf16.mxu0 0
      %795 = vmatpush1.bf16.msra.mxu0 0
      %796 = vmatprep.subr.bf16.mxu0 0
      %797 = vmatpush1.bf16.msra.mxu0 0
      %798 = vmatprep.subr.bf16.mxu0 0
      %799 = vmatpush1.bf16.msra.mxu0 0
      %800 = vmatprep.subr.bf16.mxu0 0
      %801 = vmatpush1.bf16.msra.mxu0 0
      %802 = vmatprep.subr.bf16.mxu0 0
      %803 = vmatpush1.bf16.msra.mxu0 0
      %804 = vmatprep.subr.bf16.mxu0 0
      %805 = vmatpush1.bf16.msra.mxu0 0
      %806 = vmatprep.subr.bf16.mxu0 0
      %807 = vmatpush1.bf16.msra.mxu0 0
      %808 = vmatprep.subr.bf16.mxu0 0
      %809 = vmatpush1.bf16.msra.mxu0 0
      %810 = vmatprep.subr.bf16.mxu0 0
      %811 = vmatpush1.bf16.msra.mxu0 0
      %812 = vmatprep.mubr.bf16.mxu0 0
      %813 = vmatmul.mubr.bf16.gmra.mrb[0].mxu0 %v425
      %v814 = vpop.f32.mrb[0].mxu0
      %v815 = vadd.f32 %v754, %v814
      %v816 = vpop.f32.mrb[0].mxu0
      %v817 = vpop.f32.mrb[0].mxu0
      %v818 = vpop.f32.mrb[0].mxu0
      %819 = vdwg.mxu0
      %s820 = scalar_lea.vmem %s3, 32
      %v821 = vld [vmem:[%s820] sm:$0xf]
      %v822 = vld [vmem:[%s820 + $0x4] sm:$0xf]
      %v823 = vld [vmem:[%s820 + $0x8] sm:$0xf]
      %v824 = vld [vmem:[%s820 + $0xc] sm:$0xf]
      %v825 = vld [vmem:[%s820 + $0x10] sm:$0xf]
      %v826 = vld [vmem:[%s820 + $0x14] sm:$0xf]
      %v827 = vld [vmem:[%s820 + $0x18] sm:$0xf]
      %v828 = vld [vmem:[%s820 + $0x1c] sm:$0xf]
      %s829 = scalar_lea.vmem %s4, 1
      %v830 = vld [vmem:[%s829] sm:$0x1]
      %v832 = vlaneseq
      %v833 = vshrl.u32 %v832, 7
      %v834 = vsub.s32 0, %v833
      %v835 = vrot.slane %v830, %v834
      %v845 = vunpack.c.l.b16 %v821
      %v846 = vunpack.c.l.b16 %v822
      %v847 = vunpack.c.l.b16 %v823
      %v848 = vunpack.c.l.b16 %v824
      %v849 = vunpack.c.l.b16 %v825
      %v850 = vunpack.c.l.b16 %v826
      %v851 = vunpack.c.l.b16 %v827
      %v852 = vunpack.c.l.b16 %v828
      %v853 = vpack.c.b16 %v846, %v845
      %v854 = vpack.c.b16 %v848, %v847
      %v855 = vpack.c.b16 %v850, %v849
      %v856 = vpack.c.b16 %v852, %v851
      %861 = vmatprep.subr.bf16.mxu0 0
      %862 = vmatpush1.bf16.msra.mxu0 %v853
      %863 = vmatprep.subr.bf16.mxu0 0
      %864 = vmatpush1.bf16.msra.mxu0 %v854
      %865 = vmatprep.subr.bf16.mxu0 0
      %866 = vmatpush1.bf16.msra.mxu0 %v855
      %867 = vmatprep.subr.bf16.mxu0 0
      %868 = vmatpush1.bf16.msra.mxu0 %v856
      %869 = vmatprep.subr.bf16.mxu0 0
      %870 = vmatpush1.bf16.msra.mxu0 0
      %871 = vmatprep.subr.bf16.mxu0 0
      %872 = vmatpush1.bf16.msra.mxu0 0
      %873 = vmatprep.subr.bf16.mxu0 0
      %874 = vmatpush1.bf16.msra.mxu0 0
      %875 = vmatprep.subr.bf16.mxu0 0
      %876 = vmatpush1.bf16.msra.mxu0 0
      %877 = vmatprep.subr.bf16.mxu0 0
      %878 = vmatpush1.bf16.msra.mxu0 0
      %879 = vmatprep.subr.bf16.mxu0 0
      %880 = vmatpush1.bf16.msra.mxu0 0
      %881 = vmatprep.subr.bf16.mxu0 0
      %882 = vmatpush1.bf16.msra.mxu0 0
      %883 = vmatprep.subr.bf16.mxu0 0
      %884 = vmatpush1.bf16.msra.mxu0 0
      %885 = vmatprep.subr.bf16.mxu0 0
      %886 = vmatpush1.bf16.msra.mxu0 0
      %887 = vmatprep.subr.bf16.mxu0 0
      %888 = vmatpush1.bf16.msra.mxu0 0
      %889 = vmatprep.subr.bf16.mxu0 0
      %890 = vmatpush1.bf16.msra.mxu0 0
      %891 = vmatprep.subr.bf16.mxu0 0
      %892 = vmatpush1.bf16.msra.mxu0 0
      %893 = vmatprep.mubr.bf16.mxu0 0
      %894 = vmatmul.mubr.bf16.gmra.mrb[0].mxu0 %v425
      %v895 = vpop.f32.mrb[0].mxu0
      %v896 = vadd.f32 %v835, %v895
      %v897 = vpop.f32.mrb[0].mxu0
      %v898 = vpop.f32.mrb[0].mxu0
      %v899 = vpop.f32.mrb[0].mxu0
      %900 = vdwg.mxu0
      %s901 = scalar_lea.vmem %s5, 32
      %v902 = vld [vmem:[%s901] sm:$0xf]
      %v903 = vld [vmem:[%s901 + $0x4] sm:$0xf]
      %v904 = vld [vmem:[%s901 + $0x8] sm:$0xf]
      %v905 = vld [vmem:[%s901 + $0xc] sm:$0xf]
      %v906 = vld [vmem:[%s901 + $0x10] sm:$0xf]
      %v907 = vld [vmem:[%s901 + $0x14] sm:$0xf]
      %v908 = vld [vmem:[%s901 + $0x18] sm:$0xf]
      %v909 = vld [vmem:[%s901 + $0x1c] sm:$0xf]
      %s910 = scalar_lea.vmem %s6, 1
      %v911 = vld [vmem:[%s910] sm:$0x1]
      %v913 = vlaneseq
      %v914 = vshrl.u32 %v913, 7
      %v915 = vsub.s32 0, %v914
      %v916 = vrot.slane %v911, %v915
      %v926 = vunpack.c.l.b16 %v902
      %v927 = vunpack.c.l.b16 %v903
      %v928 = vunpack.c.l.b16 %v904
      %v929 = vunpack.c.l.b16 %v905
      %v930 = vunpack.c.l.b16 %v906
      %v931 = vunpack.c.l.b16 %v907
      %v932 = vunpack.c.l.b16 %v908
      %v933 = vunpack.c.l.b16 %v909
      %v934 = vpack.c.b16 %v927, %v926
      %v935 = vpack.c.b16 %v929, %v928
      %v936 = vpack.c.b16 %v931, %v930
      %v937 = vpack.c.b16 %v933, %v932
      %942 = vmatprep.subr.bf16.mxu0 0
      %943 = vmatpush1.bf16.msra.mxu0 %v934
      %944 = vmatprep.subr.bf16.mxu0 0
      %945 = vmatpush1.bf16.msra.mxu0 %v935
      %946 = vmatprep.subr.bf16.mxu0 0
      %947 = vmatpush1.bf16.msra.mxu0 %v936
      %948 = vmatprep.subr.bf16.mxu0 0
      %949 = vmatpush1.bf16.msra.mxu0 %v937
      %950 = vmatprep.subr.bf16.mxu0 0
      %951 = vmatpush1.bf16.msra.mxu0 0
      %952 = vmatprep.subr.bf16.mxu0 0
      %953 = vmatpush1.bf16.msra.mxu0 0
      %954 = vmatprep.subr.bf16.mxu0 0
      %955 = vmatpush1.bf16.msra.mxu0 0
      %956 = vmatprep.subr.bf16.mxu0 0
      %957 = vmatpush1.bf16.msra.mxu0 0
      %958 = vmatprep.subr.bf16.mxu0 0
      %959 = vmatpush1.bf16.msra.mxu0 0
      %960 = vmatprep.subr.bf16.mxu0 0
      %961 = vmatpush1.bf16.msra.mxu0 0
      %962 = vmatprep.subr.bf16.mxu0 0
      %963 = vmatpush1.bf16.msra.mxu0 0
      %964 = vmatprep.subr.bf16.mxu0 0
      %965 = vmatpush1.bf16.msra.mxu0 0
      %966 = vmatprep.subr.bf16.mxu0 0
      %967 = vmatpush1.bf16.msra.mxu0 0
      %968 = vmatprep.subr.bf16.mxu0 0
      %969 = vmatpush1.bf16.msra.mxu0 0
      %970 = vmatprep.subr.bf16.mxu0 0
      %971 = vmatpush1.bf16.msra.mxu0 0
      %972 = vmatprep.subr.bf16.mxu0 0
      %973 = vmatpush1.bf16.msra.mxu0 0
      %974 = vmatprep.mubr.bf16.mxu0 0
      %975 = vmatmul.mubr.bf16.gmra.mrb[0].mxu0 %v425
      %v976 = vpop.f32.mrb[0].mxu0
      %v977 = vadd.f32 %v916, %v976
      %v978 = vpop.f32.mrb[0].mxu0
      %v979 = vpop.f32.mrb[0].mxu0
      %v980 = vpop.f32.mrb[0].mxu0
      %981 = vdwg.mxu0
      %v982 = vpack.c.bf16 %v815, %v815
      %v983 = vpack.c.bf16 %v896, %v896
      %v985 = vsel %vm627, %v982, 0
      %v988 = vsel %vm627, %v983, 0
      %990 = vmatprep.subr.bf16.mxu0 0
      %991 = vmatpush1.bf16.xpose.msra.mxu0 %v988
      %992 = vmatprep.subr.bf16.mxu0 0
      %993 = vmatpush1.bf16.xpose.msra.mxu0 0
      %994 = vmatprep.subr.bf16.mxu0 0
      %995 = vmatpush1.bf16.xpose.msra.mxu0 0
      %996 = vmatprep.subr.bf16.mxu0 0
      %997 = vmatpush1.bf16.xpose.msra.mxu0 0
      %998 = vmatprep.subr.bf16.mxu0 0
      %999 = vmatpush1.bf16.xpose.msra.mxu0 0
      %1000 = vmatprep.subr.bf16.mxu0 0
      %1001 = vmatpush1.bf16.xpose.msra.mxu0 0
      %1002 = vmatprep.subr.bf16.mxu0 0
      %1003 = vmatpush1.bf16.xpose.msra.mxu0 0
      %1004 = vmatprep.subr.bf16.mxu0 0
      %1005 = vmatpush1.bf16.xpose.msra.mxu0 0
      %1006 = vmatprep.subr.bf16.mxu0 0
      %1007 = vmatpush1.bf16.xpose.msra.mxu0 0
      %1008 = vmatprep.subr.bf16.mxu0 0
      %1009 = vmatpush1.bf16.xpose.msra.mxu0 0
      %1010 = vmatprep.subr.bf16.mxu0 0
      %1011 = vmatpush1.bf16.xpose.msra.mxu0 0
      %1012 = vmatprep.subr.bf16.mxu0 0
      %1013 = vmatpush1.bf16.xpose.msra.mxu0 0
      %1014 = vmatprep.subr.bf16.mxu0 0
      %1015 = vmatpush1.bf16.xpose.msra.mxu0 0
      %1016 = vmatprep.subr.bf16.mxu0 0
      %1017 = vmatpush1.bf16.xpose.msra.mxu0 0
      %1018 = vmatprep.subr.bf16.mxu0 0
      %1019 = vmatpush1.bf16.xpose.msra.mxu0 0
      %1020 = vmatprep.subr.bf16.mxu0 0
      %1021 = vmatpush1.bf16.xpose.msra.mxu0 0
      %1022 = vmatprep.mubr.bf16.mxu0 0
      %1023 = vmatmul.mubr.bf16.gmra.mrb[0].mxu0 %v985
      %v1024 = vpop.f32.mrb[0].mxu0
      %v1025 = vadd.f32 0.0, %v1024
      %v1026 = vpop.f32.mrb[0].mxu0
      %v1027 = vpop.f32.mrb[0].mxu0
      %v1028 = vpop.f32.mrb[0].mxu0
      %1029 = vdwg.mxu0
      %v1030 = vmul.f32 %v1025, 0.25
      %v1031 = vsel %vm675, %v1030, -inf
      %1032 = vmax.xlane.f32.xlu0 %v1031
      %v1033 = vpop.xlane.xlu0 %1032
      %v1034 = vsub.f32 %v1030, %v1033
      %v1035 = vmul.f32 %v1034, 1.442695
      %v1036 = vpow.pop %v1035
      %v1037 = vsel %vm675, %v1036, 0.0
      %1038 = vadd.xlane.f32.xlu0 %v1037
      %v1039 = vpop.xlane.xlu0 %1038
      %v1040 = vrcp.pop %v1039
      %v1041 = vmul.f32 %v1036, %v1040
      %v1042 = vpack.c.bf16 %v1041, %v1041
      %v1043 = vpack.c.bf16 %v977, %v977
      %v1045 = vsel %vm675, %v1042, 0
      %v1048 = vsel %vm692, %v1043, 0
      %1050 = vmatprep.subr.bf16.mxu0 0
      %1051 = vmatpush1.bf16.msra.mxu0 %v1048
      %1052 = vmatprep.subr.bf16.mxu0 0
      %1053 = vmatpush1.bf16.msra.mxu0 0
      %1054 = vmatprep.subr.bf16.mxu0 0
      %1055 = vmatpush1.bf16.msra.mxu0 0
      %1056 = vmatprep.subr.bf16.mxu0 0
      %1057 = vmatpush1.bf16.msra.mxu0 0
      %1058 = vmatprep.subr.bf16.mxu0 0
      %1059 = vmatpush1.bf16.msra.mxu0 0
      %1060 = vmatprep.subr.bf16.mxu0 0
      %1061 = vmatpush1.bf16.msra.mxu0 0
      %1062 = vmatprep.subr.bf16.mxu0 0
      %1063 = vmatpush1.bf16.msra.mxu0 0
      %1064 = vmatprep.subr.bf16.mxu0 0
      %1065 = vmatpush1.bf16.msra.mxu0 0
      %1066 = vmatprep.subr.bf16.mxu0 0
      %1067 = vmatpush1.bf16.msra.mxu0 0
      %1068 = vmatprep.subr.bf16.mxu0 0
      %1069 = vmatpush1.bf16.msra.mxu0 0
      %1070 = vmatprep.subr.bf16.mxu0 0
      %1071 = vmatpush1.bf16.msra.mxu0 0
      %1072 = vmatprep.subr.bf16.mxu0 0
      %1073 = vmatpush1.bf16.msra.mxu0 0
      %1074 = vmatprep.subr.bf16.mxu0 0
      %1075 = vmatpush1.bf16.msra.mxu0 0
      %1076 = vmatprep.subr.bf16.mxu0 0
      %1077 = vmatpush1.bf16.msra.mxu0 0
      %1078 = vmatprep.subr.bf16.mxu0 0
      %1079 = vmatpush1.bf16.msra.mxu0 0
      %1080 = vmatprep.subr.bf16.mxu0 0
      %1081 = vmatpush1.bf16.msra.mxu0 0
      %1082 = vmatprep.mubr.bf16.mxu0 0
      %1083 = vmatmul.mubr.bf16.gmra.mrb[0].mxu0 %v1045
      %v1084 = vpop.f32.mrb[0].mxu0
      %v1085 = vadd.f32 0.0, %v1084
      %v1086 = vpop.f32.mrb[0].mxu0
      %v1087 = vpop.f32.mrb[0].mxu0
      %v1088 = vpop.f32.mrb[0].mxu0
      %1089 = vdwg.mxu0
      %v1090 = vpack.c.bf16 %v1085, %v1085
      %s1091 = scalar_lea.vmem %s7, 8
      %v1092 = vld [vmem:[%s1091] sm:$0xf]
      %v1093 = vld [vmem:[%s1091 + $0x4] sm:$0xf]
      %v1096 = vunpack.c.l.b16 %v1092
      %v1097 = vunpack.c.l.b16 %v1093
      %v1098 = vpack.c.b16 %v1097, %v1096
      %v1101 = vsel %vm627, %v1090, 0
      %1103 = vmatprep.subr.bf16.mxu0 0
      %1104 = vmatpush1.bf16.msra.mxu0 %v1098
      %1105 = vmatprep.subr.bf16.mxu0 0
      %1106 = vmatpush1.bf16.msra.mxu0 0
      %1107 = vmatprep.subr.bf16.mxu0 0
      %1108 = vmatpush1.bf16.msra.mxu0 0
      %1109 = vmatprep.subr.bf16.mxu0 0
      %1110 = vmatpush1.bf16.msra.mxu0 0
      %1111 = vmatprep.subr.bf16.mxu0 0
      %1112 = vmatpush1.bf16.msra.mxu0 0
      %1113 = vmatprep.subr.bf16.mxu0 0
      %1114 = vmatpush1.bf16.msra.mxu0 0
      %1115 = vmatprep.subr.bf16.mxu0 0
      %1116 = vmatpush1.bf16.msra.mxu0 0
      %1117 = vmatprep.subr.bf16.mxu0 0
      %1118 = vmatpush1.bf16.msra.mxu0 0
      %1119 = vmatprep.subr.bf16.mxu0 0
      %1120 = vmatpush1.bf16.msra.mxu0 0
      %1121 = vmatprep.subr.bf16.mxu0 0
      %1122 = vmatpush1.bf16.msra.mxu0 0
      %1123 = vmatprep.subr.bf16.mxu0 0
      %1124 = vmatpush1.bf16.msra.mxu0 0
      %1125 = vmatprep.subr.bf16.mxu0 0
      %1126 = vmatpush1.bf16.msra.mxu0 0
      %1127 = vmatprep.subr.bf16.mxu0 0
      %1128 = vmatpush1.bf16.msra.mxu0 0
      %1129 = vmatprep.subr.bf16.mxu0 0
      %1130 = vmatpush1.bf16.msra.mxu0 0
      %1131 = vmatprep.subr.bf16.mxu0 0
      %1132 = vmatpush1.bf16.msra.mxu0 0
      %1133 = vmatprep.subr.bf16.mxu0 0
      %1134 = vmatpush1.bf16.msra.mxu0 0
      %1135 = vmatprep.mubr.bf16.mxu0 0
      %1136 = vmatmul.mubr.bf16.gmra.mrb[0].mxu0 %v1101
      %v1137 = vpop.f32.mrb[0].mxu0
      %v1138 = vadd.f32 0.0, %v1137
      %v1139 = vpop.f32.mrb[0].mxu0
      %v1140 = vpop.f32.mrb[0].mxu0
      %v1141 = vpop.f32.mrb[0].mxu0
      %1142 = vdwg.mxu0
      %v1145 = vunpack.c.l.b16 %v737
      %v1146 = vunpack.c.l.b16 %v738
      %v1147 = vpack.c.b16 %v1146, %v1145
      %v1150 = vsel %vm627, %v736, 0
      %1152 = vmatprep.subr.bf16.mxu0 0
      %1153 = vmatpush1.bf16.msra.mxu0 %v1147
      %1154 = vmatprep.subr.bf16.mxu0 0
      %1155 = vmatpush1.bf16.msra.mxu0 0
      %1156 = vmatprep.subr.bf16.mxu0 0
      %1157 = vmatpush1.bf16.msra.mxu0 0
      %1158 = vmatprep.subr.bf16.mxu0 0
      %1159 = vmatpush1.bf16.msra.mxu0 0
      %1160 = vmatprep.subr.bf16.mxu0 0
      %1161 = vmatpush1.bf16.msra.mxu0 0
      %1162 = vmatprep.subr.bf16.mxu0 0
      %1163 = vmatpush1.bf16.msra.mxu0 0
      %1164 = vmatprep.subr.bf16.mxu0 0
      %1165 = vmatpush1.bf16.msra.mxu0 0
      %1166 = vmatprep.subr.bf16.mxu0 0
      %1167 = vmatpush1.bf16.msra.mxu0 0
      %1168 = vmatprep.subr.bf16.mxu0 0
      %1169 = vmatpush1.bf16.msra.mxu0 0
      %1170 = vmatprep.subr.bf16.mxu0 0
      %1171 = vmatpush1.bf16.msra.mxu0 0
      %1172 = vmatprep.subr.bf16.mxu0 0
      %1173 = vmatpush1.bf16.msra.mxu0 0
      %1174 = vmatprep.subr.bf16.mxu0 0
      %1175 = vmatpush1.bf16.msra.mxu0 0
      %1176 = vmatprep.subr.bf16.mxu0 0
      %1177 = vmatpush1.bf16.msra.mxu0 0
      %1178 = vmatprep.subr.bf16.mxu0 0
      %1179 = vmatpush1.bf16.msra.mxu0 0
      %1180 = vmatprep.subr.bf16.mxu0 0
      %1181 = vmatpush1.bf16.msra.mxu0 0
      %1182 = vmatprep.subr.bf16.mxu0 0
      %1183 = vmatpush1.bf16.msra.mxu0 0
      %1184 = vmatprep.mubr.bf16.mxu0 0
      %1185 = vmatmul.mubr.bf16.gmra.mrb[0].mxu0 %v1150
      %v1186 = vpop.f32.mrb[0].mxu0
      %v1187 = vadd.f32 %v1138, %v1186
      %v1188 = vpop.f32.mrb[0].mxu0
      %v1189 = vpop.f32.mrb[0].mxu0
      %v1190 = vpop.f32.mrb[0].mxu0
      %1191 = vdwg.mxu0
      %s1192 = scalar_lea.vmem %s1, 64
      %v1193 = vld [vmem:[%s1192] sm:$0xf]
      %v1194 = vld [vmem:[%s1192 + $0x4] sm:$0xf]
      %v1195 = vld [vmem:[%s1192 + $0x8] sm:$0xf]
      %v1196 = vld [vmem:[%s1192 + $0xc] sm:$0xf]
      %v1197 = vld [vmem:[%s1192 + $0x10] sm:$0xf]
      %v1198 = vld [vmem:[%s1192 + $0x14] sm:$0xf]
      %v1199 = vld [vmem:[%s1192 + $0x18] sm:$0xf]
      %v1200 = vld [vmem:[%s1192 + $0x1c] sm:$0xf]
      %s1201 = scalar_lea.vmem %s2, 2
      %v1202 = vld [vmem:[%s1201] sm:$0x1]
      %v1204 = vlaneseq
      %v1205 = vshrl.u32 %v1204, 7
      %v1206 = vsub.s32 0, %v1205
      %v1207 = vrot.slane %v1202, %v1206
      %v1217 = vunpack.c.l.b16 %v1193
      %v1218 = vunpack.c.l.b16 %v1194
      %v1219 = vunpack.c.l.b16 %v1195
      %v1220 = vunpack.c.l.b16 %v1196
      %v1221 = vunpack.c.l.b16 %v1197
      %v1222 = vunpack.c.l.b16 %v1198
      %v1223 = vunpack.c.l.b16 %v1199
      %v1224 = vunpack.c.l.b16 %v1200
      %v1225 = vpack.c.b16 %v1218, %v1217
      %v1226 = vpack.c.b16 %v1220, %v1219
      %v1227 = vpack.c.b16 %v1222, %v1221
      %v1228 = vpack.c.b16 %v1224, %v1223
      %1233 = vmatprep.subr.bf16.mxu0 0
      %1234 = vmatpush1.bf16.msra.mxu0 %v1225
      %1235 = vmatprep.subr.bf16.mxu0 0
      %1236 = vmatpush1.bf16.msra.mxu0 %v1226
      %1237 = vmatprep.subr.bf16.mxu0 0
      %1238 = vmatpush1.bf16.msra.mxu0 %v1227
      %1239 = vmatprep.subr.bf16.mxu0 0
      %1240 = vmatpush1.bf16.msra.mxu0 %v1228
      %1241 = vmatprep.subr.bf16.mxu0 0
      %1242 = vmatpush1.bf16.msra.mxu0 0
      %1243 = vmatprep.subr.bf16.mxu0 0
      %1244 = vmatpush1.bf16.msra.mxu0 0
      %1245 = vmatprep.subr.bf16.mxu0 0
      %1246 = vmatpush1.bf16.msra.mxu0 0
      %1247 = vmatprep.subr.bf16.mxu0 0
      %1248 = vmatpush1.bf16.msra.mxu0 0
      %1249 = vmatprep.subr.bf16.mxu0 0
      %1250 = vmatpush1.bf16.msra.mxu0 0
      %1251 = vmatprep.subr.bf16.mxu0 0
      %1252 = vmatpush1.bf16.msra.mxu0 0
      %1253 = vmatprep.subr.bf16.mxu0 0
      %1254 = vmatpush1.bf16.msra.mxu0 0
      %1255 = vmatprep.subr.bf16.mxu0 0
      %1256 = vmatpush1.bf16.msra.mxu0 0
      %1257 = vmatprep.subr.bf16.mxu0 0
      %1258 = vmatpush1.bf16.msra.mxu0 0
      %1259 = vmatprep.subr.bf16.mxu0 0
      %1260 = vmatpush1.bf16.msra.mxu0 0
      %1261 = vmatprep.subr.bf16.mxu0 0
      %1262 = vmatpush1.bf16.msra.mxu0 0
      %1263 = vmatprep.subr.bf16.mxu0 0
      %1264 = vmatpush1.bf16.msra.mxu0 0
      %1265 = vmatprep.mubr.bf16.mxu0 0
      %1266 = vmatmul.mubr.bf16.gmra.mrb[0].mxu0 %v425
      %v1267 = vpop.f32.mrb[0].mxu0
      %v1268 = vadd.f32 %v1207, %v1267
      %v1269 = vpop.f32.mrb[0].mxu0
      %v1270 = vpop.f32.mrb[0].mxu0
      %v1271 = vpop.f32.mrb[0].mxu0
      %1272 = vdwg.mxu0
      %s1273 = scalar_lea.vmem %s3, 64
      %v1274 = vld [vmem:[%s1273] sm:$0xf]
      %v1275 = vld [vmem:[%s1273 + $0x4] sm:$0xf]
      %v1276 = vld [vmem:[%s1273 + $0x8] sm:$0xf]
      %v1277 = vld [vmem:[%s1273 + $0xc] sm:$0xf]
      %v1278 = vld [vmem:[%s1273 + $0x10] sm:$0xf]
      %v1279 = vld [vmem:[%s1273 + $0x14] sm:$0xf]
      %v1280 = vld [vmem:[%s1273 + $0x18] sm:$0xf]
      %v1281 = vld [vmem:[%s1273 + $0x1c] sm:$0xf]
      %s1282 = scalar_lea.vmem %s4, 2
      %v1283 = vld [vmem:[%s1282] sm:$0x1]
      %v1285 = vlaneseq
      %v1286 = vshrl.u32 %v1285, 7
      %v1287 = vsub.s32 0, %v1286
      %v1288 = vrot.slane %v1283, %v1287
      %v1298 = vunpack.c.l.b16 %v1274
      %v1299 = vunpack.c.l.b16 %v1275
      %v1300 = vunpack.c.l.b16 %v1276
      %v1301 = vunpack.c.l.b16 %v1277
      %v1302 = vunpack.c.l.b16 %v1278
      %v1303 = vunpack.c.l.b16 %v1279
      %v1304 = vunpack.c.l.b16 %v1280
      %v1305 = vunpack.c.l.b16 %v1281
      %v1306 = vpack.c.b16 %v1299, %v1298
      %v1307 = vpack.c.b16 %v1301, %v1300
      %v1308 = vpack.c.b16 %v1303, %v1302
      %v1309 = vpack.c.b16 %v1305, %v1304
      %1314 = vmatprep.subr.bf16.mxu0 0
      %1315 = vmatpush1.bf16.msra.mxu0 %v1306
      %1316 = vmatprep.subr.bf16.mxu0 0
      %1317 = vmatpush1.bf16.msra.mxu0 %v1307
      %1318 = vmatprep.subr.bf16.mxu0 0
      %1319 = vmatpush1.bf16.msra.mxu0 %v1308
      %1320 = vmatprep.subr.bf16.mxu0 0
      %1321 = vmatpush1.bf16.msra.mxu0 %v1309
      %1322 = vmatprep.subr.bf16.mxu0 0
      %1323 = vmatpush1.bf16.msra.mxu0 0
      %1324 = vmatprep.subr.bf16.mxu0 0
      %1325 = vmatpush1.bf16.msra.mxu0 0
      %1326 = vmatprep.subr.bf16.mxu0 0
      %1327 = vmatpush1.bf16.msra.mxu0 0
      %1328 = vmatprep.subr.bf16.mxu0 0
      %1329 = vmatpush1.bf16.msra.mxu0 0
      %1330 = vmatprep.subr.bf16.mxu0 0
      %1331 = vmatpush1.bf16.msra.mxu0 0
      %1332 = vmatprep.subr.bf16.mxu0 0
      %1333 = vmatpush1.bf16.msra.mxu0 0
      %1334 = vmatprep.subr.bf16.mxu0 0
      %1335 = vmatpush1.bf16.msra.mxu0 0
      %1336 = vmatprep.subr.bf16.mxu0 0
      %1337 = vmatpush1.bf16.msra.mxu0 0
      %1338 = vmatprep.subr.bf16.mxu0 0
      %1339 = vmatpush1.bf16.msra.mxu0 0
      %1340 = vmatprep.subr.bf16.mxu0 0
      %1341 = vmatpush1.bf16.msra.mxu0 0
      %1342 = vmatprep.subr.bf16.mxu0 0
      %1343 = vmatpush1.bf16.msra.mxu0 0
      %1344 = vmatprep.subr.bf16.mxu0 0
      %1345 = vmatpush1.bf16.msra.mxu0 0
      %1346 = vmatprep.mubr.bf16.mxu0 0
      %1347 = vmatmul.mubr.bf16.gmra.mrb[0].mxu0 %v425
      %v1348 = vpop.f32.mrb[0].mxu0
      %v1349 = vadd.f32 %v1288, %v1348
      %v1350 = vpop.f32.mrb[0].mxu0
      %v1351 = vpop.f32.mrb[0].mxu0
      %v1352 = vpop.f32.mrb[0].mxu0
      %1353 = vdwg.mxu0
      %s1354 = scalar_lea.vmem %s5, 64
      %v1355 = vld [vmem:[%s1354] sm:$0xf]
      %v1356 = vld [vmem:[%s1354 + $0x4] sm:$0xf]
      %v1357 = vld [vmem:[%s1354 + $0x8] sm:$0xf]
      %v1358 = vld [vmem:[%s1354 + $0xc] sm:$0xf]
      %v1359 = vld [vmem:[%s1354 + $0x10] sm:$0xf]
      %v1360 = vld [vmem:[%s1354 + $0x14] sm:$0xf]
      %v1361 = vld [vmem:[%s1354 + $0x18] sm:$0xf]
      %v1362 = vld [vmem:[%s1354 + $0x1c] sm:$0xf]
      %s1363 = scalar_lea.vmem %s6, 2
      %v1364 = vld [vmem:[%s1363] sm:$0x1]
      %v1366 = vlaneseq
      %v1367 = vshrl.u32 %v1366, 7
      %v1368 = vsub.s32 0, %v1367
      %v1369 = vrot.slane %v1364, %v1368
      %v1379 = vunpack.c.l.b16 %v1355
      %v1380 = vunpack.c.l.b16 %v1356
      %v1381 = vunpack.c.l.b16 %v1357
      %v1382 = vunpack.c.l.b16 %v1358
      %v1383 = vunpack.c.l.b16 %v1359
      %v1384 = vunpack.c.l.b16 %v1360
      %v1385 = vunpack.c.l.b16 %v1361
      %v1386 = vunpack.c.l.b16 %v1362
      %v1387 = vpack.c.b16 %v1380, %v1379
      %v1388 = vpack.c.b16 %v1382, %v1381
      %v1389 = vpack.c.b16 %v1384, %v1383
      %v1390 = vpack.c.b16 %v1386, %v1385
      %1395 = vmatprep.subr.bf16.mxu0 0
      %1396 = vmatpush1.bf16.msra.mxu0 %v1387
      %1397 = vmatprep.subr.bf16.mxu0 0
      %1398 = vmatpush1.bf16.msra.mxu0 %v1388
      %1399 = vmatprep.subr.bf16.mxu0 0
      %1400 = vmatpush1.bf16.msra.mxu0 %v1389
      %1401 = vmatprep.subr.bf16.mxu0 0
      %1402 = vmatpush1.bf16.msra.mxu0 %v1390
      %1403 = vmatprep.subr.bf16.mxu0 0
      %1404 = vmatpush1.bf16.msra.mxu0 0
      %1405 = vmatprep.subr.bf16.mxu0 0
      %1406 = vmatpush1.bf16.msra.mxu0 0
      %1407 = vmatprep.subr.bf16.mxu0 0
      %1408 = vmatpush1.bf16.msra.mxu0 0
      %1409 = vmatprep.subr.bf16.mxu0 0
      %1410 = vmatpush1.bf16.msra.mxu0 0
      %1411 = vmatprep.subr.bf16.mxu0 0
      %1412 = vmatpush1.bf16.msra.mxu0 0
      %1413 = vmatprep.subr.bf16.mxu0 0
      %1414 = vmatpush1.bf16.msra.mxu0 0
      %1415 = vmatprep.subr.bf16.mxu0 0
      %1416 = vmatpush1.bf16.msra.mxu0 0
      %1417 = vmatprep.subr.bf16.mxu0 0
      %1418 = vmatpush1.bf16.msra.mxu0 0
      %1419 = vmatprep.subr.bf16.mxu0 0
      %1420 = vmatpush1.bf16.msra.mxu0 0
      %1421 = vmatprep.subr.bf16.mxu0 0
      %1422 = vmatpush1.bf16.msra.mxu0 0
      %1423 = vmatprep.subr.bf16.mxu0 0
      %1424 = vmatpush1.bf16.msra.mxu0 0
      %1425 = vmatprep.subr.bf16.mxu0 0
      %1426 = vmatpush1.bf16.msra.mxu0 0
      %1427 = vmatprep.mubr.bf16.mxu0 0
      %1428 = vmatmul.mubr.bf16.gmra.mrb[0].mxu0 %v425
      %v1429 = vpop.f32.mrb[0].mxu0
      %v1430 = vadd.f32 %v1369, %v1429
      %v1431 = vpop.f32.mrb[0].mxu0
      %v1432 = vpop.f32.mrb[0].mxu0
      %v1433 = vpop.f32.mrb[0].mxu0
      %1434 = vdwg.mxu0
      %v1435 = vpack.c.bf16 %v1268, %v1268
      %v1436 = vpack.c.bf16 %v1349, %v1349
      %v1438 = vsel %vm627, %v1435, 0
      %v1441 = vsel %vm627, %v1436, 0
      %1443 = vmatprep.subr.bf16.mxu0 0
      %1444 = vmatpush1.bf16.xpose.msra.mxu0 %v1441
      %1445 = vmatprep.subr.bf16.mxu0 0
      %1446 = vmatpush1.bf16.xpose.msra.mxu0 0
      %1447 = vmatprep.subr.bf16.mxu0 0
      %1448 = vmatpush1.bf16.xpose.msra.mxu0 0
      %1449 = vmatprep.subr.bf16.mxu0 0
      %1450 = vmatpush1.bf16.xpose.msra.mxu0 0
      %1451 = vmatprep.subr.bf16.mxu0 0
      %1452 = vmatpush1.bf16.xpose.msra.mxu0 0
      %1453 = vmatprep.subr.bf16.mxu0 0
      %1454 = vmatpush1.bf16.xpose.msra.mxu0 0
      %1455 = vmatprep.subr.bf16.mxu0 0
      %1456 = vmatpush1.bf16.xpose.msra.mxu0 0
      %1457 = vmatprep.subr.bf16.mxu0 0
      %1458 = vmatpush1.bf16.xpose.msra.mxu0 0
      %1459 = vmatprep.subr.bf16.mxu0 0
      %1460 = vmatpush1.bf16.xpose.msra.mxu0 0
      %1461 = vmatprep.subr.bf16.mxu0 0
      %1462 = vmatpush1.bf16.xpose.msra.mxu0 0
      %1463 = vmatprep.subr.bf16.mxu0 0
      %1464 = vmatpush1.bf16.xpose.msra.mxu0 0
      %1465 = vmatprep.subr.bf16.mxu0 0
      %1466 = vmatpush1.bf16.xpose.msra.mxu0 0
      %1467 = vmatprep.subr.bf16.mxu0 0
      %1468 = vmatpush1.bf16.xpose.msra.mxu0 0
      %1469 = vmatprep.subr.bf16.mxu0 0
      %1470 = vmatpush1.bf16.xpose.msra.mxu0 0
      %1471 = vmatprep.subr.bf16.mxu0 0
      %1472 = vmatpush1.bf16.xpose.msra.mxu0 0
      %1473 = vmatprep.subr.bf16.mxu0 0
      %1474 = vmatpush1.bf16.xpose.msra.mxu0 0
      %1475 = vmatprep.mubr.bf16.mxu0 0
      %1476 = vmatmul.mubr.bf16.gmra.mrb[0].mxu0 %v1438
      %v1477 = vpop.f32.mrb[0].mxu0
      %v1478 = vadd.f32 0.0, %v1477
      %v1479 = vpop.f32.mrb[0].mxu0
      %v1480 = vpop.f32.mrb[0].mxu0
      %v1481 = vpop.f32.mrb[0].mxu0
      %1482 = vdwg.mxu0
      %v1483 = vmul.f32 %v1478, 0.25
      %v1484 = vsel %vm675, %v1483, -inf
      %1485 = vmax.xlane.f32.xlu0 %v1484
      %v1486 = vpop.xlane.xlu0 %1485
      %v1487 = vsub.f32 %v1483, %v1486
      %v1488 = vmul.f32 %v1487, 1.442695
      %v1489 = vpow.pop %v1488
      %v1490 = vsel %vm675, %v1489, 0.0
      %1491 = vadd.xlane.f32.xlu0 %v1490
      %v1492 = vpop.xlane.xlu0 %1491
      %v1493 = vrcp.pop %v1492
      %v1494 = vmul.f32 %v1489, %v1493
      %v1495 = vpack.c.bf16 %v1494, %v1494
      %v1496 = vpack.c.bf16 %v1430, %v1430
      %v1498 = vsel %vm675, %v1495, 0
      %v1501 = vsel %vm692, %v1496, 0
      %1503 = vmatprep.subr.bf16.mxu0 0
      %1504 = vmatpush1.bf16.msra.mxu0 %v1501
      %1505 = vmatprep.subr.bf16.mxu0 0
      %1506 = vmatpush1.bf16.msra.mxu0 0
      %1507 = vmatprep.subr.bf16.mxu0 0
      %1508 = vmatpush1.bf16.msra.mxu0 0
      %1509 = vmatprep.subr.bf16.mxu0 0
      %1510 = vmatpush1.bf16.msra.mxu0 0
      %1511 = vmatprep.subr.bf16.mxu0 0
      %1512 = vmatpush1.bf16.msra.mxu0 0
      %1513 = vmatprep.subr.bf16.mxu0 0
      %1514 = vmatpush1.bf16.msra.mxu0 0
      %1515 = vmatprep.subr.bf16.mxu0 0
      %1516 = vmatpush1.bf16.msra.mxu0 0
      %1517 = vmatprep.subr.bf16.mxu0 0
      %1518 = vmatpush1.bf16.msra.mxu0 0
      %1519 = vmatprep.subr.bf16.mxu0 0
      %1520 = vmatpush1.bf16.msra.mxu0 0
      %1521 = vmatprep.subr.bf16.mxu0 0
      %1522 = vmatpush1.bf16.msra.mxu0 0
      %1523 = vmatprep.subr.bf16.mxu0 0
      %1524 = vmatpush1.bf16.msra.mxu0 0
      %1525 = vmatprep.subr.bf16.mxu0 0
      %1526 = vmatpush1.bf16.msra.mxu0 0
      %1527 = vmatprep.subr.bf16.mxu0 0
      %1528 = vmatpush1.bf16.msra.mxu0 0
      %1529 = vmatprep.subr.bf16.mxu0 0
      %1530 = vmatpush1.bf16.msra.mxu0 0
      %1531 = vmatprep.subr.bf16.mxu0 0
      %1532 = vmatpush1.bf16.msra.mxu0 0
      %1533 = vmatprep.subr.bf16.mxu0 0
      %1534 = vmatpush1.bf16.msra.mxu0 0
      %1535 = vmatprep.mubr.bf16.mxu0 0
      %1536 = vmatmul.mubr.bf16.gmra.mrb[0].mxu0 %v1498
      %v1537 = vpop.f32.mrb[0].mxu0
      %v1538 = vadd.f32 0.0, %v1537
      %v1539 = vpop.f32.mrb[0].mxu0
      %v1540 = vpop.f32.mrb[0].mxu0
      %v1541 = vpop.f32.mrb[0].mxu0
      %1542 = vdwg.mxu0
      %v1543 = vpack.c.bf16 %v1538, %v1538
      %s1544 = scalar_lea.vmem %s7, 16
      %v1545 = vld [vmem:[%s1544] sm:$0xf]
      %v1546 = vld [vmem:[%s1544 + $0x4] sm:$0xf]
      %v1549 = vunpack.c.l.b16 %v1545
      %v1550 = vunpack.c.l.b16 %v1546
      %v1551 = vpack.c.b16 %v1550, %v1549
      %v1554 = vsel %vm627, %v1543, 0
      %1556 = vmatprep.subr.bf16.mxu0 0
      %1557 = vmatpush1.bf16.msra.mxu0 %v1551
      %1558 = vmatprep.subr.bf16.mxu0 0
      %1559 = vmatpush1.bf16.msra.mxu0 0
      %1560 = vmatprep.subr.bf16.mxu0 0
      %1561 = vmatpush1.bf16.msra.mxu0 0
      %1562 = vmatprep.subr.bf16.mxu0 0
      %1563 = vmatpush1.bf16.msra.mxu0 0
      %1564 = vmatprep.subr.bf16.mxu0 0
      %1565 = vmatpush1.bf16.msra.mxu0 0
      %1566 = vmatprep.subr.bf16.mxu0 0
      %1567 = vmatpush1.bf16.msra.mxu0 0
      %1568 = vmatprep.subr.bf16.mxu0 0
      %1569 = vmatpush1.bf16.msra.mxu0 0
      %1570 = vmatprep.subr.bf16.mxu0 0
      %1571 = vmatpush1.bf16.msra.mxu0 0
      %1572 = vmatprep.subr.bf16.mxu0 0
      %1573 = vmatpush1.bf16.msra.mxu0 0
      %1574 = vmatprep.subr.bf16.mxu0 0
      %1575 = vmatpush1.bf16.msra.mxu0 0
      %1576 = vmatprep.subr.bf16.mxu0 0
      %1577 = vmatpush1.bf16.msra.mxu0 0
      %1578 = vmatprep.subr.bf16.mxu0 0
      %1579 = vmatpush1.bf16.msra.mxu0 0
      %1580 = vmatprep.subr.bf16.mxu0 0
      %1581 = vmatpush1.bf16.msra.mxu0 0
      %1582 = vmatprep.subr.bf16.mxu0 0
      %1583 = vmatpush1.bf16.msra.mxu0 0
      %1584 = vmatprep.subr.bf16.mxu0 0
      %1585 = vmatpush1.bf16.msra.mxu0 0
      %1586 = vmatprep.subr.bf16.mxu0 0
      %1587 = vmatpush1.bf16.msra.mxu0 0
      %1588 = vmatprep.mubr.bf16.mxu0 0
      %1589 = vmatmul.mubr.bf16.gmra.mrb[0].mxu0 %v1554
      %v1590 = vpop.f32.mrb[0].mxu0
      %v1591 = vadd.f32 0.0, %v1590
      %v1592 = vpop.f32.mrb[0].mxu0
      %v1593 = vpop.f32.mrb[0].mxu0
      %v1594 = vpop.f32.mrb[0].mxu0
      %1595 = vdwg.mxu0
      %v1596 = vadd.f32 %v1187, %v1591
      %s1597 = scalar_lea.vmem %s1, 96
      %v1598 = vld [vmem:[%s1597] sm:$0xf]
      %v1599 = vld [vmem:[%s1597 + $0x4] sm:$0xf]
      %v1600 = vld [vmem:[%s1597 + $0x8] sm:$0xf]
      %v1601 = vld [vmem:[%s1597 + $0xc] sm:$0xf]
      %v1602 = vld [vmem:[%s1597 + $0x10] sm:$0xf]
      %v1603 = vld [vmem:[%s1597 + $0x14] sm:$0xf]
      %v1604 = vld [vmem:[%s1597 + $0x18] sm:$0xf]
      %v1605 = vld [vmem:[%s1597 + $0x1c] sm:$0xf]
      %s1606 = scalar_lea.vmem %s2, 3
      %v1607 = vld [vmem:[%s1606] sm:$0x1]
      %v1609 = vlaneseq
      %v1610 = vshrl.u32 %v1609, 7
      %v1611 = vsub.s32 0, %v1610
      %v1612 = vrot.slane %v1607, %v1611
      %v1622 = vunpack.c.l.b16 %v1598
      %v1623 = vunpack.c.l.b16 %v1599
      %v1624 = vunpack.c.l.b16 %v1600
      %v1625 = vunpack.c.l.b16 %v1601
      %v1626 = vunpack.c.l.b16 %v1602
      %v1627 = vunpack.c.l.b16 %v1603
      %v1628 = vunpack.c.l.b16 %v1604
      %v1629 = vunpack.c.l.b16 %v1605
      %v1630 = vpack.c.b16 %v1623, %v1622
      %v1631 = vpack.c.b16 %v1625, %v1624
      %v1632 = vpack.c.b16 %v1627, %v1626
      %v1633 = vpack.c.b16 %v1629, %v1628
      %1638 = vmatprep.subr.bf16.mxu0 0
      %1639 = vmatpush1.bf16.msra.mxu0 %v1630
      %1640 = vmatprep.subr.bf16.mxu0 0
      %1641 = vmatpush1.bf16.msra.mxu0 %v1631
      %1642 = vmatprep.subr.bf16.mxu0 0
      %1643 = vmatpush1.bf16.msra.mxu0 %v1632
      %1644 = vmatprep.subr.bf16.mxu0 0
      %1645 = vmatpush1.bf16.msra.mxu0 %v1633
      %1646 = vmatprep.subr.bf16.mxu0 0
      %1647 = vmatpush1.bf16.msra.mxu0 0
      %1648 = vmatprep.subr.bf16.mxu0 0
      %1649 = vmatpush1.bf16.msra.mxu0 0
      %1650 = vmatprep.subr.bf16.mxu0 0
      %1651 = vmatpush1.bf16.msra.mxu0 0
      %1652 = vmatprep.subr.bf16.mxu0 0
      %1653 = vmatpush1.bf16.msra.mxu0 0
      %1654 = vmatprep.subr.bf16.mxu0 0
      %1655 = vmatpush1.bf16.msra.mxu0 0
      %1656 = vmatprep.subr.bf16.mxu0 0
      %1657 = vmatpush1.bf16.msra.mxu0 0
      %1658 = vmatprep.subr.bf16.mxu0 0
      %1659 = vmatpush1.bf16.msra.mxu0 0
      %1660 = vmatprep.subr.bf16.mxu0 0
      %1661 = vmatpush1.bf16.msra.mxu0 0
      %1662 = vmatprep.subr.bf16.mxu0 0
      %1663 = vmatpush1.bf16.msra.mxu0 0
      %1664 = vmatprep.subr.bf16.mxu0 0
      %1665 = vmatpush1.bf16.msra.mxu0 0
      %1666 = vmatprep.subr.bf16.mxu0 0
      %1667 = vmatpush1.bf16.msra.mxu0 0
      %1668 = vmatprep.subr.bf16.mxu0 0
      %1669 = vmatpush1.bf16.msra.mxu0 0
      %1670 = vmatprep.mubr.bf16.mxu0 0
      %1671 = vmatmul.mubr.bf16.gmra.mrb[0].mxu0 %v425
      %v1672 = vpop.f32.mrb[0].mxu0
      %v1673 = vadd.f32 %v1612, %v1672
      %v1674 = vpop.f32.mrb[0].mxu0
      %v1675 = vpop.f32.mrb[0].mxu0
      %v1676 = vpop.f32.mrb[0].mxu0
      %1677 = vdwg.mxu0
      %s1678 = scalar_lea.vmem %s3, 96
      %v1679 = vld [vmem:[%s1678] sm:$0xf]
      %v1680 = vld [vmem:[%s1678 + $0x4] sm:$0xf]
      %v1681 = vld [vmem:[%s1678 + $0x8] sm:$0xf]
      %v1682 = vld [vmem:[%s1678 + $0xc] sm:$0xf]
      %v1683 = vld [vmem:[%s1678 + $0x10] sm:$0xf]
      %v1684 = vld [vmem:[%s1678 + $0x14] sm:$0xf]
      %v1685 = vld [vmem:[%s1678 + $0x18] sm:$0xf]
      %v1686 = vld [vmem:[%s1678 + $0x1c] sm:$0xf]
      %s1687 = scalar_lea.vmem %s4, 3
      %v1688 = vld [vmem:[%s1687] sm:$0x1]
      %v1690 = vlaneseq
      %v1691 = vshrl.u32 %v1690, 7
      %v1692 = vsub.s32 0, %v1691
      %v1693 = vrot.slane %v1688, %v1692
      %v1703 = vunpack.c.l.b16 %v1679
      %v1704 = vunpack.c.l.b16 %v1680
      %v1705 = vunpack.c.l.b16 %v1681
      %v1706 = vunpack.c.l.b16 %v1682
      %v1707 = vunpack.c.l.b16 %v1683
      %v1708 = vunpack.c.l.b16 %v1684
      %v1709 = vunpack.c.l.b16 %v1685
      %v1710 = vunpack.c.l.b16 %v1686
      %v1711 = vpack.c.b16 %v1704, %v1703
      %v1712 = vpack.c.b16 %v1706, %v1705
      %v1713 = vpack.c.b16 %v1708, %v1707
      %v1714 = vpack.c.b16 %v1710, %v1709
      %1719 = vmatprep.subr.bf16.mxu0 0
      %1720 = vmatpush1.bf16.msra.mxu0 %v1711
      %1721 = vmatprep.subr.bf16.mxu0 0
      %1722 = vmatpush1.bf16.msra.mxu0 %v1712
      %1723 = vmatprep.subr.bf16.mxu0 0
      %1724 = vmatpush1.bf16.msra.mxu0 %v1713
      %1725 = vmatprep.subr.bf16.mxu0 0
      %1726 = vmatpush1.bf16.msra.mxu0 %v1714
      %1727 = vmatprep.subr.bf16.mxu0 0
      %1728 = vmatpush1.bf16.msra.mxu0 0
      %1729 = vmatprep.subr.bf16.mxu0 0
      %1730 = vmatpush1.bf16.msra.mxu0 0
      %1731 = vmatprep.subr.bf16.mxu0 0
      %1732 = vmatpush1.bf16.msra.mxu0 0
      %1733 = vmatprep.subr.bf16.mxu0 0
      %1734 = vmatpush1.bf16.msra.mxu0 0
      %1735 = vmatprep.subr.bf16.mxu0 0
      %1736 = vmatpush1.bf16.msra.mxu0 0
      %1737 = vmatprep.subr.bf16.mxu0 0
      %1738 = vmatpush1.bf16.msra.mxu0 0
      %1739 = vmatprep.subr.bf16.mxu0 0
      %1740 = vmatpush1.bf16.msra.mxu0 0
      %1741 = vmatprep.subr.bf16.mxu0 0
      %1742 = vmatpush1.bf16.msra.mxu0 0
      %1743 = vmatprep.subr.bf16.mxu0 0
      %1744 = vmatpush1.bf16.msra.mxu0 0
      %1745 = vmatprep.subr.bf16.mxu0 0
      %1746 = vmatpush1.bf16.msra.mxu0 0
      %1747 = vmatprep.subr.bf16.mxu0 0
      %1748 = vmatpush1.bf16.msra.mxu0 0
      %1749 = vmatprep.subr.bf16.mxu0 0
      %1750 = vmatpush1.bf16.msra.mxu0 0
      %1751 = vmatprep.mubr.bf16.mxu0 0
      %1752 = vmatmul.mubr.bf16.gmra.mrb[0].mxu0 %v425
      %v1753 = vpop.f32.mrb[0].mxu0
      %v1754 = vadd.f32 %v1693, %v1753
      %v1755 = vpop.f32.mrb[0].mxu0
      %v1756 = vpop.f32.mrb[0].mxu0
      %v1757 = vpop.f32.mrb[0].mxu0
      %1758 = vdwg.mxu0
      %s1759 = scalar_lea.vmem %s5, 96
      %v1760 = vld [vmem:[%s1759] sm:$0xf]
      %v1761 = vld [vmem:[%s1759 + $0x4] sm:$0xf]
      %v1762 = vld [vmem:[%s1759 + $0x8] sm:$0xf]
      %v1763 = vld [vmem:[%s1759 + $0xc] sm:$0xf]
      %v1764 = vld [vmem:[%s1759 + $0x10] sm:$0xf]
      %v1765 = vld [vmem:[%s1759 + $0x14] sm:$0xf]
      %v1766 = vld [vmem:[%s1759 + $0x18] sm:$0xf]
      %v1767 = vld [vmem:[%s1759 + $0x1c] sm:$0xf]
      %s1768 = scalar_lea.vmem %s6, 3
      %v1769 = vld [vmem:[%s1768] sm:$0x1]
      %v1771 = vlaneseq
      %v1772 = vshrl.u32 %v1771, 7
      %v1773 = vsub.s32 0, %v1772
      %v1774 = vrot.slane %v1769, %v1773
      %v1784 = vunpack.c.l.b16 %v1760
      %v1785 = vunpack.c.l.b16 %v1761
      %v1786 = vunpack.c.l.b16 %v1762
      %v1787 = vunpack.c.l.b16 %v1763
      %v1788 = vunpack.c.l.b16 %v1764
      %v1789 = vunpack.c.l.b16 %v1765
      %v1790 = vunpack.c.l.b16 %v1766
      %v1791 = vunpack.c.l.b16 %v1767
      %v1792 = vpack.c.b16 %v1785, %v1784
      %v1793 = vpack.c.b16 %v1787, %v1786
      %v1794 = vpack.c.b16 %v1789, %v1788
      %v1795 = vpack.c.b16 %v1791, %v1790
      %1800 = vmatprep.subr.bf16.mxu0 0
      %1801 = vmatpush1.bf16.msra.mxu0 %v1792
      %1802 = vmatprep.subr.bf16.mxu0 0
      %1803 = vmatpush1.bf16.msra.mxu0 %v1793
      %1804 = vmatprep.subr.bf16.mxu0 0
      %1805 = vmatpush1.bf16.msra.mxu0 %v1794
      %1806 = vmatprep.subr.bf16.mxu0 0
      %1807 = vmatpush1.bf16.msra.mxu0 %v1795
      %1808 = vmatprep.subr.bf16.mxu0 0
      %1809 = vmatpush1.bf16.msra.mxu0 0
      %1810 = vmatprep.subr.bf16.mxu0 0
      %1811 = vmatpush1.bf16.msra.mxu0 0
      %1812 = vmatprep.subr.bf16.mxu0 0
      %1813 = vmatpush1.bf16.msra.mxu0 0
      %1814 = vmatprep.subr.bf16.mxu0 0
      %1815 = vmatpush1.bf16.msra.mxu0 0
      %1816 = vmatprep.subr.bf16.mxu0 0
      %1817 = vmatpush1.bf16.msra.mxu0 0
      %1818 = vmatprep.subr.bf16.mxu0 0
      %1819 = vmatpush1.bf16.msra.mxu0 0
      %1820 = vmatprep.subr.bf16.mxu0 0
      %1821 = vmatpush1.bf16.msra.mxu0 0
      %1822 = vmatprep.subr.bf16.mxu0 0
      %1823 = vmatpush1.bf16.msra.mxu0 0
      %1824 = vmatprep.subr.bf16.mxu0 0
      %1825 = vmatpush1.bf16.msra.mxu0 0
      %1826 = vmatprep.subr.bf16.mxu0 0
      %1827 = vmatpush1.bf16.msra.mxu0 0
      %1828 = vmatprep.subr.bf16.mxu0 0
      %1829 = vmatpush1.bf16.msra.mxu0 0
      %1830 = vmatprep.subr.bf16.mxu0 0
      %1831 = vmatpush1.bf16.msra.mxu0 0
      %1832 = vmatprep.mubr.bf16.mxu0 0
      %1833 = vmatmul.mubr.bf16.gmra.mrb[0].mxu0 %v425
      %v1834 = vpop.f32.mrb[0].mxu0
      %v1835 = vadd.f32 %v1774, %v1834
      %v1836 = vpop.f32.mrb[0].mxu0
      %v1837 = vpop.f32.mrb[0].mxu0
      %v1838 = vpop.f32.mrb[0].mxu0
      %1839 = vdwg.mxu0
      %v1840 = vpack.c.bf16 %v1673, %v1673
      %v1841 = vpack.c.bf16 %v1754, %v1754
      %v1843 = vsel %vm627, %v1840, 0
      %v1846 = vsel %vm627, %v1841, 0
      %1848 = vmatprep.subr.bf16.mxu0 0
      %1849 = vmatpush1.bf16.xpose.msra.mxu0 %v1846
      %1850 = vmatprep.subr.bf16.mxu0 0
      %1851 = vmatpush1.bf16.xpose.msra.mxu0 0
      %1852 = vmatprep.subr.bf16.mxu0 0
      %1853 = vmatpush1.bf16.xpose.msra.mxu0 0
      %1854 = vmatprep.subr.bf16.mxu0 0
      %1855 = vmatpush1.bf16.xpose.msra.mxu0 0
      %1856 = vmatprep.subr.bf16.mxu0 0
      %1857 = vmatpush1.bf16.xpose.msra.mxu0 0
      %1858 = vmatprep.subr.bf16.mxu0 0
      %1859 = vmatpush1.bf16.xpose.msra.mxu0 0
      %1860 = vmatprep.subr.bf16.mxu0 0
      %1861 = vmatpush1.bf16.xpose.msra.mxu0 0
      %1862 = vmatprep.subr.bf16.mxu0 0
      %1863 = vmatpush1.bf16.xpose.msra.mxu0 0
      %1864 = vmatprep.subr.bf16.mxu0 0
      %1865 = vmatpush1.bf16.xpose.msra.mxu0 0
      %1866 = vmatprep.subr.bf16.mxu0 0
      %1867 = vmatpush1.bf16.xpose.msra.mxu0 0
      %1868 = vmatprep.subr.bf16.mxu0 0
      %1869 = vmatpush1.bf16.xpose.msra.mxu0 0
      %1870 = vmatprep.subr.bf16.mxu0 0
      %1871 = vmatpush1.bf16.xpose.msra.mxu0 0
      %1872 = vmatprep.subr.bf16.mxu0 0
      %1873 = vmatpush1.bf16.xpose.msra.mxu0 0
      %1874 = vmatprep.subr.bf16.mxu0 0
      %1875 = vmatpush1.bf16.xpose.msra.mxu0 0
      %1876 = vmatprep.subr.bf16.mxu0 0
      %1877 = vmatpush1.bf16.xpose.msra.mxu0 0
      %1878 = vmatprep.subr.bf16.mxu0 0
      %1879 = vmatpush1.bf16.xpose.msra.mxu0 0
      %1880 = vmatprep.mubr.bf16.mxu0 0
      %1881 = vmatmul.mubr.bf16.gmra.mrb[0].mxu0 %v1843
      %v1882 = vpop.f32.mrb[0].mxu0
      %v1883 = vadd.f32 0.0, %v1882
      %v1884 = vpop.f32.mrb[0].mxu0
      %v1885 = vpop.f32.mrb[0].mxu0
      %v1886 = vpop.f32.mrb[0].mxu0
      %1887 = vdwg.mxu0
      %v1888 = vmul.f32 %v1883, 0.25
      %v1889 = vsel %vm675, %v1888, -inf
      %1890 = vmax.xlane.f32.xlu0 %v1889
      %v1891 = vpop.xlane.xlu0 %1890
      %v1892 = vsub.f32 %v1888, %v1891
      %v1893 = vmul.f32 %v1892, 1.442695
      %v1894 = vpow.pop %v1893
      %v1895 = vsel %vm675, %v1894, 0.0
      %1896 = vadd.xlane.f32.xlu0 %v1895
      %v1897 = vpop.xlane.xlu0 %1896
      %v1898 = vrcp.pop %v1897
      %v1899 = vmul.f32 %v1894, %v1898
      %v1900 = vpack.c.bf16 %v1899, %v1899
      %v1901 = vpack.c.bf16 %v1835, %v1835
      %v1903 = vsel %vm675, %v1900, 0
      %v1906 = vsel %vm692, %v1901, 0
      %1908 = vmatprep.subr.bf16.mxu0 0
      %1909 = vmatpush1.bf16.msra.mxu0 %v1906
      %1910 = vmatprep.subr.bf16.mxu0 0
      %1911 = vmatpush1.bf16.msra.mxu0 0
      %1912 = vmatprep.subr.bf16.mxu0 0
      %1913 = vmatpush1.bf16.msra.mxu0 0
      %1914 = vmatprep.subr.bf16.mxu0 0
      %1915 = vmatpush1.bf16.msra.mxu0 0
      %1916 = vmatprep.subr.bf16.mxu0 0
      %1917 = vmatpush1.bf16.msra.mxu0 0
      %1918 = vmatprep.subr.bf16.mxu0 0
      %1919 = vmatpush1.bf16.msra.mxu0 0
      %1920 = vmatprep.subr.bf16.mxu0 0
      %1921 = vmatpush1.bf16.msra.mxu0 0
      %1922 = vmatprep.subr.bf16.mxu0 0
      %1923 = vmatpush1.bf16.msra.mxu0 0
      %1924 = vmatprep.subr.bf16.mxu0 0
      %1925 = vmatpush1.bf16.msra.mxu0 0
      %1926 = vmatprep.subr.bf16.mxu0 0
      %1927 = vmatpush1.bf16.msra.mxu0 0
      %1928 = vmatprep.subr.bf16.mxu0 0
      %1929 = vmatpush1.bf16.msra.mxu0 0
      %1930 = vmatprep.subr.bf16.mxu0 0
      %1931 = vmatpush1.bf16.msra.mxu0 0
      %1932 = vmatprep.subr.bf16.mxu0 0
      %1933 = vmatpush1.bf16.msra.mxu0 0
      %1934 = vmatprep.subr.bf16.mxu0 0
      %1935 = vmatpush1.bf16.msra.mxu0 0
      %1936 = vmatprep.subr.bf16.mxu0 0
      %1937 = vmatpush1.bf16.msra.mxu0 0
      %1938 = vmatprep.subr.bf16.mxu0 0
      %1939 = vmatpush1.bf16.msra.mxu0 0
      %1940 = vmatprep.mubr.bf16.mxu0 0
      %1941 = vmatmul.mubr.bf16.gmra.mrb[0].mxu0 %v1903
      %v1942 = vpop.f32.mrb[0].mxu0
      %v1943 = vadd.f32 0.0, %v1942
      %v1944 = vpop.f32.mrb[0].mxu0
      %v1945 = vpop.f32.mrb[0].mxu0
      %v1946 = vpop.f32.mrb[0].mxu0
      %1947 = vdwg.mxu0
      %v1948 = vpack.c.bf16 %v1943, %v1943
      %s1949 = scalar_lea.vmem %s7, 24
      %v1950 = vld [vmem:[%s1949] sm:$0xf]
      %v1951 = vld [vmem:[%s1949 + $0x4] sm:$0xf]
      %v1954 = vunpack.c.l.b16 %v1950
      %v1955 = vunpack.c.l.b16 %v1951
      %v1956 = vpack.c.b16 %v1955, %v1954
      %v1959 = vsel %vm627, %v1948, 0
      %1961 = vmatprep.subr.bf16.mxu0 0
      %1962 = vmatpush1.bf16.msra.mxu0 %v1956
      %1963 = vmatprep.subr.bf16.mxu0 0
      %1964 = vmatpush1.bf16.msra.mxu0 0
      %1965 = vmatprep.subr.bf16.mxu0 0
      %1966 = vmatpush1.bf16.msra.mxu0 0
      %1967 = vmatprep.subr.bf16.mxu0 0
      %1968 = vmatpush1.bf16.msra.mxu0 0
      %1969 = vmatprep.subr.bf16.mxu0 0
      %1970 = vmatpush1.bf16.msra.mxu0 0
      %1971 = vmatprep.subr.bf16.mxu0 0
      %1972 = vmatpush1.bf16.msra.mxu0 0
      %1973 = vmatprep.subr.bf16.mxu0 0
      %1974 = vmatpush1.bf16.msra.mxu0 0
      %1975 = vmatprep.subr.bf16.mxu0 0
      %1976 = vmatpush1.bf16.msra.mxu0 0
      %1977 = vmatprep.subr.bf16.mxu0 0
      %1978 = vmatpush1.bf16.msra.mxu0 0
      %1979 = vmatprep.subr.bf16.mxu0 0
      %1980 = vmatpush1.bf16.msra.mxu0 0
      %1981 = vmatprep.subr.bf16.mxu0 0
      %1982 = vmatpush1.bf16.msra.mxu0 0
      %1983 = vmatprep.subr.bf16.mxu0 0
      %1984 = vmatpush1.bf16.msra.mxu0 0
      %1985 = vmatprep.subr.bf16.mxu0 0
      %1986 = vmatpush1.bf16.msra.mxu0 0
      %1987 = vmatprep.subr.bf16.mxu0 0
      %1988 = vmatpush1.bf16.msra.mxu0 0
      %1989 = vmatprep.subr.bf16.mxu0 0
      %1990 = vmatpush1.bf16.msra.mxu0 0
      %1991 = vmatprep.subr.bf16.mxu0 0
      %1992 = vmatpush1.bf16.msra.mxu0 0
      %1993 = vmatprep.mubr.bf16.mxu0 0
      %1994 = vmatmul.mubr.bf16.gmra.mrb[0].mxu0 %v1959
      %v1995 = vpop.f32.mrb[0].mxu0
      %v1996 = vadd.f32 0.0, %v1995
      %v1997 = vpop.f32.mrb[0].mxu0
      %v1998 = vpop.f32.mrb[0].mxu0
      %v1999 = vpop.f32.mrb[0].mxu0
      %2000 = vdwg.mxu0
      %v2001 = vadd.f32 %v1596, %v1996
      %v2002 = vld [vmem:[%s8] sm:$0x1]
      %v2004 = vlaneseq
      %v2005 = vshrl.u32 %v2004, 7
      %v2006 = vsub.s32 0, %v2005
      %v2007 = vrot.slane %v2002, %v2006
      %v2009 = vadd.f32 %v2001, %v2007
      %v2010 = vunpack.c.l.bf16 %v383
      %v2011 = vadd.f32 %v2009, %v2010
      %v2012 = vld [vmem:[%s9] sm:$0x1]
      %v2013 = vld [vmem:[%s10] sm:$0x1]
      %v2014 = vsel %vm423, %v2011, 0.0
      %2015 = vadd.xlane.f32.xlu0 %v2014
      %v2016 = vpop.xlane.xlu0 %2015
      %v2017 = vrcp.pop 64.0
      %v2018 = vmul.f32 %v2016, %v2017
      %v2019 = vsub.f32 %v2011, %v2018
      %v2020 = vmul.f32 %v2019, %v2019
      %v2021 = vsel %vm423, %v2020, 0.0
      %2022 = vadd.xlane.f32.xlu0 %v2021
      %v2023 = vpop.xlane.xlu0 %2022
      %v2024 = vmul.f32 %v2023, %v2017
      %v2025 = vadd.f32 %v2024, 1e-05
      %v2026 = vrsqrt.pop %v2025
      %v2027 = vmul.f32 %v2019, %v2026
      %v2029 = vlaneseq
      %v2030 = vshrl.u32 %v2029, 7
      %v2031 = vsub.s32 0, %v2030
      %v2032 = vrot.slane %v2012, %v2031
      %v2034 = vmul.f32 %v2027, %v2032
      %v2036 = vlaneseq
      %v2037 = vshrl.u32 %v2036, 7
      %v2038 = vsub.s32 0, %v2037
      %v2039 = vrot.slane %v2013, %v2038
      %v2041 = vadd.f32 %v2034, %v2039
      %v2042 = vpack.c.bf16 %v2041, %v2041
      %vm2043 = vcmask 519168
      %2044 = vst.msk [vmem:[%s381] sm:$0xf] %vm2043, %v2042
      %p2045 = scmp.lt.s32.totalorder %s22, 1
      %s2046 = scalar_select %p2045, %s22, 1
      %s2047 = smul.addr %s2046, 4
      %s2048 = scalar_lea.vmem %s11, %s2047
      // Predicated region
      $region65: #{transformer_translator_forward.12} parent=63 // pred_check
        %p2049 = pneg %p276
      $region66: #{transformer_translator_forward.12} parent=63 // pred_check_branch
        %2051 = sbr.rel (%p2049) target = $region68
      $region67: #{transformer_translator_forward.12} parent=63 // pred_region
        _
      $region68: #{transformer_translator_forward.12} parent=63 // pred_fallthru
        _
    $region64: #{transformer_translator_forward.12} parent=5 // pred_fallthru
      _
    %p2052 = scmp.le.s32.totalorder 2, %s17
    // Predicated region
    $region69: #{transformer_translator_forward.12} parent=5 // pred_check
      %p2053 = pneg %p2052
    $region70: #{transformer_translator_forward.12} parent=5 // pred_check_branch
      %2055 = sbr.rel (%p2053) target = $region72
    $region71: #{transformer_translator_forward.12} parent=5 // pred_region
      %s2056 = ssub.s32 %s17, 2
      // Predicated region
      $region73: #{transformer_translator_forward.12} parent=71 // pred_check
        %p2057 = pneg %p282
      $region74: #{transformer_translator_forward.12} parent=71 // pred_check_branch
        %2059 = sbr.rel (%p2057) target = $region76
      $region75: #{transformer_translator_forward.12} parent=71 // pred_region
        %p2060 = scmp.lt.s32.totalorder %s23, 1
        %s2061 = scalar_select %p2060, %s23, 1
        %s2062 = smul.addr %s2061, 4
        %s2063 = scalar_lea.vmem %s11, %s2062
      $region76: #{transformer_translator_forward.12} parent=71 // pred_fallthru
        _
    $region72: #{transformer_translator_forward.12} parent=5 // pred_fallthru
      _
  $region6: #{transformer_translator_forward.12} parent=0 // loop_footer
    %s21 = sadd.s32 1, %s17
  $region7: #{transformer_translator_forward.12} parent=0 // loop_footer_branch
    %16 = sbr.rel target = $region3
  $region8: #{transformer_translator_forward.12} parent=0 // loop_exit
    _

// kernel: transformer_translator_forward.17
$region0: #{transformer_translator_forward.17}
  #allocation0 [shape = 'u32[]', space=smem, size = 0x4, offset = 0x4, fixed_abs, tag = 'smem constant byte address 0x4 - core index']
  #allocation1 [shape = 'u32[144,128]{1,0:T(1,128)}', space=vmem, size = 0x12000, scoped, tag = 'internal scratch']
  %s0 = inlined_call_operand.vmem [shape: bf16[2,16,64], index: 0, kind: input, shape index: {}]
  %s1 = inlined_call_operand.vmem [shape: f32[16,16], index: 1, kind: input, shape index: {}]
  %s2 = inlined_call_operand.vmem [shape: bf16[4,64,16], index: 2, kind: input, shape index: {}]
  %s3 = inlined_call_operand.vmem [shape: f32[4,1,16], index: 3, kind: input, shape index: {}]
  %s4 = inlined_call_operand.vmem [shape: bf16[4,64,16], index: 4, kind: input, shape index: {}]
  %s5 = inlined_call_operand.vmem [shape: f32[4,1,16], index: 5, kind: input, shape index: {}]
  %s6 = inlined_call_operand.vmem [shape: bf16[4,64,16], index: 6, kind: input, shape index: {}]
  %s7 = inlined_call_operand.vmem [shape: f32[4,1,16], index: 7, kind: input, shape index: {}]
  %s8 = inlined_call_operand.vmem [shape: bf16[4,16,64], index: 8, kind: input, shape index: {}]
  %s9 = inlined_call_operand.vmem [shape: f32[1,64], index: 9, kind: input, shape index: {}]
  %s10 = inlined_call_operand.vmem [shape: f32[1,64], index: 10, kind: input, shape index: {}]
  %s11 = inlined_call_operand.vmem [shape: f32[1,64], index: 11, kind: input, shape index: {}]
  %s12 = inlined_call_operand.vmem [shape: bf16[2,16,64], index: 12, kind: output, shape index: {}]
  %s13 = sld [smem:[#allocation0]]
  $region81: #{transformer_translator_forward.17} parent=0
    _
  %s15 = ssub.s32 1, %s13
  %s16 = scalar_select 0, %s15, %s13
  loop: start=0, step=1, limit=4
  $region2: #{transformer_translator_forward.17} parent=0 // loop_pre_header
    _
  $region3: #{transformer_translator_forward.17} parent=0 // loop_header
    %s18 = sphi 0, %s22
    %p19 = scmp.ge.s32.totalorder %s18, 4
    %s28 = sphi 0, %s30
    %s31 = sphi 0, %s28
    %s32 = sphi 0, %s31
    %s48 = sphi 0, %s32
    %s52 = sphi 0, %s52
    %s54 = sphi 0, %s52
    %s55 = sphi 0, %s54
    %s69 = sphi 0, %s55
    %s73 = sphi 0, %s73
    %s75 = sphi 0, %s73
    %s76 = sphi 0, %s75
    %s90 = sphi 0, %s76
    %s94 = sphi 0, %s94
    %s96 = sphi 0, %s94
    %s97 = sphi 0, %s96
    %s111 = sphi 0, %s97
    %s115 = sphi 0, %s115
    %s117 = sphi 0, %s115
    %s118 = sphi 0, %s117
    %s132 = sphi 0, %s118
    %s136 = sphi 0, %s136
    %s138 = sphi 0, %s136
    %s139 = sphi 0, %s138
    %s153 = sphi 0, %s139
    %s157 = sphi 0, %s157
    %s159 = sphi 0, %s157
    %s160 = sphi 0, %s159
    %s174 = sphi 0, %s160
    %s178 = sphi 0, %s178
    %s180 = sphi 0, %s178
    %s181 = sphi 0, %s180
    %s195 = sphi 0, %s181
    %s199 = sphi 0, %s199
    %s201 = sphi 0, %s199
    %s202 = sphi 0, %s201
    %s216 = sphi 0, %s202
    %s220 = sphi 0, %s220
    %s222 = sphi 0, %s220
    %s223 = sphi 0, %s222
    %s237 = sphi 0, %s223
    %s241 = sphi 0, %s241
    %s243 = sphi 0, %s241
    %s244 = sphi 0, %s243
    %s258 = sphi 0, %s244
    %s262 = sphi 0, %s262
    %s264 = sphi 0, %s262
    %s265 = sphi 0, %s264
    %s279 = sphi 0, %s265
    %s285 = sphi 0, %s287
    %s288 = sphi 0, %s285
    %s289 = sphi 0, %s288
    %s305 = sphi 0, %s289
  $region4: #{transformer_translator_forward.17} parent=0 // loop_header_branch
    %21 = sbr.rel (%p19) target = $region8
  $region5: #{transformer_translator_forward.17} parent=0 // loop_body
    %s23 = ssub.s32 %s18, 1
    %s24 = ssub.s32 %s18, 2
    %s25 = sadd.s32 %s18, 1
    %s26 = ssub.s32 %s18, %s25
    %p27 = scmp.eq.s32.totalorder %s26, 0
    %s29 = sadd.s32 %s28, 1
    %s30 = scalar_select %p27, %s28, %s29
    %p33 = pneg %p27
    %p34 = scmp.eq.s32.totalorder %s18, 1
    %p35 = por %p33, %p34
    %p36 = scmp.ne.s32.totalorder %s28, %s31
    %p37 = scmp.eq.s32.totalorder %s18, 0
    %p38 = por %p36, %p37
    %p39 = scmp.ne.s32.totalorder %s28, %s31
    %p40 = scmp.eq.s32.totalorder %s23, 1
    %p41 = por %p39, %p40
    %p42 = scmp.ne.s32.totalorder %s31, %s32
    %p43 = scmp.eq.s32.totalorder %s23, 0
    %p44 = por %p42, %p43
    %p45 = scmp.ne.s32.totalorder %s31, %s32
    %p46 = scmp.eq.s32.totalorder %s24, 1
    %p47 = por %p45, %p46
    %p49 = scmp.ne.s32.totalorder %s32, %s48
    %p50 = scmp.eq.s32.totalorder %s24, 0
    %p51 = por %p49, %p50
    %s53 = sadd.s32 %s52, 1
    %p56 = scmp.eq.s32.totalorder %s18, 1
    %p57 = scmp.ne.s32.totalorder %s52, %s54
    %p58 = scmp.eq.s32.totalorder %s18, 0
    %p59 = por %p57, %p58
    %p60 = scmp.ne.s32.totalorder %s52, %s54
    %p61 = scmp.eq.s32.totalorder %s23, 1
    %p62 = por %p60, %p61
    %p63 = scmp.ne.s32.totalorder %s54, %s55
    %p64 = scmp.eq.s32.totalorder %s23, 0
    %p65 = por %p63, %p64
    %p66 = scmp.ne.s32.totalorder %s54, %s55
    %p67 = scmp.eq.s32.totalorder %s24, 1
    %p68 = por %p66, %p67
    %p70 = scmp.ne.s32.totalorder %s55, %s69
    %p71 = scmp.eq.s32.totalorder %s24, 0
    %p72 = por %p70, %p71
    %s74 = sadd.s32 %s73, 1
    %p77 = scmp.eq.s32.totalorder %s18, 1
    %p78 = scmp.ne.s32.totalorder %s73, %s75
    %p79 = scmp.eq.s32.totalorder %s18, 0
    %p80 = por %p78, %p79
    %p81 = scmp.ne.s32.totalorder %s73, %s75
    %p82 = scmp.eq.s32.totalorder %s23, 1
    %p83 = por %p81, %p82
    %p84 = scmp.ne.s32.totalorder %s75, %s76
    %p85 = scmp.eq.s32.totalorder %s23, 0
    %p86 = por %p84, %p85
    %p87 = scmp.ne.s32.totalorder %s75, %s76
    %p88 = scmp.eq.s32.totalorder %s24, 1
    %p89 = por %p87, %p88
    %p91 = scmp.ne.s32.totalorder %s76, %s90
    %p92 = scmp.eq.s32.totalorder %s24, 0
    %p93 = por %p91, %p92
    %s95 = sadd.s32 %s94, 1
    %p98 = scmp.eq.s32.totalorder %s18, 1
    %p99 = scmp.ne.s32.totalorder %s94, %s96
    %p100 = scmp.eq.s32.totalorder %s18, 0
    %p101 = por %p99, %p100
    %p102 = scmp.ne.s32.totalorder %s94, %s96
    %p103 = scmp.eq.s32.totalorder %s23, 1
    %p104 = por %p102, %p103
    %p105 = scmp.ne.s32.totalorder %s96, %s97
    %p106 = scmp.eq.s32.totalorder %s23, 0
    %p107 = por %p105, %p106
    %p108 = scmp.ne.s32.totalorder %s96, %s97
    %p109 = scmp.eq.s32.totalorder %s24, 1
    %p110 = por %p108, %p109
    %p112 = scmp.ne.s32.totalorder %s97, %s111
    %p113 = scmp.eq.s32.totalorder %s24, 0
    %p114 = por %p112, %p113
    %s116 = sadd.s32 %s115, 1
    %p119 = scmp.eq.s32.totalorder %s18, 1
    %p120 = scmp.ne.s32.totalorder %s115, %s117
    %p121 = scmp.eq.s32.totalorder %s18, 0
    %p122 = por %p120, %p121
    %p123 = scmp.ne.s32.totalorder %s115, %s117
    %p124 = scmp.eq.s32.totalorder %s23, 1
    %p125 = por %p123, %p124
    %p126 = scmp.ne.s32.totalorder %s117, %s118
    %p127 = scmp.eq.s32.totalorder %s23, 0
    %p128 = por %p126, %p127
    %p129 = scmp.ne.s32.totalorder %s117, %s118
    %p130 = scmp.eq.s32.totalorder %s24, 1
    %p131 = por %p129, %p130
    %p133 = scmp.ne.s32.totalorder %s118, %s132
    %p134 = scmp.eq.s32.totalorder %s24, 0
    %p135 = por %p133, %p134
    %s137 = sadd.s32 %s136, 1
    %p140 = scmp.eq.s32.totalorder %s18, 1
    %p141 = scmp.ne.s32.totalorder %s136, %s138
    %p142 = scmp.eq.s32.totalorder %s18, 0
    %p143 = por %p141, %p142
    %p144 = scmp.ne.s32.totalorder %s136, %s138
    %p145 = scmp.eq.s32.totalorder %s23, 1
    %p146 = por %p144, %p145
    %p147 = scmp.ne.s32.totalorder %s138, %s139
    %p148 = scmp.eq.s32.totalorder %s23, 0
    %p149 = por %p147, %p148
    %p150 = scmp.ne.s32.totalorder %s138, %s139
    %p151 = scmp.eq.s32.totalorder %s24, 1
    %p152 = por %p150, %p151
    %p154 = scmp.ne.s32.totalorder %s139, %s153
    %p155 = scmp.eq.s32.totalorder %s24, 0
    %p156 = por %p154, %p155
    %s158 = sadd.s32 %s157, 1
    %p161 = scmp.eq.s32.totalorder %s18, 1
    %p162 = scmp.ne.s32.totalorder %s157, %s159
    %p163 = scmp.eq.s32.totalorder %s18, 0
    %p164 = por %p162, %p163
    %p165 = scmp.ne.s32.totalorder %s157, %s159
    %p166 = scmp.eq.s32.totalorder %s23, 1
    %p167 = por %p165, %p166
    %p168 = scmp.ne.s32.totalorder %s159, %s160
    %p169 = scmp.eq.s32.totalorder %s23, 0
    %p170 = por %p168, %p169
    %p171 = scmp.ne.s32.totalorder %s159, %s160
    %p172 = scmp.eq.s32.totalorder %s24, 1
    %p173 = por %p171, %p172
    %p175 = scmp.ne.s32.totalorder %s160, %s174
    %p176 = scmp.eq.s32.totalorder %s24, 0
    %p177 = por %p175, %p176
    %s179 = sadd.s32 %s178, 1
    %p182 = scmp.eq.s32.totalorder %s18, 1
    %p183 = scmp.ne.s32.totalorder %s178, %s180
    %p184 = scmp.eq.s32.totalorder %s18, 0
    %p185 = por %p183, %p184
    %p186 = scmp.ne.s32.totalorder %s178, %s180
    %p187 = scmp.eq.s32.totalorder %s23, 1
    %p188 = por %p186, %p187
    %p189 = scmp.ne.s32.totalorder %s180, %s181
    %p190 = scmp.eq.s32.totalorder %s23, 0
    %p191 = por %p189, %p190
    %p192 = scmp.ne.s32.totalorder %s180, %s181
    %p193 = scmp.eq.s32.totalorder %s24, 1
    %p194 = por %p192, %p193
    %p196 = scmp.ne.s32.totalorder %s181, %s195
    %p197 = scmp.eq.s32.totalorder %s24, 0
    %p198 = por %p196, %p197
    %s200 = sadd.s32 %s199, 1
    %p203 = scmp.eq.s32.totalorder %s18, 1
    %p204 = scmp.ne.s32.totalorder %s199, %s201
    %p205 = scmp.eq.s32.totalorder %s18, 0
    %p206 = por %p204, %p205
    %p207 = scmp.ne.s32.totalorder %s199, %s201
    %p208 = scmp.eq.s32.totalorder %s23, 1
    %p209 = por %p207, %p208
    %p210 = scmp.ne.s32.totalorder %s201, %s202
    %p211 = scmp.eq.s32.totalorder %s23, 0
    %p212 = por %p210, %p211
    %p213 = scmp.ne.s32.totalorder %s201, %s202
    %p214 = scmp.eq.s32.totalorder %s24, 1
    %p215 = por %p213, %p214
    %p217 = scmp.ne.s32.totalorder %s202, %s216
    %p218 = scmp.eq.s32.totalorder %s24, 0
    %p219 = por %p217, %p218
    %s221 = sadd.s32 %s220, 1
    %p224 = scmp.eq.s32.totalorder %s18, 1
    %p225 = scmp.ne.s32.totalorder %s220, %s222
    %p226 = scmp.eq.s32.totalorder %s18, 0
    %p227 = por %p225, %p226
    %p228 = scmp.ne.s32.totalorder %s220, %s222
    %p229 = scmp.eq.s32.totalorder %s23, 1
    %p230 = por %p228, %p229
    %p231 = scmp.ne.s32.totalorder %s222, %s223
    %p232 = scmp.eq.s32.totalorder %s23, 0
    %p233 = por %p231, %p232
    %p234 = scmp.ne.s32.totalorder %s222, %s223
    %p235 = scmp.eq.s32.totalorder %s24, 1
    %p236 = por %p234, %p235
    %p238 = scmp.ne.s32.totalorder %s223, %s237
    %p239 = scmp.eq.s32.totalorder %s24, 0
    %p240 = por %p238, %p239
    %s242 = sadd.s32 %s241, 1
    %p245 = scmp.eq.s32.totalorder %s18, 1
    %p246 = scmp.ne.s32.totalorder %s241, %s243
    %p247 = scmp.eq.s32.totalorder %s18, 0
    %p248 = por %p246, %p247
    %p249 = scmp.ne.s32.totalorder %s241, %s243
    %p250 = scmp.eq.s32.totalorder %s23, 1
    %p251 = por %p249, %p250
    %p252 = scmp.ne.s32.totalorder %s243, %s244
    %p253 = scmp.eq.s32.totalorder %s23, 0
    %p254 = por %p252, %p253
    %p255 = scmp.ne.s32.totalorder %s243, %s244
    %p256 = scmp.eq.s32.totalorder %s24, 1
    %p257 = por %p255, %p256
    %p259 = scmp.ne.s32.totalorder %s244, %s258
    %p260 = scmp.eq.s32.totalorder %s24, 0
    %p261 = por %p259, %p260
    %s263 = sadd.s32 %s262, 1
    %p266 = scmp.eq.s32.totalorder %s18, 1
    %p267 = scmp.ne.s32.totalorder %s262, %s264
    %p268 = scmp.eq.s32.totalorder %s18, 0
    %p269 = por %p267, %p268
    %p270 = scmp.ne.s32.totalorder %s262, %s264
    %p271 = scmp.eq.s32.totalorder %s23, 1
    %p272 = por %p270, %p271
    %p273 = scmp.ne.s32.totalorder %s264, %s265
    %p274 = scmp.eq.s32.totalorder %s23, 0
    %p275 = por %p273, %p274
    %p276 = scmp.ne.s32.totalorder %s264, %s265
    %p277 = scmp.eq.s32.totalorder %s24, 1
    %p278 = por %p276, %p277
    %p280 = scmp.ne.s32.totalorder %s265, %s279
    %p281 = scmp.eq.s32.totalorder %s24, 0
    %p282 = por %p280, %p281
    %s283 = ssub.s32 %s18, %s25
    %p284 = scmp.eq.s32.totalorder %s283, 0
    %s286 = sadd.s32 %s285, 1
    %s287 = scalar_select %p284, %s285, %s286
    %p290 = pneg %p284
    %p291 = scmp.eq.s32.totalorder %s18, 1
    %p292 = por %p290, %p291
    %p293 = scmp.ne.s32.totalorder %s285, %s288
    %p294 = scmp.eq.s32.totalorder %s18, 0
    %p295 = por %p293, %p294
    %p296 = scmp.ne.s32.totalorder %s285, %s288
    %p297 = scmp.eq.s32.totalorder %s23, 1
    %p298 = por %p296, %p297
    %p299 = scmp.ne.s32.totalorder %s288, %s289
    %p300 = scmp.eq.s32.totalorder %s23, 0
    %p301 = por %p299, %p300
    %p302 = scmp.ne.s32.totalorder %s288, %s289
    %p303 = scmp.eq.s32.totalorder %s24, 1
    %p304 = por %p302, %p303
    %p306 = scmp.ne.s32.totalorder %s289, %s305
    %p307 = scmp.eq.s32.totalorder %s24, 0
    %p308 = por %p306, %p307
    %p309 = scmp.le.s32.totalorder 1, %s18
    %p310 = scmp.lt.s32.totalorder %s18, 3
    %p311 = pnand %p309, %p310
    %p312 = pneg %p311
    // Predicated region
    $region9: #{transformer_translator_forward.17} parent=5 // pred_check
      _
    $region10: #{transformer_translator_forward.17} parent=5 // pred_check_branch
      %314 = sbr.rel (%p311) target = $region12
    $region11: #{transformer_translator_forward.17} parent=5 // pred_region
      %s315 = ssub.s32 %s18, 1
      // Predicated region
      $region13: #{transformer_translator_forward.17} parent=11 // pred_check
        %p316 = pneg %p65
      $region14: #{transformer_translator_forward.17} parent=11 // pred_check_branch
        %318 = sbr.rel (%p316) target = $region16
      $region15: #{transformer_translator_forward.17} parent=11 // pred_region
        _
      $region16: #{transformer_translator_forward.17} parent=11 // pred_fallthru
        _
      // Predicated region
      $region17: #{transformer_translator_forward.17} parent=11 // pred_check
        %p319 = pneg %p86
      $region18: #{transformer_translator_forward.17} parent=11 // pred_check_branch
        %321 = sbr.rel (%p319) target = $region20
      $region19: #{transformer_translator_forward.17} parent=11 // pred_region
        _
      $region20: #{transformer_translator_forward.17} parent=11 // pred_fallthru
        _
      // Predicated region
      $region21: #{transformer_translator_forward.17} parent=11 // pred_check
        %p322 = pneg %p107
      $region22: #{transformer_translator_forward.17} parent=11 // pred_check_branch
        %324 = sbr.rel (%p322) target = $region24
      $region23: #{transformer_translator_forward.17} parent=11 // pred_region
        _
      $region24: #{transformer_translator_forward.17} parent=11 // pred_fallthru
        _
      // Predicated region
      $region25: #{transformer_translator_forward.17} parent=11 // pred_check
        %p325 = pneg %p128
      $region26: #{transformer_translator_forward.17} parent=11 // pred_check_branch
        %327 = sbr.rel (%p325) target = $region28
      $region27: #{transformer_translator_forward.17} parent=11 // pred_region
        _
      $region28: #{transformer_translator_forward.17} parent=11 // pred_fallthru
        _
      // Predicated region
      $region29: #{transformer_translator_forward.17} parent=11 // pred_check
        %p328 = pneg %p149
      $region30: #{transformer_translator_forward.17} parent=11 // pred_check_branch
        %330 = sbr.rel (%p328) target = $region32
      $region31: #{transformer_translator_forward.17} parent=11 // pred_region
        _
      $region32: #{transformer_translator_forward.17} parent=11 // pred_fallthru
        _
      // Predicated region
      $region33: #{transformer_translator_forward.17} parent=11 // pred_check
        %p331 = pneg %p170
      $region34: #{transformer_translator_forward.17} parent=11 // pred_check_branch
        %333 = sbr.rel (%p331) target = $region36
      $region35: #{transformer_translator_forward.17} parent=11 // pred_region
        _
      $region36: #{transformer_translator_forward.17} parent=11 // pred_fallthru
        _
      // Predicated region
      $region37: #{transformer_translator_forward.17} parent=11 // pred_check
        %p334 = pneg %p191
      $region38: #{transformer_translator_forward.17} parent=11 // pred_check_branch
        %336 = sbr.rel (%p334) target = $region40
      $region39: #{transformer_translator_forward.17} parent=11 // pred_region
        _
      $region40: #{transformer_translator_forward.17} parent=11 // pred_fallthru
        _
      // Predicated region
      $region41: #{transformer_translator_forward.17} parent=11 // pred_check
        %p337 = pneg %p212
      $region42: #{transformer_translator_forward.17} parent=11 // pred_check_branch
        %339 = sbr.rel (%p337) target = $region44
      $region43: #{transformer_translator_forward.17} parent=11 // pred_region
        _
      $region44: #{transformer_translator_forward.17} parent=11 // pred_fallthru
        _
      // Predicated region
      $region45: #{transformer_translator_forward.17} parent=11 // pred_check
        %p340 = pneg %p233
      $region46: #{transformer_translator_forward.17} parent=11 // pred_check_branch
        %342 = sbr.rel (%p340) target = $region48
      $region47: #{transformer_translator_forward.17} parent=11 // pred_region
        _
      $region48: #{transformer_translator_forward.17} parent=11 // pred_fallthru
        _
      // Predicated region
      $region49: #{transformer_translator_forward.17} parent=11 // pred_check
        %p343 = pneg %p254
      $region50: #{transformer_translator_forward.17} parent=11 // pred_check_branch
        %345 = sbr.rel (%p343) target = $region52
      $region51: #{transformer_translator_forward.17} parent=11 // pred_region
        _
      $region52: #{transformer_translator_forward.17} parent=11 // pred_fallthru
        _
      // Predicated region
      $region53: #{transformer_translator_forward.17} parent=11 // pred_check
        %p346 = pneg %p275
      $region54: #{transformer_translator_forward.17} parent=11 // pred_check_branch
        %348 = sbr.rel (%p346) target = $region56
      $region55: #{transformer_translator_forward.17} parent=11 // pred_region
        _
      $region56: #{transformer_translator_forward.17} parent=11 // pred_fallthru
        _
    $region12: #{transformer_translator_forward.17} parent=5 // pred_fallthru
      _
    %p349 = scmp.lt.s32.totalorder %s18, 2
    // Predicated region
    $region57: #{transformer_translator_forward.17} parent=5 // pred_check
      %p350 = pneg %p349
    $region58: #{transformer_translator_forward.17} parent=5 // pred_check_branch
      %352 = sbr.rel (%p350) target = $region60
    $region59: #{transformer_translator_forward.17} parent=5 // pred_region
      // Predicated region
      $region61: #{transformer_translator_forward.17} parent=59 // pred_check
        %p353 = pneg %p38
      $region62: #{transformer_translator_forward.17} parent=59 // pred_check_branch
        %355 = sbr.rel (%p353) target = $region64
      $region63: #{transformer_translator_forward.17} parent=59 // pred_region
        %p356 = scmp.lt.s32.totalorder %s18, 1
        %s357 = scalar_select %p356, %s18, 1
        %s358 = smul.addr %s357, 2
        %s359 = smul.addr %s358, 4
        %s360 = scalar_lea.vmem %s0, %s359
      $region64: #{transformer_translator_forward.17} parent=59 // pred_fallthru
        _
    $region60: #{transformer_translator_forward.17} parent=5 // pred_fallthru
      _
    %p361 = scmp.le.s32.totalorder 1, %s18
    %p362 = scmp.lt.s32.totalorder %s18, 3
    %p363 = pnand %p361, %p362
    %p364 = pneg %p363
    // Predicated region
    $region65: #{transformer_translator_forward.17} parent=5 // pred_check
      _
    $region66: #{transformer_translator_forward.17} parent=5 // pred_check_branch
      %366 = sbr.rel (%p363) target = $region68
    $region67: #{transformer_translator_forward.17} parent=5 // pred_region
      %s367 = ssub.s32 %s18, 1
      %p368 = scmp.lt.s32.totalorder %s23, 1
      %s369 = scalar_select %p368, %s23, 1
      %s370 = smul.addr %s369, 2
      %s371 = smul.addr %s370, 4
      %s372 = scalar_lea.vmem %s0, %s371
      %p373 = pneg %p44
      %p374 = pneg %p41
      %p375 = pneg %p65
      %p376 = pneg %p62
      %p377 = pneg %p86
      %p378 = pneg %p83
      %p379 = pneg %p107
      %p380 = pneg %p104
      %p381 = pneg %p128
      %p382 = pneg %p125
      %p383 = pneg %p149
      %p384 = pneg %p146
      %p385 = pneg %p170
      %p386 = pneg %p167
      %p387 = pneg %p191
      %p388 = pneg %p188
      %p389 = pneg %p212
      %p390 = pneg %p209
      %p391 = pneg %p233
      %p392 = pneg %p230
      %p393 = pneg %p254
      %p394 = pneg %p251
      %p395 = pneg %p275
      %p396 = pneg %p272
      %p397 = pneg %p301
      %p398 = pneg %p298
      %p399 = scmp.lt.s32.totalorder %s23, 1
      %s400 = scalar_select %p399, %s23, 1
      %s401 = smul.addr %s400, 2
      %s402 = smul.addr %s401, 4
      %s403 = scalar_lea.vmem %s12, %s402
      %p404 = scmp.lt.s32.totalorder %s23, 1
      %s405 = scalar_select %p404, %s23, 1
      %s406 = smul.addr %s405, 2
      %s407 = smul.addr %s406, 4
      %s408 = scalar_lea.vmem %s0, %s407
      %p409 = scmp.lt.s32.totalorder %s23, 1
      %s410 = scalar_select %p409, %s23, 1
      %s411 = smul.addr %s410, 2
      %s412 = smul.addr %s411, 4
      %s413 = scalar_lea.vmem %s12, %s412
      %v415 = vld [vmem:[%s408] sm:$0xf]
      %v416 = vld [vmem:[%s408 + $0x4] sm:$0xf]
      %v417 = vld [vmem:[%s1] sm:$0xff]
      %v418 = vld [vmem:[%s1 + $0x8] sm:$0xff]
      %v419 = vld [vmem:[%s2] sm:$0xf]
      %v420 = vld [vmem:[%s2 + $0x4] sm:$0xf]
      %v421 = vld [vmem:[%s2 + $0x8] sm:$0xf]
      %v422 = vld [vmem:[%s2 + $0xc] sm:$0xf]
      %v423 = vld [vmem:[%s2 + $0x10] sm:$0xf]
      %v424 = vld [vmem:[%s2 + $0x14] sm:$0xf]
      %v425 = vld [vmem:[%s2 + $0x18] sm:$0xf]
      %v426 = vld [vmem:[%s2 + $0x1c] sm:$0xf]
      %v427 = vld [vmem:[%s3] sm:$0x1]
      %v429 = vlaneseq
      %v430 = vshrl.u32 %v429, 7
      %v431 = vsub.s32 0, %v430
      %v432 = vrot.slane %v427, %v431
      %v436 = vunpack.c.l.b16 %v415
      %v437 = vunpack.c.l.b16 %v416
      %v438 = vpack.c.b16 %v437, %v436
      %v447 = vunpack.c.l.b16 %v419
      %v448 = vunpack.c.l.b16 %v420
      %v449 = vunpack.c.l.b16 %v421
      %v450 = vunpack.c.l.b16 %v422
      %v451 = vunpack.c.l.b16 %v423
      %v452 = vunpack.c.l.b16 %v424
      %v453 = vunpack.c.l.b16 %v425
      %v454 = vunpack.c.l.b16 %v426
      %v455 = vpack.c.b16 %v448, %v447
      %v456 = vpack.c.b16 %v450, %v449
      %v457 = vpack.c.b16 %v452, %v451
      %v458 = vpack.c.b16 %v454, %v453
      %vm463 = vcmask 523264
      %v465 = vsel %vm463, %v438, 0
      %467 = vmatprep.subr.bf16.mxu0 0
      %468 = vmatpush1.bf16.msra.mxu0 %v455
      %469 = vmatprep.subr.bf16.mxu0 0
      %470 = vmatpush1.bf16.msra.mxu0 %v456
      %471 = vmatprep.subr.bf16.mxu0 0
      %472 = vmatpush1.bf16.msra.mxu0 %v457
      %473 = vmatprep.subr.bf16.mxu0 0
      %474 = vmatpush1.bf16.msra.mxu0 %v458
      %475 = vmatprep.subr.bf16.mxu0 0
      %476 = vmatpush1.bf16.msra.mxu0 0
      %477 = vmatprep.subr.bf16.mxu0 0
      %478 = vmatpush1.bf16.msra.mxu0 0
      %479 = vmatprep.subr.bf16.mxu0 0
      %480 = vmatpush1.bf16.msra.mxu0 0
      %481 = vmatprep.subr.bf16.mxu0 0
      %482 = vmatpush1.bf16.msra.mxu0 0
      %483 = vmatprep.subr.bf16.mxu0 0
      %484 = vmatpush1.bf16.msra.mxu0 0
      %485 = vmatprep.subr.bf16.mxu0 0
      %486 = vmatpush1.bf16.msra.mxu0 0
      %487 = vmatprep.subr.bf16.mxu0 0
      %488 = vmatpush1.bf16.msra.mxu0 0
      %489 = vmatprep.subr.bf16.mxu0 0
      %490 = vmatpush1.bf16.msra.mxu0 0
      %491 = vmatprep.subr.bf16.mxu0 0
      %492 = vmatpush1.bf16.msra.mxu0 0
      %493 = vmatprep.subr.bf16.mxu0 0
      %494 = vmatpush1.bf16.msra.mxu0 0
      %495 = vmatprep.subr.bf16.mxu0 0
      %496 = vmatpush1.bf16.msra.mxu0 0
      %497 = vmatprep.subr.bf16.mxu0 0
      %498 = vmatpush1.bf16.msra.mxu0 0
      %499 = vmatprep.mubr.bf16.mxu0 0
      %500 = vmatmul.mubr.bf16.gmra.mrb[0].mxu0 %v465
      %v501 = vpop.f32.mrb[0].mxu0
      %v502 = vadd.f32 %v432, %v501
      %v503 = vpop.f32.mrb[0].mxu0
      %v504 = vpop.f32.mrb[0].mxu0
      %v505 = vadd.f32 %v432, %v504
      %v506 = vpop.f32.mrb[0].mxu0
      %507 = vdwg.mxu0
      %v508 = vld [vmem:[%s4] sm:$0xf]
      %v509 = vld [vmem:[%s4 + $0x4] sm:$0xf]
      %v510 = vld [vmem:[%s4 + $0x8] sm:$0xf]
      %v511 = vld [vmem:[%s4 + $0xc] sm:$0xf]
      %v512 = vld [vmem:[%s4 + $0x10] sm:$0xf]
      %v513 = vld [vmem:[%s4 + $0x14] sm:$0xf]
      %v514 = vld [vmem:[%s4 + $0x18] sm:$0xf]
      %v515 = vld [vmem:[%s4 + $0x1c] sm:$0xf]
      %v516 = vld [vmem:[%s5] sm:$0x1]
      %v518 = vlaneseq
      %v519 = vshrl.u32 %v518, 7
      %v520 = vsub.s32 0, %v519
      %v521 = vrot.slane %v516, %v520
      %v531 = vunpack.c.l.b16 %v508
      %v532 = vunpack.c.l.b16 %v509
      %v533 = vunpack.c.l.b16 %v510
      %v534 = vunpack.c.l.b16 %v511
      %v535 = vunpack.c.l.b16 %v512
      %v536 = vunpack.c.l.b16 %v513
      %v537 = vunpack.c.l.b16 %v514
      %v538 = vunpack.c.l.b16 %v515
      %v539 = vpack.c.b16 %v532, %v531
      %v540 = vpack.c.b16 %v534, %v533
      %v541 = vpack.c.b16 %v536, %v535
      %v542 = vpack.c.b16 %v538, %v537
      %547 = vmatprep.subr.bf16.mxu0 0
      %548 = vmatpush1.bf16.msra.mxu0 %v539
      %549 = vmatprep.subr.bf16.mxu0 0
      %550 = vmatpush1.bf16.msra.mxu0 %v540
      %551 = vmatprep.subr.bf16.mxu0 0
      %552 = vmatpush1.bf16.msra.mxu0 %v541
      %553 = vmatprep.subr.bf16.mxu0 0
      %554 = vmatpush1.bf16.msra.mxu0 %v542
      %555 = vmatprep.subr.bf16.mxu0 0
      %556 = vmatpush1.bf16.msra.mxu0 0
      %557 = vmatprep.subr.bf16.mxu0 0
      %558 = vmatpush1.bf16.msra.mxu0 0
      %559 = vmatprep.subr.bf16.mxu0 0
      %560 = vmatpush1.bf16.msra.mxu0 0
      %561 = vmatprep.subr.bf16.mxu0 0
      %562 = vmatpush1.bf16.msra.mxu0 0
      %563 = vmatprep.subr.bf16.mxu0 0
      %564 = vmatpush1.bf16.msra.mxu0 0
      %565 = vmatprep.subr.bf16.mxu0 0
      %566 = vmatpush1.bf16.msra.mxu0 0
      %567 = vmatprep.subr.bf16.mxu0 0
      %568 = vmatpush1.bf16.msra.mxu0 0
      %569 = vmatprep.subr.bf16.mxu0 0
      %570 = vmatpush1.bf16.msra.mxu0 0
      %571 = vmatprep.subr.bf16.mxu0 0
      %572 = vmatpush1.bf16.msra.mxu0 0
      %573 = vmatprep.subr.bf16.mxu0 0
      %574 = vmatpush1.bf16.msra.mxu0 0
      %575 = vmatprep.subr.bf16.mxu0 0
      %576 = vmatpush1.bf16.msra.mxu0 0
      %577 = vmatprep.subr.bf16.mxu0 0
      %578 = vmatpush1.bf16.msra.mxu0 0
      %579 = vmatprep.mubr.bf16.mxu0 0
      %580 = vmatmul.mubr.bf16.gmra.mrb[0].mxu0 %v465
      %v581 = vpop.f32.mrb[0].mxu0
      %v582 = vadd.f32 %v521, %v581
      %v583 = vpop.f32.mrb[0].mxu0
      %v584 = vpop.f32.mrb[0].mxu0
      %v585 = vadd.f32 %v521, %v584
      %v586 = vpop.f32.mrb[0].mxu0
      %587 = vdwg.mxu0
      %v588 = vld [vmem:[%s6] sm:$0xf]
      %v589 = vld [vmem:[%s6 + $0x4] sm:$0xf]
      %v590 = vld [vmem:[%s6 + $0x8] sm:$0xf]
      %v591 = vld [vmem:[%s6 + $0xc] sm:$0xf]
      %v592 = vld [vmem:[%s6 + $0x10] sm:$0xf]
      %v593 = vld [vmem:[%s6 + $0x14] sm:$0xf]
      %v594 = vld [vmem:[%s6 + $0x18] sm:$0xf]
      %v595 = vld [vmem:[%s6 + $0x1c] sm:$0xf]
      %v596 = vld [vmem:[%s7] sm:$0x1]
      %v598 = vlaneseq
      %v599 = vshrl.u32 %v598, 7
      %v600 = vsub.s32 0, %v599
      %v601 = vrot.slane %v596, %v600
      %v611 = vunpack.c.l.b16 %v588
      %v612 = vunpack.c.l.b16 %v589
      %v613 = vunpack.c.l.b16 %v590
      %v614 = vunpack.c.l.b16 %v591
      %v615 = vunpack.c.l.b16 %v592
      %v616 = vunpack.c.l.b16 %v593
      %v617 = vunpack.c.l.b16 %v594
      %v618 = vunpack.c.l.b16 %v595
      %v619 = vpack.c.b16 %v612, %v611
      %v620 = vpack.c.b16 %v614, %v613
      %v621 = vpack.c.b16 %v616, %v615
      %v622 = vpack.c.b16 %v618, %v617
      %627 = vmatprep.subr.bf16.mxu0 0
      %628 = vmatpush1.bf16.msra.mxu0 %v619
      %629 = vmatprep.subr.bf16.mxu0 0
      %630 = vmatpush1.bf16.msra.mxu0 %v620
      %631 = vmatprep.subr.bf16.mxu0 0
      %632 = vmatpush1.bf16.msra.mxu0 %v621
      %633 = vmatprep.subr.bf16.mxu0 0
      %634 = vmatpush1.bf16.msra.mxu0 %v622
      %635 = vmatprep.subr.bf16.mxu0 0
      %636 = vmatpush1.bf16.msra.mxu0 0
      %637 = vmatprep.subr.bf16.mxu0 0
      %638 = vmatpush1.bf16.msra.mxu0 0
      %639 = vmatprep.subr.bf16.mxu0 0
      %640 = vmatpush1.bf16.msra.mxu0 0
      %641 = vmatprep.subr.bf16.mxu0 0
      %642 = vmatpush1.bf16.msra.mxu0 0
      %643 = vmatprep.subr.bf16.mxu0 0
      %644 = vmatpush1.bf16.msra.mxu0 0
      %645 = vmatprep.subr.bf16.mxu0 0
      %646 = vmatpush1.bf16.msra.mxu0 0
      %647 = vmatprep.subr.bf16.mxu0 0
      %648 = vmatpush1.bf16.msra.mxu0 0
      %649 = vmatprep.subr.bf16.mxu0 0
      %650 = vmatpush1.bf16.msra.mxu0 0
      %651 = vmatprep.subr.bf16.mxu0 0
      %652 = vmatpush1.bf16.msra.mxu0 0
      %653 = vmatprep.subr.bf16.mxu0 0
      %654 = vmatpush1.bf16.msra.mxu0 0
      %655 = vmatprep.subr.bf16.mxu0 0
      %656 = vmatpush1.bf16.msra.mxu0 0
      %657 = vmatprep.subr.bf16.mxu0 0
      %658 = vmatpush1.bf16.msra.mxu0 0
      %659 = vmatprep.mubr.bf16.mxu0 0
      %660 = vmatmul.mubr.bf16.gmra.mrb[0].mxu0 %v465
      %v661 = vpop.f32.mrb[0].mxu0
      %v662 = vadd.f32 %v601, %v661
      %v663 = vpop.f32.mrb[0].mxu0
      %v664 = vpop.f32.mrb[0].mxu0
      %v665 = vadd.f32 %v601, %v664
      %v666 = vpop.f32.mrb[0].mxu0
      %667 = vdwg.mxu0
      %v668 = vpack.c.bf16 %v505, %v502
      %v669 = vpack.c.bf16 %v585, %v582
      %vm670 = vcmask 130048
      %v672 = vsel %vm670, %v668, 0
      %v675 = vsel %vm670, %v669, 0
      %677 = vmatprep.subr.bf16.mxu0 0
      %678 = vmatpush1.bf16.xpose.msra.mxu0 %v675
      %679 = vmatprep.subr.bf16.mxu0 0
      %680 = vmatpush1.bf16.xpose.msra.mxu0 0
      %681 = vmatprep.subr.bf16.mxu0 0
      %682 = vmatpush1.bf16.xpose.msra.mxu0 0
      %683 = vmatprep.subr.bf16.mxu0 0
      %684 = vmatpush1.bf16.xpose.msra.mxu0 0
      %685 = vmatprep.subr.bf16.mxu0 0
      %686 = vmatpush1.bf16.xpose.msra.mxu0 0
      %687 = vmatprep.subr.bf16.mxu0 0
      %688 = vmatpush1.bf16.xpose.msra.mxu0 0
      %689 = vmatprep.subr.bf16.mxu0 0
      %690 = vmatpush1.bf16.xpose.msra.mxu0 0
      %691 = vmatprep.subr.bf16.mxu0 0
      %692 = vmatpush1.bf16.xpose.msra.mxu0 0
      %693 = vmatprep.subr.bf16.mxu0 0
      %694 = vmatpush1.bf16.xpose.msra.mxu0 0
      %695 = vmatprep.subr.bf16.mxu0 0
      %696 = vmatpush1.bf16.xpose.msra.mxu0 0
      %697 = vmatprep.subr.bf16.mxu0 0
      %698 = vmatpush1.bf16.xpose.msra.mxu0 0
      %699 = vmatprep.subr.bf16.mxu0 0
      %700 = vmatpush1.bf16.xpose.msra.mxu0 0
      %701 = vmatprep.subr.bf16.mxu0 0
      %702 = vmatpush1.bf16.xpose.msra.mxu0 0
      %703 = vmatprep.subr.bf16.mxu0 0
      %704 = vmatpush1.bf16.xpose.msra.mxu0 0
      %705 = vmatprep.subr.bf16.mxu0 0
      %706 = vmatpush1.bf16.xpose.msra.mxu0 0
      %707 = vmatprep.subr.bf16.mxu0 0
      %708 = vmatpush1.bf16.xpose.msra.mxu0 0
      %709 = vmatprep.mubr.bf16.mxu0 0
      %710 = vmatmul.mubr.bf16.gmra.mrb[0].mxu0 %v672
      %v711 = vpop.f32.mrb[0].mxu0
      %v712 = vadd.f32 0.0, %v711
      %v713 = vpop.f32.mrb[0].mxu0
      %v714 = vpop.f32.mrb[0].mxu0
      %v715 = vadd.f32 0.0, %v714
      %v716 = vpop.f32.mrb[0].mxu0
      %717 = vdwg.mxu0
      %v718 = vmul.f32 %v712, 0.25
      %v719 = vmul.f32 %v715, 0.25
      %v720 = vadd.f32 %v718, %v417
      %v721 = vadd.f32 %v719, %v418
      %v722 = vsel %vm670, %v720, -inf
      %723 = vmax.xlane.f32.xlu0 %v722
      %v724 = vpop.xlane.xlu0 %723
      %v725 = vsel %vm670, %v721, -inf
      %726 = vmax.xlane.f32.xlu0 %v725
      %v727 = vpop.xlane.xlu0 %726
      %v728 = vsub.f32 %v720, %v724
      %v729 = vsub.f32 %v721, %v727
      %v730 = vmul.f32 %v728, 1.442695
      %v731 = vpow.pop %v730
      %v732 = vmul.f32 %v729, 1.442695
      %v733 = vpow.pop %v732
      %v734 = vsel %vm670, %v731, 0.0
      %735 = vadd.xlane.f32.xlu0 %v734
      %v736 = vpop.xlane.xlu0 %735
      %v737 = vsel %vm670, %v733, 0.0
      %738 = vadd.xlane.f32.xlu0 %v737
      %v739 = vpop.xlane.xlu0 %738
      %v740 = vrcp.pop %v736
      %v741 = vmul.f32 %v731, %v740
      %v742 = vrcp.pop %v739
      %v743 = vmul.f32 %v733, %v742
      %v744 = vpack.c.bf16 %v743, %v741
      %v745 = vpack.c.bf16 %v665, %v662
      %v747 = vsel %vm670, %v744, 0
      %749 = vmatprep.subr.bf16.mxu0 0
      %750 = vmatpush1.bf16.msra.mxu0 %v745
      %751 = vmatprep.subr.bf16.mxu0 0
      %752 = vmatpush1.bf16.msra.mxu0 0
      %753 = vmatprep.subr.bf16.mxu0 0
      %754 = vmatpush1.bf16.msra.mxu0 0
      %755 = vmatprep.subr.bf16.mxu0 0
      %756 = vmatpush1.bf16.msra.mxu0 0
      %757 = vmatprep.subr.bf16.mxu0 0
      %758 = vmatpush1.bf16.msra.mxu0 0
      %759 = vmatprep.subr.bf16.mxu0 0
      %760 = vmatpush1.bf16.msra.mxu0 0
      %761 = vmatprep.subr.bf16.mxu0 0
      %762 = vmatpush1.bf16.msra.mxu0 0
      %763 = vmatprep.subr.bf16.mxu0 0
      %764 = vmatpush1.bf16.msra.mxu0 0
      %765 = vmatprep.subr.bf16.mxu0 0
      %766 = vmatpush1.bf16.msra.mxu0 0
      %767 = vmatprep.subr.bf16.mxu0 0
      %768 = vmatpush1.bf16.msra.mxu0 0
      %769 = vmatprep.subr.bf16.mxu0 0
      %770 = vmatpush1.bf16.msra.mxu0 0
      %771 = vmatprep.subr.bf16.mxu0 0
      %772 = vmatpush1.bf16.msra.mxu0 0
      %773 = vmatprep.subr.bf16.mxu0 0
      %774 = vmatpush1.bf16.msra.mxu0 0
      %775 = vmatprep.subr.bf16.mxu0 0
      %776 = vmatpush1.bf16.msra.mxu0 0
      %777 = vmatprep.subr.bf16.mxu0 0
      %778 = vmatpush1.bf16.msra.mxu0 0
      %779 = vmatprep.subr.bf16.mxu0 0
      %780 = vmatpush1.bf16.msra.mxu0 0
      %781 = vmatprep.mubr.bf16.mxu0 0
      %782 = vmatmul.mubr.bf16.gmra.mrb[0].mxu0 %v747
      %v783 = vpop.f32.mrb[0].mxu0
      %v784 = vadd.f32 0.0, %v783
      %v785 = vpop.f32.mrb[0].mxu0
      %v786 = vpop.f32.mrb[0].mxu0
      %v787 = vadd.f32 0.0, %v786
      %v788 = vpop.f32.mrb[0].mxu0
      %789 = vdwg.mxu0
      %v790 = vpack.c.bf16 %v787, %v784
      %v791 = vld [vmem:[%s8] sm:$0xf]
      %v792 = vld [vmem:[%s8 + $0x4] sm:$0xf]
      %s793 = scalar_lea.vmem %s2, 32
      %v794 = vld [vmem:[%s793] sm:$0xf]
      %v795 = vld [vmem:[%s793 + $0x4] sm:$0xf]
      %v796 = vld [vmem:[%s793 + $0x8] sm:$0xf]
      %v797 = vld [vmem:[%s793 + $0xc] sm:$0xf]
      %v798 = vld [vmem:[%s793 + $0x10] sm:$0xf]
      %v799 = vld [vmem:[%s793 + $0x14] sm:$0xf]
      %v800 = vld [vmem:[%s793 + $0x18] sm:$0xf]
      %v801 = vld [vmem:[%s793 + $0x1c] sm:$0xf]
      %s802 = scalar_lea.vmem %s3, 1
      %v803 = vld [vmem:[%s802] sm:$0x1]
      %v805 = vlaneseq
      %v806 = vshrl.u32 %v805, 7
      %v807 = vsub.s32 0, %v806
      %v808 = vrot.slane %v803, %v807
      %v818 = vunpack.c.l.b16 %v794
      %v819 = vunpack.c.l.b16 %v795
      %v820 = vunpack.c.l.b16 %v796
      %v821 = vunpack.c.l.b16 %v797
      %v822 = vunpack.c.l.b16 %v798
      %v823 = vunpack.c.l.b16 %v799
      %v824 = vunpack.c.l.b16 %v800
      %v825 = vunpack.c.l.b16 %v801
      %v826 = vpack.c.b16 %v819, %v818
      %v827 = vpack.c.b16 %v821, %v820
      %v828 = vpack.c.b16 %v823, %v822
      %v829 = vpack.c.b16 %v825, %v824
      %834 = vmatprep.subr.bf16.mxu0 0
      %835 = vmatpush1.bf16.msra.mxu0 %v826
      %836 = vmatprep.subr.bf16.mxu0 0
      %837 = vmatpush1.bf16.msra.mxu0 %v827
      %838 = vmatprep.subr.bf16.mxu0 0
      %839 = vmatpush1.bf16.msra.mxu0 %v828
      %840 = vmatprep.subr.bf16.mxu0 0
      %841 = vmatpush1.bf16.msra.mxu0 %v829
      %842 = vmatprep.subr.bf16.mxu0 0
      %843 = vmatpush1.bf16.msra.mxu0 0
      %844 = vmatprep.subr.bf16.mxu0 0
      %845 = vmatpush1.bf16.msra.mxu0 0
      %846 = vmatprep.subr.bf16.mxu0 0
      %847 = vmatpush1.bf16.msra.mxu0 0
      %848 = vmatprep.subr.bf16.mxu0 0
      %849 = vmatpush1.bf16.msra.mxu0 0
      %850 = vmatprep.subr.bf16.mxu0 0
      %851 = vmatpush1.bf16.msra.mxu0 0
      %852 = vmatprep.subr.bf16.mxu0 0
      %853 = vmatpush1.bf16.msra.mxu0 0
      %854 = vmatprep.subr.bf16.mxu0 0
      %855 = vmatpush1.bf16.msra.mxu0 0
      %856 = vmatprep.subr.bf16.mxu0 0
      %857 = vmatpush1.bf16.msra.mxu0 0
      %858 = vmatprep.subr.bf16.mxu0 0
      %859 = vmatpush1.bf16.msra.mxu0 0
      %860 = vmatprep.subr.bf16.mxu0 0
      %861 = vmatpush1.bf16.msra.mxu0 0
      %862 = vmatprep.subr.bf16.mxu0 0
      %863 = vmatpush1.bf16.msra.mxu0 0
      %864 = vmatprep.subr.bf16.mxu0 0
      %865 = vmatpush1.bf16.msra.mxu0 0
      %866 = vmatprep.mubr.bf16.mxu0 0
      %867 = vmatmul.mubr.bf16.gmra.mrb[0].mxu0 %v465
      %v868 = vpop.f32.mrb[0].mxu0
      %v869 = vadd.f32 %v808, %v868
      %v870 = vpop.f32.mrb[0].mxu0
      %v871 = vpop.f32.mrb[0].mxu0
      %v872 = vadd.f32 %v808, %v871
      %v873 = vpop.f32.mrb[0].mxu0
      %874 = vdwg.mxu0
      %s875 = scalar_lea.vmem %s4, 32
      %v876 = vld [vmem:[%s875] sm:$0xf]
      %v877 = vld [vmem:[%s875 + $0x4] sm:$0xf]
      %v878 = vld [vmem:[%s875 + $0x8] sm:$0xf]
      %v879 = vld [vmem:[%s875 + $0xc] sm:$0xf]
      %v880 = vld [vmem:[%s875 + $0x10] sm:$0xf]
      %v881 = vld [vmem:[%s875 + $0x14] sm:$0xf]
      %v882 = vld [vmem:[%s875 + $0x18] sm:$0xf]
      %v883 = vld [vmem:[%s875 + $0x1c] sm:$0xf]
      %s884 = scalar_lea.vmem %s5, 1
      %v885 = vld [vmem:[%s884] sm:$0x1]
      %v887 = vlaneseq
      %v888 = vshrl.u32 %v887, 7
      %v889 = vsub.s32 0, %v888
      %v890 = vrot.slane %v885, %v889
      %v900 = vunpack.c.l.b16 %v876
      %v901 = vunpack.c.l.b16 %v877
      %v902 = vunpack.c.l.b16 %v878
      %v903 = vunpack.c.l.b16 %v879
      %v904 = vunpack.c.l.b16 %v880
      %v905 = vunpack.c.l.b16 %v881
      %v906 = vunpack.c.l.b16 %v882
      %v907 = vunpack.c.l.b16 %v883
      %v908 = vpack.c.b16 %v901, %v900
      %v909 = vpack.c.b16 %v903, %v902
      %v910 = vpack.c.b16 %v905, %v904
      %v911 = vpack.c.b16 %v907, %v906
      %916 = vmatprep.subr.bf16.mxu0 0
      %917 = vmatpush1.bf16.msra.mxu0 %v908
      %918 = vmatprep.subr.bf16.mxu0 0
      %919 = vmatpush1.bf16.msra.mxu0 %v909
      %920 = vmatprep.subr.bf16.mxu0 0
      %921 = vmatpush1.bf16.msra.mxu0 %v910
      %922 = vmatprep.subr.bf16.mxu0 0
      %923 = vmatpush1.bf16.msra.mxu0 %v911
      %924 = vmatprep.subr.bf16.mxu0 0
      %925 = vmatpush1.bf16.msra.mxu0 0
      %926 = vmatprep.subr.bf16.mxu0 0
      %927 = vmatpush1.bf16.msra.mxu0 0
      %928 = vmatprep.subr.bf16.mxu0 0
      %929 = vmatpush1.bf16.msra.mxu0 0
      %930 = vmatprep.subr.bf16.mxu0 0
      %931 = vmatpush1.bf16.msra.mxu0 0
      %932 = vmatprep.subr.bf16.mxu0 0
      %933 = vmatpush1.bf16.msra.mxu0 0
      %934 = vmatprep.subr.bf16.mxu0 0
      %935 = vmatpush1.bf16.msra.mxu0 0
      %936 = vmatprep.subr.bf16.mxu0 0
      %937 = vmatpush1.bf16.msra.mxu0 0
      %938 = vmatprep.subr.bf16.mxu0 0
      %939 = vmatpush1.bf16.msra.mxu0 0
      %940 = vmatprep.subr.bf16.mxu0 0
      %941 = vmatpush1.bf16.msra.mxu0 0
      %942 = vmatprep.subr.bf16.mxu0 0
      %943 = vmatpush1.bf16.msra.mxu0 0
      %944 = vmatprep.subr.bf16.mxu0 0
      %945 = vmatpush1.bf16.msra.mxu0 0
      %946 = vmatprep.subr.bf16.mxu0 0
      %947 = vmatpush1.bf16.msra.mxu0 0
      %948 = vmatprep.mubr.bf16.mxu0 0
      %949 = vmatmul.mubr.bf16.gmra.mrb[0].mxu0 %v465
      %v950 = vpop.f32.mrb[0].mxu0
      %v951 = vadd.f32 %v890, %v950
      %v952 = vpop.f32.mrb[0].mxu0
      %v953 = vpop.f32.mrb[0].mxu0
      %v954 = vadd.f32 %v890, %v953
      %v955 = vpop.f32.mrb[0].mxu0
      %956 = vdwg.mxu0
      %s957 = scalar_lea.vmem %s6, 32
      %v958 = vld [vmem:[%s957] sm:$0xf]
      %v959 = vld [vmem:[%s957 + $0x4] sm:$0xf]
      %v960 = vld [vmem:[%s957 + $0x8] sm:$0xf]
      %v961 = vld [vmem:[%s957 + $0xc] sm:$0xf]
      %v962 = vld [vmem:[%s957 + $0x10] sm:$0xf]
      %v963 = vld [vmem:[%s957 + $0x14] sm:$0xf]
      %v964 = vld [vmem:[%s957 + $0x18] sm:$0xf]
      %v965 = vld [vmem:[%s957 + $0x1c] sm:$0xf]
      %s966 = scalar_lea.vmem %s7, 1
      %v967 = vld [vmem:[%s966] sm:$0x1]
      %v969 = vlaneseq
      %v970 = vshrl.u32 %v969, 7
      %v971 = vsub.s32 0, %v970
      %v972 = vrot.slane %v967, %v971
      %v982 = vunpack.c.l.b16 %v958
      %v983 = vunpack.c.l.b16 %v959
      %v984 = vunpack.c.l.b16 %v960
      %v985 = vunpack.c.l.b16 %v961
      %v986 = vunpack.c.l.b16 %v962
      %v987 = vunpack.c.l.b16 %v963
      %v988 = vunpack.c.l.b16 %v964
      %v989 = vunpack.c.l.b16 %v965
      %v990 = vpack.c.b16 %v983, %v982
      %v991 = vpack.c.b16 %v985, %v984
      %v992 = vpack.c.b16 %v987, %v986
      %v993 = vpack.c.b16 %v989, %v988
      %998 = vmatprep.subr.bf16.mxu0 0
      %999 = vmatpush1.bf16.msra.mxu0 %v990
      %1000 = vmatprep.subr.bf16.mxu0 0
      %1001 = vmatpush1.bf16.msra.mxu0 %v991
      %1002 = vmatprep.subr.bf16.mxu0 0
      %1003 = vmatpush1.bf16.msra.mxu0 %v992
      %1004 = vmatprep.subr.bf16.mxu0 0
      %1005 = vmatpush1.bf16.msra.mxu0 %v993
      %1006 = vmatprep.subr.bf16.mxu0 0
      %1007 = vmatpush1.bf16.msra.mxu0 0
      %1008 = vmatprep.subr.bf16.mxu0 0
      %1009 = vmatpush1.bf16.msra.mxu0 0
      %1010 = vmatprep.subr.bf16.mxu0 0
      %1011 = vmatpush1.bf16.msra.mxu0 0
      %1012 = vmatprep.subr.bf16.mxu0 0
      %1013 = vmatpush1.bf16.msra.mxu0 0
      %1014 = vmatprep.subr.bf16.mxu0 0
      %1015 = vmatpush1.bf16.msra.mxu0 0
      %1016 = vmatprep.subr.bf16.mxu0 0
      %1017 = vmatpush1.bf16.msra.mxu0 0
      %1018 = vmatprep.subr.bf16.mxu0 0
      %1019 = vmatpush1.bf16.msra.mxu0 0
      %1020 = vmatprep.subr.bf16.mxu0 0
      %1021 = vmatpush1.bf16.msra.mxu0 0
      %1022 = vmatprep.subr.bf16.mxu0 0
      %1023 = vmatpush1.bf16.msra.mxu0 0
      %1024 = vmatprep.subr.bf16.mxu0 0
      %1025 = vmatpush1.bf16.msra.mxu0 0
      %1026 = vmatprep.subr.bf16.mxu0 0
      %1027 = vmatpush1.bf16.msra.mxu0 0
      %1028 = vmatprep.subr.bf16.mxu0 0
      %1029 = vmatpush1.bf16.msra.mxu0 0
      %1030 = vmatprep.mubr.bf16.mxu0 0
      %1031 = vmatmul.mubr.bf16.gmra.mrb[0].mxu0 %v465
      %v1032 = vpop.f32.mrb[0].mxu0
      %v1033 = vadd.f32 %v972, %v1032
      %v1034 = vpop.f32.mrb[0].mxu0
      %v1035 = vpop.f32.mrb[0].mxu0
      %v1036 = vadd.f32 %v972, %v1035
      %v1037 = vpop.f32.mrb[0].mxu0
      %1038 = vdwg.mxu0
      %v1039 = vpack.c.bf16 %v872, %v869
      %v1040 = vpack.c.bf16 %v954, %v951
      %v1042 = vsel %vm670, %v1039, 0
      %v1045 = vsel %vm670, %v1040, 0
      %1047 = vmatprep.subr.bf16.mxu0 0
      %1048 = vmatpush1.bf16.xpose.msra.mxu0 %v1045
      %1049 = vmatprep.subr.bf16.mxu0 0
      %1050 = vmatpush1.bf16.xpose.msra.mxu0 0
      %1051 = vmatprep.subr.bf16.mxu0 0
      %1052 = vmatpush1.bf16.xpose.msra.mxu0 0
      %1053 = vmatprep.subr.bf16.mxu0 0
      %1054 = vmatpush1.bf16.xpose.msra.mxu0 0
      %1055 = vmatprep.subr.bf16.mxu0 0
      %1056 = vmatpush1.bf16.xpose.msra.mxu0 0
      %1057 = vmatprep.subr.bf16.mxu0 0
      %1058 = vmatpush1.bf16.xpose.msra.mxu0 0
      %1059 = vmatprep.subr.bf16.mxu0 0
      %1060 = vmatpush1.bf16.xpose.msra.mxu0 0
      %1061 = vmatprep.subr.bf16.mxu0 0
      %1062 = vmatpush1.bf16.xpose.msra.mxu0 0
      %1063 = vmatprep.subr.bf16.mxu0 0
      %1064 = vmatpush1.bf16.xpose.msra.mxu0 0
      %1065 = vmatprep.subr.bf16.mxu0 0
      %1066 = vmatpush1.bf16.xpose.msra.mxu0 0
      %1067 = vmatprep.subr.bf16.mxu0 0
      %1068 = vmatpush1.bf16.xpose.msra.mxu0 0
      %1069 = vmatprep.subr.bf16.mxu0 0
      %1070 = vmatpush1.bf16.xpose.msra.mxu0 0
      %1071 = vmatprep.subr.bf16.mxu0 0
      %1072 = vmatpush1.bf16.xpose.msra.mxu0 0
      %1073 = vmatprep.subr.bf16.mxu0 0
      %1074 = vmatpush1.bf16.xpose.msra.mxu0 0
      %1075 = vmatprep.subr.bf16.mxu0 0
      %1076 = vmatpush1.bf16.xpose.msra.mxu0 0
      %1077 = vmatprep.subr.bf16.mxu0 0
      %1078 = vmatpush1.bf16.xpose.msra.mxu0 0
      %1079 = vmatprep.mubr.bf16.mxu0 0
      %1080 = vmatmul.mubr.bf16.gmra.mrb[0].mxu0 %v1042
      %v1081 = vpop.f32.mrb[0].mxu0
      %v1082 = vadd.f32 0.0, %v1081
      %v1083 = vpop.f32.mrb[0].mxu0
      %v1084 = vpop.f32.mrb[0].mxu0
      %v1085 = vadd.f32 0.0, %v1084
      %v1086 = vpop.f32.mrb[0].mxu0
      %1087 = vdwg.mxu0
      %v1088 = vmul.f32 %v1082, 0.25
      %v1089 = vmul.f32 %v1085, 0.25
      %v1090 = vadd.f32 %v1088, %v417
      %v1091 = vadd.f32 %v1089, %v418
      %v1092 = vsel %vm670, %v1090, -inf
      %1093 = vmax.xlane.f32.xlu0 %v1092
      %v1094 = vpop.xlane.xlu0 %1093
      %v1095 = vsel %vm670, %v1091, -inf
      %1096 = vmax.xlane.f32.xlu0 %v1095
      %v1097 = vpop.xlane.xlu0 %1096
      %v1098 = vsub.f32 %v1090, %v1094
      %v1099 = vsub.f32 %v1091, %v1097
      %v1100 = vmul.f32 %v1098, 1.442695
      %v1101 = vpow.pop %v1100
      %v1102 = vmul.f32 %v1099, 1.442695
      %v1103 = vpow.pop %v1102
      %v1104 = vsel %vm670, %v1101, 0.0
      %1105 = vadd.xlane.f32.xlu0 %v1104
      %v1106 = vpop.xlane.xlu0 %1105
      %v1107 = vsel %vm670, %v1103, 0.0
      %1108 = vadd.xlane.f32.xlu0 %v1107
      %v1109 = vpop.xlane.xlu0 %1108
      %v1110 = vrcp.pop %v1106
      %v1111 = vmul.f32 %v1101, %v1110
      %v1112 = vrcp.pop %v1109
      %v1113 = vmul.f32 %v1103, %v1112
      %v1114 = vpack.c.bf16 %v1113, %v1111
      %v1115 = vpack.c.bf16 %v1036, %v1033
      %v1117 = vsel %vm670, %v1114, 0
      %1119 = vmatprep.subr.bf16.mxu0 0
      %1120 = vmatpush1.bf16.msra.mxu0 %v1115
      %1121 = vmatprep.subr.bf16.mxu0 0
      %1122 = vmatpush1.bf16.msra.mxu0 0
      %1123 = vmatprep.subr.bf16.mxu0 0
      %1124 = vmatpush1.bf16.msra.mxu0 0
      %1125 = vmatprep.subr.bf16.mxu0 0
      %1126 = vmatpush1.bf16.msra.mxu0 0
      %1127 = vmatprep.subr.bf16.mxu0 0
      %1128 = vmatpush1.bf16.msra.mxu0 0
      %1129 = vmatprep.subr.bf16.mxu0 0
      %1130 = vmatpush1.bf16.msra.mxu0 0
      %1131 = vmatprep.subr.bf16.mxu0 0
      %1132 = vmatpush1.bf16.msra.mxu0 0
      %1133 = vmatprep.subr.bf16.mxu0 0
      %1134 = vmatpush1.bf16.msra.mxu0 0
      %1135 = vmatprep.subr.bf16.mxu0 0
      %1136 = vmatpush1.bf16.msra.mxu0 0
      %1137 = vmatprep.subr.bf16.mxu0 0
      %1138 = vmatpush1.bf16.msra.mxu0 0
      %1139 = vmatprep.subr.bf16.mxu0 0
      %1140 = vmatpush1.bf16.msra.mxu0 0
      %1141 = vmatprep.subr.bf16.mxu0 0
      %1142 = vmatpush1.bf16.msra.mxu0 0
      %1143 = vmatprep.subr.bf16.mxu0 0
      %1144 = vmatpush1.bf16.msra.mxu0 0
      %1145 = vmatprep.subr.bf16.mxu0 0
      %1146 = vmatpush1.bf16.msra.mxu0 0
      %1147 = vmatprep.subr.bf16.mxu0 0
      %1148 = vmatpush1.bf16.msra.mxu0 0
      %1149 = vmatprep.subr.bf16.mxu0 0
      %1150 = vmatpush1.bf16.msra.mxu0 0
      %1151 = vmatprep.mubr.bf16.mxu0 0
      %1152 = vmatmul.mubr.bf16.gmra.mrb[0].mxu0 %v1117
      %v1153 = vpop.f32.mrb[0].mxu0
      %v1154 = vadd.f32 0.0, %v1153
      %v1155 = vpop.f32.mrb[0].mxu0
      %v1156 = vpop.f32.mrb[0].mxu0
      %v1157 = vadd.f32 0.0, %v1156
      %v1158 = vpop.f32.mrb[0].mxu0
      %1159 = vdwg.mxu0
      %v1160 = vpack.c.bf16 %v1157, %v1154
      %s1161 = scalar_lea.vmem %s8, 8
      %v1162 = vld [vmem:[%s1161] sm:$0xf]
      %v1163 = vld [vmem:[%s1161 + $0x4] sm:$0xf]
      %v1166 = vunpack.c.l.b16 %v1162
      %v1167 = vunpack.c.l.b16 %v1163
      %v1168 = vpack.c.b16 %v1167, %v1166
      %v1171 = vsel %vm670, %v1160, 0
      %1173 = vmatprep.subr.bf16.mxu0 0
      %1174 = vmatpush1.bf16.msra.mxu0 %v1168
      %1175 = vmatprep.subr.bf16.mxu0 0
      %1176 = vmatpush1.bf16.msra.mxu0 0
      %1177 = vmatprep.subr.bf16.mxu0 0
      %1178 = vmatpush1.bf16.msra.mxu0 0
      %1179 = vmatprep.subr.bf16.mxu0 0
      %1180 = vmatpush1.bf16.msra.mxu0 0
      %1181 = vmatprep.subr.bf16.mxu0 0
      %1182 = vmatpush1.bf16.msra.mxu0 0
      %1183 = vmatprep.subr.bf16.mxu0 0
      %1184 = vmatpush1.bf16.msra.mxu0 0
      %1185 = vmatprep.subr.bf16.mxu0 0
      %1186 = vmatpush1.bf16.msra.mxu0 0
      %1187 = vmatprep.subr.bf16.mxu0 0
      %1188 = vmatpush1.bf16.msra.mxu0 0
      %1189 = vmatprep.subr.bf16.mxu0 0
      %1190 = vmatpush1.bf16.msra.mxu0 0
      %1191 = vmatprep.subr.bf16.mxu0 0
      %1192 = vmatpush1.bf16.msra.mxu0 0
      %1193 = vmatprep.subr.bf16.mxu0 0
      %1194 = vmatpush1.bf16.msra.mxu0 0
      %1195 = vmatprep.subr.bf16.mxu0 0
      %1196 = vmatpush1.bf16.msra.mxu0 0
      %1197 = vmatprep.subr.bf16.mxu0 0
      %1198 = vmatpush1.bf16.msra.mxu0 0
      %1199 = vmatprep.subr.bf16.mxu0 0
      %1200 = vmatpush1.bf16.msra.mxu0 0
      %1201 = vmatprep.subr.bf16.mxu0 0
      %1202 = vmatpush1.bf16.msra.mxu0 0
      %1203 = vmatprep.subr.bf16.mxu0 0
      %1204 = vmatpush1.bf16.msra.mxu0 0
      %1205 = vmatprep.mubr.bf16.mxu0 0
      %1206 = vmatmul.mubr.bf16.gmra.mrb[0].mxu0 %v1171
      %v1207 = vpop.f32.mrb[0].mxu0
      %v1208 = vadd.f32 0.0, %v1207
      %v1209 = vpop.f32.mrb[0].mxu0
      %v1210 = vpop.f32.mrb[0].mxu0
      %v1211 = vadd.f32 0.0, %v1210
      %v1212 = vpop.f32.mrb[0].mxu0
      %1213 = vdwg.mxu0
      %v1216 = vunpack.c.l.b16 %v791
      %v1217 = vunpack.c.l.b16 %v792
      %v1218 = vpack.c.b16 %v1217, %v1216
      %v1221 = vsel %vm670, %v790, 0
      %1223 = vmatprep.subr.bf16.mxu0 0
      %1224 = vmatpush1.bf16.msra.mxu0 %v1218
      %1225 = vmatprep.subr.bf16.mxu0 0
      %1226 = vmatpush1.bf16.msra.mxu0 0
      %1227 = vmatprep.subr.bf16.mxu0 0
      %1228 = vmatpush1.bf16.msra.mxu0 0
      %1229 = vmatprep.subr.bf16.mxu0 0
      %1230 = vmatpush1.bf16.msra.mxu0 0
      %1231 = vmatprep.subr.bf16.mxu0 0
      %1232 = vmatpush1.bf16.msra.mxu0 0
      %1233 = vmatprep.subr.bf16.mxu0 0
      %1234 = vmatpush1.bf16.msra.mxu0 0
      %1235 = vmatprep.subr.bf16.mxu0 0
      %1236 = vmatpush1.bf16.msra.mxu0 0
      %1237 = vmatprep.subr.bf16.mxu0 0
      %1238 = vmatpush1.bf16.msra.mxu0 0
      %1239 = vmatprep.subr.bf16.mxu0 0
      %1240 = vmatpush1.bf16.msra.mxu0 0
      %1241 = vmatprep.subr.bf16.mxu0 0
      %1242 = vmatpush1.bf16.msra.mxu0 0
      %1243 = vmatprep.subr.bf16.mxu0 0
      %1244 = vmatpush1.bf16.msra.mxu0 0
      %1245 = vmatprep.subr.bf16.mxu0 0
      %1246 = vmatpush1.bf16.msra.mxu0 0
      %1247 = vmatprep.subr.bf16.mxu0 0
      %1248 = vmatpush1.bf16.msra.mxu0 0
      %1249 = vmatprep.subr.bf16.mxu0 0
      %1250 = vmatpush1.bf16.msra.mxu0 0
      %1251 = vmatprep.subr.bf16.mxu0 0
      %1252 = vmatpush1.bf16.msra.mxu0 0
      %1253 = vmatprep.subr.bf16.mxu0 0
      %1254 = vmatpush1.bf16.msra.mxu0 0
      %1255 = vmatprep.mubr.bf16.mxu0 0
      %1256 = vmatmul.mubr.bf16.gmra.mrb[0].mxu0 %v1221
      %v1257 = vpop.f32.mrb[0].mxu0
      %v1258 = vadd.f32 %v1208, %v1257
      %v1259 = vpop.f32.mrb[0].mxu0
      %v1260 = vpop.f32.mrb[0].mxu0
      %v1261 = vadd.f32 %v1211, %v1260
      %v1262 = vpop.f32.mrb[0].mxu0
      %1263 = vdwg.mxu0
      %s1264 = scalar_lea.vmem %s2, 64
      %v1265 = vld [vmem:[%s1264] sm:$0xf]
      %v1266 = vld [vmem:[%s1264 + $0x4] sm:$0xf]
      %v1267 = vld [vmem:[%s1264 + $0x8] sm:$0xf]
      %v1268 = vld [vmem:[%s1264 + $0xc] sm:$0xf]
      %v1269 = vld [vmem:[%s1264 + $0x10] sm:$0xf]
      %v1270 = vld [vmem:[%s1264 + $0x14] sm:$0xf]
      %v1271 = vld [vmem:[%s1264 + $0x18] sm:$0xf]
      %v1272 = vld [vmem:[%s1264 + $0x1c] sm:$0xf]
      %s1273 = scalar_lea.vmem %s3, 2
      %v1274 = vld [vmem:[%s1273] sm:$0x1]
      %v1276 = vlaneseq
      %v1277 = vshrl.u32 %v1276, 7
      %v1278 = vsub.s32 0, %v1277
      %v1279 = vrot.slane %v1274, %v1278
      %v1289 = vunpack.c.l.b16 %v1265
      %v1290 = vunpack.c.l.b16 %v1266
      %v1291 = vunpack.c.l.b16 %v1267
      %v1292 = vunpack.c.l.b16 %v1268
      %v1293 = vunpack.c.l.b16 %v1269
      %v1294 = vunpack.c.l.b16 %v1270
      %v1295 = vunpack.c.l.b16 %v1271
      %v1296 = vunpack.c.l.b16 %v1272
      %v1297 = vpack.c.b16 %v1290, %v1289
      %v1298 = vpack.c.b16 %v1292, %v1291
      %v1299 = vpack.c.b16 %v1294, %v1293
      %v1300 = vpack.c.b16 %v1296, %v1295
      %1305 = vmatprep.subr.bf16.mxu0 0
      %1306 = vmatpush1.bf16.msra.mxu0 %v1297
      %1307 = vmatprep.subr.bf16.mxu0 0
      %1308 = vmatpush1.bf16.msra.mxu0 %v1298
      %1309 = vmatprep.subr.bf16.mxu0 0
      %1310 = vmatpush1.bf16.msra.mxu0 %v1299
      %1311 = vmatprep.subr.bf16.mxu0 0
      %1312 = vmatpush1.bf16.msra.mxu0 %v1300
      %1313 = vmatprep.subr.bf16.mxu0 0
      %1314 = vmatpush1.bf16.msra.mxu0 0
      %1315 = vmatprep.subr.bf16.mxu0 0
      %1316 = vmatpush1.bf16.msra.mxu0 0
      %1317 = vmatprep.subr.bf16.mxu0 0
      %1318 = vmatpush1.bf16.msra.mxu0 0
      %1319 = vmatprep.subr.bf16.mxu0 0
      %1320 = vmatpush1.bf16.msra.mxu0 0
      %1321 = vmatprep.subr.bf16.mxu0 0
      %1322 = vmatpush1.bf16.msra.mxu0 0
      %1323 = vmatprep.subr.bf16.mxu0 0
      %1324 = vmatpush1.bf16.msra.mxu0 0
      %1325 = vmatprep.subr.bf16.mxu0 0
      %1326 = vmatpush1.bf16.msra.mxu0 0
      %1327 = vmatprep.subr.bf16.mxu0 0
      %1328 = vmatpush1.bf16.msra.mxu0 0
      %1329 = vmatprep.subr.bf16.mxu0 0
      %1330 = vmatpush1.bf16.msra.mxu0 0
      %1331 = vmatprep.subr.bf16.mxu0 0
      %1332 = vmatpush1.bf16.msra.mxu0 0
      %1333 = vmatprep.subr.bf16.mxu0 0
      %1334 = vmatpush1.bf16.msra.mxu0 0
      %1335 = vmatprep.subr.bf16.mxu0 0
      %1336 = vmatpush1.bf16.msra.mxu0 0
      %1337 = vmatprep.mubr.bf16.mxu0 0
      %1338 = vmatmul.mubr.bf16.gmra.mrb[0].mxu0 %v465
      %v1339 = vpop.f32.mrb[0].mxu0
      %v1340 = vadd.f32 %v1279, %v1339
      %v1341 = vpop.f32.mrb[0].mxu0
      %v1342 = vpop.f32.mrb[0].mxu0
      %v1343 = vadd.f32 %v1279, %v1342
      %v1344 = vpop.f32.mrb[0].mxu0
      %1345 = vdwg.mxu0
      %s1346 = scalar_lea.vmem %s4, 64
      %v1347 = vld [vmem:[%s1346] sm:$0xf]
      %v1348 = vld [vmem:[%s1346 + $0x4] sm:$0xf]
      %v1349 = vld [vmem:[%s1346 + $0x8] sm:$0xf]
      %v1350 = vld [vmem:[%s1346 + $0xc] sm:$0xf]
      %v1351 = vld [vmem:[%s1346 + $0x10] sm:$0xf]
      %v1352 = vld [vmem:[%s1346 + $0x14] sm:$0xf]
      %v1353 = vld [vmem:[%s1346 + $0x18] sm:$0xf]
      %v1354 = vld [vmem:[%s1346 + $0x1c] sm:$0xf]
      %s1355 = scalar_lea.vmem %s5, 2
      %v1356 = vld [vmem:[%s1355] sm:$0x1]
      %v1358 = vlaneseq
      %v1359 = vshrl.u32 %v1358, 7
      %v1360 = vsub.s32 0, %v1359
      %v1361 = vrot.slane %v1356, %v1360
      %v1371 = vunpack.c.l.b16 %v1347
      %v1372 = vunpack.c.l.b16 %v1348
      %v1373 = vunpack.c.l.b16 %v1349
      %v1374 = vunpack.c.l.b16 %v1350
      %v1375 = vunpack.c.l.b16 %v1351
      %v1376 = vunpack.c.l.b16 %v1352
      %v1377 = vunpack.c.l.b16 %v1353
      %v1378 = vunpack.c.l.b16 %v1354
      %v1379 = vpack.c.b16 %v1372, %v1371
      %v1380 = vpack.c.b16 %v1374, %v1373
      %v1381 = vpack.c.b16 %v1376, %v1375
      %v1382 = vpack.c.b16 %v1378, %v1377
      %1387 = vmatprep.subr.bf16.mxu0 0
      %1388 = vmatpush1.bf16.msra.mxu0 %v1379
      %1389 = vmatprep.subr.bf16.mxu0 0
      %1390 = vmatpush1.bf16.msra.mxu0 %v1380
      %1391 = vmatprep.subr.bf16.mxu0 0
      %1392 = vmatpush1.bf16.msra.mxu0 %v1381
      %1393 = vmatprep.subr.bf16.mxu0 0
      %1394 = vmatpush1.bf16.msra.mxu0 %v1382
      %1395 = vmatprep.subr.bf16.mxu0 0
      %1396 = vmatpush1.bf16.msra.mxu0 0
      %1397 = vmatprep.subr.bf16.mxu0 0
      %1398 = vmatpush1.bf16.msra.mxu0 0
      %1399 = vmatprep.subr.bf16.mxu0 0
      %1400 = vmatpush1.bf16.msra.mxu0 0
      %1401 = vmatprep.subr.bf16.mxu0 0
      %1402 = vmatpush1.bf16.msra.mxu0 0
      %1403 = vmatprep.subr.bf16.mxu0 0
      %1404 = vmatpush1.bf16.msra.mxu0 0
      %1405 = vmatprep.subr.bf16.mxu0 0
      %1406 = vmatpush1.bf16.msra.mxu0 0
      %1407 = vmatprep.subr.bf16.mxu0 0
      %1408 = vmatpush1.bf16.msra.mxu0 0
      %1409 = vmatprep.subr.bf16.mxu0 0
      %1410 = vmatpush1.bf16.msra.mxu0 0
      %1411 = vmatprep.subr.bf16.mxu0 0
      %1412 = vmatpush1.bf16.msra.mxu0 0
      %1413 = vmatprep.subr.bf16.mxu0 0
      %1414 = vmatpush1.bf16.msra.mxu0 0
      %1415 = vmatprep.subr.bf16.mxu0 0
      %1416 = vmatpush1.bf16.msra.mxu0 0
      %1417 = vmatprep.subr.bf16.mxu0 0
      %1418 = vmatpush1.bf16.msra.mxu0 0
      %1419 = vmatprep.mubr.bf16.mxu0 0
      %1420 = vmatmul.mubr.bf16.gmra.mrb[0].mxu0 %v465
      %v1421 = vpop.f32.mrb[0].mxu0
      %v1422 = vadd.f32 %v1361, %v1421
      %v1423 = vpop.f32.mrb[0].mxu0
      %v1424 = vpop.f32.mrb[0].mxu0
      %v1425 = vadd.f32 %v1361, %v1424
      %v1426 = vpop.f32.mrb[0].mxu0
      %1427 = vdwg.mxu0
      %s1428 = scalar_lea.vmem %s6, 64
      %v1429 = vld [vmem:[%s1428] sm:$0xf]
      %v1430 = vld [vmem:[%s1428 + $0x4] sm:$0xf]
      %v1431 = vld [vmem:[%s1428 + $0x8] sm:$0xf]
      %v1432 = vld [vmem:[%s1428 + $0xc] sm:$0xf]
      %v1433 = vld [vmem:[%s1428 + $0x10] sm:$0xf]
      %v1434 = vld [vmem:[%s1428 + $0x14] sm:$0xf]
      %v1435 = vld [vmem:[%s1428 + $0x18] sm:$0xf]
      %v1436 = vld [vmem:[%s1428 + $0x1c] sm:$0xf]
      %s1437 = scalar_lea.vmem %s7, 2
      %v1438 = vld [vmem:[%s1437] sm:$0x1]
      %v1440 = vlaneseq
      %v1441 = vshrl.u32 %v1440, 7
      %v1442 = vsub.s32 0, %v1441
      %v1443 = vrot.slane %v1438, %v1442
      %v1453 = vunpack.c.l.b16 %v1429
      %v1454 = vunpack.c.l.b16 %v1430
      %v1455 = vunpack.c.l.b16 %v1431
      %v1456 = vunpack.c.l.b16 %v1432
      %v1457 = vunpack.c.l.b16 %v1433
      %v1458 = vunpack.c.l.b16 %v1434
      %v1459 = vunpack.c.l.b16 %v1435
      %v1460 = vunpack.c.l.b16 %v1436
      %v1461 = vpack.c.b16 %v1454, %v1453
      %v1462 = vpack.c.b16 %v1456, %v1455
      %v1463 = vpack.c.b16 %v1458, %v1457
      %v1464 = vpack.c.b16 %v1460, %v1459
      %1469 = vmatprep.subr.bf16.mxu0 0
      %1470 = vmatpush1.bf16.msra.mxu0 %v1461
      %1471 = vmatprep.subr.bf16.mxu0 0
      %1472 = vmatpush1.bf16.msra.mxu0 %v1462
      %1473 = vmatprep.subr.bf16.mxu0 0
      %1474 = vmatpush1.bf16.msra.mxu0 %v1463
      %1475 = vmatprep.subr.bf16.mxu0 0
      %1476 = vmatpush1.bf16.msra.mxu0 %v1464
      %1477 = vmatprep.subr.bf16.mxu0 0
      %1478 = vmatpush1.bf16.msra.mxu0 0
      %1479 = vmatprep.subr.bf16.mxu0 0
      %1480 = vmatpush1.bf16.msra.mxu0 0
      %1481 = vmatprep.subr.bf16.mxu0 0
      %1482 = vmatpush1.bf16.msra.mxu0 0
      %1483 = vmatprep.subr.bf16.mxu0 0
      %1484 = vmatpush1.bf16.msra.mxu0 0
      %1485 = vmatprep.subr.bf16.mxu0 0
      %1486 = vmatpush1.bf16.msra.mxu0 0
      %1487 = vmatprep.subr.bf16.mxu0 0
      %1488 = vmatpush1.bf16.msra.mxu0 0
      %1489 = vmatprep.subr.bf16.mxu0 0
      %1490 = vmatpush1.bf16.msra.mxu0 0
      %1491 = vmatprep.subr.bf16.mxu0 0
      %1492 = vmatpush1.bf16.msra.mxu0 0
      %1493 = vmatprep.subr.bf16.mxu0 0
      %1494 = vmatpush1.bf16.msra.mxu0 0
      %1495 = vmatprep.subr.bf16.mxu0 0
      %1496 = vmatpush1.bf16.msra.mxu0 0
      %1497 = vmatprep.subr.bf16.mxu0 0
      %1498 = vmatpush1.bf16.msra.mxu0 0
      %1499 = vmatprep.subr.bf16.mxu0 0
      %1500 = vmatpush1.bf16.msra.mxu0 0
      %1501 = vmatprep.mubr.bf16.mxu0 0
      %1502 = vmatmul.mubr.bf16.gmra.mrb[0].mxu0 %v465
      %v1503 = vpop.f32.mrb[0].mxu0
      %v1504 = vadd.f32 %v1443, %v1503
      %v1505 = vpop.f32.mrb[0].mxu0
      %v1506 = vpop.f32.mrb[0].mxu0
      %v1507 = vadd.f32 %v1443, %v1506
      %v1508 = vpop.f32.mrb[0].mxu0
      %1509 = vdwg.mxu0
      %v1510 = vpack.c.bf16 %v1343, %v1340
      %v1511 = vpack.c.bf16 %v1425, %v1422
      %v1513 = vsel %vm670, %v1510, 0
      %v1516 = vsel %vm670, %v1511, 0
      %1518 = vmatprep.subr.bf16.mxu0 0
      %1519 = vmatpush1.bf16.xpose.msra.mxu0 %v1516
      %1520 = vmatprep.subr.bf16.mxu0 0
      %1521 = vmatpush1.bf16.xpose.msra.mxu0 0
      %1522 = vmatprep.subr.bf16.mxu0 0
      %1523 = vmatpush1.bf16.xpose.msra.mxu0 0
      %1524 = vmatprep.subr.bf16.mxu0 0
      %1525 = vmatpush1.bf16.xpose.msra.mxu0 0
      %1526 = vmatprep.subr.bf16.mxu0 0
      %1527 = vmatpush1.bf16.xpose.msra.mxu0 0
      %1528 = vmatprep.subr.bf16.mxu0 0
      %1529 = vmatpush1.bf16.xpose.msra.mxu0 0
      %1530 = vmatprep.subr.bf16.mxu0 0
      %1531 = vmatpush1.bf16.xpose.msra.mxu0 0
      %1532 = vmatprep.subr.bf16.mxu0 0
      %1533 = vmatpush1.bf16.xpose.msra.mxu0 0
      %1534 = vmatprep.subr.bf16.mxu0 0
      %1535 = vmatpush1.bf16.xpose.msra.mxu0 0
      %1536 = vmatprep.subr.bf16.mxu0 0
      %1537 = vmatpush1.bf16.xpose.msra.mxu0 0
      %1538 = vmatprep.subr.bf16.mxu0 0
      %1539 = vmatpush1.bf16.xpose.msra.mxu0 0
      %1540 = vmatprep.subr.bf16.mxu0 0
      %1541 = vmatpush1.bf16.xpose.msra.mxu0 0
      %1542 = vmatprep.subr.bf16.mxu0 0
      %1543 = vmatpush1.bf16.xpose.msra.mxu0 0
      %1544 = vmatprep.subr.bf16.mxu0 0
      %1545 = vmatpush1.bf16.xpose.msra.mxu0 0
      %1546 = vmatprep.subr.bf16.mxu0 0
      %1547 = vmatpush1.bf16.xpose.msra.mxu0 0
      %1548 = vmatprep.subr.bf16.mxu0 0
      %1549 = vmatpush1.bf16.xpose.msra.mxu0 0
      %1550 = vmatprep.mubr.bf16.mxu0 0
      %1551 = vmatmul.mubr.bf16.gmra.mrb[0].mxu0 %v1513
      %v1552 = vpop.f32.mrb[0].mxu0
      %v1553 = vadd.f32 0.0, %v1552
      %v1554 = vpop.f32.mrb[0].mxu0
      %v1555 = vpop.f32.mrb[0].mxu0
      %v1556 = vadd.f32 0.0, %v1555
      %v1557 = vpop.f32.mrb[0].mxu0
      %1558 = vdwg.mxu0
      %v1559 = vmul.f32 %v1553, 0.25
      %v1560 = vmul.f32 %v1556, 0.25
      %v1561 = vadd.f32 %v1559, %v417
      %v1562 = vadd.f32 %v1560, %v418
      %v1563 = vsel %vm670, %v1561, -inf
      %1564 = vmax.xlane.f32.xlu0 %v1563
      %v1565 = vpop.xlane.xlu0 %1564
      %v1566 = vsel %vm670, %v1562, -inf
      %1567 = vmax.xlane.f32.xlu0 %v1566
      %v1568 = vpop.xlane.xlu0 %1567
      %v1569 = vsub.f32 %v1561, %v1565
      %v1570 = vsub.f32 %v1562, %v1568
      %v1571 = vmul.f32 %v1569, 1.442695
      %v1572 = vpow.pop %v1571
      %v1573 = vmul.f32 %v1570, 1.442695
      %v1574 = vpow.pop %v1573
      %v1575 = vsel %vm670, %v1572, 0.0
      %1576 = vadd.xlane.f32.xlu0 %v1575
      %v1577 = vpop.xlane.xlu0 %1576
      %v1578 = vsel %vm670, %v1574, 0.0
      %1579 = vadd.xlane.f32.xlu0 %v1578
      %v1580 = vpop.xlane.xlu0 %1579
      %v1581 = vrcp.pop %v1577
      %v1582 = vmul.f32 %v1572, %v1581
      %v1583 = vrcp.pop %v1580
      %v1584 = vmul.f32 %v1574, %v1583
      %v1585 = vpack.c.bf16 %v1584, %v1582
      %v1586 = vpack.c.bf16 %v1507, %v1504
      %v1588 = vsel %vm670, %v1585, 0
      %1590 = vmatprep.subr.bf16.mxu0 0
      %1591 = vmatpush1.bf16.msra.mxu0 %v1586
      %1592 = vmatprep.subr.bf16.mxu0 0
      %1593 = vmatpush1.bf16.msra.mxu0 0
      %1594 = vmatprep.subr.bf16.mxu0 0
      %1595 = vmatpush1.bf16.msra.mxu0 0
      %1596 = vmatprep.subr.bf16.mxu0 0
      %1597 = vmatpush1.bf16.msra.mxu0 0
      %1598 = vmatprep.subr.bf16.mxu0 0
      %1599 = vmatpush1.bf16.msra.mxu0 0
      %1600 = vmatprep.subr.bf16.mxu0 0
      %1601 = vmatpush1.bf16.msra.mxu0 0
      %1602 = vmatprep.subr.bf16.mxu0 0
      %1603 = vmatpush1.bf16.msra.mxu0 0
      %1604 = vmatprep.subr.bf16.mxu0 0
      %1605 = vmatpush1.bf16.msra.mxu0 0
      %1606 = vmatprep.subr.bf16.mxu0 0
      %1607 = vmatpush1.bf16.msra.mxu0 0
      %1608 = vmatprep.subr.bf16.mxu0 0
      %1609 = vmatpush1.bf16.msra.mxu0 0
      %1610 = vmatprep.subr.bf16.mxu0 0
      %1611 = vmatpush1.bf16.msra.mxu0 0
      %1612 = vmatprep.subr.bf16.mxu0 0
      %1613 = vmatpush1.bf16.msra.mxu0 0
      %1614 = vmatprep.subr.bf16.mxu0 0
      %1615 = vmatpush1.bf16.msra.mxu0 0
      %1616 = vmatprep.subr.bf16.mxu0 0
      %1617 = vmatpush1.bf16.msra.mxu0 0
      %1618 = vmatprep.subr.bf16.mxu0 0
      %1619 = vmatpush1.bf16.msra.mxu0 0
      %1620 = vmatprep.subr.bf16.mxu0 0
      %1621 = vmatpush1.bf16.msra.mxu0 0
      %1622 = vmatprep.mubr.bf16.mxu0 0
      %1623 = vmatmul.mubr.bf16.gmra.mrb[0].mxu0 %v1588
      %v1624 = vpop.f32.mrb[0].mxu0
      %v1625 = vadd.f32 0.0, %v1624
      %v1626 = vpop.f32.mrb[0].mxu0
      %v1627 = vpop.f32.mrb[0].mxu0
      %v1628 = vadd.f32 0.0, %v1627
      %v1629 = vpop.f32.mrb[0].mxu0
      %1630 = vdwg.mxu0
      %v1631 = vpack.c.bf16 %v1628, %v1625
      %s1632 = scalar_lea.vmem %s8, 16
      %v1633 = vld [vmem:[%s1632] sm:$0xf]
      %v1634 = vld [vmem:[%s1632 + $0x4] sm:$0xf]
      %v1637 = vunpack.c.l.b16 %v1633
      %v1638 = vunpack.c.l.b16 %v1634
      %v1639 = vpack.c.b16 %v1638, %v1637
      %v1642 = vsel %vm670, %v1631, 0
      %1644 = vmatprep.subr.bf16.mxu0 0
      %1645 = vmatpush1.bf16.msra.mxu0 %v1639
      %1646 = vmatprep.subr.bf16.mxu0 0
      %1647 = vmatpush1.bf16.msra.mxu0 0
      %1648 = vmatprep.subr.bf16.mxu0 0
      %1649 = vmatpush1.bf16.msra.mxu0 0
      %1650 = vmatprep.subr.bf16.mxu0 0
      %1651 = vmatpush1.bf16.msra.mxu0 0
      %1652 = vmatprep.subr.bf16.mxu0 0
      %1653 = vmatpush1.bf16.msra.mxu0 0
      %1654 = vmatprep.subr.bf16.mxu0 0
      %1655 = vmatpush1.bf16.msra.mxu0 0
      %1656 = vmatprep.subr.bf16.mxu0 0
      %1657 = vmatpush1.bf16.msra.mxu0 0
      %1658 = vmatprep.subr.bf16.mxu0 0
      %1659 = vmatpush1.bf16.msra.mxu0 0
      %1660 = vmatprep.subr.bf16.mxu0 0
      %1661 = vmatpush1.bf16.msra.mxu0 0
      %1662 = vmatprep.subr.bf16.mxu0 0
      %1663 = vmatpush1.bf16.msra.mxu0 0
      %1664 = vmatprep.subr.bf16.mxu0 0
      %1665 = vmatpush1.bf16.msra.mxu0 0
      %1666 = vmatprep.subr.bf16.mxu0 0
      %1667 = vmatpush1.bf16.msra.mxu0 0
      %1668 = vmatprep.subr.bf16.mxu0 0
      %1669 = vmatpush1.bf16.msra.mxu0 0
      %1670 = vmatprep.subr.bf16.mxu0 0
      %1671 = vmatpush1.bf16.msra.mxu0 0
      %1672 = vmatprep.subr.bf16.mxu0 0
      %1673 = vmatpush1.bf16.msra.mxu0 0
      %1674 = vmatprep.subr.bf16.mxu0 0
      %1675 = vmatpush1.bf16.msra.mxu0 0
      %1676 = vmatprep.mubr.bf16.mxu0 0
      %1677 = vmatmul.mubr.bf16.gmra.mrb[0].mxu0 %v1642
      %v1678 = vpop.f32.mrb[0].mxu0
      %v1679 = vadd.f32 0.0, %v1678
      %v1680 = vpop.f32.mrb[0].mxu0
      %v1681 = vpop.f32.mrb[0].mxu0
      %v1682 = vadd.f32 0.0, %v1681
      %v1683 = vpop.f32.mrb[0].mxu0
      %1684 = vdwg.mxu0
      %v1685 = vadd.f32 %v1258, %v1679
      %v1686 = vadd.f32 %v1261, %v1682
      %s1687 = scalar_lea.vmem %s2, 96
      %v1688 = vld [vmem:[%s1687] sm:$0xf]
      %v1689 = vld [vmem:[%s1687 + $0x4] sm:$0xf]
      %v1690 = vld [vmem:[%s1687 + $0x8] sm:$0xf]
      %v1691 = vld [vmem:[%s1687 + $0xc] sm:$0xf]
      %v1692 = vld [vmem:[%s1687 + $0x10] sm:$0xf]
      %v1693 = vld [vmem:[%s1687 + $0x14] sm:$0xf]
      %v1694 = vld [vmem:[%s1687 + $0x18] sm:$0xf]
      %v1695 = vld [vmem:[%s1687 + $0x1c] sm:$0xf]
      %s1696 = scalar_lea.vmem %s3, 3
      %v1697 = vld [vmem:[%s1696] sm:$0x1]
      %v1699 = vlaneseq
      %v1700 = vshrl.u32 %v1699, 7
      %v1701 = vsub.s32 0, %v1700
      %v1702 = vrot.slane %v1697, %v1701
      %v1712 = vunpack.c.l.b16 %v1688
      %v1713 = vunpack.c.l.b16 %v1689
      %v1714 = vunpack.c.l.b16 %v1690
      %v1715 = vunpack.c.l.b16 %v1691
      %v1716 = vunpack.c.l.b16 %v1692
      %v1717 = vunpack.c.l.b16 %v1693
      %v1718 = vunpack.c.l.b16 %v1694
      %v1719 = vunpack.c.l.b16 %v1695
      %v1720 = vpack.c.b16 %v1713, %v1712
      %v1721 = vpack.c.b16 %v1715, %v1714
      %v1722 = vpack.c.b16 %v1717, %v1716
      %v1723 = vpack.c.b16 %v1719, %v1718
      %1728 = vmatprep.subr.bf16.mxu0 0
      %1729 = vmatpush1.bf16.msra.mxu0 %v1720
      %1730 = vmatprep.subr.bf16.mxu0 0
      %1731 = vmatpush1.bf16.msra.mxu0 %v1721
      %1732 = vmatprep.subr.bf16.mxu0 0
      %1733 = vmatpush1.bf16.msra.mxu0 %v1722
      %1734 = vmatprep.subr.bf16.mxu0 0
      %1735 = vmatpush1.bf16.msra.mxu0 %v1723
      %1736 = vmatprep.subr.bf16.mxu0 0
      %1737 = vmatpush1.bf16.msra.mxu0 0
      %1738 = vmatprep.subr.bf16.mxu0 0
      %1739 = vmatpush1.bf16.msra.mxu0 0
      %1740 = vmatprep.subr.bf16.mxu0 0
      %1741 = vmatpush1.bf16.msra.mxu0 0
      %1742 = vmatprep.subr.bf16.mxu0 0
      %1743 = vmatpush1.bf16.msra.mxu0 0
      %1744 = vmatprep.subr.bf16.mxu0 0
      %1745 = vmatpush1.bf16.msra.mxu0 0
      %1746 = vmatprep.subr.bf16.mxu0 0
      %1747 = vmatpush1.bf16.msra.mxu0 0
      %1748 = vmatprep.subr.bf16.mxu0 0
      %1749 = vmatpush1.bf16.msra.mxu0 0
      %1750 = vmatprep.subr.bf16.mxu0 0
      %1751 = vmatpush1.bf16.msra.mxu0 0
      %1752 = vmatprep.subr.bf16.mxu0 0
      %1753 = vmatpush1.bf16.msra.mxu0 0
      %1754 = vmatprep.subr.bf16.mxu0 0
      %1755 = vmatpush1.bf16.msra.mxu0 0
      %1756 = vmatprep.subr.bf16.mxu0 0
      %1757 = vmatpush1.bf16.msra.mxu0 0
      %1758 = vmatprep.subr.bf16.mxu0 0
      %1759 = vmatpush1.bf16.msra.mxu0 0
      %1760 = vmatprep.mubr.bf16.mxu0 0
      %1761 = vmatmul.mubr.bf16.gmra.mrb[0].mxu0 %v465
      %v1762 = vpop.f32.mrb[0].mxu0
      %v1763 = vadd.f32 %v1702, %v1762
      %v1764 = vpop.f32.mrb[0].mxu0
      %v1765 = vpop.f32.mrb[0].mxu0
      %v1766 = vadd.f32 %v1702, %v1765
      %v1767 = vpop.f32.mrb[0].mxu0
      %1768 = vdwg.mxu0
      %s1769 = scalar_lea.vmem %s4, 96
      %v1770 = vld [vmem:[%s1769] sm:$0xf]
      %v1771 = vld [vmem:[%s1769 + $0x4] sm:$0xf]
      %v1772 = vld [vmem:[%s1769 + $0x8] sm:$0xf]
      %v1773 = vld [vmem:[%s1769 + $0xc] sm:$0xf]
      %v1774 = vld [vmem:[%s1769 + $0x10] sm:$0xf]
      %v1775 = vld [vmem:[%s1769 + $0x14] sm:$0xf]
      %v1776 = vld [vmem:[%s1769 + $0x18] sm:$0xf]
      %v1777 = vld [vmem:[%s1769 + $0x1c] sm:$0xf]
      %s1778 = scalar_lea.vmem %s5, 3
      %v1779 = vld [vmem:[%s1778] sm:$0x1]
      %v1781 = vlaneseq
      %v1782 = vshrl.u32 %v1781, 7
      %v1783 = vsub.s32 0, %v1782
      %v1784 = vrot.slane %v1779, %v1783
      %v1794 = vunpack.c.l.b16 %v1770
      %v1795 = vunpack.c.l.b16 %v1771
      %v1796 = vunpack.c.l.b16 %v1772
      %v1797 = vunpack.c.l.b16 %v1773
      %v1798 = vunpack.c.l.b16 %v1774
      %v1799 = vunpack.c.l.b16 %v1775
      %v1800 = vunpack.c.l.b16 %v1776
      %v1801 = vunpack.c.l.b16 %v1777
      %v1802 = vpack.c.b16 %v1795, %v1794
      %v1803 = vpack.c.b16 %v1797, %v1796
      %v1804 = vpack.c.b16 %v1799, %v1798
      %v1805 = vpack.c.b16 %v1801, %v1800
      %1810 = vmatprep.subr.bf16.mxu0 0
      %1811 = vmatpush1.bf16.msra.mxu0 %v1802
      %1812 = vmatprep.subr.bf16.mxu0 0
      %1813 = vmatpush1.bf16.msra.mxu0 %v1803
      %1814 = vmatprep.subr.bf16.mxu0 0
      %1815 = vmatpush1.bf16.msra.mxu0 %v1804
      %1816 = vmatprep.subr.bf16.mxu0 0
      %1817 = vmatpush1.bf16.msra.mxu0 %v1805
      %1818 = vmatprep.subr.bf16.mxu0 0
      %1819 = vmatpush1.bf16.msra.mxu0 0
      %1820 = vmatprep.subr.bf16.mxu0 0
      %1821 = vmatpush1.bf16.msra.mxu0 0
      %1822 = vmatprep.subr.bf16.mxu0 0
      %1823 = vmatpush1.bf16.msra.mxu0 0
      %1824 = vmatprep.subr.bf16.mxu0 0
      %1825 = vmatpush1.bf16.msra.mxu0 0
      %1826 = vmatprep.subr.bf16.mxu0 0
      %1827 = vmatpush1.bf16.msra.mxu0 0
      %1828 = vmatprep.subr.bf16.mxu0 0
      %1829 = vmatpush1.bf16.msra.mxu0 0
      %1830 = vmatprep.subr.bf16.mxu0 0
      %1831 = vmatpush1.bf16.msra.mxu0 0
      %1832 = vmatprep.subr.bf16.mxu0 0
      %1833 = vmatpush1.bf16.msra.mxu0 0
      %1834 = vmatprep.subr.bf16.mxu0 0
      %1835 = vmatpush1.bf16.msra.mxu0 0
      %1836 = vmatprep.subr.bf16.mxu0 0
      %1837 = vmatpush1.bf16.msra.mxu0 0
      %1838 = vmatprep.subr.bf16.mxu0 0
      %1839 = vmatpush1.bf16.msra.mxu0 0
      %1840 = vmatprep.subr.bf16.mxu0 0
      %1841 = vmatpush1.bf16.msra.mxu0 0
      %1842 = vmatprep.mubr.bf16.mxu0 0
      %1843 = vmatmul.mubr.bf16.gmra.mrb[0].mxu0 %v465
      %v1844 = vpop.f32.mrb[0].mxu0
      %v1845 = vadd.f32 %v1784, %v1844
      %v1846 = vpop.f32.mrb[0].mxu0
      %v1847 = vpop.f32.mrb[0].mxu0
      %v1848 = vadd.f32 %v1784, %v1847
      %v1849 = vpop.f32.mrb[0].mxu0
      %1850 = vdwg.mxu0
      %s1851 = scalar_lea.vmem %s6, 96
      %v1852 = vld [vmem:[%s1851] sm:$0xf]
      %v1853 = vld [vmem:[%s1851 + $0x4] sm:$0xf]
      %v1854 = vld [vmem:[%s1851 + $0x8] sm:$0xf]
      %v1855 = vld [vmem:[%s1851 + $0xc] sm:$0xf]
      %v1856 = vld [vmem:[%s1851 + $0x10] sm:$0xf]
      %v1857 = vld [vmem:[%s1851 + $0x14] sm:$0xf]
      %v1858 = vld [vmem:[%s1851 + $0x18] sm:$0xf]
      %v1859 = vld [vmem:[%s1851 + $0x1c] sm:$0xf]
      %s1860 = scalar_lea.vmem %s7, 3
      %v1861 = vld [vmem:[%s1860] sm:$0x1]
      %v1863 = vlaneseq
      %v1864 = vshrl.u32 %v1863, 7
      %v1865 = vsub.s32 0, %v1864
      %v1866 = vrot.slane %v1861, %v1865
      %v1876 = vunpack.c.l.b16 %v1852
      %v1877 = vunpack.c.l.b16 %v1853
      %v1878 = vunpack.c.l.b16 %v1854
      %v1879 = vunpack.c.l.b16 %v1855
      %v1880 = vunpack.c.l.b16 %v1856
      %v1881 = vunpack.c.l.b16 %v1857
      %v1882 = vunpack.c.l.b16 %v1858
      %v1883 = vunpack.c.l.b16 %v1859
      %v1884 = vpack.c.b16 %v1877, %v1876
      %v1885 = vpack.c.b16 %v1879, %v1878
      %v1886 = vpack.c.b16 %v1881, %v1880
      %v1887 = vpack.c.b16 %v1883, %v1882
      %1892 = vmatprep.subr.bf16.mxu0 0
      %1893 = vmatpush1.bf16.msra.mxu0 %v1884
      %1894 = vmatprep.subr.bf16.mxu0 0
      %1895 = vmatpush1.bf16.msra.mxu0 %v1885
      %1896 = vmatprep.subr.bf16.mxu0 0
      %1897 = vmatpush1.bf16.msra.mxu0 %v1886
      %1898 = vmatprep.subr.bf16.mxu0 0
      %1899 = vmatpush1.bf16.msra.mxu0 %v1887
      %1900 = vmatprep.subr.bf16.mxu0 0
      %1901 = vmatpush1.bf16.msra.mxu0 0
      %1902 = vmatprep.subr.bf16.mxu0 0
      %1903 = vmatpush1.bf16.msra.mxu0 0
      %1904 = vmatprep.subr.bf16.mxu0 0
      %1905 = vmatpush1.bf16.msra.mxu0 0
      %1906 = vmatprep.subr.bf16.mxu0 0
      %1907 = vmatpush1.bf16.msra.mxu0 0
      %1908 = vmatprep.subr.bf16.mxu0 0
      %1909 = vmatpush1.bf16.msra.mxu0 0
      %1910 = vmatprep.subr.bf16.mxu0 0
      %1911 = vmatpush1.bf16.msra.mxu0 0
      %1912 = vmatprep.subr.bf16.mxu0 0
      %1913 = vmatpush1.bf16.msra.mxu0 0
      %1914 = vmatprep.subr.bf16.mxu0 0
      %1915 = vmatpush1.bf16.msra.mxu0 0
      %1916 = vmatprep.subr.bf16.mxu0 0
      %1917 = vmatpush1.bf16.msra.mxu0 0
      %1918 = vmatprep.subr.bf16.mxu0 0
      %1919 = vmatpush1.bf16.msra.mxu0 0
      %1920 = vmatprep.subr.bf16.mxu0 0
      %1921 = vmatpush1.bf16.msra.mxu0 0
      %1922 = vmatprep.subr.bf16.mxu0 0
      %1923 = vmatpush1.bf16.msra.mxu0 0
      %1924 = vmatprep.mubr.bf16.mxu0 0
      %1925 = vmatmul.mubr.bf16.gmra.mrb[0].mxu0 %v465
      %v1926 = vpop.f32.mrb[0].mxu0
      %v1927 = vadd.f32 %v1866, %v1926
      %v1928 = vpop.f32.mrb[0].mxu0
      %v1929 = vpop.f32.mrb[0].mxu0
      %v1930 = vadd.f32 %v1866, %v1929
      %v1931 = vpop.f32.mrb[0].mxu0
      %1932 = vdwg.mxu0
      %v1933 = vpack.c.bf16 %v1766, %v1763
      %v1934 = vpack.c.bf16 %v1848, %v1845
      %v1936 = vsel %vm670, %v1933, 0
      %v1939 = vsel %vm670, %v1934, 0
      %1941 = vmatprep.subr.bf16.mxu0 0
      %1942 = vmatpush1.bf16.xpose.msra.mxu0 %v1939
      %1943 = vmatprep.subr.bf16.mxu0 0
      %1944 = vmatpush1.bf16.xpose.msra.mxu0 0
      %1945 = vmatprep.subr.bf16.mxu0 0
      %1946 = vmatpush1.bf16.xpose.msra.mxu0 0
      %1947 = vmatprep.subr.bf16.mxu0 0
      %1948 = vmatpush1.bf16.xpose.msra.mxu0 0
      %1949 = vmatprep.subr.bf16.mxu0 0
      %1950 = vmatpush1.bf16.xpose.msra.mxu0 0
      %1951 = vmatprep.subr.bf16.mxu0 0
      %1952 = vmatpush1.bf16.xpose.msra.mxu0 0
      %1953 = vmatprep.subr.bf16.mxu0 0
      %1954 = vmatpush1.bf16.xpose.msra.mxu0 0
      %1955 = vmatprep.subr.bf16.mxu0 0
      %1956 = vmatpush1.bf16.xpose.msra.mxu0 0
      %1957 = vmatprep.subr.bf16.mxu0 0
      %1958 = vmatpush1.bf16.xpose.msra.mxu0 0
      %1959 = vmatprep.subr.bf16.mxu0 0
      %1960 = vmatpush1.bf16.xpose.msra.mxu0 0
      %1961 = vmatprep.subr.bf16.mxu0 0
      %1962 = vmatpush1.bf16.xpose.msra.mxu0 0
      %1963 = vmatprep.subr.bf16.mxu0 0
      %1964 = vmatpush1.bf16.xpose.msra.mxu0 0
      %1965 = vmatprep.subr.bf16.mxu0 0
      %1966 = vmatpush1.bf16.xpose.msra.mxu0 0
      %1967 = vmatprep.subr.bf16.mxu0 0
      %1968 = vmatpush1.bf16.xpose.msra.mxu0 0
      %1969 = vmatprep.subr.bf16.mxu0 0
      %1970 = vmatpush1.bf16.xpose.msra.mxu0 0
      %1971 = vmatprep.subr.bf16.mxu0 0
      %1972 = vmatpush1.bf16.xpose.msra.mxu0 0
      %1973 = vmatprep.mubr.bf16.mxu0 0
      %1974 = vmatmul.mubr.bf16.gmra.mrb[0].mxu0 %v1936
      %v1975 = vpop.f32.mrb[0].mxu0
      %v1976 = vadd.f32 0.0, %v1975
      %v1977 = vpop.f32.mrb[0].mxu0
      %v1978 = vpop.f32.mrb[0].mxu0
      %v1979 = vadd.f32 0.0, %v1978
      %v1980 = vpop.f32.mrb[0].mxu0
      %1981 = vdwg.mxu0
      %v1982 = vmul.f32 %v1976, 0.25
      %v1983 = vmul.f32 %v1979, 0.25
      %v1984 = vadd.f32 %v1982, %v417
      %v1985 = vadd.f32 %v1983, %v418
      %v1986 = vsel %vm670, %v1984, -inf
      %1987 = vmax.xlane.f32.xlu0 %v1986
      %v1988 = vpop.xlane.xlu0 %1987
      %v1989 = vsel %vm670, %v1985, -inf
      %1990 = vmax.xlane.f32.xlu0 %v1989
      %v1991 = vpop.xlane.xlu0 %1990
      %v1992 = vsub.f32 %v1984, %v1988
      %v1993 = vsub.f32 %v1985, %v1991
      %v1994 = vmul.f32 %v1992, 1.442695
      %v1995 = vpow.pop %v1994
      %v1996 = vmul.f32 %v1993, 1.442695
      %v1997 = vpow.pop %v1996
      %v1998 = vsel %vm670, %v1995, 0.0
      %1999 = vadd.xlane.f32.xlu0 %v1998
      %v2000 = vpop.xlane.xlu0 %1999
      %v2001 = vsel %vm670, %v1997, 0.0
      %2002 = vadd.xlane.f32.xlu0 %v2001
      %v2003 = vpop.xlane.xlu0 %2002
      %v2004 = vrcp.pop %v2000
      %v2005 = vmul.f32 %v1995, %v2004
      %v2006 = vrcp.pop %v2003
      %v2007 = vmul.f32 %v1997, %v2006
      %v2008 = vpack.c.bf16 %v2007, %v2005
      %v2009 = vpack.c.bf16 %v1930, %v1927
      %v2011 = vsel %vm670, %v2008, 0
      %2013 = vmatprep.subr.bf16.mxu0 0
      %2014 = vmatpush1.bf16.msra.mxu0 %v2009
      %2015 = vmatprep.subr.bf16.mxu0 0
      %2016 = vmatpush1.bf16.msra.mxu0 0
      %2017 = vmatprep.subr.bf16.mxu0 0
      %2018 = vmatpush1.bf16.msra.mxu0 0
      %2019 = vmatprep.subr.bf16.mxu0 0
      %2020 = vmatpush1.bf16.msra.mxu0 0
      %2021 = vmatprep.subr.bf16.mxu0 0
      %2022 = vmatpush1.bf16.msra.mxu0 0
      %2023 = vmatprep.subr.bf16.mxu0 0
      %2024 = vmatpush1.bf16.msra.mxu0 0
      %2025 = vmatprep.subr.bf16.mxu0 0
      %2026 = vmatpush1.bf16.msra.mxu0 0
      %2027 = vmatprep.subr.bf16.mxu0 0
      %2028 = vmatpush1.bf16.msra.mxu0 0
      %2029 = vmatprep.subr.bf16.mxu0 0
      %2030 = vmatpush1.bf16.msra.mxu0 0
      %2031 = vmatprep.subr.bf16.mxu0 0
      %2032 = vmatpush1.bf16.msra.mxu0 0
      %2033 = vmatprep.subr.bf16.mxu0 0
      %2034 = vmatpush1.bf16.msra.mxu0 0
      %2035 = vmatprep.subr.bf16.mxu0 0
      %2036 = vmatpush1.bf16.msra.mxu0 0
      %2037 = vmatprep.subr.bf16.mxu0 0
      %2038 = vmatpush1.bf16.msra.mxu0 0
      %2039 = vmatprep.subr.bf16.mxu0 0
      %2040 = vmatpush1.bf16.msra.mxu0 0
      %2041 = vmatprep.subr.bf16.mxu0 0
      %2042 = vmatpush1.bf16.msra.mxu0 0
      %2043 = vmatprep.subr.bf16.mxu0 0
      %2044 = vmatpush1.bf16.msra.mxu0 0
      %2045 = vmatprep.mubr.bf16.mxu0 0
      %2046 = vmatmul.mubr.bf16.gmra.mrb[0].mxu0 %v2011
      %v2047 = vpop.f32.mrb[0].mxu0
      %v2048 = vadd.f32 0.0, %v2047
      %v2049 = vpop.f32.mrb[0].mxu0
      %v2050 = vpop.f32.mrb[0].mxu0
      %v2051 = vadd.f32 0.0, %v2050
      %v2052 = vpop.f32.mrb[0].mxu0
      %2053 = vdwg.mxu0
      %v2054 = vpack.c.bf16 %v2051, %v2048
      %s2055 = scalar_lea.vmem %s8, 24
      %v2056 = vld [vmem:[%s2055] sm:$0xf]
      %v2057 = vld [vmem:[%s2055 + $0x4] sm:$0xf]
      %v2060 = vunpack.c.l.b16 %v2056
      %v2061 = vunpack.c.l.b16 %v2057
      %v2062 = vpack.c.b16 %v2061, %v2060
      %v2065 = vsel %vm670, %v2054, 0
      %2067 = vmatprep.subr.bf16.mxu0 0
      %2068 = vmatpush1.bf16.msra.mxu0 %v2062
      %2069 = vmatprep.subr.bf16.mxu0 0
      %2070 = vmatpush1.bf16.msra.mxu0 0
      %2071 = vmatprep.subr.bf16.mxu0 0
      %2072 = vmatpush1.bf16.msra.mxu0 0
      %2073 = vmatprep.subr.bf16.mxu0 0
      %2074 = vmatpush1.bf16.msra.mxu0 0
      %2075 = vmatprep.subr.bf16.mxu0 0
      %2076 = vmatpush1.bf16.msra.mxu0 0
      %2077 = vmatprep.subr.bf16.mxu0 0
      %2078 = vmatpush1.bf16.msra.mxu0 0
      %2079 = vmatprep.subr.bf16.mxu0 0
      %2080 = vmatpush1.bf16.msra.mxu0 0
      %2081 = vmatprep.subr.bf16.mxu0 0
      %2082 = vmatpush1.bf16.msra.mxu0 0
      %2083 = vmatprep.subr.bf16.mxu0 0
      %2084 = vmatpush1.bf16.msra.mxu0 0
      %2085 = vmatprep.subr.bf16.mxu0 0
      %2086 = vmatpush1.bf16.msra.mxu0 0
      %2087 = vmatprep.subr.bf16.mxu0 0
      %2088 = vmatpush1.bf16.msra.mxu0 0
      %2089 = vmatprep.subr.bf16.mxu0 0
      %2090 = vmatpush1.bf16.msra.mxu0 0
      %2091 = vmatprep.subr.bf16.mxu0 0
      %2092 = vmatpush1.bf16.msra.mxu0 0
      %2093 = vmatprep.subr.bf16.mxu0 0
      %2094 = vmatpush1.bf16.msra.mxu0 0
      %2095 = vmatprep.subr.bf16.mxu0 0
      %2096 = vmatpush1.bf16.msra.mxu0 0
      %2097 = vmatprep.subr.bf16.mxu0 0
      %2098 = vmatpush1.bf16.msra.mxu0 0
      %2099 = vmatprep.mubr.bf16.mxu0 0
      %2100 = vmatmul.mubr.bf16.gmra.mrb[0].mxu0 %v2065
      %v2101 = vpop.f32.mrb[0].mxu0
      %v2102 = vadd.f32 0.0, %v2101
      %v2103 = vpop.f32.mrb[0].mxu0
      %v2104 = vpop.f32.mrb[0].mxu0
      %v2105 = vadd.f32 0.0, %v2104
      %v2106 = vpop.f32.mrb[0].mxu0
      %2107 = vdwg.mxu0
      %v2108 = vadd.f32 %v1685, %v2102
      %v2109 = vadd.f32 %v1686, %v2105
      %v2110 = vld [vmem:[%s9] sm:$0x1]
      %v2112 = vlaneseq
      %v2113 = vshrl.u32 %v2112, 7
      %v2114 = vsub.s32 0, %v2113
      %v2115 = vrot.slane %v2110, %v2114
      %v2117 = vadd.f32 %v2108, %v2115
      %v2118 = vadd.f32 %v2109, %v2115
      %v2119 = vunpack.c.l.bf16 %v415
      %v2120 = vunpack.c.l.bf16 %v416
      %v2121 = vadd.f32 %v2117, %v2119
      %v2122 = vadd.f32 %v2118, %v2120
      %v2123 = vld [vmem:[%s10] sm:$0x1]
      %v2124 = vld [vmem:[%s11] sm:$0x1]
      %v2125 = vsel %vm463, %v2121, 0.0
      %2126 = vadd.xlane.f32.xlu0 %v2125
      %v2127 = vpop.xlane.xlu0 %2126
      %v2128 = vsel %vm463, %v2122, 0.0
      %2129 = vadd.xlane.f32.xlu0 %v2128
      %v2130 = vpop.xlane.xlu0 %2129
      %v2131 = vrcp.pop 64.0
      %v2132 = vmul.f32 %v2127, %v2131
      %v2133 = vmul.f32 %v2130, %v2131
      %v2134 = vsub.f32 %v2121, %v2132
      %v2135 = vsub.f32 %v2122, %v2133
      %v2136 = vmul.f32 %v2134, %v2134
      %v2137 = vmul.f32 %v2135, %v2135
      %v2138 = vsel %vm463, %v2136, 0.0
      %2139 = vadd.xlane.f32.xlu0 %v2138
      %v2140 = vpop.xlane.xlu0 %2139
      %v2141 = vsel %vm463, %v2137, 0.0
      %2142 = vadd.xlane.f32.xlu0 %v2141
      %v2143 = vpop.xlane.xlu0 %2142
      %v2144 = vmul.f32 %v2140, %v2131
      %v2145 = vmul.f32 %v2143, %v2131
      %v2146 = vadd.f32 %v2144, 1e-05
      %v2147 = vadd.f32 %v2145, 1e-05
      %v2148 = vrsqrt.pop %v2146
      %v2149 = vrsqrt.pop %v2147
      %v2150 = vmul.f32 %v2134, %v2148
      %v2151 = vmul.f32 %v2135, %v2149
      %v2153 = vlaneseq
      %v2154 = vshrl.u32 %v2153, 7
      %v2155 = vsub.s32 0, %v2154
      %v2156 = vrot.slane %v2123, %v2155
      %v2158 = vmul.f32 %v2150, %v2156
      %v2159 = vmul.f32 %v2151, %v2156
      %v2161 = vlaneseq
      %v2162 = vshrl.u32 %v2161, 7
      %v2163 = vsub.s32 0, %v2162
      %v2164 = vrot.slane %v2124, %v2163
      %v2166 = vadd.f32 %v2158, %v2164
      %v2167 = vadd.f32 %v2159, %v2164
      %v2168 = vpack.c.bf16 %v2167, %v2166
      %v2170 = vunpack.c.l.b16 %v2168
      %v2171 = vunpack.c.h.b16 %v2168
      %v2172 = vpack.c.b16 %v2170, %v2170
      %v2173 = vpack.c.b16 %v2171, %v2171
      %vm2176 = vcmask 519168
      %2177 = vst.msk [vmem:[%s413] sm:$0xf] %vm2176, %v2172
      %2178 = vst.msk [vmem:[%s413 + $0x4] sm:$0xf] %vm2176, %v2173
      %p2179 = scmp.lt.s32.totalorder %s23, 1
      %s2180 = scalar_select %p2179, %s23, 1
      %s2181 = smul.addr %s2180, 2
      %s2182 = smul.addr %s2181, 4
      %s2183 = scalar_lea.vmem %s12, %s2182
      // Predicated region
      $region69: #{transformer_translator_forward.17} parent=67 // pred_check
        %p2184 = pneg %p298
      $region70: #{transformer_translator_forward.17} parent=67 // pred_check_branch
        %2186 = sbr.rel (%p2184) target = $region72
      $region71: #{transformer_translator_forward.17} parent=67 // pred_region
        _
      $region72: #{transformer_translator_forward.17} parent=67 // pred_fallthru
        _
    $region68: #{transformer_translator_forward.17} parent=5 // pred_fallthru
      _
    %p2187 = scmp.le.s32.totalorder 2, %s18
    // Predicated region
    $region73: #{transformer_translator_forward.17} parent=5 // pred_check
      %p2188 = pneg %p2187
    $region74: #{transformer_translator_forward.17} parent=5 // pred_check_branch
      %2190 = sbr.rel (%p2188) target = $region76
    $region75: #{transformer_translator_forward.17} parent=5 // pred_region
      %s2191 = ssub.s32 %s18, 2
      // Predicated region
      $region77: #{transformer_translator_forward.17} parent=75 // pred_check
        %p2192 = pneg %p304
      $region78: #{transformer_translator_forward.17} parent=75 // pred_check_branch
        %2194 = sbr.rel (%p2192) target = $region80
      $region79: #{transformer_translator_forward.17} parent=75 // pred_region
        %p2195 = scmp.lt.s32.totalorder %s24, 1
        %s2196 = scalar_select %p2195, %s24, 1
        %s2197 = smul.addr %s2196, 2
        %s2198 = smul.addr %s2197, 4
        %s2199 = scalar_lea.vmem %s12, %s2198
      $region80: #{transformer_translator_forward.17} parent=75 // pred_fallthru
        _
    $region76: #{transformer_translator_forward.17} parent=5 // pred_fallthru
      _
  $region6: #{transformer_translator_forward.17} parent=0 // loop_footer
    %s22 = sadd.s32 1, %s18
  $region7: #{transformer_translator_forward.17} parent=0 // loop_footer_branch
    %17 = sbr.rel target = $region3
  $region8: #{transformer_translator_forward.17} parent=0 // loop_exit
    _

// kernel: transformer_translator_forward.19
$region0: #{transformer_translator_forward.19}
  #allocation0 [shape = 'u32[]', space=smem, size = 0x4, offset = 0x4, fixed_abs, tag = 'smem constant byte address 0x4 - core index']
  #allocation1 [shape = 'u32[144,128]{1,0:T(1,128)}', space=vmem, size = 0x12000, scoped, tag = 'internal scratch']
  %s0 = inlined_call_operand.vmem [shape: bf16[2,16,64], index: 0, kind: input, shape index: {}]
  %s1 = inlined_call_operand.vmem [shape: bf16[64,128], index: 1, kind: input, shape index: {}]
  %s2 = inlined_call_operand.vmem [shape: f32[1,128], index: 2, kind: input, shape index: {}]
  %s3 = inlined_call_operand.vmem [shape: bf16[128,64], index: 3, kind: input, shape index: {}]
  %s4 = inlined_call_operand.vmem [shape: f32[1,64], index: 4, kind: input, shape index: {}]
  %s5 = inlined_call_operand.vmem [shape: f32[1,64], index: 5, kind: input, shape index: {}]
  %s6 = inlined_call_operand.vmem [shape: f32[1,64], index: 6, kind: input, shape index: {}]
  %s7 = inlined_call_operand.vmem [shape: bf16[2,16,64], index: 7, kind: output, shape index: {}]
  %s8 = sld [smem:[#allocation0]]
  $region61: #{transformer_translator_forward.19} parent=0
    _
  %s10 = ssub.s32 1, %s8
  %s11 = scalar_select 0, %s10, %s8
  loop: start=0, step=1, limit=4
  $region2: #{transformer_translator_forward.19} parent=0 // loop_pre_header
    _
  $region3: #{transformer_translator_forward.19} parent=0 // loop_header
    %s13 = sphi 0, %s17
    %p14 = scmp.ge.s32.totalorder %s13, 4
    %s23 = sphi 0, %s25
    %s26 = sphi 0, %s23
    %s27 = sphi 0, %s26
    %s43 = sphi 0, %s27
    %s47 = sphi 0, %s47
    %s49 = sphi 0, %s47
    %s50 = sphi 0, %s49
    %s64 = sphi 0, %s50
    %s68 = sphi 0, %s68
    %s70 = sphi 0, %s68
    %s71 = sphi 0, %s70
    %s85 = sphi 0, %s71
    %s89 = sphi 0, %s89
    %s91 = sphi 0, %s89
    %s92 = sphi 0, %s91
    %s106 = sphi 0, %s92
    %s110 = sphi 0, %s110
    %s112 = sphi 0, %s110
    %s113 = sphi 0, %s112
    %s127 = sphi 0, %s113
    %s131 = sphi 0, %s131
    %s133 = sphi 0, %s131
    %s134 = sphi 0, %s133
    %s148 = sphi 0, %s134
    %s152 = sphi 0, %s152
    %s154 = sphi 0, %s152
    %s155 = sphi 0, %s154
    %s169 = sphi 0, %s155
    %s175 = sphi 0, %s177
    %s178 = sphi 0, %s175
    %s179 = sphi 0, %s178
    %s195 = sphi 0, %s179
  $region4: #{transformer_translator_forward.19} parent=0 // loop_header_branch
    %16 = sbr.rel (%p14) target = $region8
  $region5: #{transformer_translator_forward.19} parent=0 // loop_body
    %s18 = ssub.s32 %s13, 1
    %s19 = ssub.s32 %s13, 2
    %s20 = sadd.s32 %s13, 1
    %s21 = ssub.s32 %s13, %s20
    %p22 = scmp.eq.s32.totalorder %s21, 0
    %s24 = sadd.s32 %s23, 1
    %s25 = scalar_select %p22, %s23, %s24
    %p28 = pneg %p22
    %p29 = scmp.eq.s32.totalorder %s13, 1
    %p30 = por %p28, %p29
    %p31 = scmp.ne.s32.totalorder %s23, %s26
    %p32 = scmp.eq.s32.totalorder %s13, 0
    %p33 = por %p31, %p32
    %p34 = scmp.ne.s32.totalorder %s23, %s26
    %p35 = scmp.eq.s32.totalorder %s18, 1
    %p36 = por %p34, %p35
    %p37 = scmp.ne.s32.totalorder %s26, %s27
    %p38 = scmp.eq.s32.totalorder %s18, 0
    %p39 = por %p37, %p38
    %p40 = scmp.ne.s32.totalorder %s26, %s27
    %p41 = scmp.eq.s32.totalorder %s19, 1
    %p42 = por %p40, %p41
    %p44 = scmp.ne.s32.totalorder %s27, %s43
    %p45 = scmp.eq.s32.totalorder %s19, 0
    %p46 = por %p44, %p45
    %s48 = sadd.s32 %s47, 1
    %p51 = scmp.eq.s32.totalorder %s13, 1
    %p52 = scmp.ne.s32.totalorder %s47, %s49
    %p53 = scmp.eq.s32.totalorder %s13, 0
    %p54 = por %p52, %p53
    %p55 = scmp.ne.s32.totalorder %s47, %s49
    %p56 = scmp.eq.s32.totalorder %s18, 1
    %p57 = por %p55, %p56
    %p58 = scmp.ne.s32.totalorder %s49, %s50
    %p59 = scmp.eq.s32.totalorder %s18, 0
    %p60 = por %p58, %p59
    %p61 = scmp.ne.s32.totalorder %s49, %s50
    %p62 = scmp.eq.s32.totalorder %s19, 1
    %p63 = por %p61, %p62
    %p65 = scmp.ne.s32.totalorder %s50, %s64
    %p66 = scmp.eq.s32.totalorder %s19, 0
    %p67 = por %p65, %p66
    %s69 = sadd.s32 %s68, 1
    %p72 = scmp.eq.s32.totalorder %s13, 1
    %p73 = scmp.ne.s32.totalorder %s68, %s70
    %p74 = scmp.eq.s32.totalorder %s13, 0
    %p75 = por %p73, %p74
    %p76 = scmp.ne.s32.totalorder %s68, %s70
    %p77 = scmp.eq.s32.totalorder %s18, 1
    %p78 = por %p76, %p77
    %p79 = scmp.ne.s32.totalorder %s70, %s71
    %p80 = scmp.eq.s32.totalorder %s18, 0
    %p81 = por %p79, %p80
    %p82 = scmp.ne.s32.totalorder %s70, %s71
    %p83 = scmp.eq.s32.totalorder %s19, 1
    %p84 = por %p82, %p83
    %p86 = scmp.ne.s32.totalorder %s71, %s85
    %p87 = scmp.eq.s32.totalorder %s19, 0
    %p88 = por %p86, %p87
    %s90 = sadd.s32 %s89, 1
    %p93 = scmp.eq.s32.totalorder %s13, 1
    %p94 = scmp.ne.s32.totalorder %s89, %s91
    %p95 = scmp.eq.s32.totalorder %s13, 0
    %p96 = por %p94, %p95
    %p97 = scmp.ne.s32.totalorder %s89, %s91
    %p98 = scmp.eq.s32.totalorder %s18, 1
    %p99 = por %p97, %p98
    %p100 = scmp.ne.s32.totalorder %s91, %s92
    %p101 = scmp.eq.s32.totalorder %s18, 0
    %p102 = por %p100, %p101
    %p103 = scmp.ne.s32.totalorder %s91, %s92
    %p104 = scmp.eq.s32.totalorder %s19, 1
    %p105 = por %p103, %p104
    %p107 = scmp.ne.s32.totalorder %s92, %s106
    %p108 = scmp.eq.s32.totalorder %s19, 0
    %p109 = por %p107, %p108
    %s111 = sadd.s32 %s110, 1
    %p114 = scmp.eq.s32.totalorder %s13, 1
    %p115 = scmp.ne.s32.totalorder %s110, %s112
    %p116 = scmp.eq.s32.totalorder %s13, 0
    %p117 = por %p115, %p116
    %p118 = scmp.ne.s32.totalorder %s110, %s112
    %p119 = scmp.eq.s32.totalorder %s18, 1
    %p120 = por %p118, %p119
    %p121 = scmp.ne.s32.totalorder %s112, %s113
    %p122 = scmp.eq.s32.totalorder %s18, 0
    %p123 = por %p121, %p122
    %p124 = scmp.ne.s32.totalorder %s112, %s113
    %p125 = scmp.eq.s32.totalorder %s19, 1
    %p126 = por %p124, %p125
    %p128 = scmp.ne.s32.totalorder %s113, %s127
    %p129 = scmp.eq.s32.totalorder %s19, 0
    %p130 = por %p128, %p129
    %s132 = sadd.s32 %s131, 1
    %p135 = scmp.eq.s32.totalorder %s13, 1
    %p136 = scmp.ne.s32.totalorder %s131, %s133
    %p137 = scmp.eq.s32.totalorder %s13, 0
    %p138 = por %p136, %p137
    %p139 = scmp.ne.s32.totalorder %s131, %s133
    %p140 = scmp.eq.s32.totalorder %s18, 1
    %p141 = por %p139, %p140
    %p142 = scmp.ne.s32.totalorder %s133, %s134
    %p143 = scmp.eq.s32.totalorder %s18, 0
    %p144 = por %p142, %p143
    %p145 = scmp.ne.s32.totalorder %s133, %s134
    %p146 = scmp.eq.s32.totalorder %s19, 1
    %p147 = por %p145, %p146
    %p149 = scmp.ne.s32.totalorder %s134, %s148
    %p150 = scmp.eq.s32.totalorder %s19, 0
    %p151 = por %p149, %p150
    %s153 = sadd.s32 %s152, 1
    %p156 = scmp.eq.s32.totalorder %s13, 1
    %p157 = scmp.ne.s32.totalorder %s152, %s154
    %p158 = scmp.eq.s32.totalorder %s13, 0
    %p159 = por %p157, %p158
    %p160 = scmp.ne.s32.totalorder %s152, %s154
    %p161 = scmp.eq.s32.totalorder %s18, 1
    %p162 = por %p160, %p161
    %p163 = scmp.ne.s32.totalorder %s154, %s155
    %p164 = scmp.eq.s32.totalorder %s18, 0
    %p165 = por %p163, %p164
    %p166 = scmp.ne.s32.totalorder %s154, %s155
    %p167 = scmp.eq.s32.totalorder %s19, 1
    %p168 = por %p166, %p167
    %p170 = scmp.ne.s32.totalorder %s155, %s169
    %p171 = scmp.eq.s32.totalorder %s19, 0
    %p172 = por %p170, %p171
    %s173 = ssub.s32 %s13, %s20
    %p174 = scmp.eq.s32.totalorder %s173, 0
    %s176 = sadd.s32 %s175, 1
    %s177 = scalar_select %p174, %s175, %s176
    %p180 = pneg %p174
    %p181 = scmp.eq.s32.totalorder %s13, 1
    %p182 = por %p180, %p181
    %p183 = scmp.ne.s32.totalorder %s175, %s178
    %p184 = scmp.eq.s32.totalorder %s13, 0
    %p185 = por %p183, %p184
    %p186 = scmp.ne.s32.totalorder %s175, %s178
    %p187 = scmp.eq.s32.totalorder %s18, 1
    %p188 = por %p186, %p187
    %p189 = scmp.ne.s32.totalorder %s178, %s179
    %p190 = scmp.eq.s32.totalorder %s18, 0
    %p191 = por %p189, %p190
    %p192 = scmp.ne.s32.totalorder %s178, %s179
    %p193 = scmp.eq.s32.totalorder %s19, 1
    %p194 = por %p192, %p193
    %p196 = scmp.ne.s32.totalorder %s179, %s195
    %p197 = scmp.eq.s32.totalorder %s19, 0
    %p198 = por %p196, %p197
    %p199 = scmp.le.s32.totalorder 1, %s13
    %p200 = scmp.lt.s32.totalorder %s13, 3
    %p201 = pnand %p199, %p200
    %p202 = pneg %p201
    // Predicated region
    $region9: #{transformer_translator_forward.19} parent=5 // pred_check
      _
    $region10: #{transformer_translator_forward.19} parent=5 // pred_check_branch
      %204 = sbr.rel (%p201) target = $region12
    $region11: #{transformer_translator_forward.19} parent=5 // pred_region
      %s205 = ssub.s32 %s13, 1
      // Predicated region
      $region13: #{transformer_translator_forward.19} parent=11 // pred_check
        %p206 = pneg %p60
      $region14: #{transformer_translator_forward.19} parent=11 // pred_check_branch
        %208 = sbr.rel (%p206) target = $region16
      $region15: #{transformer_translator_forward.19} parent=11 // pred_region
        _
      $region16: #{transformer_translator_forward.19} parent=11 // pred_fallthru
        _
      // Predicated region
      $region17: #{transformer_translator_forward.19} parent=11 // pred_check
        %p209 = pneg %p81
      $region18: #{transformer_translator_forward.19} parent=11 // pred_check_branch
        %211 = sbr.rel (%p209) target = $region20
      $region19: #{transformer_translator_forward.19} parent=11 // pred_region
        _
      $region20: #{transformer_translator_forward.19} parent=11 // pred_fallthru
        _
      // Predicated region
      $region21: #{transformer_translator_forward.19} parent=11 // pred_check
        %p212 = pneg %p102
      $region22: #{transformer_translator_forward.19} parent=11 // pred_check_branch
        %214 = sbr.rel (%p212) target = $region24
      $region23: #{transformer_translator_forward.19} parent=11 // pred_region
        _
      $region24: #{transformer_translator_forward.19} parent=11 // pred_fallthru
        _
      // Predicated region
      $region25: #{transformer_translator_forward.19} parent=11 // pred_check
        %p215 = pneg %p123
      $region26: #{transformer_translator_forward.19} parent=11 // pred_check_branch
        %217 = sbr.rel (%p215) target = $region28
      $region27: #{transformer_translator_forward.19} parent=11 // pred_region
        _
      $region28: #{transformer_translator_forward.19} parent=11 // pred_fallthru
        _
      // Predicated region
      $region29: #{transformer_translator_forward.19} parent=11 // pred_check
        %p218 = pneg %p144
      $region30: #{transformer_translator_forward.19} parent=11 // pred_check_branch
        %220 = sbr.rel (%p218) target = $region32
      $region31: #{transformer_translator_forward.19} parent=11 // pred_region
        _
      $region32: #{transformer_translator_forward.19} parent=11 // pred_fallthru
        _
      // Predicated region
      $region33: #{transformer_translator_forward.19} parent=11 // pred_check
        %p221 = pneg %p165
      $region34: #{transformer_translator_forward.19} parent=11 // pred_check_branch
        %223 = sbr.rel (%p221) target = $region36
      $region35: #{transformer_translator_forward.19} parent=11 // pred_region
        _
      $region36: #{transformer_translator_forward.19} parent=11 // pred_fallthru
        _
    $region12: #{transformer_translator_forward.19} parent=5 // pred_fallthru
      _
    %p224 = scmp.lt.s32.totalorder %s13, 2
    // Predicated region
    $region37: #{transformer_translator_forward.19} parent=5 // pred_check
      %p225 = pneg %p224
    $region38: #{transformer_translator_forward.19} parent=5 // pred_check_branch
      %227 = sbr.rel (%p225) target = $region40
    $region39: #{transformer_translator_forward.19} parent=5 // pred_region
      // Predicated region
      $region41: #{transformer_translator_forward.19} parent=39 // pred_check
        %p228 = pneg %p33
      $region42: #{transformer_translator_forward.19} parent=39 // pred_check_branch
        %230 = sbr.rel (%p228) target = $region44
      $region43: #{transformer_translator_forward.19} parent=39 // pred_region
        %p231 = scmp.lt.s32.totalorder %s13, 1
        %s232 = scalar_select %p231, %s13, 1
        %s233 = smul.addr %s232, 2
        %s234 = smul.addr %s233, 4
        %s235 = scalar_lea.vmem %s0, %s234
      $region44: #{transformer_translator_forward.19} parent=39 // pred_fallthru
        _
    $region40: #{transformer_translator_forward.19} parent=5 // pred_fallthru
      _
    %p236 = scmp.le.s32.totalorder 1, %s13
    %p237 = scmp.lt.s32.totalorder %s13, 3
    %p238 = pnand %p236, %p237
    %p239 = pneg %p238
    // Predicated region
    $region45: #{transformer_translator_forward.19} parent=5 // pred_check
      _
    $region46: #{transformer_translator_forward.19} parent=5 // pred_check_branch
      %241 = sbr.rel (%p238) target = $region48
    $region47: #{transformer_translator_forward.19} parent=5 // pred_region
      %s242 = ssub.s32 %s13, 1
      %p243 = scmp.lt.s32.totalorder %s18, 1
      %s244 = scalar_select %p243, %s18, 1
      %s245 = smul.addr %s244, 2
      %s246 = smul.addr %s245, 4
      %s247 = scalar_lea.vmem %s0, %s246
      %p248 = pneg %p39
      %p249 = pneg %p36
      %p250 = pneg %p60
      %p251 = pneg %p57
      %p252 = pneg %p81
      %p253 = pneg %p78
      %p254 = pneg %p102
      %p255 = pneg %p99
      %p256 = pneg %p123
      %p257 = pneg %p120
      %p258 = pneg %p144
      %p259 = pneg %p141
      %p260 = pneg %p165
      %p261 = pneg %p162
      %p262 = pneg %p191
      %p263 = pneg %p188
      %p264 = scmp.lt.s32.totalorder %s18, 1
      %s265 = scalar_select %p264, %s18, 1
      %s266 = smul.addr %s265, 2
      %s267 = smul.addr %s266, 4
      %s268 = scalar_lea.vmem %s7, %s267
      %p269 = scmp.lt.s32.totalorder %s18, 1
      %s270 = scalar_select %p269, %s18, 1
      %s271 = smul.addr %s270, 2
      %s272 = smul.addr %s271, 4
      %s273 = scalar_lea.vmem %s0, %s272
      %p274 = scmp.lt.s32.totalorder %s18, 1
      %s275 = scalar_select %p274, %s18, 1
      %s276 = smul.addr %s275, 2
      %s277 = smul.addr %s276, 4
      %s278 = scalar_lea.vmem %s7, %s277
      %v280 = vld [vmem:[%s273] sm:$0xf]
      %v281 = vld [vmem:[%s273 + $0x4] sm:$0xf]
      %v282 = vld [vmem:[%s1] sm:$0xf]
      %v283 = vld [vmem:[%s1 + $0x4] sm:$0xf]
      %v284 = vld [vmem:[%s1 + $0x8] sm:$0xf]
      %v285 = vld [vmem:[%s1 + $0xc] sm:$0xf]
      %v286 = vld [vmem:[%s1 + $0x10] sm:$0xf]
      %v287 = vld [vmem:[%s1 + $0x14] sm:$0xf]
      %v288 = vld [vmem:[%s1 + $0x18] sm:$0xf]
      %v289 = vld [vmem:[%s1 + $0x1c] sm:$0xf]
      %v290 = vld [vmem:[%s2] sm:$0x1]
      %v292 = vlaneseq
      %v293 = vshrl.u32 %v292, 7
      %v294 = vsub.s32 0, %v293
      %v295 = vrot.slane %v290, %v294
      %v299 = vunpack.c.l.b16 %v280
      %v300 = vunpack.c.l.b16 %v281
      %v301 = vpack.c.b16 %v300, %v299
      %v310 = vunpack.c.l.b16 %v282
      %v311 = vunpack.c.l.b16 %v283
      %v312 = vunpack.c.l.b16 %v284
      %v313 = vunpack.c.l.b16 %v285
      %v314 = vunpack.c.l.b16 %v286
      %v315 = vunpack.c.l.b16 %v287
      %v316 = vunpack.c.l.b16 %v288
      %v317 = vunpack.c.l.b16 %v289
      %v318 = vpack.c.b16 %v311, %v310
      %v319 = vpack.c.b16 %v313, %v312
      %v320 = vpack.c.b16 %v315, %v314
      %v321 = vpack.c.b16 %v317, %v316
      %vm326 = vcmask 523264
      %v328 = vsel %vm326, %v301, 0
      %330 = vmatprep.subr.bf16.mxu0 0
      %331 = vmatpush1.bf16.msra.mxu0 %v318
      %332 = vmatprep.subr.bf16.mxu0 0
      %333 = vmatpush1.bf16.msra.mxu0 %v319
      %334 = vmatprep.subr.bf16.mxu0 0
      %335 = vmatpush1.bf16.msra.mxu0 %v320
      %336 = vmatprep.subr.bf16.mxu0 0
      %337 = vmatpush1.bf16.msra.mxu0 %v321
      %338 = vmatprep.subr.bf16.mxu0 0
      %339 = vmatpush1.bf16.msra.mxu0 0
      %340 = vmatprep.subr.bf16.mxu0 0
      %341 = vmatpush1.bf16.msra.mxu0 0
      %342 = vmatprep.subr.bf16.mxu0 0
      %343 = vmatpush1.bf16.msra.mxu0 0
      %344 = vmatprep.subr.bf16.mxu0 0
      %345 = vmatpush1.bf16.msra.mxu0 0
      %346 = vmatprep.subr.bf16.mxu0 0
      %347 = vmatpush1.bf16.msra.mxu0 0
      %348 = vmatprep.subr.bf16.mxu0 0
      %349 = vmatpush1.bf16.msra.mxu0 0
      %350 = vmatprep.subr.bf16.mxu0 0
      %351 = vmatpush1.bf16.msra.mxu0 0
      %352 = vmatprep.subr.bf16.mxu0 0
      %353 = vmatpush1.bf16.msra.mxu0 0
      %354 = vmatprep.subr.bf16.mxu0 0
      %355 = vmatpush1.bf16.msra.mxu0 0
      %356 = vmatprep.subr.bf16.mxu0 0
      %357 = vmatpush1.bf16.msra.mxu0 0
      %358 = vmatprep.subr.bf16.mxu0 0
      %359 = vmatpush1.bf16.msra.mxu0 0
      %360 = vmatprep.subr.bf16.mxu0 0
      %361 = vmatpush1.bf16.msra.mxu0 0
      %362 = vmatprep.mubr.bf16.mxu0 0
      %363 = vmatmul.mubr.bf16.gmra.mrb[0].mxu0 %v328
      %v364 = vpop.f32.mrb[0].mxu0
      %v365 = vadd.f32 %v295, %v364
      %v366 = vpop.f32.mrb[0].mxu0
      %v367 = vpop.f32.mrb[0].mxu0
      %v368 = vadd.f32 %v295, %v367
      %v369 = vpop.f32.mrb[0].mxu0
      %370 = vdwg.mxu0
      %v371 = vmax.f32 %v365, 0.0
      %v372 = vmax.f32 %v368, 0.0
      %v373 = vpack.c.bf16 %v372, %v371
      %v374 = vld [vmem:[%s3] sm:$0xf]
      %v375 = vld [vmem:[%s3 + $0x4] sm:$0xf]
      %v376 = vld [vmem:[%s3 + $0x8] sm:$0xf]
      %v377 = vld [vmem:[%s3 + $0xc] sm:$0xf]
      %v378 = vld [vmem:[%s3 + $0x10] sm:$0xf]
      %v379 = vld [vmem:[%s3 + $0x14] sm:$0xf]
      %v380 = vld [vmem:[%s3 + $0x18] sm:$0xf]
      %v381 = vld [vmem:[%s3 + $0x1c] sm:$0xf]
      %v382 = vld [vmem:[%s3 + $0x20] sm:$0xf]
      %v383 = vld [vmem:[%s3 + $0x24] sm:$0xf]
      %v384 = vld [vmem:[%s3 + $0x28] sm:$0xf]
      %v385 = vld [vmem:[%s3 + $0x2c] sm:$0xf]
      %v386 = vld [vmem:[%s3 + $0x30] sm:$0xf]
      %v387 = vld [vmem:[%s3 + $0x34] sm:$0xf]
      %v388 = vld [vmem:[%s3 + $0x38] sm:$0xf]
      %v389 = vld [vmem:[%s3 + $0x3c] sm:$0xf]
      %v390 = vld [vmem:[%s4] sm:$0x1]
      %v392 = vlaneseq
      %v393 = vshrl.u32 %v392, 7
      %v394 = vsub.s32 0, %v393
      %v395 = vrot.slane %v390, %v394
      %v413 = vunpack.c.l.b16 %v374
      %v414 = vunpack.c.l.b16 %v375
      %v415 = vunpack.c.l.b16 %v376
      %v416 = vunpack.c.l.b16 %v377
      %v417 = vunpack.c.l.b16 %v378
      %v418 = vunpack.c.l.b16 %v379
      %v419 = vunpack.c.l.b16 %v380
      %v420 = vunpack.c.l.b16 %v381
      %v421 = vunpack.c.l.b16 %v382
      %v422 = vunpack.c.l.b16 %v383
      %v423 = vunpack.c.l.b16 %v384
      %v424 = vunpack.c.l.b16 %v385
      %v425 = vunpack.c.l.b16 %v386
      %v426 = vunpack.c.l.b16 %v387
      %v427 = vunpack.c.l.b16 %v388
      %v428 = vunpack.c.l.b16 %v389
      %v429 = vpack.c.b16 %v414, %v413
      %v430 = vpack.c.b16 %v416, %v415
      %v431 = vpack.c.b16 %v418, %v417
      %v432 = vpack.c.b16 %v420, %v419
      %v433 = vpack.c.b16 %v422, %v421
      %v434 = vpack.c.b16 %v424, %v423
      %v435 = vpack.c.b16 %v426, %v425
      %v436 = vpack.c.b16 %v428, %v427
      %445 = vmatprep.subr.bf16.mxu0 0
      %446 = vmatpush1.bf16.msra.mxu0 %v429
      %447 = vmatprep.subr.bf16.mxu0 0
      %448 = vmatpush1.bf16.msra.mxu0 %v430
      %449 = vmatprep.subr.bf16.mxu0 0
      %450 = vmatpush1.bf16.msra.mxu0 %v431
      %451 = vmatprep.subr.bf16.mxu0 0
      %452 = vmatpush1.bf16.msra.mxu0 %v432
      %453 = vmatprep.subr.bf16.mxu0 0
      %454 = vmatpush1.bf16.msra.mxu0 %v433
      %455 = vmatprep.subr.bf16.mxu0 0
      %456 = vmatpush1.bf16.msra.mxu0 %v434
      %457 = vmatprep.subr.bf16.mxu0 0
      %458 = vmatpush1.bf16.msra.mxu0 %v435
      %459 = vmatprep.subr.bf16.mxu0 0
      %460 = vmatpush1.bf16.msra.mxu0 %v436
      %461 = vmatprep.subr.bf16.mxu0 0
      %462 = vmatpush1.bf16.msra.mxu0 0
      %463 = vmatprep.subr.bf16.mxu0 0
      %464 = vmatpush1.bf16.msra.mxu0 0
      %465 = vmatprep.subr.bf16.mxu0 0
      %466 = vmatpush1.bf16.msra.mxu0 0
      %467 = vmatprep.subr.bf16.mxu0 0
      %468 = vmatpush1.bf16.msra.mxu0 0
      %469 = vmatprep.subr.bf16.mxu0 0
      %470 = vmatpush1.bf16.msra.mxu0 0
      %471 = vmatprep.subr.bf16.mxu0 0
      %472 = vmatpush1.bf16.msra.mxu0 0
      %473 = vmatprep.subr.bf16.mxu0 0
      %474 = vmatpush1.bf16.msra.mxu0 0
      %475 = vmatprep.subr.bf16.mxu0 0
      %476 = vmatpush1.bf16.msra.mxu0 0
      %477 = vmatprep.mubr.bf16.mxu0 0
      %478 = vmatmul.mubr.bf16.gmra.mrb[0].mxu0 %v373
      %v479 = vpop.f32.mrb[0].mxu0
      %v480 = vadd.f32 %v395, %v479
      %v481 = vpop.f32.mrb[0].mxu0
      %v482 = vpop.f32.mrb[0].mxu0
      %v483 = vadd.f32 %v395, %v482
      %v484 = vpop.f32.mrb[0].mxu0
      %485 = vdwg.mxu0
      %v486 = vunpack.c.l.bf16 %v280
      %v487 = vunpack.c.l.bf16 %v281
      %v488 = vadd.f32 %v480, %v486
      %v489 = vadd.f32 %v483, %v487
      %v490 = vld [vmem:[%s5] sm:$0x1]
      %v491 = vld [vmem:[%s6] sm:$0x1]
      %v492 = vsel %vm326, %v488, 0.0
      %493 = vadd.xlane.f32.xlu0 %v492
      %v494 = vpop.xlane.xlu0 %493
      %v495 = vsel %vm326, %v489, 0.0
      %496 = vadd.xlane.f32.xlu0 %v495
      %v497 = vpop.xlane.xlu0 %496
      %v498 = vrcp.pop 64.0
      %v499 = vmul.f32 %v494, %v498
      %v500 = vmul.f32 %v497, %v498
      %v501 = vsub.f32 %v488, %v499
      %v502 = vsub.f32 %v489, %v500
      %v503 = vmul.f32 %v501, %v501
      %v504 = vmul.f32 %v502, %v502
      %v505 = vsel %vm326, %v503, 0.0
      %506 = vadd.xlane.f32.xlu0 %v505
      %v507 = vpop.xlane.xlu0 %506
      %v508 = vsel %vm326, %v504, 0.0
      %509 = vadd.xlane.f32.xlu0 %v508
      %v510 = vpop.xlane.xlu0 %509
      %v511 = vmul.f32 %v507, %v498
      %v512 = vmul.f32 %v510, %v498
      %v513 = vadd.f32 %v511, 1e-05
      %v514 = vadd.f32 %v512, 1e-05
      %v515 = vrsqrt.pop %v513
      %v516 = vrsqrt.pop %v514
      %v517 = vmul.f32 %v501, %v515
      %v518 = vmul.f32 %v502, %v516
      %v520 = vlaneseq
      %v521 = vshrl.u32 %v520, 7
      %v522 = vsub.s32 0, %v521
      %v523 = vrot.slane %v490, %v522
      %v525 = vmul.f32 %v517, %v523
      %v526 = vmul.f32 %v518, %v523
      %v528 = vlaneseq
      %v529 = vshrl.u32 %v528, 7
      %v530 = vsub.s32 0, %v529
      %v531 = vrot.slane %v491, %v530
      %v533 = vadd.f32 %v525, %v531
      %v534 = vadd.f32 %v526, %v531
      %v535 = vpack.c.bf16 %v534, %v533
      %v537 = vunpack.c.l.b16 %v535
      %v538 = vunpack.c.h.b16 %v535
      %v539 = vpack.c.b16 %v537, %v537
      %v540 = vpack.c.b16 %v538, %v538
      %vm543 = vcmask 519168
      %544 = vst.msk [vmem:[%s278] sm:$0xf] %vm543, %v539
      %545 = vst.msk [vmem:[%s278 + $0x4] sm:$0xf] %vm543, %v540
      %p546 = scmp.lt.s32.totalorder %s18, 1
      %s547 = scalar_select %p546, %s18, 1
      %s548 = smul.addr %s547, 2
      %s549 = smul.addr %s548, 4
      %s550 = scalar_lea.vmem %s7, %s549
      // Predicated region
      $region49: #{transformer_translator_forward.19} parent=47 // pred_check
        %p551 = pneg %p188
      $region50: #{transformer_translator_forward.19} parent=47 // pred_check_branch
        %553 = sbr.rel (%p551) target = $region52
      $region51: #{transformer_translator_forward.19} parent=47 // pred_region
        _
      $region52: #{transformer_translator_forward.19} parent=47 // pred_fallthru
        _
    $region48: #{transformer_translator_forward.19} parent=5 // pred_fallthru
      _
    %p554 = scmp.le.s32.totalorder 2, %s13
    // Predicated region
    $region53: #{transformer_translator_forward.19} parent=5 // pred_check
      %p555 = pneg %p554
    $region54: #{transformer_translator_forward.19} parent=5 // pred_check_branch
      %557 = sbr.rel (%p555) target = $region56
    $region55: #{transformer_translator_forward.19} parent=5 // pred_region
      %s558 = ssub.s32 %s13, 2
      // Predicated region
      $region57: #{transformer_translator_forward.19} parent=55 // pred_check
        %p559 = pneg %p194
      $region58: #{transformer_translator_forward.19} parent=55 // pred_check_branch
        %561 = sbr.rel (%p559) target = $region60
      $region59: #{transformer_translator_forward.19} parent=55 // pred_region
        %p562 = scmp.lt.s32.totalorder %s19, 1
        %s563 = scalar_select %p562, %s19, 1
        %s564 = smul.addr %s563, 2
        %s565 = smul.addr %s564, 4
        %s566 = scalar_lea.vmem %s7, %s565
      $region60: #{transformer_translator_forward.19} parent=55 // pred_fallthru
        _
    $region56: #{transformer_translator_forward.19} parent=5 // pred_fallthru
      _
  $region6: #{transformer_translator_forward.19} parent=0 // loop_footer
    %s17 = sadd.s32 1, %s13
  $region7: #{transformer_translator_forward.19} parent=0 // loop_footer_branch
    %12 = sbr.rel target = $region3
  $region8: #{transformer_translator_forward.19} parent=0 // loop_exit
    _

// kernel: transformer_translator_forward.18
$region0: #{transformer_translator_forward.18}
  #allocation0 [shape = 'u32[]', space=smem, size = 0x4, offset = 0x4, fixed_abs, tag = 'smem constant byte address 0x4 - core index']
  #allocation1 [shape = 'u32[144,128]{1,0:T(1,128)}', space=vmem, size = 0x12000, scoped, tag = 'internal scratch']
  %s0 = inlined_call_operand.vmem [shape: bf16[2,16,64], index: 0, kind: input, shape index: {}]
  %s1 = inlined_call_operand.vmem [shape: bf16[2,8,64], index: 1, kind: input, shape index: {}]
  %s2 = inlined_call_operand.vmem [shape: bf16[4,64,16], index: 2, kind: input, shape index: {}]
  %s3 = inlined_call_operand.vmem [shape: f32[4,1,16], index: 3, kind: input, shape index: {}]
  %s4 = inlined_call_operand.vmem [shape: bf16[4,64,16], index: 4, kind: input, shape index: {}]
  %s5 = inlined_call_operand.vmem [shape: f32[4,1,16], index: 5, kind: input, shape index: {}]
  %s6 = inlined_call_operand.vmem [shape: bf16[4,64,16], index: 6, kind: input, shape index: {}]
  %s7 = inlined_call_operand.vmem [shape: f32[4,1,16], index: 7, kind: input, shape index: {}]
  %s8 = inlined_call_operand.vmem [shape: bf16[4,16,64], index: 8, kind: input, shape index: {}]
  %s9 = inlined_call_operand.vmem [shape: f32[1,64], index: 9, kind: input, shape index: {}]
  %s10 = inlined_call_operand.vmem [shape: f32[1,64], index: 10, kind: input, shape index: {}]
  %s11 = inlined_call_operand.vmem [shape: f32[1,64], index: 11, kind: input, shape index: {}]
  %s12 = inlined_call_operand.vmem [shape: bf16[2,16,64], index: 12, kind: output, shape index: {}]
  %s13 = sld [smem:[#allocation0]]
  $region81: #{transformer_translator_forward.18} parent=0
    _
  %s15 = ssub.s32 1, %s13
  %s16 = scalar_select 0, %s15, %s13
  loop: start=0, step=1, limit=4
  $region2: #{transformer_translator_forward.18} parent=0 // loop_pre_header
    _
  $region3: #{transformer_translator_forward.18} parent=0 // loop_header
    %s18 = sphi 0, %s22
    %p19 = scmp.ge.s32.totalorder %s18, 4
    %s28 = sphi 0, %s30
    %s31 = sphi 0, %s28
    %s32 = sphi 0, %s31
    %s48 = sphi 0, %s32
    %s54 = sphi 0, %s56
    %s57 = sphi 0, %s54
    %s58 = sphi 0, %s57
    %s74 = sphi 0, %s58
    %s78 = sphi 0, %s78
    %s80 = sphi 0, %s78
    %s81 = sphi 0, %s80
    %s95 = sphi 0, %s81
    %s99 = sphi 0, %s99
    %s101 = sphi 0, %s99
    %s102 = sphi 0, %s101
    %s116 = sphi 0, %s102
    %s120 = sphi 0, %s120
    %s122 = sphi 0, %s120
    %s123 = sphi 0, %s122
    %s137 = sphi 0, %s123
    %s141 = sphi 0, %s141
    %s143 = sphi 0, %s141
    %s144 = sphi 0, %s143
    %s158 = sphi 0, %s144
    %s162 = sphi 0, %s162
    %s164 = sphi 0, %s162
    %s165 = sphi 0, %s164
    %s179 = sphi 0, %s165
    %s183 = sphi 0, %s183
    %s185 = sphi 0, %s183
    %s186 = sphi 0, %s185
    %s200 = sphi 0, %s186
    %s204 = sphi 0, %s204
    %s206 = sphi 0, %s204
    %s207 = sphi 0, %s206
    %s221 = sphi 0, %s207
    %s225 = sphi 0, %s225
    %s227 = sphi 0, %s225
    %s228 = sphi 0, %s227
    %s242 = sphi 0, %s228
    %s246 = sphi 0, %s246
    %s248 = sphi 0, %s246
    %s249 = sphi 0, %s248
    %s263 = sphi 0, %s249
    %s267 = sphi 0, %s267
    %s269 = sphi 0, %s267
    %s270 = sphi 0, %s269
    %s284 = sphi 0, %s270
    %s290 = sphi 0, %s292
    %s293 = sphi 0, %s290
    %s294 = sphi 0, %s293
    %s310 = sphi 0, %s294
  $region4: #{transformer_translator_forward.18} parent=0 // loop_header_branch
    %21 = sbr.rel (%p19) target = $region8
  $region5: #{transformer_translator_forward.18} parent=0 // loop_body
    %s23 = ssub.s32 %s18, 1
    %s24 = ssub.s32 %s18, 2
    %s25 = sadd.s32 %s18, 1
    %s26 = ssub.s32 %s18, %s25
    %p27 = scmp.eq.s32.totalorder %s26, 0
    %s29 = sadd.s32 %s28, 1
    %s30 = scalar_select %p27, %s28, %s29
    %p33 = pneg %p27
    %p34 = scmp.eq.s32.totalorder %s18, 1
    %p35 = por %p33, %p34
    %p36 = scmp.ne.s32.totalorder %s28, %s31
    %p37 = scmp.eq.s32.totalorder %s18, 0
    %p38 = por %p36, %p37
    %p39 = scmp.ne.s32.totalorder %s28, %s31
    %p40 = scmp.eq.s32.totalorder %s23, 1
    %p41 = por %p39, %p40
    %p42 = scmp.ne.s32.totalorder %s31, %s32
    %p43 = scmp.eq.s32.totalorder %s23, 0
    %p44 = por %p42, %p43
    %p45 = scmp.ne.s32.totalorder %s31, %s32
    %p46 = scmp.eq.s32.totalorder %s24, 1
    %p47 = por %p45, %p46
    %p49 = scmp.ne.s32.totalorder %s32, %s48
    %p50 = scmp.eq.s32.totalorder %s24, 0
    %p51 = por %p49, %p50
    %s52 = ssub.s32 %s18, %s25
    %p53 = scmp.eq.s32.totalorder %s52, 0
    %s55 = sadd.s32 %s54, 1
    %s56 = scalar_select %p53, %s54, %s55
    %p59 = pneg %p53
    %p60 = scmp.eq.s32.totalorder %s18, 1
    %p61 = por %p59, %p60
    %p62 = scmp.ne.s32.totalorder %s54, %s57
    %p63 = scmp.eq.s32.totalorder %s18, 0
    %p64 = por %p62, %p63
    %p65 = scmp.ne.s32.totalorder %s54, %s57
    %p66 = scmp.eq.s32.totalorder %s23, 1
    %p67 = por %p65, %p66
    %p68 = scmp.ne.s32.totalorder %s57, %s58
    %p69 = scmp.eq.s32.totalorder %s23, 0
    %p70 = por %p68, %p69
    %p71 = scmp.ne.s32.totalorder %s57, %s58
    %p72 = scmp.eq.s32.totalorder %s24, 1
    %p73 = por %p71, %p72
    %p75 = scmp.ne.s32.totalorder %s58, %s74
    %p76 = scmp.eq.s32.totalorder %s24, 0
    %p77 = por %p75, %p76
    %s79 = sadd.s32 %s78, 1
    %p82 = scmp.eq.s32.totalorder %s18, 1
    %p83 = scmp.ne.s32.totalorder %s78, %s80
    %p84 = scmp.eq.s32.totalorder %s18, 0
    %p85 = por %p83, %p84
    %p86 = scmp.ne.s32.totalorder %s78, %s80
    %p87 = scmp.eq.s32.totalorder %s23, 1
    %p88 = por %p86, %p87
    %p89 = scmp.ne.s32.totalorder %s80, %s81
    %p90 = scmp.eq.s32.totalorder %s23, 0
    %p91 = por %p89, %p90
    %p92 = scmp.ne.s32.totalorder %s80, %s81
    %p93 = scmp.eq.s32.totalorder %s24, 1
    %p94 = por %p92, %p93
    %p96 = scmp.ne.s32.totalorder %s81, %s95
    %p97 = scmp.eq.s32.totalorder %s24, 0
    %p98 = por %p96, %p97
    %s100 = sadd.s32 %s99, 1
    %p103 = scmp.eq.s32.totalorder %s18, 1
    %p104 = scmp.ne.s32.totalorder %s99, %s101
    %p105 = scmp.eq.s32.totalorder %s18, 0
    %p106 = por %p104, %p105
    %p107 = scmp.ne.s32.totalorder %s99, %s101
    %p108 = scmp.eq.s32.totalorder %s23, 1
    %p109 = por %p107, %p108
    %p110 = scmp.ne.s32.totalorder %s101, %s102
    %p111 = scmp.eq.s32.totalorder %s23, 0
    %p112 = por %p110, %p111
    %p113 = scmp.ne.s32.totalorder %s101, %s102
    %p114 = scmp.eq.s32.totalorder %s24, 1
    %p115 = por %p113, %p114
    %p117 = scmp.ne.s32.totalorder %s102, %s116
    %p118 = scmp.eq.s32.totalorder %s24, 0
    %p119 = por %p117, %p118
    %s121 = sadd.s32 %s120, 1
    %p124 = scmp.eq.s32.totalorder %s18, 1
    %p125 = scmp.ne.s32.totalorder %s120, %s122
    %p126 = scmp.eq.s32.totalorder %s18, 0
    %p127 = por %p125, %p126
    %p128 = scmp.ne.s32.totalorder %s120, %s122
    %p129 = scmp.eq.s32.totalorder %s23, 1
    %p130 = por %p128, %p129
    %p131 = scmp.ne.s32.totalorder %s122, %s123
    %p132 = scmp.eq.s32.totalorder %s23, 0
    %p133 = por %p131, %p132
    %p134 = scmp.ne.s32.totalorder %s122, %s123
    %p135 = scmp.eq.s32.totalorder %s24, 1
    %p136 = por %p134, %p135
    %p138 = scmp.ne.s32.totalorder %s123, %s137
    %p139 = scmp.eq.s32.totalorder %s24, 0
    %p140 = por %p138, %p139
    %s142 = sadd.s32 %s141, 1
    %p145 = scmp.eq.s32.totalorder %s18, 1
    %p146 = scmp.ne.s32.totalorder %s141, %s143
    %p147 = scmp.eq.s32.totalorder %s18, 0
    %p148 = por %p146, %p147
    %p149 = scmp.ne.s32.totalorder %s141, %s143
    %p150 = scmp.eq.s32.totalorder %s23, 1
    %p151 = por %p149, %p150
    %p152 = scmp.ne.s32.totalorder %s143, %s144
    %p153 = scmp.eq.s32.totalorder %s23, 0
    %p154 = por %p152, %p153
    %p155 = scmp.ne.s32.totalorder %s143, %s144
    %p156 = scmp.eq.s32.totalorder %s24, 1
    %p157 = por %p155, %p156
    %p159 = scmp.ne.s32.totalorder %s144, %s158
    %p160 = scmp.eq.s32.totalorder %s24, 0
    %p161 = por %p159, %p160
    %s163 = sadd.s32 %s162, 1
    %p166 = scmp.eq.s32.totalorder %s18, 1
    %p167 = scmp.ne.s32.totalorder %s162, %s164
    %p168 = scmp.eq.s32.totalorder %s18, 0
    %p169 = por %p167, %p168
    %p170 = scmp.ne.s32.totalorder %s162, %s164
    %p171 = scmp.eq.s32.totalorder %s23, 1
    %p172 = por %p170, %p171
    %p173 = scmp.ne.s32.totalorder %s164, %s165
    %p174 = scmp.eq.s32.totalorder %s23, 0
    %p175 = por %p173, %p174
    %p176 = scmp.ne.s32.totalorder %s164, %s165
    %p177 = scmp.eq.s32.totalorder %s24, 1
    %p178 = por %p176, %p177
    %p180 = scmp.ne.s32.totalorder %s165, %s179
    %p181 = scmp.eq.s32.totalorder %s24, 0
    %p182 = por %p180, %p181
    %s184 = sadd.s32 %s183, 1
    %p187 = scmp.eq.s32.totalorder %s18, 1
    %p188 = scmp.ne.s32.totalorder %s183, %s185
    %p189 = scmp.eq.s32.totalorder %s18, 0
    %p190 = por %p188, %p189
    %p191 = scmp.ne.s32.totalorder %s183, %s185
    %p192 = scmp.eq.s32.totalorder %s23, 1
    %p193 = por %p191, %p192
    %p194 = scmp.ne.s32.totalorder %s185, %s186
    %p195 = scmp.eq.s32.totalorder %s23, 0
    %p196 = por %p194, %p195
    %p197 = scmp.ne.s32.totalorder %s185, %s186
    %p198 = scmp.eq.s32.totalorder %s24, 1
    %p199 = por %p197, %p198
    %p201 = scmp.ne.s32.totalorder %s186, %s200
    %p202 = scmp.eq.s32.totalorder %s24, 0
    %p203 = por %p201, %p202
    %s205 = sadd.s32 %s204, 1
    %p208 = scmp.eq.s32.totalorder %s18, 1
    %p209 = scmp.ne.s32.totalorder %s204, %s206
    %p210 = scmp.eq.s32.totalorder %s18, 0
    %p211 = por %p209, %p210
    %p212 = scmp.ne.s32.totalorder %s204, %s206
    %p213 = scmp.eq.s32.totalorder %s23, 1
    %p214 = por %p212, %p213
    %p215 = scmp.ne.s32.totalorder %s206, %s207
    %p216 = scmp.eq.s32.totalorder %s23, 0
    %p217 = por %p215, %p216
    %p218 = scmp.ne.s32.totalorder %s206, %s207
    %p219 = scmp.eq.s32.totalorder %s24, 1
    %p220 = por %p218, %p219
    %p222 = scmp.ne.s32.totalorder %s207, %s221
    %p223 = scmp.eq.s32.totalorder %s24, 0
    %p224 = por %p222, %p223
    %s226 = sadd.s32 %s225, 1
    %p229 = scmp.eq.s32.totalorder %s18, 1
    %p230 = scmp.ne.s32.totalorder %s225, %s227
    %p231 = scmp.eq.s32.totalorder %s18, 0
    %p232 = por %p230, %p231
    %p233 = scmp.ne.s32.totalorder %s225, %s227
    %p234 = scmp.eq.s32.totalorder %s23, 1
    %p235 = por %p233, %p234
    %p236 = scmp.ne.s32.totalorder %s227, %s228
    %p237 = scmp.eq.s32.totalorder %s23, 0
    %p238 = por %p236, %p237
    %p239 = scmp.ne.s32.totalorder %s227, %s228
    %p240 = scmp.eq.s32.totalorder %s24, 1
    %p241 = por %p239, %p240
    %p243 = scmp.ne.s32.totalorder %s228, %s242
    %p244 = scmp.eq.s32.totalorder %s24, 0
    %p245 = por %p243, %p244
    %s247 = sadd.s32 %s246, 1
    %p250 = scmp.eq.s32.totalorder %s18, 1
    %p251 = scmp.ne.s32.totalorder %s246, %s248
    %p252 = scmp.eq.s32.totalorder %s18, 0
    %p253 = por %p251, %p252
    %p254 = scmp.ne.s32.totalorder %s246, %s248
    %p255 = scmp.eq.s32.totalorder %s23, 1
    %p256 = por %p254, %p255
    %p257 = scmp.ne.s32.totalorder %s248, %s249
    %p258 = scmp.eq.s32.totalorder %s23, 0
    %p259 = por %p257, %p258
    %p260 = scmp.ne.s32.totalorder %s248, %s249
    %p261 = scmp.eq.s32.totalorder %s24, 1
    %p262 = por %p260, %p261
    %p264 = scmp.ne.s32.totalorder %s249, %s263
    %p265 = scmp.eq.s32.totalorder %s24, 0
    %p266 = por %p264, %p265
    %s268 = sadd.s32 %s267, 1
    %p271 = scmp.eq.s32.totalorder %s18, 1
    %p272 = scmp.ne.s32.totalorder %s267, %s269
    %p273 = scmp.eq.s32.totalorder %s18, 0
    %p274 = por %p272, %p273
    %p275 = scmp.ne.s32.totalorder %s267, %s269
    %p276 = scmp.eq.s32.totalorder %s23, 1
    %p277 = por %p275, %p276
    %p278 = scmp.ne.s32.totalorder %s269, %s270
    %p279 = scmp.eq.s32.totalorder %s23, 0
    %p280 = por %p278, %p279
    %p281 = scmp.ne.s32.totalorder %s269, %s270
    %p282 = scmp.eq.s32.totalorder %s24, 1
    %p283 = por %p281, %p282
    %p285 = scmp.ne.s32.totalorder %s270, %s284
    %p286 = scmp.eq.s32.totalorder %s24, 0
    %p287 = por %p285, %p286
    %s288 = ssub.s32 %s18, %s25
    %p289 = scmp.eq.s32.totalorder %s288, 0
    %s291 = sadd.s32 %s290, 1
    %s292 = scalar_select %p289, %s290, %s291
    %p295 = pneg %p289
    %p296 = scmp.eq.s32.totalorder %s18, 1
    %p297 = por %p295, %p296
    %p298 = scmp.ne.s32.totalorder %s290, %s293
    %p299 = scmp.eq.s32.totalorder %s18, 0
    %p300 = por %p298, %p299
    %p301 = scmp.ne.s32.totalorder %s290, %s293
    %p302 = scmp.eq.s32.totalorder %s23, 1
    %p303 = por %p301, %p302
    %p304 = scmp.ne.s32.totalorder %s293, %s294
    %p305 = scmp.eq.s32.totalorder %s23, 0
    %p306 = por %p304, %p305
    %p307 = scmp.ne.s32.totalorder %s293, %s294
    %p308 = scmp.eq.s32.totalorder %s24, 1
    %p309 = por %p307, %p308
    %p311 = scmp.ne.s32.totalorder %s294, %s310
    %p312 = scmp.eq.s32.totalorder %s24, 0
    %p313 = por %p311, %p312
    %p314 = scmp.le.s32.totalorder 1, %s18
    %p315 = scmp.lt.s32.totalorder %s18, 3
    %p316 = pnand %p314, %p315
    %p317 = pneg %p316
    // Predicated region
    $region9: #{transformer_translator_forward.18} parent=5 // pred_check
      _
    $region10: #{transformer_translator_forward.18} parent=5 // pred_check_branch
      %319 = sbr.rel (%p316) target = $region12
    $region11: #{transformer_translator_forward.18} parent=5 // pred_region
      %s320 = ssub.s32 %s18, 1
      // Predicated region
      $region13: #{transformer_translator_forward.18} parent=11 // pred_check
        %p321 = pneg %p91
      $region14: #{transformer_translator_forward.18} parent=11 // pred_check_branch
        %323 = sbr.rel (%p321) target = $region16
      $region15: #{transformer_translator_forward.18} parent=11 // pred_region
        _
      $region16: #{transformer_translator_forward.18} parent=11 // pred_fallthru
        _
      // Predicated region
      $region17: #{transformer_translator_forward.18} parent=11 // pred_check
        %p324 = pneg %p112
      $region18: #{transformer_translator_forward.18} parent=11 // pred_check_branch
        %326 = sbr.rel (%p324) target = $region20
      $region19: #{transformer_translator_forward.18} parent=11 // pred_region
        _
      $region20: #{transformer_translator_forward.18} parent=11 // pred_fallthru
        _
      // Predicated region
      $region21: #{transformer_translator_forward.18} parent=11 // pred_check
        %p327 = pneg %p133
      $region22: #{transformer_translator_forward.18} parent=11 // pred_check_branch
        %329 = sbr.rel (%p327) target = $region24
      $region23: #{transformer_translator_forward.18} parent=11 // pred_region
        _
      $region24: #{transformer_translator_forward.18} parent=11 // pred_fallthru
        _
      // Predicated region
      $region25: #{transformer_translator_forward.18} parent=11 // pred_check
        %p330 = pneg %p154
      $region26: #{transformer_translator_forward.18} parent=11 // pred_check_branch
        %332 = sbr.rel (%p330) target = $region28
      $region27: #{transformer_translator_forward.18} parent=11 // pred_region
        _
      $region28: #{transformer_translator_forward.18} parent=11 // pred_fallthru
        _
      // Predicated region
      $region29: #{transformer_translator_forward.18} parent=11 // pred_check
        %p333 = pneg %p175
      $region30: #{transformer_translator_forward.18} parent=11 // pred_check_branch
        %335 = sbr.rel (%p333) target = $region32
      $region31: #{transformer_translator_forward.18} parent=11 // pred_region
        _
      $region32: #{transformer_translator_forward.18} parent=11 // pred_fallthru
        _
      // Predicated region
      $region33: #{transformer_translator_forward.18} parent=11 // pred_check
        %p336 = pneg %p196
      $region34: #{transformer_translator_forward.18} parent=11 // pred_check_branch
        %338 = sbr.rel (%p336) target = $region36
      $region35: #{transformer_translator_forward.18} parent=11 // pred_region
        _
      $region36: #{transformer_translator_forward.18} parent=11 // pred_fallthru
        _
      // Predicated region
      $region37: #{transformer_translator_forward.18} parent=11 // pred_check
        %p339 = pneg %p217
      $region38: #{transformer_translator_forward.18} parent=11 // pred_check_branch
        %341 = sbr.rel (%p339) target = $region40
      $region39: #{transformer_translator_forward.18} parent=11 // pred_region
        _
      $region40: #{transformer_translator_forward.18} parent=11 // pred_fallthru
        _
      // Predicated region
      $region41: #{transformer_translator_forward.18} parent=11 // pred_check
        %p342 = pneg %p238
      $region42: #{transformer_translator_forward.18} parent=11 // pred_check_branch
        %344 = sbr.rel (%p342) target = $region44
      $region43: #{transformer_translator_forward.18} parent=11 // pred_region
        _
      $region44: #{transformer_translator_forward.18} parent=11 // pred_fallthru
        _
      // Predicated region
      $region45: #{transformer_translator_forward.18} parent=11 // pred_check
        %p345 = pneg %p259
      $region46: #{transformer_translator_forward.18} parent=11 // pred_check_branch
        %347 = sbr.rel (%p345) target = $region48
      $region47: #{transformer_translator_forward.18} parent=11 // pred_region
        _
      $region48: #{transformer_translator_forward.18} parent=11 // pred_fallthru
        _
      // Predicated region
      $region49: #{transformer_translator_forward.18} parent=11 // pred_check
        %p348 = pneg %p280
      $region50: #{transformer_translator_forward.18} parent=11 // pred_check_branch
        %350 = sbr.rel (%p348) target = $region52
      $region51: #{transformer_translator_forward.18} parent=11 // pred_region
        _
      $region52: #{transformer_translator_forward.18} parent=11 // pred_fallthru
        _
    $region12: #{transformer_translator_forward.18} parent=5 // pred_fallthru
      _
    %p351 = scmp.lt.s32.totalorder %s18, 2
    // Predicated region
    $region53: #{transformer_translator_forward.18} parent=5 // pred_check
      %p352 = pneg %p351
    $region54: #{transformer_translator_forward.18} parent=5 // pred_check_branch
      %354 = sbr.rel (%p352) target = $region56
    $region55: #{transformer_translator_forward.18} parent=5 // pred_region
      // Predicated region
      $region57: #{transformer_translator_forward.18} parent=55 // pred_check
        %p355 = pneg %p38
      $region58: #{transformer_translator_forward.18} parent=55 // pred_check_branch
        %357 = sbr.rel (%p355) target = $region60
      $region59: #{transformer_translator_forward.18} parent=55 // pred_region
        %p358 = scmp.lt.s32.totalorder %s18, 1
        %s359 = scalar_select %p358, %s18, 1
        %s360 = smul.addr %s359, 2
        %s361 = smul.addr %s360, 4
        %s362 = scalar_lea.vmem %s0, %s361
      $region60: #{transformer_translator_forward.18} parent=55 // pred_fallthru
        _
      // Predicated region
      $region61: #{transformer_translator_forward.18} parent=55 // pred_check
        %p363 = pneg %p64
      $region62: #{transformer_translator_forward.18} parent=55 // pred_check_branch
        %365 = sbr.rel (%p363) target = $region64
      $region63: #{transformer_translator_forward.18} parent=55 // pred_region
        %p366 = scmp.lt.s32.totalorder %s18, 1
        %s367 = scalar_select %p366, %s18, 1
        %s368 = smul.addr %s367, 4
        %s369 = scalar_lea.vmem %s1, %s368
      $region64: #{transformer_translator_forward.18} parent=55 // pred_fallthru
        _
    $region56: #{transformer_translator_forward.18} parent=5 // pred_fallthru
      _
    %p370 = scmp.le.s32.totalorder 1, %s18
    %p371 = scmp.lt.s32.totalorder %s18, 3
    %p372 = pnand %p370, %p371
    %p373 = pneg %p372
    // Predicated region
    $region65: #{transformer_translator_forward.18} parent=5 // pred_check
      _
    $region66: #{transformer_translator_forward.18} parent=5 // pred_check_branch
      %375 = sbr.rel (%p372) target = $region68
    $region67: #{transformer_translator_forward.18} parent=5 // pred_region
      %s376 = ssub.s32 %s18, 1
      %p377 = scmp.lt.s32.totalorder %s23, 1
      %s378 = scalar_select %p377, %s23, 1
      %s379 = smul.addr %s378, 2
      %s380 = smul.addr %s379, 4
      %s381 = scalar_lea.vmem %s0, %s380
      %p382 = pneg %p44
      %p383 = pneg %p41
      %p384 = scmp.lt.s32.totalorder %s23, 1
      %s385 = scalar_select %p384, %s23, 1
      %s386 = smul.addr %s385, 4
      %s387 = scalar_lea.vmem %s1, %s386
      %p388 = pneg %p70
      %p389 = pneg %p67
      %p390 = pneg %p91
      %p391 = pneg %p88
      %p392 = pneg %p112
      %p393 = pneg %p109
      %p394 = pneg %p133
      %p395 = pneg %p130
      %p396 = pneg %p154
      %p397 = pneg %p151
      %p398 = pneg %p175
      %p399 = pneg %p172
      %p400 = pneg %p196
      %p401 = pneg %p193
      %p402 = pneg %p217
      %p403 = pneg %p214
      %p404 = pneg %p238
      %p405 = pneg %p235
      %p406 = pneg %p259
      %p407 = pneg %p256
      %p408 = pneg %p280
      %p409 = pneg %p277
      %p410 = pneg %p306
      %p411 = pneg %p303
      %p412 = scmp.lt.s32.totalorder %s23, 1
      %s413 = scalar_select %p412, %s23, 1
      %s414 = smul.addr %s413, 2
      %s415 = smul.addr %s414, 4
      %s416 = scalar_lea.vmem %s12, %s415
      %p417 = scmp.lt.s32.totalorder %s23, 1
      %s418 = scalar_select %p417, %s23, 1
      %s419 = smul.addr %s418, 2
      %s420 = smul.addr %s419, 4
      %s421 = scalar_lea.vmem %s0, %s420
      %p422 = scmp.lt.s32.totalorder %s23, 1
      %s423 = scalar_select %p422, %s23, 1
      %s424 = smul.addr %s423, 4
      %s425 = scalar_lea.vmem %s1, %s424
      %p426 = scmp.lt.s32.totalorder %s23, 1
      %s427 = scalar_select %p426, %s23, 1
      %s428 = smul.addr %s427, 2
      %s429 = smul.addr %s428, 4
      %s430 = scalar_lea.vmem %s12, %s429
      %v432 = vld [vmem:[%s421] sm:$0xf]
      %v433 = vld [vmem:[%s421 + $0x4] sm:$0xf]
      %v434 = vld [vmem:[%s425] sm:$0xf]
      %v435 = vld [vmem:[%s2] sm:$0xf]
      %v436 = vld [vmem:[%s2 + $0x4] sm:$0xf]
      %v437 = vld [vmem:[%s2 + $0x8] sm:$0xf]
      %v438 = vld [vmem:[%s2 + $0xc] sm:$0xf]
      %v439 = vld [vmem:[%s2 + $0x10] sm:$0xf]
      %v440 = vld [vmem:[%s2 + $0x14] sm:$0xf]
      %v441 = vld [vmem:[%s2 + $0x18] sm:$0xf]
      %v442 = vld [vmem:[%s2 + $0x1c] sm:$0xf]
      %v443 = vld [vmem:[%s3] sm:$0x1]
      %v445 = vlaneseq
      %v446 = vshrl.u32 %v445, 7
      %v447 = vsub.s32 0, %v446
      %v448 = vrot.slane %v443, %v447
      %v452 = vunpack.c.l.b16 %v432
      %v453 = vunpack.c.l.b16 %v433
      %v454 = vpack.c.b16 %v453, %v452
      %v463 = vunpack.c.l.b16 %v435
      %v464 = vunpack.c.l.b16 %v436
      %v465 = vunpack.c.l.b16 %v437
      %v466 = vunpack.c.l.b16 %v438
      %v467 = vunpack.c.l.b16 %v439
      %v468 = vunpack.c.l.b16 %v440
      %v469 = vunpack.c.l.b16 %v441
      %v470 = vunpack.c.l.b16 %v442
      %v471 = vpack.c.b16 %v464, %v463
      %v472 = vpack.c.b16 %v466, %v465
      %v473 = vpack.c.b16 %v468, %v467
      %v474 = vpack.c.b16 %v470, %v469
      %vm479 = vcmask 523264
      %v481 = vsel %vm479, %v454, 0
      %483 = vmatprep.subr.bf16.mxu0 0
      %484 = vmatpush1.bf16.msra.mxu0 %v471
      %485 = vmatprep.subr.bf16.mxu0 0
      %486 = vmatpush1.bf16.msra.mxu0 %v472
      %487 = vmatprep.subr.bf16.mxu0 0
      %488 = vmatpush1.bf16.msra.mxu0 %v473
      %489 = vmatprep.subr.bf16.mxu0 0
      %490 = vmatpush1.bf16.msra.mxu0 %v474
      %491 = vmatprep.subr.bf16.mxu0 0
      %492 = vmatpush1.bf16.msra.mxu0 0
      %493 = vmatprep.subr.bf16.mxu0 0
      %494 = vmatpush1.bf16.msra.mxu0 0
      %495 = vmatprep.subr.bf16.mxu0 0
      %496 = vmatpush1.bf16.msra.mxu0 0
      %497 = vmatprep.subr.bf16.mxu0 0
      %498 = vmatpush1.bf16.msra.mxu0 0
      %499 = vmatprep.subr.bf16.mxu0 0
      %500 = vmatpush1.bf16.msra.mxu0 0
      %501 = vmatprep.subr.bf16.mxu0 0
      %502 = vmatpush1.bf16.msra.mxu0 0
      %503 = vmatprep.subr.bf16.mxu0 0
      %504 = vmatpush1.bf16.msra.mxu0 0
      %505 = vmatprep.subr.bf16.mxu0 0
      %506 = vmatpush1.bf16.msra.mxu0 0
      %507 = vmatprep.subr.bf16.mxu0 0
      %508 = vmatpush1.bf16.msra.mxu0 0
      %509 = vmatprep.subr.bf16.mxu0 0
      %510 = vmatpush1.bf16.msra.mxu0 0
      %511 = vmatprep.subr.bf16.mxu0 0
      %512 = vmatpush1.bf16.msra.mxu0 0
      %513 = vmatprep.subr.bf16.mxu0 0
      %514 = vmatpush1.bf16.msra.mxu0 0
      %515 = vmatprep.mubr.bf16.mxu0 0
      %516 = vmatmul.mubr.bf16.gmra.mrb[0].mxu0 %v481
      %v517 = vpop.f32.mrb[0].mxu0
      %v518 = vadd.f32 %v448, %v517
      %v519 = vpop.f32.mrb[0].mxu0
      %v520 = vpop.f32.mrb[0].mxu0
      %v521 = vadd.f32 %v448, %v520
      %v522 = vpop.f32.mrb[0].mxu0
      %523 = vdwg.mxu0
      %v524 = vld [vmem:[%s4] sm:$0xf]
      %v525 = vld [vmem:[%s4 + $0x4] sm:$0xf]
      %v526 = vld [vmem:[%s4 + $0x8] sm:$0xf]
      %v527 = vld [vmem:[%s4 + $0xc] sm:$0xf]
      %v528 = vld [vmem:[%s4 + $0x10] sm:$0xf]
      %v529 = vld [vmem:[%s4 + $0x14] sm:$0xf]
      %v530 = vld [vmem:[%s4 + $0x18] sm:$0xf]
      %v531 = vld [vmem:[%s4 + $0x1c] sm:$0xf]
      %v532 = vld [vmem:[%s5] sm:$0x1]
      %v534 = vlaneseq
      %v535 = vshrl.u32 %v534, 7
      %v536 = vsub.s32 0, %v535
      %v537 = vrot.slane %v532, %v536
      %v547 = vunpack.c.l.b16 %v524
      %v548 = vunpack.c.l.b16 %v525
      %v549 = vunpack.c.l.b16 %v526
      %v550 = vunpack.c.l.b16 %v527
      %v551 = vunpack.c.l.b16 %v528
      %v552 = vunpack.c.l.b16 %v529
      %v553 = vunpack.c.l.b16 %v530
      %v554 = vunpack.c.l.b16 %v531
      %v555 = vpack.c.b16 %v548, %v547
      %v556 = vpack.c.b16 %v550, %v549
      %v557 = vpack.c.b16 %v552, %v551
      %v558 = vpack.c.b16 %v554, %v553
      %v564 = vsel %vm479, %v434, 0
      %566 = vmatprep.subr.bf16.mxu0 0
      %567 = vmatpush1.bf16.msra.mxu0 %v555
      %568 = vmatprep.subr.bf16.mxu0 0
      %569 = vmatpush1.bf16.msra.mxu0 %v556
      %570 = vmatprep.subr.bf16.mxu0 0
      %571 = vmatpush1.bf16.msra.mxu0 %v557
      %572 = vmatprep.subr.bf16.mxu0 0
      %573 = vmatpush1.bf16.msra.mxu0 %v558
      %574 = vmatprep.subr.bf16.mxu0 0
      %575 = vmatpush1.bf16.msra.mxu0 0
      %576 = vmatprep.subr.bf16.mxu0 0
      %577 = vmatpush1.bf16.msra.mxu0 0
      %578 = vmatprep.subr.bf16.mxu0 0
      %579 = vmatpush1.bf16.msra.mxu0 0
      %580 = vmatprep.subr.bf16.mxu0 0
      %581 = vmatpush1.bf16.msra.mxu0 0
      %582 = vmatprep.subr.bf16.mxu0 0
      %583 = vmatpush1.bf16.msra.mxu0 0
      %584 = vmatprep.subr.bf16.mxu0 0
      %585 = vmatpush1.bf16.msra.mxu0 0
      %586 = vmatprep.subr.bf16.mxu0 0
      %587 = vmatpush1.bf16.msra.mxu0 0
      %588 = vmatprep.subr.bf16.mxu0 0
      %589 = vmatpush1.bf16.msra.mxu0 0
      %590 = vmatprep.subr.bf16.mxu0 0
      %591 = vmatpush1.bf16.msra.mxu0 0
      %592 = vmatprep.subr.bf16.mxu0 0
      %593 = vmatpush1.bf16.msra.mxu0 0
      %594 = vmatprep.subr.bf16.mxu0 0
      %595 = vmatpush1.bf16.msra.mxu0 0
      %596 = vmatprep.subr.bf16.mxu0 0
      %597 = vmatpush1.bf16.msra.mxu0 0
      %598 = vmatprep.mubr.bf16.mxu0 0
      %599 = vmatmul.mubr.bf16.gmra.mrb[0].mxu0 %v564
      %v600 = vpop.f32.mrb[0].mxu0
      %v601 = vadd.f32 %v537, %v600
      %v602 = vpop.f32.mrb[0].mxu0
      %v603 = vpop.f32.mrb[0].mxu0
      %v604 = vpop.f32.mrb[0].mxu0
      %605 = vdwg.mxu0
      %v606 = vld [vmem:[%s6] sm:$0xf]
      %v607 = vld [vmem:[%s6 + $0x4] sm:$0xf]
      %v608 = vld [vmem:[%s6 + $0x8] sm:$0xf]
      %v609 = vld [vmem:[%s6 + $0xc] sm:$0xf]
      %v610 = vld [vmem:[%s6 + $0x10] sm:$0xf]
      %v611 = vld [vmem:[%s6 + $0x14] sm:$0xf]
      %v612 = vld [vmem:[%s6 + $0x18] sm:$0xf]
      %v613 = vld [vmem:[%s6 + $0x1c] sm:$0xf]
      %v614 = vld [vmem:[%s7] sm:$0x1]
      %v616 = vlaneseq
      %v617 = vshrl.u32 %v616, 7
      %v618 = vsub.s32 0, %v617
      %v619 = vrot.slane %v614, %v618
      %v629 = vunpack.c.l.b16 %v606
      %v630 = vunpack.c.l.b16 %v607
      %v631 = vunpack.c.l.b16 %v608
      %v632 = vunpack.c.l.b16 %v609
      %v633 = vunpack.c.l.b16 %v610
      %v634 = vunpack.c.l.b16 %v611
      %v635 = vunpack.c.l.b16 %v612
      %v636 = vunpack.c.l.b16 %v613
      %v637 = vpack.c.b16 %v630, %v629
      %v638 = vpack.c.b16 %v632, %v631
      %v639 = vpack.c.b16 %v634, %v633
      %v640 = vpack.c.b16 %v636, %v635
      %645 = vmatprep.subr.bf16.mxu0 0
      %646 = vmatpush1.bf16.msra.mxu0 %v637
      %647 = vmatprep.subr.bf16.mxu0 0
      %648 = vmatpush1.bf16.msra.mxu0 %v638
      %649 = vmatprep.subr.bf16.mxu0 0
      %650 = vmatpush1.bf16.msra.mxu0 %v639
      %651 = vmatprep.subr.bf16.mxu0 0
      %652 = vmatpush1.bf16.msra.mxu0 %v640
      %653 = vmatprep.subr.bf16.mxu0 0
      %654 = vmatpush1.bf16.msra.mxu0 0
      %655 = vmatprep.subr.bf16.mxu0 0
      %656 = vmatpush1.bf16.msra.mxu0 0
      %657 = vmatprep.subr.bf16.mxu0 0
      %658 = vmatpush1.bf16.msra.mxu0 0
      %659 = vmatprep.subr.bf16.mxu0 0
      %660 = vmatpush1.bf16.msra.mxu0 0
      %661 = vmatprep.subr.bf16.mxu0 0
      %662 = vmatpush1.bf16.msra.mxu0 0
      %663 = vmatprep.subr.bf16.mxu0 0
      %664 = vmatpush1.bf16.msra.mxu0 0
      %665 = vmatprep.subr.bf16.mxu0 0
      %666 = vmatpush1.bf16.msra.mxu0 0
      %667 = vmatprep.subr.bf16.mxu0 0
      %668 = vmatpush1.bf16.msra.mxu0 0
      %669 = vmatprep.subr.bf16.mxu0 0
      %670 = vmatpush1.bf16.msra.mxu0 0
      %671 = vmatprep.subr.bf16.mxu0 0
      %672 = vmatpush1.bf16.msra.mxu0 0
      %673 = vmatprep.subr.bf16.mxu0 0
      %674 = vmatpush1.bf16.msra.mxu0 0
      %675 = vmatprep.subr.bf16.mxu0 0
      %676 = vmatpush1.bf16.msra.mxu0 0
      %677 = vmatprep.mubr.bf16.mxu0 0
      %678 = vmatmul.mubr.bf16.gmra.mrb[0].mxu0 %v564
      %v679 = vpop.f32.mrb[0].mxu0
      %v680 = vadd.f32 %v619, %v679
      %v681 = vpop.f32.mrb[0].mxu0
      %v682 = vpop.f32.mrb[0].mxu0
      %v683 = vpop.f32.mrb[0].mxu0
      %684 = vdwg.mxu0
      %v685 = vpack.c.bf16 %v521, %v518
      %v686 = vpack.c.bf16 %v601, %v601
      %vm687 = vcmask 130048
      %v689 = vsel %vm687, %v685, 0
      %v692 = vsel %vm687, %v686, 0
      %694 = vmatprep.subr.bf16.mxu0 0
      %695 = vmatpush1.bf16.xpose.msra.mxu0 %v692
      %696 = vmatprep.subr.bf16.mxu0 0
      %697 = vmatpush1.bf16.xpose.msra.mxu0 0
      %698 = vmatprep.subr.bf16.mxu0 0
      %699 = vmatpush1.bf16.xpose.msra.mxu0 0
      %700 = vmatprep.subr.bf16.mxu0 0
      %701 = vmatpush1.bf16.xpose.msra.mxu0 0
      %702 = vmatprep.subr.bf16.mxu0 0
      %703 = vmatpush1.bf16.xpose.msra.mxu0 0
      %704 = vmatprep.subr.bf16.mxu0 0
      %705 = vmatpush1.bf16.xpose.msra.mxu0 0
      %706 = vmatprep.subr.bf16.mxu0 0
      %707 = vmatpush1.bf16.xpose.msra.mxu0 0
      %708 = vmatprep.subr.bf16.mxu0 0
      %709 = vmatpush1.bf16.xpose.msra.mxu0 0
      %710 = vmatprep.subr.bf16.mxu0 0
      %711 = vmatpush1.bf16.xpose.msra.mxu0 0
      %712 = vmatprep.subr.bf16.mxu0 0
      %713 = vmatpush1.bf16.xpose.msra.mxu0 0
      %714 = vmatprep.subr.bf16.mxu0 0
      %715 = vmatpush1.bf16.xpose.msra.mxu0 0
      %716 = vmatprep.subr.bf16.mxu0 0
      %717 = vmatpush1.bf16.xpose.msra.mxu0 0
      %718 = vmatprep.subr.bf16.mxu0 0
      %719 = vmatpush1.bf16.xpose.msra.mxu0 0
      %720 = vmatprep.subr.bf16.mxu0 0
      %721 = vmatpush1.bf16.xpose.msra.mxu0 0
      %722 = vmatprep.subr.bf16.mxu0 0
      %723 = vmatpush1.bf16.xpose.msra.mxu0 0
      %724 = vmatprep.subr.bf16.mxu0 0
      %725 = vmatpush1.bf16.xpose.msra.mxu0 0
      %726 = vmatprep.mubr.bf16.mxu0 0
      %727 = vmatmul.mubr.bf16.gmra.mrb[0].mxu0 %v689
      %v728 = vpop.f32.mrb[0].mxu0
      %v729 = vadd.f32 0.0, %v728
      %v730 = vpop.f32.mrb[0].mxu0
      %v731 = vpop.f32.mrb[0].mxu0
      %v732 = vadd.f32 0.0, %v731
      %v733 = vpop.f32.mrb[0].mxu0
      %734 = vdwg.mxu0
      %v735 = vmul.f32 %v729, 0.25
      %v736 = vmul.f32 %v732, 0.25
      %vm737 = vcmask 64512
      %v738 = vsel %vm737, %v735, -inf
      %739 = vmax.xlane.f32.xlu0 %v738
      %v740 = vpop.xlane.xlu0 %739
      %v741 = vsel %vm737, %v736, -inf
      %742 = vmax.xlane.f32.xlu0 %v741
      %v743 = vpop.xlane.xlu0 %742
      %v744 = vsub.f32 %v735, %v740
      %v745 = vsub.f32 %v736, %v743
      %v746 = vmul.f32 %v744, 1.442695
      %v747 = vpow.pop %v746
      %v748 = vmul.f32 %v745, 1.442695
      %v749 = vpow.pop %v748
      %v750 = vsel %vm737, %v747, 0.0
      %751 = vadd.xlane.f32.xlu0 %v750
      %v752 = vpop.xlane.xlu0 %751
      %v753 = vsel %vm737, %v749, 0.0
      %754 = vadd.xlane.f32.xlu0 %v753
      %v755 = vpop.xlane.xlu0 %754
      %v756 = vrcp.pop %v752
      %v757 = vmul.f32 %v747, %v756
      %v758 = vrcp.pop %v755
      %v759 = vmul.f32 %v749, %v758
      %v760 = vpack.c.bf16 %v759, %v757
      %v761 = vpack.c.bf16 %v680, %v680
      %v763 = vsel %vm737, %v760, 0
      %vm765 = vcmask 1043456
      %v767 = vsel %vm765, %v761, 0
      %769 = vmatprep.subr.bf16.mxu0 0
      %770 = vmatpush1.bf16.msra.mxu0 %v767
      %771 = vmatprep.subr.bf16.mxu0 0
      %772 = vmatpush1.bf16.msra.mxu0 0
      %773 = vmatprep.subr.bf16.mxu0 0
      %774 = vmatpush1.bf16.msra.mxu0 0
      %775 = vmatprep.subr.bf16.mxu0 0
      %776 = vmatpush1.bf16.msra.mxu0 0
      %777 = vmatprep.subr.bf16.mxu0 0
      %778 = vmatpush1.bf16.msra.mxu0 0
      %779 = vmatprep.subr.bf16.mxu0 0
      %780 = vmatpush1.bf16.msra.mxu0 0
      %781 = vmatprep.subr.bf16.mxu0 0
      %782 = vmatpush1.bf16.msra.mxu0 0
      %783 = vmatprep.subr.bf16.mxu0 0
      %784 = vmatpush1.bf16.msra.mxu0 0
      %785 = vmatprep.subr.bf16.mxu0 0
      %786 = vmatpush1.bf16.msra.mxu0 0
      %787 = vmatprep.subr.bf16.mxu0 0
      %788 = vmatpush1.bf16.msra.mxu0 0
      %789 = vmatprep.subr.bf16.mxu0 0
      %790 = vmatpush1.bf16.msra.mxu0 0
      %791 = vmatprep.subr.bf16.mxu0 0
      %792 = vmatpush1.bf16.msra.mxu0 0
      %793 = vmatprep.subr.bf16.mxu0 0
      %794 = vmatpush1.bf16.msra.mxu0 0
      %795 = vmatprep.subr.bf16.mxu0 0
      %796 = vmatpush1.bf16.msra.mxu0 0
      %797 = vmatprep.subr.bf16.mxu0 0
      %798 = vmatpush1.bf16.msra.mxu0 0
      %799 = vmatprep.subr.bf16.mxu0 0
      %800 = vmatpush1.bf16.msra.mxu0 0
      %801 = vmatprep.mubr.bf16.mxu0 0
      %802 = vmatmul.mubr.bf16.gmra.mrb[0].mxu0 %v763
      %v803 = vpop.f32.mrb[0].mxu0
      %v804 = vadd.f32 0.0, %v803
      %v805 = vpop.f32.mrb[0].mxu0
      %v806 = vpop.f32.mrb[0].mxu0
      %v807 = vadd.f32 0.0, %v806
      %v808 = vpop.f32.mrb[0].mxu0
      %809 = vdwg.mxu0
      %v810 = vpack.c.bf16 %v807, %v804
      %v811 = vld [vmem:[%s8] sm:$0xf]
      %v812 = vld [vmem:[%s8 + $0x4] sm:$0xf]
      %s813 = scalar_lea.vmem %s2, 32
      %v814 = vld [vmem:[%s813] sm:$0xf]
      %v815 = vld [vmem:[%s813 + $0x4] sm:$0xf]
      %v816 = vld [vmem:[%s813 + $0x8] sm:$0xf]
      %v817 = vld [vmem:[%s813 + $0xc] sm:$0xf]
      %v818 = vld [vmem:[%s813 + $0x10] sm:$0xf]
      %v819 = vld [vmem:[%s813 + $0x14] sm:$0xf]
      %v820 = vld [vmem:[%s813 + $0x18] sm:$0xf]
      %v821 = vld [vmem:[%s813 + $0x1c] sm:$0xf]
      %s822 = scalar_lea.vmem %s3, 1
      %v823 = vld [vmem:[%s822] sm:$0x1]
      %v825 = vlaneseq
      %v826 = vshrl.u32 %v825, 7
      %v827 = vsub.s32 0, %v826
      %v828 = vrot.slane %v823, %v827
      %v838 = vunpack.c.l.b16 %v814
      %v839 = vunpack.c.l.b16 %v815
      %v840 = vunpack.c.l.b16 %v816
      %v841 = vunpack.c.l.b16 %v817
      %v842 = vunpack.c.l.b16 %v818
      %v843 = vunpack.c.l.b16 %v819
      %v844 = vunpack.c.l.b16 %v820
      %v845 = vunpack.c.l.b16 %v821
      %v846 = vpack.c.b16 %v839, %v838
      %v847 = vpack.c.b16 %v841, %v840
      %v848 = vpack.c.b16 %v843, %v842
      %v849 = vpack.c.b16 %v845, %v844
      %854 = vmatprep.subr.bf16.mxu0 0
      %855 = vmatpush1.bf16.msra.mxu0 %v846
      %856 = vmatprep.subr.bf16.mxu0 0
      %857 = vmatpush1.bf16.msra.mxu0 %v847
      %858 = vmatprep.subr.bf16.mxu0 0
      %859 = vmatpush1.bf16.msra.mxu0 %v848
      %860 = vmatprep.subr.bf16.mxu0 0
      %861 = vmatpush1.bf16.msra.mxu0 %v849
      %862 = vmatprep.subr.bf16.mxu0 0
      %863 = vmatpush1.bf16.msra.mxu0 0
      %864 = vmatprep.subr.bf16.mxu0 0
      %865 = vmatpush1.bf16.msra.mxu0 0
      %866 = vmatprep.subr.bf16.mxu0 0
      %867 = vmatpush1.bf16.msra.mxu0 0
      %868 = vmatprep.subr.bf16.mxu0 0
      %869 = vmatpush1.bf16.msra.mxu0 0
      %870 = vmatprep.subr.bf16.mxu0 0
      %871 = vmatpush1.bf16.msra.mxu0 0
      %872 = vmatprep.subr.bf16.mxu0 0
      %873 = vmatpush1.bf16.msra.mxu0 0
      %874 = vmatprep.subr.bf16.mxu0 0
      %875 = vmatpush1.bf16.msra.mxu0 0
      %876 = vmatprep.subr.bf16.mxu0 0
      %877 = vmatpush1.bf16.msra.mxu0 0
      %878 = vmatprep.subr.bf16.mxu0 0
      %879 = vmatpush1.bf16.msra.mxu0 0
      %880 = vmatprep.subr.bf16.mxu0 0
      %881 = vmatpush1.bf16.msra.mxu0 0
      %882 = vmatprep.subr.bf16.mxu0 0
      %883 = vmatpush1.bf16.msra.mxu0 0
      %884 = vmatprep.subr.bf16.mxu0 0
      %885 = vmatpush1.bf16.msra.mxu0 0
      %886 = vmatprep.mubr.bf16.mxu0 0
      %887 = vmatmul.mubr.bf16.gmra.mrb[0].mxu0 %v481
      %v888 = vpop.f32.mrb[0].mxu0
      %v889 = vadd.f32 %v828, %v888
      %v890 = vpop.f32.mrb[0].mxu0
      %v891 = vpop.f32.mrb[0].mxu0
      %v892 = vadd.f32 %v828, %v891
      %v893 = vpop.f32.mrb[0].mxu0
      %894 = vdwg.mxu0
      %s895 = scalar_lea.vmem %s4, 32
      %v896 = vld [vmem:[%s895] sm:$0xf]
      %v897 = vld [vmem:[%s895 + $0x4] sm:$0xf]
      %v898 = vld [vmem:[%s895 + $0x8] sm:$0xf]
      %v899 = vld [vmem:[%s895 + $0xc] sm:$0xf]
      %v900 = vld [vmem:[%s895 + $0x10] sm:$0xf]
      %v901 = vld [vmem:[%s895 + $0x14] sm:$0xf]
      %v902 = vld [vmem:[%s895 + $0x18] sm:$0xf]
      %v903 = vld [vmem:[%s895 + $0x1c] sm:$0xf]
      %s904 = scalar_lea.vmem %s5, 1
      %v905 = vld [vmem:[%s904] sm:$0x1]
      %v907 = vlaneseq
      %v908 = vshrl.u32 %v907, 7
      %v909 = vsub.s32 0, %v908
      %v910 = vrot.slane %v905, %v909
      %v920 = vunpack.c.l.b16 %v896
      %v921 = vunpack.c.l.b16 %v897
      %v922 = vunpack.c.l.b16 %v898
      %v923 = vunpack.c.l.b16 %v899
      %v924 = vunpack.c.l.b16 %v900
      %v925 = vunpack.c.l.b16 %v901
      %v926 = vunpack.c.l.b16 %v902
      %v927 = vunpack.c.l.b16 %v903
      %v928 = vpack.c.b16 %v921, %v920
      %v929 = vpack.c.b16 %v923, %v922
      %v930 = vpack.c.b16 %v925, %v924
      %v931 = vpack.c.b16 %v927, %v926
      %936 = vmatprep.subr.bf16.mxu0 0
      %937 = vmatpush1.bf16.msra.mxu0 %v928
      %938 = vmatprep.subr.bf16.mxu0 0
      %939 = vmatpush1.bf16.msra.mxu0 %v929
      %940 = vmatprep.subr.bf16.mxu0 0
      %941 = vmatpush1.bf16.msra.mxu0 %v930
      %942 = vmatprep.subr.bf16.mxu0 0
      %943 = vmatpush1.bf16.msra.mxu0 %v931
      %944 = vmatprep.subr.bf16.mxu0 0
      %945 = vmatpush1.bf16.msra.mxu0 0
      %946 = vmatprep.subr.bf16.mxu0 0
      %947 = vmatpush1.bf16.msra.mxu0 0
      %948 = vmatprep.subr.bf16.mxu0 0
      %949 = vmatpush1.bf16.msra.mxu0 0
      %950 = vmatprep.subr.bf16.mxu0 0
      %951 = vmatpush1.bf16.msra.mxu0 0
      %952 = vmatprep.subr.bf16.mxu0 0
      %953 = vmatpush1.bf16.msra.mxu0 0
      %954 = vmatprep.subr.bf16.mxu0 0
      %955 = vmatpush1.bf16.msra.mxu0 0
      %956 = vmatprep.subr.bf16.mxu0 0
      %957 = vmatpush1.bf16.msra.mxu0 0
      %958 = vmatprep.subr.bf16.mxu0 0
      %959 = vmatpush1.bf16.msra.mxu0 0
      %960 = vmatprep.subr.bf16.mxu0 0
      %961 = vmatpush1.bf16.msra.mxu0 0
      %962 = vmatprep.subr.bf16.mxu0 0
      %963 = vmatpush1.bf16.msra.mxu0 0
      %964 = vmatprep.subr.bf16.mxu0 0
      %965 = vmatpush1.bf16.msra.mxu0 0
      %966 = vmatprep.subr.bf16.mxu0 0
      %967 = vmatpush1.bf16.msra.mxu0 0
      %968 = vmatprep.mubr.bf16.mxu0 0
      %969 = vmatmul.mubr.bf16.gmra.mrb[0].mxu0 %v564
      %v970 = vpop.f32.mrb[0].mxu0
      %v971 = vadd.f32 %v910, %v970
      %v972 = vpop.f32.mrb[0].mxu0
      %v973 = vpop.f32.mrb[0].mxu0
      %v974 = vpop.f32.mrb[0].mxu0
      %975 = vdwg.mxu0
      %s976 = scalar_lea.vmem %s6, 32
      %v977 = vld [vmem:[%s976] sm:$0xf]
      %v978 = vld [vmem:[%s976 + $0x4] sm:$0xf]
      %v979 = vld [vmem:[%s976 + $0x8] sm:$0xf]
      %v980 = vld [vmem:[%s976 + $0xc] sm:$0xf]
      %v981 = vld [vmem:[%s976 + $0x10] sm:$0xf]
      %v982 = vld [vmem:[%s976 + $0x14] sm:$0xf]
      %v983 = vld [vmem:[%s976 + $0x18] sm:$0xf]
      %v984 = vld [vmem:[%s976 + $0x1c] sm:$0xf]
      %s985 = scalar_lea.vmem %s7, 1
      %v986 = vld [vmem:[%s985] sm:$0x1]
      %v988 = vlaneseq
      %v989 = vshrl.u32 %v988, 7
      %v990 = vsub.s32 0, %v989
      %v991 = vrot.slane %v986, %v990
      %v1001 = vunpack.c.l.b16 %v977
      %v1002 = vunpack.c.l.b16 %v978
      %v1003 = vunpack.c.l.b16 %v979
      %v1004 = vunpack.c.l.b16 %v980
      %v1005 = vunpack.c.l.b16 %v981
      %v1006 = vunpack.c.l.b16 %v982
      %v1007 = vunpack.c.l.b16 %v983
      %v1008 = vunpack.c.l.b16 %v984
      %v1009 = vpack.c.b16 %v1002, %v1001
      %v1010 = vpack.c.b16 %v1004, %v1003
      %v1011 = vpack.c.b16 %v1006, %v1005
      %v1012 = vpack.c.b16 %v1008, %v1007
      %1017 = vmatprep.subr.bf16.mxu0 0
      %1018 = vmatpush1.bf16.msra.mxu0 %v1009
      %1019 = vmatprep.subr.bf16.mxu0 0
      %1020 = vmatpush1.bf16.msra.mxu0 %v1010
      %1021 = vmatprep.subr.bf16.mxu0 0
      %1022 = vmatpush1.bf16.msra.mxu0 %v1011
      %1023 = vmatprep.subr.bf16.mxu0 0
      %1024 = vmatpush1.bf16.msra.mxu0 %v1012
      %1025 = vmatprep.subr.bf16.mxu0 0
      %1026 = vmatpush1.bf16.msra.mxu0 0
      %1027 = vmatprep.subr.bf16.mxu0 0
      %1028 = vmatpush1.bf16.msra.mxu0 0
      %1029 = vmatprep.subr.bf16.mxu0 0
      %1030 = vmatpush1.bf16.msra.mxu0 0
      %1031 = vmatprep.subr.bf16.mxu0 0
      %1032 = vmatpush1.bf16.msra.mxu0 0
      %1033 = vmatprep.subr.bf16.mxu0 0
      %1034 = vmatpush1.bf16.msra.mxu0 0
      %1035 = vmatprep.subr.bf16.mxu0 0
      %1036 = vmatpush1.bf16.msra.mxu0 0
      %1037 = vmatprep.subr.bf16.mxu0 0
      %1038 = vmatpush1.bf16.msra.mxu0 0
      %1039 = vmatprep.subr.bf16.mxu0 0
      %1040 = vmatpush1.bf16.msra.mxu0 0
      %1041 = vmatprep.subr.bf16.mxu0 0
      %1042 = vmatpush1.bf16.msra.mxu0 0
      %1043 = vmatprep.subr.bf16.mxu0 0
      %1044 = vmatpush1.bf16.msra.mxu0 0
      %1045 = vmatprep.subr.bf16.mxu0 0
      %1046 = vmatpush1.bf16.msra.mxu0 0
      %1047 = vmatprep.subr.bf16.mxu0 0
      %1048 = vmatpush1.bf16.msra.mxu0 0
      %1049 = vmatprep.mubr.bf16.mxu0 0
      %1050 = vmatmul.mubr.bf16.gmra.mrb[0].mxu0 %v564
      %v1051 = vpop.f32.mrb[0].mxu0
      %v1052 = vadd.f32 %v991, %v1051
      %v1053 = vpop.f32.mrb[0].mxu0
      %v1054 = vpop.f32.mrb[0].mxu0
      %v1055 = vpop.f32.mrb[0].mxu0
      %1056 = vdwg.mxu0
      %v1057 = vpack.c.bf16 %v892, %v889
      %v1058 = vpack.c.bf16 %v971, %v971
      %v1060 = vsel %vm687, %v1057, 0
      %v1063 = vsel %vm687, %v1058, 0
      %1065 = vmatprep.subr.bf16.mxu0 0
      %1066 = vmatpush1.bf16.xpose.msra.mxu0 %v1063
      %1067 = vmatprep.subr.bf16.mxu0 0
      %1068 = vmatpush1.bf16.xpose.msra.mxu0 0
      %1069 = vmatprep.subr.bf16.mxu0 0
      %1070 = vmatpush1.bf16.xpose.msra.mxu0 0
      %1071 = vmatprep.subr.bf16.mxu0 0
      %1072 = vmatpush1.bf16.xpose.msra.mxu0 0
      %1073 = vmatprep.subr.bf16.mxu0 0
      %1074 = vmatpush1.bf16.xpose.msra.mxu0 0
      %1075 = vmatprep.subr.bf16.mxu0 0
      %1076 = vmatpush1.bf16.xpose.msra.mxu0 0
      %1077 = vmatprep.subr.bf16.mxu0 0
      %1078 = vmatpush1.bf16.xpose.msra.mxu0 0
      %1079 = vmatprep.subr.bf16.mxu0 0
      %1080 = vmatpush1.bf16.xpose.msra.mxu0 0
      %1081 = vmatprep.subr.bf16.mxu0 0
      %1082 = vmatpush1.bf16.xpose.msra.mxu0 0
      %1083 = vmatprep.subr.bf16.mxu0 0
      %1084 = vmatpush1.bf16.xpose.msra.mxu0 0
      %1085 = vmatprep.subr.bf16.mxu0 0
      %1086 = vmatpush1.bf16.xpose.msra.mxu0 0
      %1087 = vmatprep.subr.bf16.mxu0 0
      %1088 = vmatpush1.bf16.xpose.msra.mxu0 0
      %1089 = vmatprep.subr.bf16.mxu0 0
      %1090 = vmatpush1.bf16.xpose.msra.mxu0 0
      %1091 = vmatprep.subr.bf16.mxu0 0
      %1092 = vmatpush1.bf16.xpose.msra.mxu0 0
      %1093 = vmatprep.subr.bf16.mxu0 0
      %1094 = vmatpush1.bf16.xpose.msra.mxu0 0
      %1095 = vmatprep.subr.bf16.mxu0 0
      %1096 = vmatpush1.bf16.xpose.msra.mxu0 0
      %1097 = vmatprep.mubr.bf16.mxu0 0
      %1098 = vmatmul.mubr.bf16.gmra.mrb[0].mxu0 %v1060
      %v1099 = vpop.f32.mrb[0].mxu0
      %v1100 = vadd.f32 0.0, %v1099
      %v1101 = vpop.f32.mrb[0].mxu0
      %v1102 = vpop.f32.mrb[0].mxu0
      %v1103 = vadd.f32 0.0, %v1102
      %v1104 = vpop.f32.mrb[0].mxu0
      %1105 = vdwg.mxu0
      %v1106 = vmul.f32 %v1100, 0.25
      %v1107 = vmul.f32 %v1103, 0.25
      %v1108 = vsel %vm737, %v1106, -inf
      %1109 = vmax.xlane.f32.xlu0 %v1108
      %v1110 = vpop.xlane.xlu0 %1109
      %v1111 = vsel %vm737, %v1107, -inf
      %1112 = vmax.xlane.f32.xlu0 %v1111
      %v1113 = vpop.xlane.xlu0 %1112
      %v1114 = vsub.f32 %v1106, %v1110
      %v1115 = vsub.f32 %v1107, %v1113
      %v1116 = vmul.f32 %v1114, 1.442695
      %v1117 = vpow.pop %v1116
      %v1118 = vmul.f32 %v1115, 1.442695
      %v1119 = vpow.pop %v1118
      %v1120 = vsel %vm737, %v1117, 0.0
      %1121 = vadd.xlane.f32.xlu0 %v1120
      %v1122 = vpop.xlane.xlu0 %1121
      %v1123 = vsel %vm737, %v1119, 0.0
      %1124 = vadd.xlane.f32.xlu0 %v1123
      %v1125 = vpop.xlane.xlu0 %1124
      %v1126 = vrcp.pop %v1122
      %v1127 = vmul.f32 %v1117, %v1126
      %v1128 = vrcp.pop %v1125
      %v1129 = vmul.f32 %v1119, %v1128
      %v1130 = vpack.c.bf16 %v1129, %v1127
      %v1131 = vpack.c.bf16 %v1052, %v1052
      %v1133 = vsel %vm737, %v1130, 0
      %v1136 = vsel %vm765, %v1131, 0
      %1138 = vmatprep.subr.bf16.mxu0 0
      %1139 = vmatpush1.bf16.msra.mxu0 %v1136
      %1140 = vmatprep.subr.bf16.mxu0 0
      %1141 = vmatpush1.bf16.msra.mxu0 0
      %1142 = vmatprep.subr.bf16.mxu0 0
      %1143 = vmatpush1.bf16.msra.mxu0 0
      %1144 = vmatprep.subr.bf16.mxu0 0
      %1145 = vmatpush1.bf16.msra.mxu0 0
      %1146 = vmatprep.subr.bf16.mxu0 0
      %1147 = vmatpush1.bf16.msra.mxu0 0
      %1148 = vmatprep.subr.bf16.mxu0 0
      %1149 = vmatpush1.bf16.msra.mxu0 0
      %1150 = vmatprep.subr.bf16.mxu0 0
      %1151 = vmatpush1.bf16.msra.mxu0 0
      %1152 = vmatprep.subr.bf16.mxu0 0
      %1153 = vmatpush1.bf16.msra.mxu0 0
      %1154 = vmatprep.subr.bf16.mxu0 0
      %1155 = vmatpush1.bf16.msra.mxu0 0
      %1156 = vmatprep.subr.bf16.mxu0 0
      %1157 = vmatpush1.bf16.msra.mxu0 0
      %1158 = vmatprep.subr.bf16.mxu0 0
      %1159 = vmatpush1.bf16.msra.mxu0 0
      %1160 = vmatprep.subr.bf16.mxu0 0
      %1161 = vmatpush1.bf16.msra.mxu0 0
      %1162 = vmatprep.subr.bf16.mxu0 0
      %1163 = vmatpush1.bf16.msra.mxu0 0
      %1164 = vmatprep.subr.bf16.mxu0 0
      %1165 = vmatpush1.bf16.msra.mxu0 0
      %1166 = vmatprep.subr.bf16.mxu0 0
      %1167 = vmatpush1.bf16.msra.mxu0 0
      %1168 = vmatprep.subr.bf16.mxu0 0
      %1169 = vmatpush1.bf16.msra.mxu0 0
      %1170 = vmatprep.mubr.bf16.mxu0 0
      %1171 = vmatmul.mubr.bf16.gmra.mrb[0].mxu0 %v1133
      %v1172 = vpop.f32.mrb[0].mxu0
      %v1173 = vadd.f32 0.0, %v1172
      %v1174 = vpop.f32.mrb[0].mxu0
      %v1175 = vpop.f32.mrb[0].mxu0
      %v1176 = vadd.f32 0.0, %v1175
      %v1177 = vpop.f32.mrb[0].mxu0
      %1178 = vdwg.mxu0
      %v1179 = vpack.c.bf16 %v1176, %v1173
      %s1180 = scalar_lea.vmem %s8, 8
      %v1181 = vld [vmem:[%s1180] sm:$0xf]
      %v1182 = vld [vmem:[%s1180 + $0x4] sm:$0xf]
      %v1185 = vunpack.c.l.b16 %v1181
      %v1186 = vunpack.c.l.b16 %v1182
      %v1187 = vpack.c.b16 %v1186, %v1185
      %v1190 = vsel %vm687, %v1179, 0
      %1192 = vmatprep.subr.bf16.mxu0 0
      %1193 = vmatpush1.bf16.msra.mxu0 %v1187
      %1194 = vmatprep.subr.bf16.mxu0 0
      %1195 = vmatpush1.bf16.msra.mxu0 0
      %1196 = vmatprep.subr.bf16.mxu0 0
      %1197 = vmatpush1.bf16.msra.mxu0 0
      %1198 = vmatprep.subr.bf16.mxu0 0
      %1199 = vmatpush1.bf16.msra.mxu0 0
      %1200 = vmatprep.subr.bf16.mxu0 0
      %1201 = vmatpush1.bf16.msra.mxu0 0
      %1202 = vmatprep.subr.bf16.mxu0 0
      %1203 = vmatpush1.bf16.msra.mxu0 0
      %1204 = vmatprep.subr.bf16.mxu0 0
      %1205 = vmatpush1.bf16.msra.mxu0 0
      %1206 = vmatprep.subr.bf16.mxu0 0
      %1207 = vmatpush1.bf16.msra.mxu0 0
      %1208 = vmatprep.subr.bf16.mxu0 0
      %1209 = vmatpush1.bf16.msra.mxu0 0
      %1210 = vmatprep.subr.bf16.mxu0 0
      %1211 = vmatpush1.bf16.msra.mxu0 0
      %1212 = vmatprep.subr.bf16.mxu0 0
      %1213 = vmatpush1.bf16.msra.mxu0 0
      %1214 = vmatprep.subr.bf16.mxu0 0
      %1215 = vmatpush1.bf16.msra.mxu0 0
      %1216 = vmatprep.subr.bf16.mxu0 0
      %1217 = vmatpush1.bf16.msra.mxu0 0
      %1218 = vmatprep.subr.bf16.mxu0 0
      %1219 = vmatpush1.bf16.msra.mxu0 0
      %1220 = vmatprep.subr.bf16.mxu0 0
      %1221 = vmatpush1.bf16.msra.mxu0 0
      %1222 = vmatprep.subr.bf16.mxu0 0
      %1223 = vmatpush1.bf16.msra.mxu0 0
      %1224 = vmatprep.mubr.bf16.mxu0 0
      %1225 = vmatmul.mubr.bf16.gmra.mrb[0].mxu0 %v1190
      %v1226 = vpop.f32.mrb[0].mxu0
      %v1227 = vadd.f32 0.0, %v1226
      %v1228 = vpop.f32.mrb[0].mxu0
      %v1229 = vpop.f32.mrb[0].mxu0
      %v1230 = vadd.f32 0.0, %v1229
      %v1231 = vpop.f32.mrb[0].mxu0
      %1232 = vdwg.mxu0
      %v1235 = vunpack.c.l.b16 %v811
      %v1236 = vunpack.c.l.b16 %v812
      %v1237 = vpack.c.b16 %v1236, %v1235
      %v1240 = vsel %vm687, %v810, 0
      %1242 = vmatprep.subr.bf16.mxu0 0
      %1243 = vmatpush1.bf16.msra.mxu0 %v1237
      %1244 = vmatprep.subr.bf16.mxu0 0
      %1245 = vmatpush1.bf16.msra.mxu0 0
      %1246 = vmatprep.subr.bf16.mxu0 0
      %1247 = vmatpush1.bf16.msra.mxu0 0
      %1248 = vmatprep.subr.bf16.mxu0 0
      %1249 = vmatpush1.bf16.msra.mxu0 0
      %1250 = vmatprep.subr.bf16.mxu0 0
      %1251 = vmatpush1.bf16.msra.mxu0 0
      %1252 = vmatprep.subr.bf16.mxu0 0
      %1253 = vmatpush1.bf16.msra.mxu0 0
      %1254 = vmatprep.subr.bf16.mxu0 0
      %1255 = vmatpush1.bf16.msra.mxu0 0
      %1256 = vmatprep.subr.bf16.mxu0 0
      %1257 = vmatpush1.bf16.msra.mxu0 0
      %1258 = vmatprep.subr.bf16.mxu0 0
      %1259 = vmatpush1.bf16.msra.mxu0 0
      %1260 = vmatprep.subr.bf16.mxu0 0
      %1261 = vmatpush1.bf16.msra.mxu0 0
      %1262 = vmatprep.subr.bf16.mxu0 0
      %1263 = vmatpush1.bf16.msra.mxu0 0
      %1264 = vmatprep.subr.bf16.mxu0 0
      %1265 = vmatpush1.bf16.msra.mxu0 0
      %1266 = vmatprep.subr.bf16.mxu0 0
      %1267 = vmatpush1.bf16.msra.mxu0 0
      %1268 = vmatprep.subr.bf16.mxu0 0
      %1269 = vmatpush1.bf16.msra.mxu0 0
      %1270 = vmatprep.subr.bf16.mxu0 0
      %1271 = vmatpush1.bf16.msra.mxu0 0
      %1272 = vmatprep.subr.bf16.mxu0 0
      %1273 = vmatpush1.bf16.msra.mxu0 0
      %1274 = vmatprep.mubr.bf16.mxu0 0
      %1275 = vmatmul.mubr.bf16.gmra.mrb[0].mxu0 %v1240
      %v1276 = vpop.f32.mrb[0].mxu0
      %v1277 = vadd.f32 %v1227, %v1276
      %v1278 = vpop.f32.mrb[0].mxu0
      %v1279 = vpop.f32.mrb[0].mxu0
      %v1280 = vadd.f32 %v1230, %v1279
      %v1281 = vpop.f32.mrb[0].mxu0
      %1282 = vdwg.mxu0
      %s1283 = scalar_lea.vmem %s2, 64
      %v1284 = vld [vmem:[%s1283] sm:$0xf]
      %v1285 = vld [vmem:[%s1283 + $0x4] sm:$0xf]
      %v1286 = vld [vmem:[%s1283 + $0x8] sm:$0xf]
      %v1287 = vld [vmem:[%s1283 + $0xc] sm:$0xf]
      %v1288 = vld [vmem:[%s1283 + $0x10] sm:$0xf]
      %v1289 = vld [vmem:[%s1283 + $0x14] sm:$0xf]
      %v1290 = vld [vmem:[%s1283 + $0x18] sm:$0xf]
      %v1291 = vld [vmem:[%s1283 + $0x1c] sm:$0xf]
      %s1292 = scalar_lea.vmem %s3, 2
      %v1293 = vld [vmem:[%s1292] sm:$0x1]
      %v1295 = vlaneseq
      %v1296 = vshrl.u32 %v1295, 7
      %v1297 = vsub.s32 0, %v1296
      %v1298 = vrot.slane %v1293, %v1297
      %v1308 = vunpack.c.l.b16 %v1284
      %v1309 = vunpack.c.l.b16 %v1285
      %v1310 = vunpack.c.l.b16 %v1286
      %v1311 = vunpack.c.l.b16 %v1287
      %v1312 = vunpack.c.l.b16 %v1288
      %v1313 = vunpack.c.l.b16 %v1289
      %v1314 = vunpack.c.l.b16 %v1290
      %v1315 = vunpack.c.l.b16 %v1291
      %v1316 = vpack.c.b16 %v1309, %v1308
      %v1317 = vpack.c.b16 %v1311, %v1310
      %v1318 = vpack.c.b16 %v1313, %v1312
      %v1319 = vpack.c.b16 %v1315, %v1314
      %1324 = vmatprep.subr.bf16.mxu0 0
      %1325 = vmatpush1.bf16.msra.mxu0 %v1316
      %1326 = vmatprep.subr.bf16.mxu0 0
      %1327 = vmatpush1.bf16.msra.mxu0 %v1317
      %1328 = vmatprep.subr.bf16.mxu0 0
      %1329 = vmatpush1.bf16.msra.mxu0 %v1318
      %1330 = vmatprep.subr.bf16.mxu0 0
      %1331 = vmatpush1.bf16.msra.mxu0 %v1319
      %1332 = vmatprep.subr.bf16.mxu0 0
      %1333 = vmatpush1.bf16.msra.mxu0 0
      %1334 = vmatprep.subr.bf16.mxu0 0
      %1335 = vmatpush1.bf16.msra.mxu0 0
      %1336 = vmatprep.subr.bf16.mxu0 0
      %1337 = vmatpush1.bf16.msra.mxu0 0
      %1338 = vmatprep.subr.bf16.mxu0 0
      %1339 = vmatpush1.bf16.msra.mxu0 0
      %1340 = vmatprep.subr.bf16.mxu0 0
      %1341 = vmatpush1.bf16.msra.mxu0 0
      %1342 = vmatprep.subr.bf16.mxu0 0
      %1343 = vmatpush1.bf16.msra.mxu0 0
      %1344 = vmatprep.subr.bf16.mxu0 0
      %1345 = vmatpush1.bf16.msra.mxu0 0
      %1346 = vmatprep.subr.bf16.mxu0 0
      %1347 = vmatpush1.bf16.msra.mxu0 0
      %1348 = vmatprep.subr.bf16.mxu0 0
      %1349 = vmatpush1.bf16.msra.mxu0 0
      %1350 = vmatprep.subr.bf16.mxu0 0
      %1351 = vmatpush1.bf16.msra.mxu0 0
      %1352 = vmatprep.subr.bf16.mxu0 0
      %1353 = vmatpush1.bf16.msra.mxu0 0
      %1354 = vmatprep.subr.bf16.mxu0 0
      %1355 = vmatpush1.bf16.msra.mxu0 0
      %1356 = vmatprep.mubr.bf16.mxu0 0
      %1357 = vmatmul.mubr.bf16.gmra.mrb[0].mxu0 %v481
      %v1358 = vpop.f32.mrb[0].mxu0
      %v1359 = vadd.f32 %v1298, %v1358
      %v1360 = vpop.f32.mrb[0].mxu0
      %v1361 = vpop.f32.mrb[0].mxu0
      %v1362 = vadd.f32 %v1298, %v1361
      %v1363 = vpop.f32.mrb[0].mxu0
      %1364 = vdwg.mxu0
      %s1365 = scalar_lea.vmem %s4, 64
      %v1366 = vld [vmem:[%s1365] sm:$0xf]
      %v1367 = vld [vmem:[%s1365 + $0x4] sm:$0xf]
      %v1368 = vld [vmem:[%s1365 + $0x8] sm:$0xf]
      %v1369 = vld [vmem:[%s1365 + $0xc] sm:$0xf]
      %v1370 = vld [vmem:[%s1365 + $0x10] sm:$0xf]
      %v1371 = vld [vmem:[%s1365 + $0x14] sm:$0xf]
      %v1372 = vld [vmem:[%s1365 + $0x18] sm:$0xf]
      %v1373 = vld [vmem:[%s1365 + $0x1c] sm:$0xf]
      %s1374 = scalar_lea.vmem %s5, 2
      %v1375 = vld [vmem:[%s1374] sm:$0x1]
      %v1377 = vlaneseq
      %v1378 = vshrl.u32 %v1377, 7
      %v1379 = vsub.s32 0, %v1378
      %v1380 = vrot.slane %v1375, %v1379
      %v1390 = vunpack.c.l.b16 %v1366
      %v1391 = vunpack.c.l.b16 %v1367
      %v1392 = vunpack.c.l.b16 %v1368
      %v1393 = vunpack.c.l.b16 %v1369
      %v1394 = vunpack.c.l.b16 %v1370
      %v1395 = vunpack.c.l.b16 %v1371
      %v1396 = vunpack.c.l.b16 %v1372
      %v1397 = vunpack.c.l.b16 %v1373
      %v1398 = vpack.c.b16 %v1391, %v1390
      %v1399 = vpack.c.b16 %v1393, %v1392
      %v1400 = vpack.c.b16 %v1395, %v1394
      %v1401 = vpack.c.b16 %v1397, %v1396
      %1406 = vmatprep.subr.bf16.mxu0 0
      %1407 = vmatpush1.bf16.msra.mxu0 %v1398
      %1408 = vmatprep.subr.bf16.mxu0 0
      %1409 = vmatpush1.bf16.msra.mxu0 %v1399
      %1410 = vmatprep.subr.bf16.mxu0 0
      %1411 = vmatpush1.bf16.msra.mxu0 %v1400
      %1412 = vmatprep.subr.bf16.mxu0 0
      %1413 = vmatpush1.bf16.msra.mxu0 %v1401
      %1414 = vmatprep.subr.bf16.mxu0 0
      %1415 = vmatpush1.bf16.msra.mxu0 0
      %1416 = vmatprep.subr.bf16.mxu0 0
      %1417 = vmatpush1.bf16.msra.mxu0 0
      %1418 = vmatprep.subr.bf16.mxu0 0
      %1419 = vmatpush1.bf16.msra.mxu0 0
      %1420 = vmatprep.subr.bf16.mxu0 0
      %1421 = vmatpush1.bf16.msra.mxu0 0
      %1422 = vmatprep.subr.bf16.mxu0 0
      %1423 = vmatpush1.bf16.msra.mxu0 0
      %1424 = vmatprep.subr.bf16.mxu0 0
      %1425 = vmatpush1.bf16.msra.mxu0 0
      %1426 = vmatprep.subr.bf16.mxu0 0
      %1427 = vmatpush1.bf16.msra.mxu0 0
      %1428 = vmatprep.subr.bf16.mxu0 0
      %1429 = vmatpush1.bf16.msra.mxu0 0
      %1430 = vmatprep.subr.bf16.mxu0 0
      %1431 = vmatpush1.bf16.msra.mxu0 0
      %1432 = vmatprep.subr.bf16.mxu0 0
      %1433 = vmatpush1.bf16.msra.mxu0 0
      %1434 = vmatprep.subr.bf16.mxu0 0
      %1435 = vmatpush1.bf16.msra.mxu0 0
      %1436 = vmatprep.subr.bf16.mxu0 0
      %1437 = vmatpush1.bf16.msra.mxu0 0
      %1438 = vmatprep.mubr.bf16.mxu0 0
      %1439 = vmatmul.mubr.bf16.gmra.mrb[0].mxu0 %v564
      %v1440 = vpop.f32.mrb[0].mxu0
      %v1441 = vadd.f32 %v1380, %v1440
      %v1442 = vpop.f32.mrb[0].mxu0
      %v1443 = vpop.f32.mrb[0].mxu0
      %v1444 = vpop.f32.mrb[0].mxu0
      %1445 = vdwg.mxu0
      %s1446 = scalar_lea.vmem %s6, 64
      %v1447 = vld [vmem:[%s1446] sm:$0xf]
      %v1448 = vld [vmem:[%s1446 + $0x4] sm:$0xf]
      %v1449 = vld [vmem:[%s1446 + $0x8] sm:$0xf]
      %v1450 = vld [vmem:[%s1446 + $0xc] sm:$0xf]
      %v1451 = vld [vmem:[%s1446 + $0x10] sm:$0xf]
      %v1452 = vld [vmem:[%s1446 + $0x14] sm:$0xf]
      %v1453 = vld [vmem:[%s1446 + $0x18] sm:$0xf]
      %v1454 = vld [vmem:[%s1446 + $0x1c] sm:$0xf]
      %s1455 = scalar_lea.vmem %s7, 2
      %v1456 = vld [vmem:[%s1455] sm:$0x1]
      %v1458 = vlaneseq
      %v1459 = vshrl.u32 %v1458, 7
      %v1460 = vsub.s32 0, %v1459
      %v1461 = vrot.slane %v1456, %v1460
      %v1471 = vunpack.c.l.b16 %v1447
      %v1472 = vunpack.c.l.b16 %v1448
      %v1473 = vunpack.c.l.b16 %v1449
      %v1474 = vunpack.c.l.b16 %v1450
      %v1475 = vunpack.c.l.b16 %v1451
      %v1476 = vunpack.c.l.b16 %v1452
      %v1477 = vunpack.c.l.b16 %v1453
      %v1478 = vunpack.c.l.b16 %v1454
      %v1479 = vpack.c.b16 %v1472, %v1471
      %v1480 = vpack.c.b16 %v1474, %v1473
      %v1481 = vpack.c.b16 %v1476, %v1475
      %v1482 = vpack.c.b16 %v1478, %v1477
      %1487 = vmatprep.subr.bf16.mxu0 0
      %1488 = vmatpush1.bf16.msra.mxu0 %v1479
      %1489 = vmatprep.subr.bf16.mxu0 0
      %1490 = vmatpush1.bf16.msra.mxu0 %v1480
      %1491 = vmatprep.subr.bf16.mxu0 0
      %1492 = vmatpush1.bf16.msra.mxu0 %v1481
      %1493 = vmatprep.subr.bf16.mxu0 0
      %1494 = vmatpush1.bf16.msra.mxu0 %v1482
      %1495 = vmatprep.subr.bf16.mxu0 0
      %1496 = vmatpush1.bf16.msra.mxu0 0
      %1497 = vmatprep.subr.bf16.mxu0 0
      %1498 = vmatpush1.bf16.msra.mxu0 0
      %1499 = vmatprep.subr.bf16.mxu0 0
      %1500 = vmatpush1.bf16.msra.mxu0 0
      %1501 = vmatprep.subr.bf16.mxu0 0
      %1502 = vmatpush1.bf16.msra.mxu0 0
      %1503 = vmatprep.subr.bf16.mxu0 0
      %1504 = vmatpush1.bf16.msra.mxu0 0
      %1505 = vmatprep.subr.bf16.mxu0 0
      %1506 = vmatpush1.bf16.msra.mxu0 0
      %1507 = vmatprep.subr.bf16.mxu0 0
      %1508 = vmatpush1.bf16.msra.mxu0 0
      %1509 = vmatprep.subr.bf16.mxu0 0
      %1510 = vmatpush1.bf16.msra.mxu0 0
      %1511 = vmatprep.subr.bf16.mxu0 0
      %1512 = vmatpush1.bf16.msra.mxu0 0
      %1513 = vmatprep.subr.bf16.mxu0 0
      %1514 = vmatpush1.bf16.msra.mxu0 0
      %1515 = vmatprep.subr.bf16.mxu0 0
      %1516 = vmatpush1.bf16.msra.mxu0 0
      %1517 = vmatprep.subr.bf16.mxu0 0
      %1518 = vmatpush1.bf16.msra.mxu0 0
      %1519 = vmatprep.mubr.bf16.mxu0 0
      %1520 = vmatmul.mubr.bf16.gmra.mrb[0].mxu0 %v564
      %v1521 = vpop.f32.mrb[0].mxu0
      %v1522 = vadd.f32 %v1461, %v1521
      %v1523 = vpop.f32.mrb[0].mxu0
      %v1524 = vpop.f32.mrb[0].mxu0
      %v1525 = vpop.f32.mrb[0].mxu0
      %1526 = vdwg.mxu0
      %v1527 = vpack.c.bf16 %v1362, %v1359
      %v1528 = vpack.c.bf16 %v1441, %v1441
      %v1530 = vsel %vm687, %v1527, 0
      %v1533 = vsel %vm687, %v1528, 0
      %1535 = vmatprep.subr.bf16.mxu0 0
      %1536 = vmatpush1.bf16.xpose.msra.mxu0 %v1533
      %1537 = vmatprep.subr.bf16.mxu0 0
      %1538 = vmatpush1.bf16.xpose.msra.mxu0 0
      %1539 = vmatprep.subr.bf16.mxu0 0
      %1540 = vmatpush1.bf16.xpose.msra.mxu0 0
      %1541 = vmatprep.subr.bf16.mxu0 0
      %1542 = vmatpush1.bf16.xpose.msra.mxu0 0
      %1543 = vmatprep.subr.bf16.mxu0 0
      %1544 = vmatpush1.bf16.xpose.msra.mxu0 0
      %1545 = vmatprep.subr.bf16.mxu0 0
      %1546 = vmatpush1.bf16.xpose.msra.mxu0 0
      %1547 = vmatprep.subr.bf16.mxu0 0
      %1548 = vmatpush1.bf16.xpose.msra.mxu0 0
      %1549 = vmatprep.subr.bf16.mxu0 0
      %1550 = vmatpush1.bf16.xpose.msra.mxu0 0
      %1551 = vmatprep.subr.bf16.mxu0 0
      %1552 = vmatpush1.bf16.xpose.msra.mxu0 0
      %1553 = vmatprep.subr.bf16.mxu0 0
      %1554 = vmatpush1.bf16.xpose.msra.mxu0 0
      %1555 = vmatprep.subr.bf16.mxu0 0
      %1556 = vmatpush1.bf16.xpose.msra.mxu0 0
      %1557 = vmatprep.subr.bf16.mxu0 0
      %1558 = vmatpush1.bf16.xpose.msra.mxu0 0
      %1559 = vmatprep.subr.bf16.mxu0 0
      %1560 = vmatpush1.bf16.xpose.msra.mxu0 0
      %1561 = vmatprep.subr.bf16.mxu0 0
      %1562 = vmatpush1.bf16.xpose.msra.mxu0 0
      %1563 = vmatprep.subr.bf16.mxu0 0
      %1564 = vmatpush1.bf16.xpose.msra.mxu0 0
      %1565 = vmatprep.subr.bf16.mxu0 0
      %1566 = vmatpush1.bf16.xpose.msra.mxu0 0
      %1567 = vmatprep.mubr.bf16.mxu0 0
      %1568 = vmatmul.mubr.bf16.gmra.mrb[0].mxu0 %v1530
      %v1569 = vpop.f32.mrb[0].mxu0
      %v1570 = vadd.f32 0.0, %v1569
      %v1571 = vpop.f32.mrb[0].mxu0
      %v1572 = vpop.f32.mrb[0].mxu0
      %v1573 = vadd.f32 0.0, %v1572
      %v1574 = vpop.f32.mrb[0].mxu0
      %1575 = vdwg.mxu0
      %v1576 = vmul.f32 %v1570, 0.25
      %v1577 = vmul.f32 %v1573, 0.25
      %v1578 = vsel %vm737, %v1576, -inf
      %1579 = vmax.xlane.f32.xlu0 %v1578
      %v1580 = vpop.xlane.xlu0 %1579
      %v1581 = vsel %vm737, %v1577, -inf
      %1582 = vmax.xlane.f32.xlu0 %v1581
      %v1583 = vpop.xlane.xlu0 %1582
      %v1584 = vsub.f32 %v1576, %v1580
      %v1585 = vsub.f32 %v1577, %v1583
      %v1586 = vmul.f32 %v1584, 1.442695
      %v1587 = vpow.pop %v1586
      %v1588 = vmul.f32 %v1585, 1.442695
      %v1589 = vpow.pop %v1588
      %v1590 = vsel %vm737, %v1587, 0.0
      %1591 = vadd.xlane.f32.xlu0 %v1590
      %v1592 = vpop.xlane.xlu0 %1591
      %v1593 = vsel %vm737, %v1589, 0.0
      %1594 = vadd.xlane.f32.xlu0 %v1593
      %v1595 = vpop.xlane.xlu0 %1594
      %v1596 = vrcp.pop %v1592
      %v1597 = vmul.f32 %v1587, %v1596
      %v1598 = vrcp.pop %v1595
      %v1599 = vmul.f32 %v1589, %v1598
      %v1600 = vpack.c.bf16 %v1599, %v1597
      %v1601 = vpack.c.bf16 %v1522, %v1522
      %v1603 = vsel %vm737, %v1600, 0
      %v1606 = vsel %vm765, %v1601, 0
      %1608 = vmatprep.subr.bf16.mxu0 0
      %1609 = vmatpush1.bf16.msra.mxu0 %v1606
      %1610 = vmatprep.subr.bf16.mxu0 0
      %1611 = vmatpush1.bf16.msra.mxu0 0
      %1612 = vmatprep.subr.bf16.mxu0 0
      %1613 = vmatpush1.bf16.msra.mxu0 0
      %1614 = vmatprep.subr.bf16.mxu0 0
      %1615 = vmatpush1.bf16.msra.mxu0 0
      %1616 = vmatprep.subr.bf16.mxu0 0
      %1617 = vmatpush1.bf16.msra.mxu0 0
      %1618 = vmatprep.subr.bf16.mxu0 0
      %1619 = vmatpush1.bf16.msra.mxu0 0
      %1620 = vmatprep.subr.bf16.mxu0 0
      %1621 = vmatpush1.bf16.msra.mxu0 0
      %1622 = vmatprep.subr.bf16.mxu0 0
      %1623 = vmatpush1.bf16.msra.mxu0 0
      %1624 = vmatprep.subr.bf16.mxu0 0
      %1625 = vmatpush1.bf16.msra.mxu0 0
      %1626 = vmatprep.subr.bf16.mxu0 0
      %1627 = vmatpush1.bf16.msra.mxu0 0
      %1628 = vmatprep.subr.bf16.mxu0 0
      %1629 = vmatpush1.bf16.msra.mxu0 0
      %1630 = vmatprep.subr.bf16.mxu0 0
      %1631 = vmatpush1.bf16.msra.mxu0 0
      %1632 = vmatprep.subr.bf16.mxu0 0
      %1633 = vmatpush1.bf16.msra.mxu0 0
      %1634 = vmatprep.subr.bf16.mxu0 0
      %1635 = vmatpush1.bf16.msra.mxu0 0
      %1636 = vmatprep.subr.bf16.mxu0 0
      %1637 = vmatpush1.bf16.msra.mxu0 0
      %1638 = vmatprep.subr.bf16.mxu0 0
      %1639 = vmatpush1.bf16.msra.mxu0 0
      %1640 = vmatprep.mubr.bf16.mxu0 0
      %1641 = vmatmul.mubr.bf16.gmra.mrb[0].mxu0 %v1603
      %v1642 = vpop.f32.mrb[0].mxu0
      %v1643 = vadd.f32 0.0, %v1642
      %v1644 = vpop.f32.mrb[0].mxu0
      %v1645 = vpop.f32.mrb[0].mxu0
      %v1646 = vadd.f32 0.0, %v1645
      %v1647 = vpop.f32.mrb[0].mxu0
      %1648 = vdwg.mxu0
      %v1649 = vpack.c.bf16 %v1646, %v1643
      %s1650 = scalar_lea.vmem %s8, 16
      %v1651 = vld [vmem:[%s1650] sm:$0xf]
      %v1652 = vld [vmem:[%s1650 + $0x4] sm:$0xf]
      %v1655 = vunpack.c.l.b16 %v1651
      %v1656 = vunpack.c.l.b16 %v1652
      %v1657 = vpack.c.b16 %v1656, %v1655
      %v1660 = vsel %vm687, %v1649, 0
      %1662 = vmatprep.subr.bf16.mxu0 0
      %1663 = vmatpush1.bf16.msra.mxu0 %v1657
      %1664 = vmatprep.subr.bf16.mxu0 0
      %1665 = vmatpush1.bf16.msra.mxu0 0
      %1666 = vmatprep.subr.bf16.mxu0 0
      %1667 = vmatpush1.bf16.msra.mxu0 0
      %1668 = vmatprep.subr.bf16.mxu0 0
      %1669 = vmatpush1.bf16.msra.mxu0 0
      %1670 = vmatprep.subr.bf16.mxu0 0
      %1671 = vmatpush1.bf16.msra.mxu0 0
      %1672 = vmatprep.subr.bf16.mxu0 0
      %1673 = vmatpush1.bf16.msra.mxu0 0
      %1674 = vmatprep.subr.bf16.mxu0 0
      %1675 = vmatpush1.bf16.msra.mxu0 0
      %1676 = vmatprep.subr.bf16.mxu0 0
      %1677 = vmatpush1.bf16.msra.mxu0 0
      %1678 = vmatprep.subr.bf16.mxu0 0
      %1679 = vmatpush1.bf16.msra.mxu0 0
      %1680 = vmatprep.subr.bf16.mxu0 0
      %1681 = vmatpush1.bf16.msra.mxu0 0
      %1682 = vmatprep.subr.bf16.mxu0 0
      %1683 = vmatpush1.bf16.msra.mxu0 0
      %1684 = vmatprep.subr.bf16.mxu0 0
      %1685 = vmatpush1.bf16.msra.mxu0 0
      %1686 = vmatprep.subr.bf16.mxu0 0
      %1687 = vmatpush1.bf16.msra.mxu0 0
      %1688 = vmatprep.subr.bf16.mxu0 0
      %1689 = vmatpush1.bf16.msra.mxu0 0
      %1690 = vmatprep.subr.bf16.mxu0 0
      %1691 = vmatpush1.bf16.msra.mxu0 0
      %1692 = vmatprep.subr.bf16.mxu0 0
      %1693 = vmatpush1.bf16.msra.mxu0 0
      %1694 = vmatprep.mubr.bf16.mxu0 0
      %1695 = vmatmul.mubr.bf16.gmra.mrb[0].mxu0 %v1660
      %v1696 = vpop.f32.mrb[0].mxu0
      %v1697 = vadd.f32 0.0, %v1696
      %v1698 = vpop.f32.mrb[0].mxu0
      %v1699 = vpop.f32.mrb[0].mxu0
      %v1700 = vadd.f32 0.0, %v1699
      %v1701 = vpop.f32.mrb[0].mxu0
      %1702 = vdwg.mxu0
      %v1703 = vadd.f32 %v1277, %v1697
      %v1704 = vadd.f32 %v1280, %v1700
      %s1705 = scalar_lea.vmem %s2, 96
      %v1706 = vld [vmem:[%s1705] sm:$0xf]
      %v1707 = vld [vmem:[%s1705 + $0x4] sm:$0xf]
      %v1708 = vld [vmem:[%s1705 + $0x8] sm:$0xf]
      %v1709 = vld [vmem:[%s1705 + $0xc] sm:$0xf]
      %v1710 = vld [vmem:[%s1705 + $0x10] sm:$0xf]
      %v1711 = vld [vmem:[%s1705 + $0x14] sm:$0xf]
      %v1712 = vld [vmem:[%s1705 + $0x18] sm:$0xf]
      %v1713 = vld [vmem:[%s1705 + $0x1c] sm:$0xf]
      %s1714 = scalar_lea.vmem %s3, 3
      %v1715 = vld [vmem:[%s1714] sm:$0x1]
      %v1717 = vlaneseq
      %v1718 = vshrl.u32 %v1717, 7
      %v1719 = vsub.s32 0, %v1718
      %v1720 = vrot.slane %v1715, %v1719
      %v1730 = vunpack.c.l.b16 %v1706
      %v1731 = vunpack.c.l.b16 %v1707
      %v1732 = vunpack.c.l.b16 %v1708
      %v1733 = vunpack.c.l.b16 %v1709
      %v1734 = vunpack.c.l.b16 %v1710
      %v1735 = vunpack.c.l.b16 %v1711
      %v1736 = vunpack.c.l.b16 %v1712
      %v1737 = vunpack.c.l.b16 %v1713
      %v1738 = vpack.c.b16 %v1731, %v1730
      %v1739 = vpack.c.b16 %v1733, %v1732
      %v1740 = vpack.c.b16 %v1735, %v1734
      %v1741 = vpack.c.b16 %v1737, %v1736
      %1746 = vmatprep.subr.bf16.mxu0 0
      %1747 = vmatpush1.bf16.msra.mxu0 %v1738
      %1748 = vmatprep.subr.bf16.mxu0 0
      %1749 = vmatpush1.bf16.msra.mxu0 %v1739
      %1750 = vmatprep.subr.bf16.mxu0 0
      %1751 = vmatpush1.bf16.msra.mxu0 %v1740
      %1752 = vmatprep.subr.bf16.mxu0 0
      %1753 = vmatpush1.bf16.msra.mxu0 %v1741
      %1754 = vmatprep.subr.bf16.mxu0 0
      %1755 = vmatpush1.bf16.msra.mxu0 0
      %1756 = vmatprep.subr.bf16.mxu0 0
      %1757 = vmatpush1.bf16.msra.mxu0 0
      %1758 = vmatprep.subr.bf16.mxu0 0
      %1759 = vmatpush1.bf16.msra.mxu0 0
      %1760 = vmatprep.subr.bf16.mxu0 0
      %1761 = vmatpush1.bf16.msra.mxu0 0
      %1762 = vmatprep.subr.bf16.mxu0 0
      %1763 = vmatpush1.bf16.msra.mxu0 0
      %1764 = vmatprep.subr.bf16.mxu0 0
      %1765 = vmatpush1.bf16.msra.mxu0 0
      %1766 = vmatprep.subr.bf16.mxu0 0
      %1767 = vmatpush1.bf16.msra.mxu0 0
      %1768 = vmatprep.subr.bf16.mxu0 0
      %1769 = vmatpush1.bf16.msra.mxu0 0
      %1770 = vmatprep.subr.bf16.mxu0 0
      %1771 = vmatpush1.bf16.msra.mxu0 0
      %1772 = vmatprep.subr.bf16.mxu0 0
      %1773 = vmatpush1.bf16.msra.mxu0 0
      %1774 = vmatprep.subr.bf16.mxu0 0
      %1775 = vmatpush1.bf16.msra.mxu0 0
      %1776 = vmatprep.subr.bf16.mxu0 0
      %1777 = vmatpush1.bf16.msra.mxu0 0
      %1778 = vmatprep.mubr.bf16.mxu0 0
      %1779 = vmatmul.mubr.bf16.gmra.mrb[0].mxu0 %v481
      %v1780 = vpop.f32.mrb[0].mxu0
      %v1781 = vadd.f32 %v1720, %v1780
      %v1782 = vpop.f32.mrb[0].mxu0
      %v1783 = vpop.f32.mrb[0].mxu0
      %v1784 = vadd.f32 %v1720, %v1783
      %v1785 = vpop.f32.mrb[0].mxu0
      %1786 = vdwg.mxu0
      %s1787 = scalar_lea.vmem %s4, 96
      %v1788 = vld [vmem:[%s1787] sm:$0xf]
      %v1789 = vld [vmem:[%s1787 + $0x4] sm:$0xf]
      %v1790 = vld [vmem:[%s1787 + $0x8] sm:$0xf]
      %v1791 = vld [vmem:[%s1787 + $0xc] sm:$0xf]
      %v1792 = vld [vmem:[%s1787 + $0x10] sm:$0xf]
      %v1793 = vld [vmem:[%s1787 + $0x14] sm:$0xf]
      %v1794 = vld [vmem:[%s1787 + $0x18] sm:$0xf]
      %v1795 = vld [vmem:[%s1787 + $0x1c] sm:$0xf]
      %s1796 = scalar_lea.vmem %s5, 3
      %v1797 = vld [vmem:[%s1796] sm:$0x1]
      %v1799 = vlaneseq
      %v1800 = vshrl.u32 %v1799, 7
      %v1801 = vsub.s32 0, %v1800
      %v1802 = vrot.slane %v1797, %v1801
      %v1812 = vunpack.c.l.b16 %v1788
      %v1813 = vunpack.c.l.b16 %v1789
      %v1814 = vunpack.c.l.b16 %v1790
      %v1815 = vunpack.c.l.b16 %v1791
      %v1816 = vunpack.c.l.b16 %v1792
      %v1817 = vunpack.c.l.b16 %v1793
      %v1818 = vunpack.c.l.b16 %v1794
      %v1819 = vunpack.c.l.b16 %v1795
      %v1820 = vpack.c.b16 %v1813, %v1812
      %v1821 = vpack.c.b16 %v1815, %v1814
      %v1822 = vpack.c.b16 %v1817, %v1816
      %v1823 = vpack.c.b16 %v1819, %v1818
      %1828 = vmatprep.subr.bf16.mxu0 0
      %1829 = vmatpush1.bf16.msra.mxu0 %v1820
      %1830 = vmatprep.subr.bf16.mxu0 0
      %1831 = vmatpush1.bf16.msra.mxu0 %v1821
      %1832 = vmatprep.subr.bf16.mxu0 0
      %1833 = vmatpush1.bf16.msra.mxu0 %v1822
      %1834 = vmatprep.subr.bf16.mxu0 0
      %1835 = vmatpush1.bf16.msra.mxu0 %v1823
      %1836 = vmatprep.subr.bf16.mxu0 0
      %1837 = vmatpush1.bf16.msra.mxu0 0
      %1838 = vmatprep.subr.bf16.mxu0 0
      %1839 = vmatpush1.bf16.msra.mxu0 0
      %1840 = vmatprep.subr.bf16.mxu0 0
      %1841 = vmatpush1.bf16.msra.mxu0 0
      %1842 = vmatprep.subr.bf16.mxu0 0
      %1843 = vmatpush1.bf16.msra.mxu0 0
      %1844 = vmatprep.subr.bf16.mxu0 0
      %1845 = vmatpush1.bf16.msra.mxu0 0
      %1846 = vmatprep.subr.bf16.mxu0 0
      %1847 = vmatpush1.bf16.msra.mxu0 0
      %1848 = vmatprep.subr.bf16.mxu0 0
      %1849 = vmatpush1.bf16.msra.mxu0 0
      %1850 = vmatprep.subr.bf16.mxu0 0
      %1851 = vmatpush1.bf16.msra.mxu0 0
      %1852 = vmatprep.subr.bf16.mxu0 0
      %1853 = vmatpush1.bf16.msra.mxu0 0
      %1854 = vmatprep.subr.bf16.mxu0 0
      %1855 = vmatpush1.bf16.msra.mxu0 0
      %1856 = vmatprep.subr.bf16.mxu0 0
      %1857 = vmatpush1.bf16.msra.mxu0 0
      %1858 = vmatprep.subr.bf16.mxu0 0
      %1859 = vmatpush1.bf16.msra.mxu0 0
      %1860 = vmatprep.mubr.bf16.mxu0 0
      %1861 = vmatmul.mubr.bf16.gmra.mrb[0].mxu0 %v564
      %v1862 = vpop.f32.mrb[0].mxu0
      %v1863 = vadd.f32 %v1802, %v1862
      %v1864 = vpop.f32.mrb[0].mxu0
      %v1865 = vpop.f32.mrb[0].mxu0
      %v1866 = vpop.f32.mrb[0].mxu0
      %1867 = vdwg.mxu0
      %s1868 = scalar_lea.vmem %s6, 96
      %v1869 = vld [vmem:[%s1868] sm:$0xf]
      %v1870 = vld [vmem:[%s1868 + $0x4] sm:$0xf]
      %v1871 = vld [vmem:[%s1868 + $0x8] sm:$0xf]
      %v1872 = vld [vmem:[%s1868 + $0xc] sm:$0xf]
      %v1873 = vld [vmem:[%s1868 + $0x10] sm:$0xf]
      %v1874 = vld [vmem:[%s1868 + $0x14] sm:$0xf]
      %v1875 = vld [vmem:[%s1868 + $0x18] sm:$0xf]
      %v1876 = vld [vmem:[%s1868 + $0x1c] sm:$0xf]
      %s1877 = scalar_lea.vmem %s7, 3
      %v1878 = vld [vmem:[%s1877] sm:$0x1]
      %v1880 = vlaneseq
      %v1881 = vshrl.u32 %v1880, 7
      %v1882 = vsub.s32 0, %v1881
      %v1883 = vrot.slane %v1878, %v1882
      %v1893 = vunpack.c.l.b16 %v1869
      %v1894 = vunpack.c.l.b16 %v1870
      %v1895 = vunpack.c.l.b16 %v1871
      %v1896 = vunpack.c.l.b16 %v1872
      %v1897 = vunpack.c.l.b16 %v1873
      %v1898 = vunpack.c.l.b16 %v1874
      %v1899 = vunpack.c.l.b16 %v1875
      %v1900 = vunpack.c.l.b16 %v1876
      %v1901 = vpack.c.b16 %v1894, %v1893
      %v1902 = vpack.c.b16 %v1896, %v1895
      %v1903 = vpack.c.b16 %v1898, %v1897
      %v1904 = vpack.c.b16 %v1900, %v1899
      %1909 = vmatprep.subr.bf16.mxu0 0
      %1910 = vmatpush1.bf16.msra.mxu0 %v1901
      %1911 = vmatprep.subr.bf16.mxu0 0
      %1912 = vmatpush1.bf16.msra.mxu0 %v1902
      %1913 = vmatprep.subr.bf16.mxu0 0
      %1914 = vmatpush1.bf16.msra.mxu0 %v1903
      %1915 = vmatprep.subr.bf16.mxu0 0
      %1916 = vmatpush1.bf16.msra.mxu0 %v1904
      %1917 = vmatprep.subr.bf16.mxu0 0
      %1918 = vmatpush1.bf16.msra.mxu0 0
      %1919 = vmatprep.subr.bf16.mxu0 0
      %1920 = vmatpush1.bf16.msra.mxu0 0
      %1921 = vmatprep.subr.bf16.mxu0 0
      %1922 = vmatpush1.bf16.msra.mxu0 0
      %1923 = vmatprep.subr.bf16.mxu0 0
      %1924 = vmatpush1.bf16.msra.mxu0 0
      %1925 = vmatprep.subr.bf16.mxu0 0
      %1926 = vmatpush1.bf16.msra.mxu0 0
      %1927 = vmatprep.subr.bf16.mxu0 0
      %1928 = vmatpush1.bf16.msra.mxu0 0
      %1929 = vmatprep.subr.bf16.mxu0 0
      %1930 = vmatpush1.bf16.msra.mxu0 0
      %1931 = vmatprep.subr.bf16.mxu0 0
      %1932 = vmatpush1.bf16.msra.mxu0 0
      %1933 = vmatprep.subr.bf16.mxu0 0
      %1934 = vmatpush1.bf16.msra.mxu0 0
      %1935 = vmatprep.subr.bf16.mxu0 0
      %1936 = vmatpush1.bf16.msra.mxu0 0
      %1937 = vmatprep.subr.bf16.mxu0 0
      %1938 = vmatpush1.bf16.msra.mxu0 0
      %1939 = vmatprep.subr.bf16.mxu0 0
      %1940 = vmatpush1.bf16.msra.mxu0 0
      %1941 = vmatprep.mubr.bf16.mxu0 0
      %1942 = vmatmul.mubr.bf16.gmra.mrb[0].mxu0 %v564
      %v1943 = vpop.f32.mrb[0].mxu0
      %v1944 = vadd.f32 %v1883, %v1943
      %v1945 = vpop.f32.mrb[0].mxu0
      %v1946 = vpop.f32.mrb[0].mxu0
      %v1947 = vpop.f32.mrb[0].mxu0
      %1948 = vdwg.mxu0
      %v1949 = vpack.c.bf16 %v1784, %v1781
      %v1950 = vpack.c.bf16 %v1863, %v1863
      %v1952 = vsel %vm687, %v1949, 0
      %v1955 = vsel %vm687, %v1950, 0
      %1957 = vmatprep.subr.bf16.mxu0 0
      %1958 = vmatpush1.bf16.xpose.msra.mxu0 %v1955
      %1959 = vmatprep.subr.bf16.mxu0 0
      %1960 = vmatpush1.bf16.xpose.msra.mxu0 0
      %1961 = vmatprep.subr.bf16.mxu0 0
      %1962 = vmatpush1.bf16.xpose.msra.mxu0 0
      %1963 = vmatprep.subr.bf16.mxu0 0
      %1964 = vmatpush1.bf16.xpose.msra.mxu0 0
      %1965 = vmatprep.subr.bf16.mxu0 0
      %1966 = vmatpush1.bf16.xpose.msra.mxu0 0
      %1967 = vmatprep.subr.bf16.mxu0 0
      %1968 = vmatpush1.bf16.xpose.msra.mxu0 0
      %1969 = vmatprep.subr.bf16.mxu0 0
      %1970 = vmatpush1.bf16.xpose.msra.mxu0 0
      %1971 = vmatprep.subr.bf16.mxu0 0
      %1972 = vmatpush1.bf16.xpose.msra.mxu0 0
      %1973 = vmatprep.subr.bf16.mxu0 0
      %1974 = vmatpush1.bf16.xpose.msra.mxu0 0
      %1975 = vmatprep.subr.bf16.mxu0 0
      %1976 = vmatpush1.bf16.xpose.msra.mxu0 0
      %1977 = vmatprep.subr.bf16.mxu0 0
      %1978 = vmatpush1.bf16.xpose.msra.mxu0 0
      %1979 = vmatprep.subr.bf16.mxu0 0
      %1980 = vmatpush1.bf16.xpose.msra.mxu0 0
      %1981 = vmatprep.subr.bf16.mxu0 0
      %1982 = vmatpush1.bf16.xpose.msra.mxu0 0
      %1983 = vmatprep.subr.bf16.mxu0 0
      %1984 = vmatpush1.bf16.xpose.msra.mxu0 0
      %1985 = vmatprep.subr.bf16.mxu0 0
      %1986 = vmatpush1.bf16.xpose.msra.mxu0 0
      %1987 = vmatprep.subr.bf16.mxu0 0
      %1988 = vmatpush1.bf16.xpose.msra.mxu0 0
      %1989 = vmatprep.mubr.bf16.mxu0 0
      %1990 = vmatmul.mubr.bf16.gmra.mrb[0].mxu0 %v1952
      %v1991 = vpop.f32.mrb[0].mxu0
      %v1992 = vadd.f32 0.0, %v1991
      %v1993 = vpop.f32.mrb[0].mxu0
      %v1994 = vpop.f32.mrb[0].mxu0
      %v1995 = vadd.f32 0.0, %v1994
      %v1996 = vpop.f32.mrb[0].mxu0
      %1997 = vdwg.mxu0
      %v1998 = vmul.f32 %v1992, 0.25
      %v1999 = vmul.f32 %v1995, 0.25
      %v2000 = vsel %vm737, %v1998, -inf
      %2001 = vmax.xlane.f32.xlu0 %v2000
      %v2002 = vpop.xlane.xlu0 %2001
      %v2003 = vsel %vm737, %v1999, -inf
      %2004 = vmax.xlane.f32.xlu0 %v2003
      %v2005 = vpop.xlane.xlu0 %2004
      %v2006 = vsub.f32 %v1998, %v2002
      %v2007 = vsub.f32 %v1999, %v2005
      %v2008 = vmul.f32 %v2006, 1.442695
      %v2009 = vpow.pop %v2008
      %v2010 = vmul.f32 %v2007, 1.442695
      %v2011 = vpow.pop %v2010
      %v2012 = vsel %vm737, %v2009, 0.0
      %2013 = vadd.xlane.f32.xlu0 %v2012
      %v2014 = vpop.xlane.xlu0 %2013
      %v2015 = vsel %vm737, %v2011, 0.0
      %2016 = vadd.xlane.f32.xlu0 %v2015
      %v2017 = vpop.xlane.xlu0 %2016
      %v2018 = vrcp.pop %v2014
      %v2019 = vmul.f32 %v2009, %v2018
      %v2020 = vrcp.pop %v2017
      %v2021 = vmul.f32 %v2011, %v2020
      %v2022 = vpack.c.bf16 %v2021, %v2019
      %v2023 = vpack.c.bf16 %v1944, %v1944
      %v2025 = vsel %vm737, %v2022, 0
      %v2028 = vsel %vm765, %v2023, 0
      %2030 = vmatprep.subr.bf16.mxu0 0
      %2031 = vmatpush1.bf16.msra.mxu0 %v2028
      %2032 = vmatprep.subr.bf16.mxu0 0
      %2033 = vmatpush1.bf16.msra.mxu0 0
      %2034 = vmatprep.subr.bf16.mxu0 0
      %2035 = vmatpush1.bf16.msra.mxu0 0
      %2036 = vmatprep.subr.bf16.mxu0 0
      %2037 = vmatpush1.bf16.msra.mxu0 0
      %2038 = vmatprep.subr.bf16.mxu0 0
      %2039 = vmatpush1.bf16.msra.mxu0 0
      %2040 = vmatprep.subr.bf16.mxu0 0
      %2041 = vmatpush1.bf16.msra.mxu0 0
      %2042 = vmatprep.subr.bf16.mxu0 0
      %2043 = vmatpush1.bf16.msra.mxu0 0
      %2044 = vmatprep.subr.bf16.mxu0 0
      %2045 = vmatpush1.bf16.msra.mxu0 0
      %2046 = vmatprep.subr.bf16.mxu0 0
      %2047 = vmatpush1.bf16.msra.mxu0 0
      %2048 = vmatprep.subr.bf16.mxu0 0
      %2049 = vmatpush1.bf16.msra.mxu0 0
      %2050 = vmatprep.subr.bf16.mxu0 0
      %2051 = vmatpush1.bf16.msra.mxu0 0
      %2052 = vmatprep.subr.bf16.mxu0 0
      %2053 = vmatpush1.bf16.msra.mxu0 0
      %2054 = vmatprep.subr.bf16.mxu0 0
      %2055 = vmatpush1.bf16.msra.mxu0 0
      %2056 = vmatprep.subr.bf16.mxu0 0
      %2057 = vmatpush1.bf16.msra.mxu0 0
      %2058 = vmatprep.subr.bf16.mxu0 0
      %2059 = vmatpush1.bf16.msra.mxu0 0
      %2060 = vmatprep.subr.bf16.mxu0 0
      %2061 = vmatpush1.bf16.msra.mxu0 0
      %2062 = vmatprep.mubr.bf16.mxu0 0
      %2063 = vmatmul.mubr.bf16.gmra.mrb[0].mxu0 %v2025
      %v2064 = vpop.f32.mrb[0].mxu0
      %v2065 = vadd.f32 0.0, %v2064
      %v2066 = vpop.f32.mrb[0].mxu0
      %v2067 = vpop.f32.mrb[0].mxu0
      %v2068 = vadd.f32 0.0, %v2067
      %v2069 = vpop.f32.mrb[0].mxu0
      %2070 = vdwg.mxu0
      %v2071 = vpack.c.bf16 %v2068, %v2065
      %s2072 = scalar_lea.vmem %s8, 24
      %v2073 = vld [vmem:[%s2072] sm:$0xf]
      %v2074 = vld [vmem:[%s2072 + $0x4] sm:$0xf]
      %v2077 = vunpack.c.l.b16 %v2073
      %v2078 = vunpack.c.l.b16 %v2074
      %v2079 = vpack.c.b16 %v2078, %v2077
      %v2082 = vsel %vm687, %v2071, 0
      %2084 = vmatprep.subr.bf16.mxu0 0
      %2085 = vmatpush1.bf16.msra.mxu0 %v2079
      %2086 = vmatprep.subr.bf16.mxu0 0
      %2087 = vmatpush1.bf16.msra.mxu0 0
      %2088 = vmatprep.subr.bf16.mxu0 0
      %2089 = vmatpush1.bf16.msra.mxu0 0
      %2090 = vmatprep.subr.bf16.mxu0 0
      %2091 = vmatpush1.bf16.msra.mxu0 0
      %2092 = vmatprep.subr.bf16.mxu0 0
      %2093 = vmatpush1.bf16.msra.mxu0 0
      %2094 = vmatprep.subr.bf16.mxu0 0
      %2095 = vmatpush1.bf16.msra.mxu0 0
      %2096 = vmatprep.subr.bf16.mxu0 0
      %2097 = vmatpush1.bf16.msra.mxu0 0
      %2098 = vmatprep.subr.bf16.mxu0 0
      %2099 = vmatpush1.bf16.msra.mxu0 0
      %2100 = vmatprep.subr.bf16.mxu0 0
      %2101 = vmatpush1.bf16.msra.mxu0 0
      %2102 = vmatprep.subr.bf16.mxu0 0
      %2103 = vmatpush1.bf16.msra.mxu0 0
      %2104 = vmatprep.subr.bf16.mxu0 0
      %2105 = vmatpush1.bf16.msra.mxu0 0
      %2106 = vmatprep.subr.bf16.mxu0 0
      %2107 = vmatpush1.bf16.msra.mxu0 0
      %2108 = vmatprep.subr.bf16.mxu0 0
      %2109 = vmatpush1.bf16.msra.mxu0 0
      %2110 = vmatprep.subr.bf16.mxu0 0
      %2111 = vmatpush1.bf16.msra.mxu0 0
      %2112 = vmatprep.subr.bf16.mxu0 0
      %2113 = vmatpush1.bf16.msra.mxu0 0
      %2114 = vmatprep.subr.bf16.mxu0 0
      %2115 = vmatpush1.bf16.msra.mxu0 0
      %2116 = vmatprep.mubr.bf16.mxu0 0
      %2117 = vmatmul.mubr.bf16.gmra.mrb[0].mxu0 %v2082
      %v2118 = vpop.f32.mrb[0].mxu0
      %v2119 = vadd.f32 0.0, %v2118
      %v2120 = vpop.f32.mrb[0].mxu0
      %v2121 = vpop.f32.mrb[0].mxu0
      %v2122 = vadd.f32 0.0, %v2121
      %v2123 = vpop.f32.mrb[0].mxu0
      %2124 = vdwg.mxu0
      %v2125 = vadd.f32 %v1703, %v2119
      %v2126 = vadd.f32 %v1704, %v2122
      %v2127 = vld [vmem:[%s9] sm:$0x1]
      %v2129 = vlaneseq
      %v2130 = vshrl.u32 %v2129, 7
      %v2131 = vsub.s32 0, %v2130
      %v2132 = vrot.slane %v2127, %v2131
      %v2134 = vadd.f32 %v2125, %v2132
      %v2135 = vadd.f32 %v2126, %v2132
      %v2136 = vunpack.c.l.bf16 %v432
      %v2137 = vunpack.c.l.bf16 %v433
      %v2138 = vadd.f32 %v2134, %v2136
      %v2139 = vadd.f32 %v2135, %v2137
      %v2140 = vld [vmem:[%s10] sm:$0x1]
      %v2141 = vld [vmem:[%s11] sm:$0x1]
      %v2142 = vsel %vm479, %v2138, 0.0
      %2143 = vadd.xlane.f32.xlu0 %v2142
      %v2144 = vpop.xlane.xlu0 %2143
      %v2145 = vsel %vm479, %v2139, 0.0
      %2146 = vadd.xlane.f32.xlu0 %v2145
      %v2147 = vpop.xlane.xlu0 %2146
      %v2148 = vrcp.pop 64.0
      %v2149 = vmul.f32 %v2144, %v2148
      %v2150 = vmul.f32 %v2147, %v2148
      %v2151 = vsub.f32 %v2138, %v2149
      %v2152 = vsub.f32 %v2139, %v2150
      %v2153 = vmul.f32 %v2151, %v2151
      %v2154 = vmul.f32 %v2152, %v2152
      %v2155 = vsel %vm479, %v2153, 0.0
      %2156 = vadd.xlane.f32.xlu0 %v2155
      %v2157 = vpop.xlane.xlu0 %2156
      %v2158 = vsel %vm479, %v2154, 0.0
      %2159 = vadd.xlane.f32.xlu0 %v2158
      %v2160 = vpop.xlane.xlu0 %2159
      %v2161 = vmul.f32 %v2157, %v2148
      %v2162 = vmul.f32 %v2160, %v2148
      %v2163 = vadd.f32 %v2161, 1e-05
      %v2164 = vadd.f32 %v2162, 1e-05
      %v2165 = vrsqrt.pop %v2163
      %v2166 = vrsqrt.pop %v2164
      %v2167 = vmul.f32 %v2151, %v2165
      %v2168 = vmul.f32 %v2152, %v2166
      %v2170 = vlaneseq
      %v2171 = vshrl.u32 %v2170, 7
      %v2172 = vsub.s32 0, %v2171
      %v2173 = vrot.slane %v2140, %v2172
      %v2175 = vmul.f32 %v2167, %v2173
      %v2176 = vmul.f32 %v2168, %v2173
      %v2178 = vlaneseq
      %v2179 = vshrl.u32 %v2178, 7
      %v2180 = vsub.s32 0, %v2179
      %v2181 = vrot.slane %v2141, %v2180
      %v2183 = vadd.f32 %v2175, %v2181
      %v2184 = vadd.f32 %v2176, %v2181
      %v2185 = vpack.c.bf16 %v2184, %v2183
      %v2187 = vunpack.c.l.b16 %v2185
      %v2188 = vunpack.c.h.b16 %v2185
      %v2189 = vpack.c.b16 %v2187, %v2187
      %v2190 = vpack.c.b16 %v2188, %v2188
      %vm2193 = vcmask 519168
      %2194 = vst.msk [vmem:[%s430] sm:$0xf] %vm2193, %v2189
      %2195 = vst.msk [vmem:[%s430 + $0x4] sm:$0xf] %vm2193, %v2190
      %p2196 = scmp.lt.s32.totalorder %s23, 1
      %s2197 = scalar_select %p2196, %s23, 1
      %s2198 = smul.addr %s2197, 2
      %s2199 = smul.addr %s2198, 4
      %s2200 = scalar_lea.vmem %s12, %s2199
      // Predicated region
      $region69: #{transformer_translator_forward.18} parent=67 // pred_check
        %p2201 = pneg %p303
      $region70: #{transformer_translator_forward.18} parent=67 // pred_check_branch
        %2203 = sbr.rel (%p2201) target = $region72
      $region71: #{transformer_translator_forward.18} parent=67 // pred_region
        _
      $region72: #{transformer_translator_forward.18} parent=67 // pred_fallthru
        _
    $region68: #{transformer_translator_forward.18} parent=5 // pred_fallthru
      _
    %p2204 = scmp.le.s32.totalorder 2, %s18
    // Predicated region
    $region73: #{transformer_translator_forward.18} parent=5 // pred_check
      %p2205 = pneg %p2204
    $region74: #{transformer_translator_forward.18} parent=5 // pred_check_branch
      %2207 = sbr.rel (%p2205) target = $region76
    $region75: #{transformer_translator_forward.18} parent=5 // pred_region
      %s2208 = ssub.s32 %s18, 2
      // Predicated region
      $region77: #{transformer_translator_forward.18} parent=75 // pred_check
        %p2209 = pneg %p309
      $region78: #{transformer_translator_forward.18} parent=75 // pred_check_branch
        %2211 = sbr.rel (%p2209) target = $region80
      $region79: #{transformer_translator_forward.18} parent=75 // pred_region
        %p2212 = scmp.lt.s32.totalorder %s24, 1
        %s2213 = scalar_select %p2212, %s24, 1
        %s2214 = smul.addr %s2213, 2
        %s2215 = smul.addr %s2214, 4
        %s2216 = scalar_lea.vmem %s12, %s2215
      $region80: #{transformer_translator_forward.18} parent=75 // pred_fallthru
        _
    $region76: #{transformer_translator_forward.18} parent=5 // pred_fallthru
      _
  $region6: #{transformer_translator_forward.18} parent=0 // loop_footer
    %s22 = sadd.s32 1, %s18
  $region7: #{transformer_translator_forward.18} parent=0 // loop_footer_branch
    %17 = sbr.rel target = $region3
  $region8: #{transformer_translator_forward.18} parent=0 // loop_exit
    _

// kernel: transformer_translator_forward.23
$region0: #{transformer_translator_forward.23}
  #allocation0 [shape = 'u32[]', space=smem, size = 0x4, offset = 0x4, fixed_abs, tag = 'smem constant byte address 0x4 - core index']
  #allocation1 [shape = 'u32[144,128]{1,0:T(1,128)}', space=vmem, size = 0x12000, scoped, tag = 'internal scratch']
  %s0 = inlined_call_operand.vmem [shape: bf16[32,64], index: 0, kind: input, shape index: {}]
  %s1 = inlined_call_operand.vmem [shape: f32[1,64], index: 1, kind: input, shape index: {}]
  %s2 = inlined_call_operand.vmem [shape: f32[1,64], index: 2, kind: input, shape index: {}]
  %s3 = inlined_call_operand.vmem [shape: bf16[64,128], index: 3, kind: input, shape index: {}]
  %s4 = inlined_call_operand.vmem [shape: f32[1,128], index: 4, kind: input, shape index: {}]
  %s5 = inlined_call_operand.vmem [shape: f32[32,128], index: 5, kind: output, shape index: {}]
  %s6 = sld [smem:[#allocation0]]
  $region30: #{transformer_translator_forward.23} parent=0
    _
  %s8 = ssub.s32 1, %s6
  %s9 = scalar_select 0, %s8, %s6
  // Predicated region
  $region2: #{transformer_translator_forward.23} parent=0 // pred_check
    _
  $region3: #{transformer_translator_forward.23} parent=0 // pred_check_branch
    %11 = sbr.rel (0) target = $region5
  $region4: #{transformer_translator_forward.23} parent=0 // pred_region
    _
  $region5: #{transformer_translator_forward.23} parent=0 // pred_fallthru
    _
  // Predicated region
  $region6: #{transformer_translator_forward.23} parent=0 // pred_check
    _
  $region7: #{transformer_translator_forward.23} parent=0 // pred_check_branch
    %13 = sbr.rel (0) target = $region9
  $region8: #{transformer_translator_forward.23} parent=0 // pred_region
    _
  $region9: #{transformer_translator_forward.23} parent=0 // pred_fallthru
    _
  // Predicated region
  $region10: #{transformer_translator_forward.23} parent=0 // pred_check
    _
  $region11: #{transformer_translator_forward.23} parent=0 // pred_check_branch
    %15 = sbr.rel (0) target = $region13
  $region12: #{transformer_translator_forward.23} parent=0 // pred_region
    _
  $region13: #{transformer_translator_forward.23} parent=0 // pred_fallthru
    _
  // Predicated region
  $region14: #{transformer_translator_forward.23} parent=0 // pred_check
    _
  $region15: #{transformer_translator_forward.23} parent=0 // pred_check_branch
    %17 = sbr.rel (0) target = $region17
  $region16: #{transformer_translator_forward.23} parent=0 // pred_region
    _
  $region17: #{transformer_translator_forward.23} parent=0 // pred_fallthru
    _
  // Predicated region
  $region18: #{transformer_translator_forward.23} parent=0 // pred_check
    _
  $region19: #{transformer_translator_forward.23} parent=0 // pred_check_branch
    %19 = sbr.rel (0) target = $region21
  $region20: #{transformer_translator_forward.23} parent=0 // pred_region
    _
  $region21: #{transformer_translator_forward.23} parent=0 // pred_fallthru
    _
  %v21 = vld [vmem:[%s0] sm:$0xf]
  %v22 = vld [vmem:[%s0 + $0x4] sm:$0xf]
  %v23 = vld [vmem:[%s0 + $0x8] sm:$0xf]
  %v24 = vld [vmem:[%s0 + $0xc] sm:$0xf]
  %v25 = vunpack.c.l.bf16 %v21
  %v26 = vunpack.c.l.bf16 %v22
  %v27 = vunpack.c.l.bf16 %v23
  %v28 = vunpack.c.l.bf16 %v24
  %v29 = vld [vmem:[%s1] sm:$0x1]
  %v30 = vld [vmem:[%s2] sm:$0x1]
  %vm31 = vcmask 523264
  %v32 = vsel %vm31, %v25, 0.0
  %33 = vadd.xlane.f32.xlu0 %v32
  %v34 = vpop.xlane.xlu0 %33
  %v35 = vsel %vm31, %v26, 0.0
  %36 = vadd.xlane.f32.xlu0 %v35
  %v37 = vpop.xlane.xlu0 %36
  %v38 = vsel %vm31, %v27, 0.0
  %39 = vadd.xlane.f32.xlu0 %v38
  %v40 = vpop.xlane.xlu0 %39
  %v41 = vsel %vm31, %v28, 0.0
  %42 = vadd.xlane.f32.xlu0 %v41
  %v43 = vpop.xlane.xlu0 %42
  %v44 = vrcp.pop 64.0
  %v45 = vmul.f32 %v34, %v44
  %v46 = vmul.f32 %v37, %v44
  %v47 = vmul.f32 %v40, %v44
  %v48 = vmul.f32 %v43, %v44
  %v49 = vsub.f32 %v25, %v45
  %v50 = vsub.f32 %v26, %v46
  %v51 = vsub.f32 %v27, %v47
  %v52 = vsub.f32 %v28, %v48
  %v53 = vmul.f32 %v49, %v49
  %v54 = vmul.f32 %v50, %v50
  %v55 = vmul.f32 %v51, %v51
  %v56 = vmul.f32 %v52, %v52
  %v57 = vsel %vm31, %v53, 0.0
  %58 = vadd.xlane.f32.xlu0 %v57
  %v59 = vpop.xlane.xlu0 %58
  %v60 = vsel %vm31, %v54, 0.0
  %61 = vadd.xlane.f32.xlu0 %v60
  %v62 = vpop.xlane.xlu0 %61
  %v63 = vsel %vm31, %v55, 0.0
  %64 = vadd.xlane.f32.xlu0 %v63
  %v65 = vpop.xlane.xlu0 %64
  %v66 = vsel %vm31, %v56, 0.0
  %67 = vadd.xlane.f32.xlu0 %v66
  %v68 = vpop.xlane.xlu0 %67
  %v69 = vmul.f32 %v59, %v44
  %v70 = vmul.f32 %v62, %v44
  %v71 = vmul.f32 %v65, %v44
  %v72 = vmul.f32 %v68, %v44
  %v73 = vadd.f32 %v69, 1e-05
  %v74 = vadd.f32 %v70, 1e-05
  %v75 = vadd.f32 %v71, 1e-05
  %v76 = vadd.f32 %v72, 1e-05
  %v77 = vrsqrt.pop %v73
  %v78 = vrsqrt.pop %v74
  %v79 = vrsqrt.pop %v75
  %v80 = vrsqrt.pop %v76
  %v81 = vmul.f32 %v49, %v77
  %v82 = vmul.f32 %v50, %v78
  %v83 = vmul.f32 %v51, %v79
  %v84 = vmul.f32 %v52, %v80
  %v86 = vlaneseq
  %v87 = vshrl.u32 %v86, 7
  %v88 = vsub.s32 0, %v87
  %v89 = vrot.slane %v29, %v88
  %v91 = vmul.f32 %v81, %v89
  %v92 = vmul.f32 %v82, %v89
  %v93 = vmul.f32 %v83, %v89
  %v94 = vmul.f32 %v84, %v89
  %v96 = vlaneseq
  %v97 = vshrl.u32 %v96, 7
  %v98 = vsub.s32 0, %v97
  %v99 = vrot.slane %v30, %v98
  %v101 = vadd.f32 %v91, %v99
  %v102 = vadd.f32 %v92, %v99
  %v103 = vadd.f32 %v93, %v99
  %v104 = vadd.f32 %v94, %v99
  %v105 = vpack.c.bf16 %v102, %v101
  %v106 = vpack.c.bf16 %v104, %v103
  %v107 = vld [vmem:[%s3] sm:$0xf]
  %v108 = vld [vmem:[%s3 + $0x4] sm:$0xf]
  %v109 = vld [vmem:[%s3 + $0x8] sm:$0xf]
  %v110 = vld [vmem:[%s3 + $0xc] sm:$0xf]
  %v111 = vld [vmem:[%s3 + $0x10] sm:$0xf]
  %v112 = vld [vmem:[%s3 + $0x14] sm:$0xf]
  %v113 = vld [vmem:[%s3 + $0x18] sm:$0xf]
  %v114 = vld [vmem:[%s3 + $0x1c] sm:$0xf]
  %v115 = vld [vmem:[%s4] sm:$0x1]
  %v117 = vlaneseq
  %v118 = vshrl.u32 %v117, 7
  %v119 = vsub.s32 0, %v118
  %v120 = vrot.slane %v115, %v119
  %v130 = vunpack.c.l.b16 %v107
  %v131 = vunpack.c.l.b16 %v108
  %v132 = vunpack.c.l.b16 %v109
  %v133 = vunpack.c.l.b16 %v110
  %v134 = vunpack.c.l.b16 %v111
  %v135 = vunpack.c.l.b16 %v112
  %v136 = vunpack.c.l.b16 %v113
  %v137 = vunpack.c.l.b16 %v114
  %v138 = vpack.c.b16 %v131, %v130
  %v139 = vpack.c.b16 %v133, %v132
  %v140 = vpack.c.b16 %v135, %v134
  %v141 = vpack.c.b16 %v137, %v136
  %v147 = vsel %vm31, %v105, 0
  %v150 = vsel %vm31, %v106, 0
  %152 = vmatprep.subr.bf16.mxu0 0
  %153 = vmatpush1.bf16.msra.mxu0 %v138
  %154 = vmatprep.subr.bf16.mxu0 0
  %155 = vmatpush1.bf16.msra.mxu0 %v139
  %156 = vmatprep.subr.bf16.mxu0 0
  %157 = vmatpush1.bf16.msra.mxu0 %v140
  %158 = vmatprep.subr.bf16.mxu0 0
  %159 = vmatpush1.bf16.msra.mxu0 %v141
  %160 = vmatprep.subr.bf16.mxu0 0
  %161 = vmatpush1.bf16.msra.mxu0 0
  %162 = vmatprep.subr.bf16.mxu0 0
  %163 = vmatpush1.bf16.msra.mxu0 0
  %164 = vmatprep.subr.bf16.mxu0 0
  %165 = vmatpush1.bf16.msra.mxu0 0
  %166 = vmatprep.subr.bf16.mxu0 0
  %167 = vmatpush1.bf16.msra.mxu0 0
  %168 = vmatprep.subr.bf16.mxu0 0
  %169 = vmatpush1.bf16.msra.mxu0 0
  %170 = vmatprep.subr.bf16.mxu0 0
  %171 = vmatpush1.bf16.msra.mxu0 0
  %172 = vmatprep.subr.bf16.mxu0 0
  %173 = vmatpush1.bf16.msra.mxu0 0
  %174 = vmatprep.subr.bf16.mxu0 0
  %175 = vmatpush1.bf16.msra.mxu0 0
  %176 = vmatprep.subr.bf16.mxu0 0
  %177 = vmatpush1.bf16.msra.mxu0 0
  %178 = vmatprep.subr.bf16.mxu0 0
  %179 = vmatpush1.bf16.msra.mxu0 0
  %180 = vmatprep.subr.bf16.mxu0 0
  %181 = vmatpush1.bf16.msra.mxu0 0
  %182 = vmatprep.subr.bf16.mxu0 0
  %183 = vmatpush1.bf16.msra.mxu0 0
  %184 = vmatprep.mubr.bf16.mxu0 0
  %185 = vmatmul.mubr.bf16.gmra.mrb[0].mxu0 %v147
  %v186 = vpop.f32.mrb[0].mxu0
  %v187 = vadd.f32 %v120, %v186
  %v188 = vpop.f32.mrb[0].mxu0
  %v189 = vpop.f32.mrb[0].mxu0
  %v190 = vadd.f32 %v120, %v189
  %v191 = vpop.f32.mrb[0].mxu0
  %192 = vmatprep.mubr.bf16.mxu0 0
  %193 = vmatmul.mubr.bf16.gmra.mrb[0].mxu0 %v150
  %v194 = vpop.f32.mrb[0].mxu0
  %v195 = vadd.f32 %v120, %v194
  %v196 = vpop.f32.mrb[0].mxu0
  %v197 = vpop.f32.mrb[0].mxu0
  %v198 = vadd.f32 %v120, %v197
  %v199 = vpop.f32.mrb[0].mxu0
  %200 = vdwg.mxu0
  %201 = vst [vmem:[%s5] sm:$0xff] %v187
  %202 = vst [vmem:[%s5 + $0x8] sm:$0xff] %v190
  %203 = vst [vmem:[%s5 + $0x10] sm:$0xff] %v195
  %204 = vst [vmem:[%s5 + $0x18] sm:$0xff] %v198
  // Predicated region
  $region22: #{transformer_translator_forward.23} parent=0 // pred_check
    _
  $region23: #{transformer_translator_forward.23} parent=0 // pred_check_branch
    %206 = sbr.rel (0) target = $region25
  $region24: #{transformer_translator_forward.23} parent=0 // pred_region
    _
  $region25: #{transformer_translator_forward.23} parent=0 // pred_fallthru
    _
  // Predicated region
  $region26: #{transformer_translator_forward.23} parent=0 // pred_check
    _
  $region27: #{transformer_translator_forward.23} parent=0 // pred_check_branch
    %208 = sbr.rel (0) target = $region29
  $region28: #{transformer_translator_forward.23} parent=0 // pred_region
    _
  $region29: #{transformer_translator_forward.23} parent=0 // pred_fallthru
    _

</llo_original>
